<compile_context>
chip_gen: v7x
topology: tpu7x:2x2x1
jax: 0.10.0
libtpu: 0.0.40
codegen_flags: <defaults>
</compile_context>

<pallas_src>
import functools

import jax
import jax.numpy as jnp
from jax import lax
from jax.experimental import pallas as pl
from jax.experimental.pallas import tpu as pltpu

BF16 = jnp.bfloat16
F32 = jnp.float32

_ROW_TILE = 2048      # pixel tile for kernels A and C (multiple of 128)
_CHUNK_TILE = 4096    # pixel chunk target for kernel B (multiple of 128)


def _vmem_limit_bytes():
    """Right-sized VMEM cap (leaves headroom; v7x only has 64 MiB physical)."""
    cap = 128 * 1024 * 1024
    try:
        info_cap = int(pltpu.get_tpu_info().vmem_capacity_bytes)
        if info_cap > 0:
            cap = info_cap
    except Exception:
        pass
    return min((cap * 3) // 4, 96 * 1024 * 1024)


# -----------------------------------------------------------------------------
# Kernel A: feats = disp_conv(x), channels-major  (conv1x1+BN folded+ReLU)
# -----------------------------------------------------------------------------
def _feats_kernel(x_ref, wdt_ref, bd_ref, f_ref):
    # x_ref: (1, K, TR) f32 in native (channels, pixels) layout -> no transpose:
    # feats_cm = relu(Wd^T @ x + bd)
    x_bf = x_ref[0].astype(BF16)                                   # (K, TR)
    f = jnp.dot(wdt_ref[...], x_bf, preferred_element_type=F32)    # (256, TR)
    f_ref[0] = jnp.maximum(f + bd_ref[...], 0.0).astype(f_ref.dtype)


def _disp_conv(x_flat, params):
    B, K, HW = x_flat.shape
    wd, bd = params["disp"]                                        # (K, 256), (256,)
    TR = min(_ROW_TILE, HW)
    return pl.pallas_call(
        _feats_kernel,
        out_shape=jax.ShapeDtypeStruct((B, 256, HW), BF16),
        grid=(B, pl.cdiv(HW, TR)),
        in_specs=[
            pl.BlockSpec((1, K, TR), lambda b, t: (b, 0, t)),
            pl.BlockSpec((256, K), lambda b, t: (0, 0)),
            pl.BlockSpec((256, 1), lambda b, t: (0, 0)),
        ],
        out_specs=pl.BlockSpec((1, 256, TR), lambda b, t: (b, 0, t)),
        compiler_params=pltpu.CompilerParams(
            dimension_semantics=("parallel", "parallel"),
            vmem_limit_bytes=_vmem_limit_bytes()),
    )(x_flat, wd.T.astype(BF16), bd.reshape(-1, 1).astype(F32))


# -----------------------------------------------------------------------------
# Kernel B: M = L1norm(softmax(cost)); d_feas = M @ feats^T;
#           key = phi(d_feas) (rows); value = f_down(d_feas) (channels-major)
# Two-pass chunked grid over HW: pass 0 accumulates, pass 1 writes normalized M.
# -----------------------------------------------------------------------------
def _m_kv_kernel(cost_ref, f_ref, wph1_ref, bph1_ref, wph2_ref, bph2_ref,
                 wfdt_ref, bfdc_ref,
                 m_ref, k_ref, vt_ref,
                 accr_ref, accc_ref, denc_ref, denr_ref, *, nt):
    t = pl.program_id(1)
    tcb = cost_ref.shape[-1]

    @pl.when(t == 0)
    def _init():
        accr_ref[...] = jnp.zeros_like(accr_ref)
        accc_ref[...] = jnp.zeros_like(accc_ref)
        denc_ref[...] = jnp.zeros_like(denc_ref)
        denr_ref[...] = jnp.zeros_like(denr_ref)

    # Per-pixel softmax over the class axis for this chunk (exact f32 math;
    # M is an externally returned tensor).
    c = cost_ref[0]                                                # (n_class, tcb)
    c = c - jnp.max(c, axis=0, keepdims=True)
    e = jnp.exp(c)
    p = e / jnp.sum(e, axis=0, keepdims=True)

    # ---- pass 0 (t < nt): accumulate L1 denominators and d_feas = M @ feats^T
    @pl.when(t < nt)
    def _accumulate():
        p_bf = p.astype(BF16)
        f_cm = f_ref[0]                                            # (256, tcb) bf16
        denc_ref[...] += jnp.sum(p, axis=1, keepdims=True)         # (n_class, 1) exact
        denr_ref[...] += lax.dot_general(                          # (1, n_class)
            jnp.ones((1, tcb), BF16), p_bf,
            (((1,), (1,)), ((), ())), preferred_element_type=F32)
        accr_ref[...] += lax.dot_general(                          # (n_class, 256)
            p_bf, f_cm, (((1,), (1,)), ((), ())), preferred_element_type=F32)
        accc_ref[...] += lax.dot_general(                          # (256, n_class)
            f_cm, p_bf, (((1,), (1,)), ((), ())), preferred_element_type=F32)

    # ---- end of pass 0: key = phi(d_feas), value = f_down(d_feas)
    @pl.when(t == nt - 1)
    def _key_value():
        inv_c = 1.0 / jnp.maximum(denc_ref[...], 1e-12)            # (n_class, 1)
        inv_r = 1.0 / jnp.maximum(denr_ref[...], 1e-12)            # (1, n_class)
        d_rows = (accr_ref[...] * inv_c).astype(BF16)              # (n_class, 256)
        k = jnp.dot(d_rows, wph1_ref[...], preferred_element_type=F32)
        k = jnp.maximum(k + bph1_ref[...], 0.0)
        k = jnp.dot(k.astype(BF16), wph2_ref[...], preferred_element_type=F32)
        k = jnp.maximum(k + bph2_ref[...], 0.0)
        k_ref[0] = k.astype(k_ref.dtype)
        d_cm = (accc_ref[...] * inv_r).astype(BF16)                # (256, n_class)
        v = jnp.dot(wfdt_ref[...], d_cm, preferred_element_type=F32)
        v = jnp.maximum(v + bfdc_ref[...], 0.0)
        vt_ref[0] = v.astype(vt_ref.dtype)

    # ---- pass 1 (t >= nt): write exactly L1-normalized M chunks
    @pl.when(t >= nt)
    def _write_m():
        inv_c = 1.0 / jnp.maximum(denc_ref[...], 1e-12)
        m_ref[0] = (p * inv_c).astype(m_ref.dtype)


def _pick_chunk(hw, target):
    """Largest multiple-of-128 divisor of hw that is <= target (else hw)."""
    if hw <= target or hw % 128 != 0:
        # TODO(synk): very large HW with no 128-multiple divisor falls back to a
        # single full-HW chunk (same footprint as an untiled kernel B).
        return hw
    t = (target // 128) * 128
    while t >= 128:
        if hw % t == 0:
            return t
        t -= 128
    return hw


def _m_key_value(cost_flat, feats_cm, params):
    B, n_class, HW = cost_flat.shape
    TCB = _pick_chunk(HW, _CHUNK_TILE)
    nt = HW // TCB
    wph1, bph1 = params["phi1"]
    wph2, bph2 = params["phi2"]
    wfd, bfd = params["fdown"]
    kernel = functools.partial(_m_kv_kernel, nt=nt)
    return pl.pallas_call(
        kernel,
        out_shape=(jax.ShapeDtypeStruct((B, n_class, HW), F32),
                   jax.ShapeDtypeStruct((B, n_class, 128), BF16),
                   jax.ShapeDtypeStruct((B, 128, n_class), BF16)),
        grid=(B, 2 * nt),
        in_specs=[
            # cost chunks: walked in both passes (the only doubly-read input)
            pl.BlockSpec((1, n_class, TCB), lambda b, t: (b, 0, t % nt)),
            # feats chunks: walked in pass 0 only; pinned (no re-DMA) in pass 1
            pl.BlockSpec((1, 256, TCB), lambda b, t: (b, 0, jnp.minimum(t, nt - 1))),
            pl.BlockSpec((256, 128), lambda b, t: (0, 0)),
            pl.BlockSpec((1, 128), lambda b, t: (0, 0)),
            pl.BlockSpec((128, 128), lambda b, t: (0, 0)),
            pl.BlockSpec((1, 128), lambda b, t: (0, 0)),
            pl.BlockSpec((128, 256), lambda b, t: (0, 0)),
            pl.BlockSpec((128, 1), lambda b, t: (0, 0)),
        ],
        out_specs=(
            # M blocks only advance (and hence only write back) during pass 1
            pl.BlockSpec((1, n_class, TCB), lambda b, t: (b, 0, jnp.maximum(t - nt, 0))),
            pl.BlockSpec((1, n_class, 128), lambda b, t: (b, 0, 0)),
            pl.BlockSpec((1, 128, n_class), lambda b, t: (b, 0, 0)),
        ),
        scratch_shapes=[pltpu.VMEM((n_class, 256), F32),
                        pltpu.VMEM((256, n_class), F32),
                        pltpu.VMEM((n_class, 1), F32),
                        pltpu.VMEM((1, n_class), F32)],
        compiler_params=pltpu.CompilerParams(
            dimension_semantics=("parallel", "arbitrary"),
            vmem_limit_bytes=_vmem_limit_bytes()),
    )(cost_flat, feats_cm,
      wph1.astype(BF16), bph1.reshape(1, -1).astype(F32),
      wph2.astype(BF16), bph2.reshape(1, -1).astype(F32),
      wfd.T.astype(BF16), bfd.reshape(-1, 1).astype(F32))


# -----------------------------------------------------------------------------
# Kernel C: psi(recomputed) + object attention + f_up + final_conv(cat folded)
#           + classifier, emitted directly in (B, d_num, HW) layout.
# -----------------------------------------------------------------------------
def _attn_tail_kernel(f_ref, k_ref, vt_ref,
                      wp1_ref, bp1_ref, wp2_ref, bp2_ref,
                      wfu_ref, bfu_ref, wfy_ref, wff_ref, bfin_ref,
                      wcls_ref, bcls_ref, o_ref):
    f = f_ref[0]                                                   # (256, TQ) bf16
    # query = psi(feats), recomputed here instead of round-tripping through HBM
    q = jnp.dot(wp1_ref[...], f, preferred_element_type=F32)       # (128, TQ)
    q = jnp.maximum(q + bp1_ref[...], 0.0)
    q = jnp.dot(wp2_ref[...], q.astype(BF16), preferred_element_type=F32)
    q = jnp.maximum(q + bp2_ref[...], 0.0).astype(BF16)
    # sim^T = key_rows @ query_cm -> (n_class, TQ); softmax over the class axis
    simT = jnp.dot(k_ref[0], q, preferred_element_type=F32)
    simT = simT - jnp.max(simT, axis=0, keepdims=True)
    e = jnp.exp(simT)
    pT = e * pl.reciprocal(jnp.sum(e, axis=0, keepdims=True), approx=True)
    # context (channels-major) = value^T @ p^T -> (128, TQ)
    ctx = jnp.dot(vt_ref[0], pT.astype(BF16), preferred_element_type=F32)
    # y = f_up(context)
    y = jnp.dot(wfu_ref[...], ctx.astype(BF16), preferred_element_type=F32)
    y = jnp.maximum(y + bfu_ref[...], 0.0)
    # final_conv(cat([y, feats], C)) with the concat folded into split weights
    out = jnp.dot(wfy_ref[...], y.astype(BF16), preferred_element_type=F32)
    out = out + jnp.dot(wff_ref[...], f, preferred_element_type=F32)
    out = jnp.maximum(out + bfin_ref[...], 0.0)
    # classifier (bias=True), produced directly as (d_num, pixels)
    logits = jnp.dot(wcls_ref[...], out.astype(BF16), preferred_element_type=F32)
    o_ref[0] = (logits + bcls_ref[...]).astype(o_ref.dtype)


def _attn_tail(feats_cm, k, v_t, params):
    B, _, HW = feats_cm.shape
    n_class = k.shape[1]
    wp1, bp1 = params["psi1"]
    wp2, bp2 = params["psi2"]
    wfu, bfu = params["fup"]
    wfin, bfin = params["final"]
    wcls, bcls = params["cls"]
    d_num = wcls.shape[1]
    wfy, wff = wfin[:256], wfin[256:]          # concat folded into split weights
    TQ = min(_ROW_TILE, HW)
    return pl.pallas_call(
        _attn_tail_kernel,
        out_shape=jax.ShapeDtypeStruct((B, d_num, HW), F32),
        grid=(B, pl.cdiv(HW, TQ)),
        in_specs=[
            pl.BlockSpec((1, 256, TQ), lambda b, t: (b, 0, t)),
            pl.BlockSpec((1, n_class, 128), lambda b, t: (b, 0, 0)),
            pl.BlockSpec((1, 128, n_class), lambda b, t: (b, 0, 0)),
            pl.BlockSpec((128, 256), lambda b, t: (0, 0)),
            pl.BlockSpec((128, 1), lambda b, t: (0, 0)),
            pl.BlockSpec((128, 128), lambda b, t: (0, 0)),
            pl.BlockSpec((128, 1), lambda b, t: (0, 0)),
            pl.BlockSpec((256, 128), lambda b, t: (0, 0)),
            pl.BlockSpec((256, 1), lambda b, t: (0, 0)),
            pl.BlockSpec((256, 256), lambda b, t: (0, 0)),
            pl.BlockSpec((256, 256), lambda b, t: (0, 0)),
            pl.BlockSpec((256, 1), lambda b, t: (0, 0)),
            pl.BlockSpec((d_num, 256), lambda b, t: (0, 0)),
            pl.BlockSpec((d_num, 1), lambda b, t: (0, 0)),
        ],
        out_specs=pl.BlockSpec((1, d_num, TQ), lambda b, t: (b, 0, t)),
        compiler_params=pltpu.CompilerParams(
            dimension_semantics=("parallel", "parallel"),
            vmem_limit_bytes=_vmem_limit_bytes()),
    )(feats_cm, k, v_t,
      wp1.T.astype(BF16), bp1.reshape(-1, 1).astype(F32),
      wp2.T.astype(BF16), bp2.reshape(-1, 1).astype(F32),
      wfu.T.astype(BF16), bfu.reshape(-1, 1).astype(F32),
      wfy.T.astype(BF16), wff.T.astype(BF16), bfin.reshape(-1, 1).astype(F32),
      wcls.T.astype(BF16), bcls.reshape(-1, 1).astype(F32))


# -----------------------------------------------------------------------------
# Parameters (deterministic; conv1x1+BN folded into an affine map, eval mode)
# -----------------------------------------------------------------------------
def init_params(key, c_num, d_num):
    def lin(k, cin, cout):
        kw, kb = jax.random.split(k)
        w = jax.random.normal(kw, (cin, cout), jnp.float32) / jnp.sqrt(float(cin))
        b = jax.random.normal(kb, (cout,), jnp.float32) * 0.01
        return w, b

    keys = jax.random.split(key, 9)
    return {
        "disp": lin(keys[0], c_num * d_num, 256),   # disp_conv
        "psi1": lin(keys[1], 256, 128),             # ObjectAttention.psi[0]
        "psi2": lin(keys[2], 128, 128),             # ObjectAttention.psi[1]
        "phi1": lin(keys[3], 256, 128),             # ObjectAttention.phi[0]
        "phi2": lin(keys[4], 128, 128),             # ObjectAttention.phi[1]
        "fdown": lin(keys[5], 256, 128),            # ObjectAttention.f_down
        "fup": lin(keys[6], 128, 256),              # ObjectAttention.f_up
        "final": lin(keys[7], 512, 256),            # final_conv
        "cls": lin(keys[8], 256, d_num),            # classifier (has bias)
    }


# -----------------------------------------------------------------------------
# Forward (use_gt=False path, inference semantics)
# -----------------------------------------------------------------------------
def ocr_forward(params, x, cost):
    # x: (B, c_num, n_class, H, W), cost: (B, 1, n_class, H, W)   [NCHW-style]
    B, c_num, n_class, H, W = x.shape
    HW = H * W
    K = c_num * n_class

    # Native channel-major flattening: pure reshapes, no HBM transpose pass.
    x_flat = x.reshape(B, K, HW).astype(F32)
    cost_flat = jnp.squeeze(cost, 1).reshape(B, n_class, HW).astype(F32)

    # A) feats = disp_conv(x), stored channels-major (B, 256, HW) bf16.
    feats = _disp_conv(x_flat, params)

    # B) M = L1norm(softmax(cost)); d_feas = M @ feats^T; key = phi; value = f_down.
    M, k, v_t = _m_key_value(cost_flat, feats, params)

    # C) psi + attention + f_up + final_conv(cat folded) + classifier.
    out = _attn_tail(feats, k, v_t, params)            # (B, d_num, HW) f32
    # TODO(synk): Dropout2d(p=0.05) modeled as identity (inference semantics);
    #             use_gt=True ground-truth (label_to_onehot) path not implemented.

    d_num = params["cls"][0].shape[1]
    return out.reshape(B, d_num, H, W), M.reshape(B, n_class, H, W)


if __name__ == "__main__":
    key = jax.random.PRNGKey(0)
    kx, kc, kp = jax.random.split(key, 3)

    B, c_num, d_num, H, W = 2, 4, 8, 8, 8        # n_class == d_num
    x = jax.random.normal(kx, (B, c_num, d_num, H, W), jnp.float32)
    cost = jax.random.normal(kc, (B, 1, d_num, H, W), jnp.float32)

    params = init_params(kp, c_num, d_num)

    output, M = jax.jit(ocr_forward)(params, x, cost)
    jax.block_until_ready((output, M))

    assert output.shape == (B, d_num, H, W)
    assert M.shape == (B, d_num, H, W)

    # M is computed with exact f32 math -> it should match the reference tightly.
    ref_p = jax.nn.softmax(cost[:, 0].reshape(B, d_num, -1), axis=1)
    ref_M = ref_p / jnp.maximum(jnp.sum(ref_p, axis=2, keepdims=True), 1e-12)
    assert jnp.allclose(M.reshape(B, d_num, -1), ref_M, rtol=1e-4, atol=1e-4)
    assert bool(jnp.all(jnp.isfinite(output)))

    print("KERNEL_OK")
</pallas_src>

<mosaic_0001>
module attributes {stable_mosaic.version = 11 : i64} {
  func.func @_feats_kernel(%arg0: i32, %arg1: i32, %arg2: memref<1x32x64xf32, #tpu.memory_space<vmem>>, %arg3: memref<256x32xbf16, #tpu.memory_space<vmem>>, %arg4: memref<256x1xf32, #tpu.memory_space<vmem>>, %arg5: memref<1x256x64xbf16, #tpu.memory_space<vmem>>) attributes {dimension_semantics = [#tpu.dimension_semantics<parallel>, #tpu.dimension_semantics<parallel>], iteration_bounds = array<i64: 2, 1>, scalar_prefetch = 0 : i64, scratch_operands = 0 : i64, tpu.core_type = #tpu.core_type<tc>, window_params = [{transform_indices = @transform_0, window_bounds = array<i64: 1, 32, 64>}, {pipeline_mode = #tpu.pipeline_mode<synchronous>, transform_indices = @transform_1, window_bounds = array<i64: 256, 32>}, {pipeline_mode = #tpu.pipeline_mode<synchronous>, transform_indices = @transform_2, window_bounds = array<i64: 256, 1>}, {transform_indices = @transform_3, window_bounds = array<i64: 1, 256, 64>}]} {
    %c0 = arith.constant 0 : index
    %c0_0 = arith.constant 0 : index
    %c0_1 = arith.constant 0 : index
    %0 = vector.load %arg2[%c0, %c0_0, %c0_1] : memref<1x32x64xf32, #tpu.memory_space<vmem>>, vector<1x32x64xf32>
    %1 = vector.shape_cast %0 : vector<1x32x64xf32> to vector<32x64xf32>
    %2 = arith.truncf %1 : vector<32x64xf32> to vector<32x64xbf16>
    %c0_2 = arith.constant 0 : index
    %c0_3 = arith.constant 0 : index
    %3 = vector.load %arg3[%c0_2, %c0_3] : memref<256x32xbf16, #tpu.memory_space<vmem>>, vector<256x32xbf16>
    %cst = arith.constant dense<0.000000e+00> : vector<256x64xf32>
    %4 = tpu.matmul %3, %2, %cst {dimension_numbers = #tpu.dot_dimension_numbers<[1], [0], [0], [1], [0, 0, 1, 1], [], []>} : vector<256x32xbf16>, vector<32x64xbf16>, vector<256x64xf32> -> vector<256x64xf32>
    %c0_4 = arith.constant 0 : index
    %c0_5 = arith.constant 0 : index
    %5 = vector.load %arg4[%c0_4, %c0_5] : memref<256x1xf32, #tpu.memory_space<vmem>>, vector<256x1xf32>
    %6 = vector.broadcast %5 : vector<256x1xf32> to vector<256x64xf32>
    %7 = arith.addf %4, %6 : vector<256x64xf32>
    %cst_6 = arith.constant 0.000000e+00 : f32
    %8 = vector.broadcast %cst_6 : f32 to vector<256x64xf32>
    %9 = arith.maximumf %7, %8 : vector<256x64xf32>
    %10 = arith.truncf %9 : vector<256x64xf32> to vector<256x64xbf16>
    %c0_7 = arith.constant 0 : index
    %c0_8 = arith.constant 0 : index
    %c0_9 = arith.constant 0 : index
    %11 = vector.load %arg5[%c0_7, %c0_8, %c0_9] : memref<1x256x64xbf16, #tpu.memory_space<vmem>>, vector<1x256x64xbf16>
    %12 = vector.shape_cast %11 : vector<1x256x64xbf16> to vector<256x64xbf16>
    %13 = vector.shape_cast %10 : vector<256x64xbf16> to vector<1x256x64xbf16>
    tpu.vector_store %arg5[%c0_7, %c0_8, %c0_9], %13 {strides = array<i32>} : memref<1x256x64xbf16, #tpu.memory_space<vmem>>, vector<1x256x64xbf16>,
    return
  }
  func.func @transform_0(%arg0: i32, %arg1: i32) -> (i32, i32, i32) {
    %c0_i32 = arith.constant 0 : i32
    %c0_i32_0 = arith.constant 0 : i32
    return %arg0, %c0_i32, %arg1 : i32, i32, i32
  }
  func.func @transform_1(%arg0: i32, %arg1: i32) -> (i32, i32) {
    %c0_i32 = arith.constant 0 : i32
    %c0_i32_0 = arith.constant 0 : i32
    %c0_i32_1 = arith.constant 0 : i32
    return %c0_i32, %c0_i32_0 : i32, i32
  }
  func.func @transform_2(%arg0: i32, %arg1: i32) -> (i32, i32) {
    %c0_i32 = arith.constant 0 : i32
    %c0_i32_0 = arith.constant 0 : i32
    %c0_i32_1 = arith.constant 0 : i32
    return %c0_i32, %c0_i32_0 : i32, i32
  }
  func.func @transform_3(%arg0: i32, %arg1: i32) -> (i32, i32, i32) {
    %c0_i32 = arith.constant 0 : i32
    %c0_i32_0 = arith.constant 0 : i32
    return %arg0, %c0_i32, %arg1 : i32, i32, i32
  }
}

module attributes {stable_mosaic.version = 11 : i64} {
  func.func @_m_kv_kernel(%arg0: i32, %arg1: i32, %arg2: memref<1x8x64xf32, #tpu.memory_space<vmem>>, %arg3: memref<1x256x64xbf16, #tpu.memory_space<vmem>>, %arg4: memref<256x128xbf16, #tpu.memory_space<vmem>>, %arg5: memref<1x128xf32, #tpu.memory_space<vmem>>, %arg6: memref<128x128xbf16, #tpu.memory_space<vmem>>, %arg7: memref<1x128xf32, #tpu.memory_space<vmem>>, %arg8: memref<128x256xbf16, #tpu.memory_space<vmem>>, %arg9: memref<128x1xf32, #tpu.memory_space<vmem>>, %arg10: memref<1x8x64xf32, #tpu.memory_space<vmem>>, %arg11: memref<1x8x128xbf16, #tpu.memory_space<vmem>>, %arg12: memref<1x128x8xbf16, #tpu.memory_space<vmem>>, %arg13: memref<8x256xf32, #tpu.memory_space<vmem>>, %arg14: memref<256x8xf32, #tpu.memory_space<vmem>>, %arg15: memref<8x1xf32, #tpu.memory_space<vmem>>, %arg16: memref<1x8xf32, #tpu.memory_space<vmem>>) attributes {dimension_semantics = [#tpu.dimension_semantics<parallel>, #tpu.dimension_semantics<arbitrary>], iteration_bounds = array<i64: 2, 2>, scalar_prefetch = 0 : i64, scratch_operands = 4 : i64, tpu.core_type = #tpu.core_type<tc>, window_params = [{transform_indices = @transform_0, window_bounds = array<i64: 1, 8, 64>}, {transform_indices = @transform_1, window_bounds = array<i64: 1, 256, 64>}, {pipeline_mode = #tpu.pipeline_mode<synchronous>, transform_indices = @transform_2, window_bounds = array<i64: 256, 128>}, {pipeline_mode = #tpu.pipeline_mode<synchronous>, transform_indices = @transform_3, window_bounds = array<i64: 1, 128>}, {pipeline_mode = #tpu.pipeline_mode<synchronous>, transform_indices = @transform_4, window_bounds = array<i64: 128, 128>}, {pipeline_mode = #tpu.pipeline_mode<synchronous>, transform_indices = @transform_5, window_bounds = array<i64: 1, 128>}, {pipeline_mode = #tpu.pipeline_mode<synchronous>, transform_indices = @transform_6, window_bounds = array<i64: 128, 256>}, {pipeline_mode = #tpu.pipeline_mode<synchronous>, transform_indices = @transform_7, window_bounds = array<i64: 128, 1>}, {transform_indices = @transform_8, window_bounds = array<i64: 1, 8, 64>}, {transform_indices = @transform_9, window_bounds = array<i64: 1, 8, 128>}, {transform_indices = @transform_10, window_bounds = array<i64: 1, 128, 8>}]} {
    %c0_i32 = arith.constant 0 : i32
    %0 = arith.cmpi eq, %arg1, %c0_i32 : i32
    %1 = arith.extui %0 : i1 to i32
    %c0_i32_0 = arith.constant 0 : i32
    %2 = arith.cmpi ne, %1, %c0_i32_0 : i32
    scf.if %2 {
      %cst_9 = arith.constant 0.000000e+00 : f32
      %23 = vector.broadcast %cst_9 : f32 to vector<8x256xf32>
      %c0_10 = arith.constant 0 : index
      %c0_11 = arith.constant 0 : index
      %24 = vector.load %arg13[%c0_10, %c0_11] : memref<8x256xf32, #tpu.memory_space<vmem>>, vector<8x256xf32>
      tpu.vector_store %arg13[%c0_10, %c0_11], %23 {strides = array<i32>} : memref<8x256xf32, #tpu.memory_space<vmem>>, vector<8x256xf32>,
      %cst_12 = arith.constant 0.000000e+00 : f32
      %25 = vector.broadcast %cst_12 : f32 to vector<256x8xf32>
      %c0_13 = arith.constant 0 : index
      %c0_14 = arith.constant 0 : index
      %26 = vector.load %arg14[%c0_13, %c0_14] : memref<256x8xf32, #tpu.memory_space<vmem>>, vector<256x8xf32>
      tpu.vector_store %arg14[%c0_13, %c0_14], %25 {strides = array<i32>} : memref<256x8xf32, #tpu.memory_space<vmem>>, vector<256x8xf32>,
      %cst_15 = arith.constant 0.000000e+00 : f32
      %27 = vector.broadcast %cst_15 : f32 to vector<8x1xf32>
      %c0_16 = arith.constant 0 : index
      %c0_17 = arith.constant 0 : index
      %28 = vector.load %arg15[%c0_16, %c0_17] : memref<8x1xf32, #tpu.memory_space<vmem>>, vector<8x1xf32>
      tpu.vector_store %arg15[%c0_16, %c0_17], %27 {strides = array<i32>} : memref<8x1xf32, #tpu.memory_space<vmem>>, vector<8x1xf32>,
      %cst_18 = arith.constant 0.000000e+00 : f32
      %29 = vector.broadcast %cst_18 : f32 to vector<1x8xf32>
      %c0_19 = arith.constant 0 : index
      %c0_20 = arith.constant 0 : index
      %30 = vector.load %arg16[%c0_19, %c0_20] : memref<1x8xf32, #tpu.memory_space<vmem>>, vector<1x8xf32>
      tpu.vector_store %arg16[%c0_19, %c0_20], %29 {strides = array<i32>} : memref<1x8xf32, #tpu.memory_space<vmem>>, vector<1x8xf32>,
    } else {
    }
    %c0 = arith.constant 0 : index
    %c0_1 = arith.constant 0 : index
    %c0_2 = arith.constant 0 : index
    %3 = vector.load %arg2[%c0, %c0_1, %c0_2] : memref<1x8x64xf32, #tpu.memory_space<vmem>>, vector<1x8x64xf32>
    %4 = vector.shape_cast %3 : vector<1x8x64xf32> to vector<8x64xf32>
    %cst = arith.constant dense<0xFF800000> : vector<64xf32>
    %5 = vector.multi_reduction <maximumf>, %4, %cst [0] : vector<8x64xf32> to vector<64xf32>
    %6 = vector.shape_cast %5 : vector<64xf32> to vector<1x64xf32>
    %7 = vector.broadcast %6 : vector<1x64xf32> to vector<8x64xf32>
    %8 = arith.subf %4, %7 : vector<8x64xf32>
    %9 = math.exp %8 : vector<8x64xf32>
    %cst_3 = arith.constant dense<0.000000e+00> : vector<64xf32>
    %10 = vector.multi_reduction <add>, %9, %cst_3 [0] : vector<8x64xf32> to vector<64xf32>
    %11 = vector.shape_cast %10 : vector<64xf32> to vector<1x64xf32>
    %12 = vector.broadcast %11 : vector<1x64xf32> to vector<8x64xf32>
    %13 = arith.divf %9, %12 : vector<8x64xf32>
    %c1_i32 = arith.constant 1 : i32
    %14 = arith.cmpi slt, %arg1, %c1_i32 : i32
    %15 = arith.extui %14 : i1 to i32
    %c0_i32_4 = arith.constant 0 : i32
    %16 = arith.cmpi ne, %15, %c0_i32_4 : i32
    scf.if %16 {
      %23 = arith.truncf %13 : vector<8x64xf32> to vector<8x64xbf16>
      %c0_9 = arith.constant 0 : index
      %c0_10 = arith.constant 0 : index
      %c0_11 = arith.constant 0 : index
      %24 = vector.load %arg3[%c0_9, %c0_10, %c0_11] : memref<1x256x64xbf16, #tpu.memory_space<vmem>>, vector<1x256x64xbf16>
      %25 = vector.shape_cast %24 : vector<1x256x64xbf16> to vector<256x64xbf16>
      %c0_12 = arith.constant 0 : index
      %c0_13 = arith.constant 0 : index
      %26 = vector.load %arg15[%c0_12, %c0_13] : memref<8x1xf32, #tpu.memory_space<vmem>>, vector<8x1xf32>
      %cst_14 = arith.constant dense<0.000000e+00> : vector<8xf32>
      %27 = vector.multi_reduction <add>, %13, %cst_14 [1] : vector<8x64xf32> to vector<8xf32>
      %28 = vector.shape_cast %27 : vector<8xf32> to vector<8x1xf32>
      %29 = arith.addf %26, %28 : vector<8x1xf32>
      %c0_15 = arith.constant 0 : index
      %c0_16 = arith.constant 0 : index
      %30 = vector.load %arg15[%c0_15, %c0_16] : memref<8x1xf32, #tpu.memory_space<vmem>>, vector<8x1xf32>
      tpu.vector_store %arg15[%c0_15, %c0_16], %29 {strides = array<i32>} : memref<8x1xf32, #tpu.memory_space<vmem>>, vector<8x1xf32>,
      %c0_17 = arith.constant 0 : index
      %c0_18 = arith.constant 0 : index
      %31 = vector.load %arg16[%c0_17, %c0_18] : memref<1x8xf32, #tpu.memory_space<vmem>>, vector<1x8xf32>
      %cst_19 = arith.constant 1.000000e+00 : bf16
      %32 = vector.broadcast %cst_19 : bf16 to vector<1x64xbf16>
      %cst_20 = arith.constant dense<0.000000e+00> : vector<1x8xf32>
      %33 = tpu.matmul %32, %23, %cst_20 {dimension_numbers = #tpu.dot_dimension_numbers<[1], [1], [0], [0], [0, 0, 1, 0], [], []>} : vector<1x64xbf16>, vector<8x64xbf16>, vector<1x8xf32> -> vector<1x8xf32>
      %34 = arith.addf %31, %33 : vector<1x8xf32>
      %c0_21 = arith.constant 0 : index
      %c0_22 = arith.constant 0 : index
      %35 = vector.load %arg16[%c0_21, %c0_22] : memref<1x8xf32, #tpu.memory_space<vmem>>, vector<1x8xf32>
      tpu.vector_store %arg16[%c0_21, %c0_22], %34 {strides = array<i32>} : memref<1x8xf32, #tpu.memory_space<vmem>>, vector<1x8xf32>,
      %c0_23 = arith.constant 0 : index
      %c0_24 = arith.constant 0 : index
      %36 = vector.load %arg13[%c0_23, %c0_24] : memref<8x256xf32, #tpu.memory_space<vmem>>, vector<8x256xf32>
      %cst_25 = arith.constant dense<0.000000e+00> : vector<8x256xf32>
      %37 = tpu.matmul %23, %25, %cst_25 {dimension_numbers = #tpu.dot_dimension_numbers<[1], [1], [0], [0], [0, 0, 1, 0], [], []>} : vector<8x64xbf16>, vector<256x64xbf16>, vector<8x256xf32> -> vector<8x256xf32>
      %38 = arith.addf %36, %37 : vector<8x256xf32>
      %c0_26 = arith.constant 0 : index
      %c0_27 = arith.constant 0 : index
      %39 = vector.load %arg13[%c0_26, %c0_27] : memref<8x256xf32, #tpu.memory_space<vmem>>, vector<8x256xf32>
      tpu.vector_store %arg13[%c0_26, %c0_27], %38 {strides = array<i32>} : memref<8x256xf32, #tpu.memory_space<vmem>>, vector<8x256xf32>,
      %c0_28 = arith.constant 0 : index
      %c0_29 = arith.constant 0 : index
      %40 = vector.load %arg14[%c0_28, %c0_29] : memref<256x8xf32, #tpu.memory_space<vmem>>, vector<256x8xf32>
      %cst_30 = arith.constant dense<0.000000e+00> : vector<256x8xf32>
      %41 = tpu.matmul %25, %23, %cst_30 {dimension_numbers = #tpu.dot_dimension_numbers<[1], [1], [0], [0], [0, 0, 1, 0], [], []>} : vector<256x64xbf16>, vector<8x64xbf16>, vector<256x8xf32> -> vector<256x8xf32>
      %42 = arith.addf %40, %41 : vector<256x8xf32>
      %c0_31 = arith.constant 0 : index
      %c0_32 = arith.constant 0 : index
      %43 = vector.load %arg14[%c0_31, %c0_32] : memref<256x8xf32, #tpu.memory_space<vmem>>, vector<256x8xf32>
      tpu.vector_store %arg14[%c0_31, %c0_32], %42 {strides = array<i32>} : memref<256x8xf32, #tpu.memory_space<vmem>>, vector<256x8xf32>,
    } else {
    }
    %c0_i32_5 = arith.constant 0 : i32
    %17 = arith.cmpi eq, %arg1, %c0_i32_5 : i32
    %18 = arith.extui %17 : i1 to i32
    %c0_i32_6 = arith.constant 0 : i32
    %19 = arith.cmpi ne, %18, %c0_i32_6 : i32
    scf.if %19 {
      %c0_9 = arith.constant 0 : index
      %c0_10 = arith.constant 0 : index
      %23 = vector.load %arg15[%c0_9, %c0_10] : memref<8x1xf32, #tpu.memory_space<vmem>>, vector<8x1xf32>
      %cst_11 = arith.constant 9.99999996E-13 : f32
      %24 = vector.broadcast %cst_11 : f32 to vector<8x1xf32>
      %25 = arith.maximumf %23, %24 : vector<8x1xf32>
      %cst_12 = arith.constant 1.000000e+00 : f32
      %26 = vector.broadcast %cst_12 : f32 to vector<8x1xf32>
      %27 = arith.divf %26, %25 : vector<8x1xf32>
      %c0_13 = arith.constant 0 : index
      %c0_14 = arith.constant 0 : index
      %28 = vector.load %arg16[%c0_13, %c0_14] : memref<1x8xf32, #tpu.memory_space<vmem>>, vector<1x8xf32>
      %cst_15 = arith.constant 9.99999996E-13 : f32
      %29 = vector.broadcast %cst_15 : f32 to vector<1x8xf32>
      %30 = arith.maximumf %28, %29 : vector<1x8xf32>
      %cst_16 = arith.constant 1.000000e+00 : f32
      %31 = vector.broadcast %cst_16 : f32 to vector<1x8xf32>
      %32 = arith.divf %31, %30 : vector<1x8xf32>
      %c0_17 = arith.constant 0 : index
      %c0_18 = arith.constant 0 : index
      %33 = vector.load %arg13[%c0_17, %c0_18] : memref<8x256xf32, #tpu.memory_space<vmem>>, vector<8x256xf32>
      %34 = vector.broadcast %27 : vector<8x1xf32> to vector<8x256xf32>
      %35 = arith.mulf %33, %34 : vector<8x256xf32>
      %36 = arith.truncf %35 : vector<8x256xf32> to vector<8x256xbf16>
      %c0_19 = arith.constant 0 : index
      %c0_20 = arith.constant 0 : index
      %37 = vector.load %arg4[%c0_19, %c0_20] : memref<256x128xbf16, #tpu.memory_space<vmem>>, vector<256x128xbf16>
      %cst_21 = arith.constant dense<0.000000e+00> : vector<8x128xf32>
      %38 = tpu.matmul %36, %37, %cst_21 {dimension_numbers = #tpu.dot_dimension_numbers<[1], [0], [0], [1], [0, 0, 1, 1], [], []>} : vector<8x256xbf16>, vector<256x128xbf16>, vector<8x128xf32> -> vector<8x128xf32>
      %c0_22 = arith.constant 0 : index
      %c0_23 = arith.constant 0 : index
      %39 = vector.load %arg5[%c0_22, %c0_23] : memref<1x128xf32, #tpu.memory_space<vmem>>, vector<1x128xf32>
      %40 = vector.broadcast %39 : vector<1x128xf32> to vector<8x128xf32>
      %41 = arith.addf %38, %40 : vector<8x128xf32>
      %cst_24 = arith.constant 0.000000e+00 : f32
      %42 = vector.broadcast %cst_24 : f32 to vector<8x128xf32>
      %43 = arith.maximumf %41, %42 : vector<8x128xf32>
      %44 = arith.truncf %43 : vector<8x128xf32> to vector<8x128xbf16>
      %c0_25 = arith.constant 0 : index
      %c0_26 = arith.constant 0 : index
      %45 = vector.load %arg6[%c0_25, %c0_26] : memref<128x128xbf16, #tpu.memory_space<vmem>>, vector<128x128xbf16>
      %cst_27 = arith.constant dense<0.000000e+00> : vector<8x128xf32>
      %46 = tpu.matmul %44, %45, %cst_27 {dimension_numbers = #tpu.dot_dimension_numbers<[1], [0], [0], [1], [0, 0, 1, 1], [], []>} : vector<8x128xbf16>, vector<128x128xbf16>, vector<8x128xf32> -> vector<8x128xf32>
      %c0_28 = arith.constant 0 : index
      %c0_29 = arith.constant 0 : index
      %47 = vector.load %arg7[%c0_28, %c0_29] : memref<1x128xf32, #tpu.memory_space<vmem>>, vector<1x128xf32>
      %48 = vector.broadcast %47 : vector<1x128xf32> to vector<8x128xf32>
      %49 = arith.addf %46, %48 : vector<8x128xf32>
      %cst_30 = arith.constant 0.000000e+00 : f32
      %50 = vector.broadcast %cst_30 : f32 to vector<8x128xf32>
      %51 = arith.maximumf %49, %50 : vector<8x128xf32>
      %52 = arith.truncf %51 : vector<8x128xf32> to vector<8x128xbf16>
      %c0_31 = arith.constant 0 : index
      %c0_32 = arith.constant 0 : index
      %c0_33 = arith.constant 0 : index
      %53 = vector.load %arg11[%c0_31, %c0_32, %c0_33] : memref<1x8x128xbf16, #tpu.memory_space<vmem>>, vector<1x8x128xbf16>
      %54 = vector.shape_cast %53 : vector<1x8x128xbf16> to vector<8x128xbf16>
      %55 = vector.shape_cast %52 : vector<8x128xbf16> to vector<1x8x128xbf16>
      tpu.vector_store %arg11[%c0_31, %c0_32, %c0_33], %55 {strides = array<i32>} : memref<1x8x128xbf16, #tpu.memory_space<vmem>>, vector<1x8x128xbf16>,
      %c0_34 = arith.constant 0 : index
      %c0_35 = arith.constant 0 : index
      %56 = vector.load %arg14[%c0_34, %c0_35] : memref<256x8xf32, #tpu.memory_space<vmem>>, vector<256x8xf32>
      %57 = vector.broadcast %32 : vector<1x8xf32> to vector<256x8xf32>
      %58 = arith.mulf %56, %57 : vector<256x8xf32>
      %59 = arith.truncf %58 : vector<256x8xf32> to vector<256x8xbf16>
      %c0_36 = arith.constant 0 : index
      %c0_37 = arith.constant 0 : index
      %60 = vector.load %arg8[%c0_36, %c0_37] : memref<128x256xbf16, #tpu.memory_space<vmem>>, vector<128x256xbf16>
      %cst_38 = arith.constant dense<0.000000e+00> : vector<128x8xf32>
      %61 = tpu.matmul %60, %59, %cst_38 {dimension_numbers = #tpu.dot_dimension_numbers<[1], [0], [0], [1], [0, 0, 1, 1], [], []>} : vector<128x256xbf16>, vector<256x8xbf16>, vector<128x8xf32> -> vector<128x8xf32>
      %c0_39 = arith.constant 0 : index
      %c0_40 = arith.constant 0 : index
      %62 = vector.load %arg9[%c0_39, %c0_40] : memref<128x1xf32, #tpu.memory_space<vmem>>, vector<128x1xf32>
      %63 = vector.broadcast %62 : vector<128x1xf32> to vector<128x8xf32>
      %64 = arith.addf %61, %63 : vector<128x8xf32>
      %cst_41 = arith.constant 0.000000e+00 : f32
      %65 = vector.broadcast %cst_41 : f32 to vector<128x8xf32>
      %66 = arith.maximumf %64, %65 : vector<128x8xf32>
      %67 = arith.truncf %66 : vector<128x8xf32> to vector<128x8xbf16>
      %c0_42 = arith.constant 0 : index
      %c0_43 = arith.constant 0 : index
      %c0_44 = arith.constant 0 : index
      %68 = vector.load %arg12[%c0_42, %c0_43, %c0_44] : memref<1x128x8xbf16, #tpu.memory_space<vmem>>, vector<1x128x8xbf16>
      %69 = vector.shape_cast %68 : vector<1x128x8xbf16> to vector<128x8xbf16>
      %70 = vector.shape_cast %67 : vector<128x8xbf16> to vector<1x128x8xbf16>
      tpu.vector_store %arg12[%c0_42, %c0_43, %c0_44], %70 {strides = array<i32>} : memref<1x128x8xbf16, #tpu.memory_space<vmem>>, vector<1x128x8xbf16>,
    } else {
    }
    %c1_i32_7 = arith.constant 1 : i32
    %20 = arith.cmpi sge, %arg1, %c1_i32_7 : i32
    %21 = arith.extui %20 : i1 to i32
    %c0_i32_8 = arith.constant 0 : i32
    %22 = arith.cmpi ne, %21, %c0_i32_8 : i32
    scf.if %22 {
      %c0_9 = arith.constant 0 : index
      %c0_10 = arith.constant 0 : index
      %23 = vector.load %arg15[%c0_9, %c0_10] : memref<8x1xf32, #tpu.memory_space<vmem>>, vector<8x1xf32>
      %cst_11 = arith.constant 9.99999996E-13 : f32
      %24 = vector.broadcast %cst_11 : f32 to vector<8x1xf32>
      %25 = arith.maximumf %23, %24 : vector<8x1xf32>
      %cst_12 = arith.constant 1.000000e+00 : f32
      %26 = vector.broadcast %cst_12 : f32 to vector<8x1xf32>
      %27 = arith.divf %26, %25 : vector<8x1xf32>
      %28 = vector.broadcast %27 : vector<8x1xf32> to vector<8x64xf32>
      %29 = arith.mulf %13, %28 : vector<8x64xf32>
      %c0_13 = arith.constant 0 : index
      %c0_14 = arith.constant 0 : index
      %c0_15 = arith.constant 0 : index
      %30 = vector.load %arg10[%c0_13, %c0_14, %c0_15] : memref<1x8x64xf32, #tpu.memory_space<vmem>>, vector<1x8x64xf32>
      %31 = vector.shape_cast %30 : vector<1x8x64xf32> to vector<8x64xf32>
      %32 = vector.shape_cast %29 : vector<8x64xf32> to vector<1x8x64xf32>
      tpu.vector_store %arg10[%c0_13, %c0_14, %c0_15], %32 {strides = array<i32>} : memref<1x8x64xf32, #tpu.memory_space<vmem>>, vector<1x8x64xf32>,
    } else {
    }
    return
  }
  func.func @transform_0(%arg0: i32, %arg1: i32) -> (i32, i32, i32) {
    %c1_i32 = arith.constant 1 : i32
    %c0_i32 = arith.constant 0 : i32
    %0 = arith.cmpi eq, %c1_i32, %c0_i32 : i32
    %c1_i32_0 = arith.constant 1 : i32
    %1 = arith.select %0, %c1_i32_0, %c1_i32 : i32
    %2 = arith.remsi %arg1, %1 : i32
    %c0_i32_1 = arith.constant 0 : i32
    %3 = arith.cmpi ne, %2, %c0_i32_1 : i32
    %c0_i32_2 = arith.constant 0 : i32
    %4 = arith.cmpi slt, %2, %c0_i32_2 : i32
    %c0_i32_3 = arith.constant 0 : i32
    %5 = arith.cmpi slt, %1, %c0_i32_3 : i32
    %6 = arith.xori %4, %5 : i1
    %7 = arith.andi %6, %3 : i1
    %8 = arith.addi %2, %1 : i32
    %9 = arith.select %7, %8, %2 : i32
    %c0_i32_4 = arith.constant 0 : i32
    %c0_i32_5 = arith.constant 0 : i32
    return %arg0, %c0_i32_4, %9 : i32, i32, i32
  }
  func.func @transform_1(%arg0: i32, %arg1: i32) -> (i32, i32, i32) {
    %c0_i32 = arith.constant 0 : i32
    %0 = arith.minsi %arg1, %c0_i32 : i32
    %c0_i32_0 = arith.constant 0 : i32
    %c0_i32_1 = arith.constant 0 : i32
    return %arg0, %c0_i32_0, %0 : i32, i32, i32
  }
  func.func @transform_2(%arg0: i32, %arg1: i32) -> (i32, i32) {
    %c0_i32 = arith.constant 0 : i32
    %c0_i32_0 = arith.constant 0 : i32
    %c0_i32_1 = arith.constant 0 : i32
    return %c0_i32, %c0_i32_0 : i32, i32
  }
  func.func @transform_3(%arg0: i32, %arg1: i32) -> (i32, i32) {
    %c0_i32 = arith.constant 0 : i32
    %c0_i32_0 = arith.constant 0 : i32
    %c0_i32_1 = arith.constant 0 : i32
    return %c0_i32, %c0_i32_0 : i32, i32
  }
  func.func @transform_4(%arg0: i32, %arg1: i32) -> (i32, i32) {
    %c0_i32 = arith.constant 0 : i32
    %c0_i32_0 = arith.constant 0 : i32
    %c0_i32_1 = arith.constant 0 : i32
    return %c0_i32, %c0_i32_0 : i32, i32
  }
  func.func @transform_5(%arg0: i32, %arg1: i32) -> (i32, i32) {
    %c0_i32 = arith.constant 0 : i32
    %c0_i32_0 = arith.constant 0 : i32
    %c0_i32_1 = arith.constant 0 : i32
    return %c0_i32, %c0_i32_0 : i32, i32
  }
  func.func @transform_6(%arg0: i32, %arg1: i32) -> (i32, i32) {
    %c0_i32 = arith.constant 0 : i32
    %c0_i32_0 = arith.constant 0 : i32
    %c0_i32_1 = arith.constant 0 : i32
    return %c0_i32, %c0_i32_0 : i32, i32
  }
  func.func @transform_7(%arg0: i32, %arg1: i32) -> (i32, i32) {
    %c0_i32 = arith.constant 0 : i32
    %c0_i32_0 = arith.constant 0 : i32
    %c0_i32_1 = arith.constant 0 : i32
    return %c0_i32, %c0_i32_0 : i32, i32
  }
  func.func @transform_8(%arg0: i32, %arg1: i32) -> (i32, i32, i32) {
    %c1_i32 = arith.constant 1 : i32
    %0 = arith.subi %arg1, %c1_i32 : i32
    %c0_i32 = arith.constant 0 : i32
    %1 = arith.maxsi %0, %c0_i32 : i32
    %c0_i32_0 = arith.constant 0 : i32
    %c0_i32_1 = arith.constant 0 : i32
    return %arg0, %c0_i32_0, %1 : i32, i32, i32
  }
  func.func @transform_9(%arg0: i32, %arg1: i32) -> (i32, i32, i32) {
    %c0_i32 = arith.constant 0 : i32
    %c0_i32_0 = arith.constant 0 : i32
    %c0_i32_1 = arith.constant 0 : i32
    return %arg0, %c0_i32, %c0_i32_0 : i32, i32, i32
  }
  func.func @transform_10(%arg0: i32, %arg1: i32) -> (i32, i32, i32) {
    %c0_i32 = arith.constant 0 : i32
    %c0_i32_0 = arith.constant 0 : i32
    %c0_i32_1 = arith.constant 0 : i32
    return %arg0, %c0_i32, %c0_i32_0 : i32, i32, i32
  }
}

module attributes {stable_mosaic.version = 11 : i64} {
  func.func @_attn_tail_kernel(%arg0: i32, %arg1: i32, %arg2: memref<1x256x64xbf16, #tpu.memory_space<vmem>>, %arg3: memref<1x8x128xbf16, #tpu.memory_space<vmem>>, %arg4: memref<1x128x8xbf16, #tpu.memory_space<vmem>>, %arg5: memref<128x256xbf16, #tpu.memory_space<vmem>>, %arg6: memref<128x1xf32, #tpu.memory_space<vmem>>, %arg7: memref<128x128xbf16, #tpu.memory_space<vmem>>, %arg8: memref<128x1xf32, #tpu.memory_space<vmem>>, %arg9: memref<256x128xbf16, #tpu.memory_space<vmem>>, %arg10: memref<256x1xf32, #tpu.memory_space<vmem>>, %arg11: memref<256x256xbf16, #tpu.memory_space<vmem>>, %arg12: memref<256x256xbf16, #tpu.memory_space<vmem>>, %arg13: memref<256x1xf32, #tpu.memory_space<vmem>>, %arg14: memref<8x256xbf16, #tpu.memory_space<vmem>>, %arg15: memref<8x1xf32, #tpu.memory_space<vmem>>, %arg16: memref<1x8x64xf32, #tpu.memory_space<vmem>>) attributes {dimension_semantics = [#tpu.dimension_semantics<parallel>, #tpu.dimension_semantics<parallel>], iteration_bounds = array<i64: 2, 1>, scalar_prefetch = 0 : i64, scratch_operands = 0 : i64, tpu.core_type = #tpu.core_type<tc>, window_params = [{transform_indices = @transform_0, window_bounds = array<i64: 1, 256, 64>}, {transform_indices = @transform_1, window_bounds = array<i64: 1, 8, 128>}, {transform_indices = @transform_2, window_bounds = array<i64: 1, 128, 8>}, {pipeline_mode = #tpu.pipeline_mode<synchronous>, transform_indices = @transform_3, window_bounds = array<i64: 128, 256>}, {pipeline_mode = #tpu.pipeline_mode<synchronous>, transform_indices = @transform_4, window_bounds = array<i64: 128, 1>}, {pipeline_mode = #tpu.pipeline_mode<synchronous>, transform_indices = @transform_5, window_bounds = array<i64: 128, 128>}, {pipeline_mode = #tpu.pipeline_mode<synchronous>, transform_indices = @transform_6, window_bounds = array<i64: 128, 1>}, {pipeline_mode = #tpu.pipeline_mode<synchronous>, transform_indices = @transform_7, window_bounds = array<i64: 256, 128>}, {pipeline_mode = #tpu.pipeline_mode<synchronous>, transform_indices = @transform_8, window_bounds = array<i64: 256, 1>}, {pipeline_mode = #tpu.pipeline_mode<synchronous>, transform_indices = @transform_9, window_bounds = array<i64: 256, 256>}, {pipeline_mode = #tpu.pipeline_mode<synchronous>, transform_indices = @transform_10, window_bounds = array<i64: 256, 256>}, {pipeline_mode = #tpu.pipeline_mode<synchronous>, transform_indices = @transform_11, window_bounds = array<i64: 256, 1>}, {pipeline_mode = #tpu.pipeline_mode<synchronous>, transform_indices = @transform_12, window_bounds = array<i64: 8, 256>}, {pipeline_mode = #tpu.pipeline_mode<synchronous>, transform_indices = @transform_13, window_bounds = array<i64: 8, 1>}, {transform_indices = @transform_14, window_bounds = array<i64: 1, 8, 64>}]} {
    %c0 = arith.constant 0 : index
    %c0_0 = arith.constant 0 : index
    %c0_1 = arith.constant 0 : index
    %0 = vector.load %arg2[%c0, %c0_0, %c0_1] : memref<1x256x64xbf16, #tpu.memory_space<vmem>>, vector<1x256x64xbf16>
    %1 = vector.shape_cast %0 : vector<1x256x64xbf16> to vector<256x64xbf16>
    %c0_2 = arith.constant 0 : index
    %c0_3 = arith.constant 0 : index
    %2 = vector.load %arg5[%c0_2, %c0_3] : memref<128x256xbf16, #tpu.memory_space<vmem>>, vector<128x256xbf16>
    %cst = arith.constant dense<0.000000e+00> : vector<128x64xf32>
    %3 = tpu.matmul %2, %1, %cst {dimension_numbers = #tpu.dot_dimension_numbers<[1], [0], [0], [1], [0, 0, 1, 1], [], []>} : vector<128x256xbf16>, vector<256x64xbf16>, vector<128x64xf32> -> vector<128x64xf32>
    %c0_4 = arith.constant 0 : index
    %c0_5 = arith.constant 0 : index
    %4 = vector.load %arg6[%c0_4, %c0_5] : memref<128x1xf32, #tpu.memory_space<vmem>>, vector<128x1xf32>
    %5 = vector.broadcast %4 : vector<128x1xf32> to vector<128x64xf32>
    %6 = arith.addf %3, %5 : vector<128x64xf32>
    %cst_6 = arith.constant 0.000000e+00 : f32
    %7 = vector.broadcast %cst_6 : f32 to vector<128x64xf32>
    %8 = arith.maximumf %6, %7 : vector<128x64xf32>
    %c0_7 = arith.constant 0 : index
    %c0_8 = arith.constant 0 : index
    %9 = vector.load %arg7[%c0_7, %c0_8] : memref<128x128xbf16, #tpu.memory_space<vmem>>, vector<128x128xbf16>
    %10 = arith.truncf %8 : vector<128x64xf32> to vector<128x64xbf16>
    %cst_9 = arith.constant dense<0.000000e+00> : vector<128x64xf32>
    %11 = tpu.matmul %9, %10, %cst_9 {dimension_numbers = #tpu.dot_dimension_numbers<[1], [0], [0], [1], [0, 0, 1, 1], [], []>} : vector<128x128xbf16>, vector<128x64xbf16>, vector<128x64xf32> -> vector<128x64xf32>
    %c0_10 = arith.constant 0 : index
    %c0_11 = arith.constant 0 : index
    %12 = vector.load %arg8[%c0_10, %c0_11] : memref<128x1xf32, #tpu.memory_space<vmem>>, vector<128x1xf32>
    %13 = vector.broadcast %12 : vector<128x1xf32> to vector<128x64xf32>
    %14 = arith.addf %11, %13 : vector<128x64xf32>
    %cst_12 = arith.constant 0.000000e+00 : f32
    %15 = vector.broadcast %cst_12 : f32 to vector<128x64xf32>
    %16 = arith.maximumf %14, %15 : vector<128x64xf32>
    %17 = arith.truncf %16 : vector<128x64xf32> to vector<128x64xbf16>
    %c0_13 = arith.constant 0 : index
    %c0_14 = arith.constant 0 : index
    %c0_15 = arith.constant 0 : index
    %18 = vector.load %arg3[%c0_13, %c0_14, %c0_15] : memref<1x8x128xbf16, #tpu.memory_space<vmem>>, vector<1x8x128xbf16>
    %19 = vector.shape_cast %18 : vector<1x8x128xbf16> to vector<8x128xbf16>
    %cst_16 = arith.constant dense<0.000000e+00> : vector<8x64xf32>
    %20 = tpu.matmul %19, %17, %cst_16 {dimension_numbers = #tpu.dot_dimension_numbers<[1], [0], [0], [1], [0, 0, 1, 1], [], []>} : vector<8x128xbf16>, vector<128x64xbf16>, vector<8x64xf32> -> vector<8x64xf32>
    %cst_17 = arith.constant dense<0xFF800000> : vector<64xf32>
    %21 = vector.multi_reduction <maximumf>, %20, %cst_17 [0] : vector<8x64xf32> to vector<64xf32>
    %22 = vector.shape_cast %21 : vector<64xf32> to vector<1x64xf32>
    %23 = vector.broadcast %22 : vector<1x64xf32> to vector<8x64xf32>
    %24 = arith.subf %20, %23 : vector<8x64xf32>
    %25 = math.exp %24 : vector<8x64xf32>
    %cst_18 = arith.constant dense<0.000000e+00> : vector<64xf32>
    %26 = vector.multi_reduction <add>, %25, %cst_18 [0] : vector<8x64xf32> to vector<64xf32>
    %27 = vector.shape_cast %26 : vector<64xf32> to vector<1x64xf32>
    %28 = tpu.reciprocal %27 {approx = true} : vector<1x64xf32> -> vector<1x64xf32>
    %29 = vector.broadcast %28 : vector<1x64xf32> to vector<8x64xf32>
    %30 = arith.mulf %25, %29 : vector<8x64xf32>
    %c0_19 = arith.constant 0 : index
    %c0_20 = arith.constant 0 : index
    %c0_21 = arith.constant 0 : index
    %31 = vector.load %arg4[%c0_19, %c0_20, %c0_21] : memref<1x128x8xbf16, #tpu.memory_space<vmem>>, vector<1x128x8xbf16>
    %32 = vector.shape_cast %31 : vector<1x128x8xbf16> to vector<128x8xbf16>
    %33 = arith.truncf %30 : vector<8x64xf32> to vector<8x64xbf16>
    %cst_22 = arith.constant dense<0.000000e+00> : vector<128x64xf32>
    %34 = tpu.matmul %32, %33, %cst_22 {dimension_numbers = #tpu.dot_dimension_numbers<[1], [0], [0], [1], [0, 0, 1, 1], [], []>} : vector<128x8xbf16>, vector<8x64xbf16>, vector<128x64xf32> -> vector<128x64xf32>
    %c0_23 = arith.constant 0 : index
    %c0_24 = arith.constant 0 : index
    %35 = vector.load %arg9[%c0_23, %c0_24] : memref<256x128xbf16, #tpu.memory_space<vmem>>, vector<256x128xbf16>
    %36 = arith.truncf %34 : vector<128x64xf32> to vector<128x64xbf16>
    %cst_25 = arith.constant dense<0.000000e+00> : vector<256x64xf32>
    %37 = tpu.matmul %35, %36, %cst_25 {dimension_numbers = #tpu.dot_dimension_numbers<[1], [0], [0], [1], [0, 0, 1, 1], [], []>} : vector<256x128xbf16>, vector<128x64xbf16>, vector<256x64xf32> -> vector<256x64xf32>
    %c0_26 = arith.constant 0 : index
    %c0_27 = arith.constant 0 : index
    %38 = vector.load %arg10[%c0_26, %c0_27] : memref<256x1xf32, #tpu.memory_space<vmem>>, vector<256x1xf32>
    %39 = vector.broadcast %38 : vector<256x1xf32> to vector<256x64xf32>
    %40 = arith.addf %37, %39 : vector<256x64xf32>
    %cst_28 = arith.constant 0.000000e+00 : f32
    %41 = vector.broadcast %cst_28 : f32 to vector<256x64xf32>
    %42 = arith.maximumf %40, %41 : vector<256x64xf32>
    %c0_29 = arith.constant 0 : index
    %c0_30 = arith.constant 0 : index
    %43 = vector.load %arg11[%c0_29, %c0_30] : memref<256x256xbf16, #tpu.memory_space<vmem>>, vector<256x256xbf16>
    %44 = arith.truncf %42 : vector<256x64xf32> to vector<256x64xbf16>
    %cst_31 = arith.constant dense<0.000000e+00> : vector<256x64xf32>
    %45 = tpu.matmul %43, %44, %cst_31 {dimension_numbers = #tpu.dot_dimension_numbers<[1], [0], [0], [1], [0, 0, 1, 1], [], []>} : vector<256x256xbf16>, vector<256x64xbf16>, vector<256x64xf32> -> vector<256x64xf32>
    %c0_32 = arith.constant 0 : index
    %c0_33 = arith.constant 0 : index
    %46 = vector.load %arg12[%c0_32, %c0_33] : memref<256x256xbf16, #tpu.memory_space<vmem>>, vector<256x256xbf16>
    %cst_34 = arith.constant dense<0.000000e+00> : vector<256x64xf32>
    %47 = tpu.matmul %46, %1, %cst_34 {dimension_numbers = #tpu.dot_dimension_numbers<[1], [0], [0], [1], [0, 0, 1, 1], [], []>} : vector<256x256xbf16>, vector<256x64xbf16>, vector<256x64xf32> -> vector<256x64xf32>
    %48 = arith.addf %45, %47 : vector<256x64xf32>
    %c0_35 = arith.constant 0 : index
    %c0_36 = arith.constant 0 : index
    %49 = vector.load %arg13[%c0_35, %c0_36] : memref<256x1xf32, #tpu.memory_space<vmem>>, vector<256x1xf32>
    %50 = vector.broadcast %49 : vector<256x1xf32> to vector<256x64xf32>
    %51 = arith.addf %48, %50 : vector<256x64xf32>
    %cst_37 = arith.constant 0.000000e+00 : f32
    %52 = vector.broadcast %cst_37 : f32 to vector<256x64xf32>
    %53 = arith.maximumf %51, %52 : vector<256x64xf32>
    %c0_38 = arith.constant 0 : index
    %c0_39 = arith.constant 0 : index
    %54 = vector.load %arg14[%c0_38, %c0_39] : memref<8x256xbf16, #tpu.memory_space<vmem>>, vector<8x256xbf16>
    %55 = arith.truncf %53 : vector<256x64xf32> to vector<256x64xbf16>
    %cst_40 = arith.constant dense<0.000000e+00> : vector<8x64xf32>
    %56 = tpu.matmul %54, %55, %cst_40 {dimension_numbers = #tpu.dot_dimension_numbers<[1], [0], [0], [1], [0, 0, 1, 1], [], []>} : vector<8x256xbf16>, vector<256x64xbf16>, vector<8x64xf32> -> vector<8x64xf32>
    %c0_41 = arith.constant 0 : index
    %c0_42 = arith.constant 0 : index
    %57 = vector.load %arg15[%c0_41, %c0_42] : memref<8x1xf32, #tpu.memory_space<vmem>>, vector<8x1xf32>
    %58 = vector.broadcast %57 : vector<8x1xf32> to vector<8x64xf32>
    %59 = arith.addf %56, %58 : vector<8x64xf32>
    %c0_43 = arith.constant 0 : index
    %c0_44 = arith.constant 0 : index
    %c0_45 = arith.constant 0 : index
    %60 = vector.load %arg16[%c0_43, %c0_44, %c0_45] : memref<1x8x64xf32, #tpu.memory_space<vmem>>, vector<1x8x64xf32>
    %61 = vector.shape_cast %60 : vector<1x8x64xf32> to vector<8x64xf32>
    %62 = vector.shape_cast %59 : vector<8x64xf32> to vector<1x8x64xf32>
    tpu.vector_store %arg16[%c0_43, %c0_44, %c0_45], %62 {strides = array<i32>} : memref<1x8x64xf32, #tpu.memory_space<vmem>>, vector<1x8x64xf32>,
    return
  }
  func.func @transform_0(%arg0: i32, %arg1: i32) -> (i32, i32, i32) {
    %c0_i32 = arith.constant 0 : i32
    %c0_i32_0 = arith.constant 0 : i32
    return %arg0, %c0_i32, %arg1 : i32, i32, i32
  }
  func.func @transform_1(%arg0: i32, %arg1: i32) -> (i32, i32, i32) {
    %c0_i32 = arith.constant 0 : i32
    %c0_i32_0 = arith.constant 0 : i32
    %c0_i32_1 = arith.constant 0 : i32
    return %arg0, %c0_i32, %c0_i32_0 : i32, i32, i32
  }
  func.func @transform_2(%arg0: i32, %arg1: i32) -> (i32, i32, i32) {
    %c0_i32 = arith.constant 0 : i32
    %c0_i32_0 = arith.constant 0 : i32
    %c0_i32_1 = arith.constant 0 : i32
    return %arg0, %c0_i32, %c0_i32_0 : i32, i32, i32
  }
  func.func @transform_3(%arg0: i32, %arg1: i32) -> (i32, i32) {
    %c0_i32 = arith.constant 0 : i32
    %c0_i32_0 = arith.constant 0 : i32
    %c0_i32_1 = arith.constant 0 : i32
    return %c0_i32, %c0_i32_0 : i32, i32
  }
  func.func @transform_4(%arg0: i32, %arg1: i32) -> (i32, i32) {
    %c0_i32 = arith.constant 0 : i32
    %c0_i32_0 = arith.constant 0 : i32
    %c0_i32_1 = arith.constant 0 : i32
    return %c0_i32, %c0_i32_0 : i32, i32
  }
  func.func @transform_5(%arg0: i32, %arg1: i32) -> (i32, i32) {
    %c0_i32 = arith.constant 0 : i32
    %c0_i32_0 = arith.constant 0 : i32
    %c0_i32_1 = arith.constant 0 : i32
    return %c0_i32, %c0_i32_0 : i32, i32
  }
  func.func @transform_6(%arg0: i32, %arg1: i32) -> (i32, i32) {
    %c0_i32 = arith.constant 0 : i32
    %c0_i32_0 = arith.constant 0 : i32
    %c0_i32_1 = arith.constant 0 : i32
    return %c0_i32, %c0_i32_0 : i32, i32
  }
  func.func @transform_7(%arg0: i32, %arg1: i32) -> (i32, i32) {
    %c0_i32 = arith.constant 0 : i32
    %c0_i32_0 = arith.constant 0 : i32
    %c0_i32_1 = arith.constant 0 : i32
    return %c0_i32, %c0_i32_0 : i32, i32
  }
  func.func @transform_8(%arg0: i32, %arg1: i32) -> (i32, i32) {
    %c0_i32 = arith.constant 0 : i32
    %c0_i32_0 = arith.constant 0 : i32
    %c0_i32_1 = arith.constant 0 : i32
    return %c0_i32, %c0_i32_0 : i32, i32
  }
  func.func @transform_9(%arg0: i32, %arg1: i32) -> (i32, i32) {
    %c0_i32 = arith.constant 0 : i32
    %c0_i32_0 = arith.constant 0 : i32
    %c0_i32_1 = arith.constant 0 : i32
    return %c0_i32, %c0_i32_0 : i32, i32
  }
  func.func @transform_10(%arg0: i32, %arg1: i32) -> (i32, i32) {
    %c0_i32 = arith.constant 0 : i32
    %c0_i32_0 = arith.constant 0 : i32
    %c0_i32_1 = arith.constant 0 : i32
    return %c0_i32, %c0_i32_0 : i32, i32
  }
  func.func @transform_11(%arg0: i32, %arg1: i32) -> (i32, i32) {
    %c0_i32 = arith.constant 0 : i32
    %c0_i32_0 = arith.constant 0 : i32
    %c0_i32_1 = arith.constant 0 : i32
    return %c0_i32, %c0_i32_0 : i32, i32
  }
  func.func @transform_12(%arg0: i32, %arg1: i32) -> (i32, i32) {
    %c0_i32 = arith.constant 0 : i32
    %c0_i32_0 = arith.constant 0 : i32
    %c0_i32_1 = arith.constant 0 : i32
    return %c0_i32, %c0_i32_0 : i32, i32
  }
  func.func @transform_13(%arg0: i32, %arg1: i32) -> (i32, i32) {
    %c0_i32 = arith.constant 0 : i32
    %c0_i32_0 = arith.constant 0 : i32
    %c0_i32_1 = arith.constant 0 : i32
    return %c0_i32, %c0_i32_0 : i32, i32
  }
  func.func @transform_14(%arg0: i32, %arg1: i32) -> (i32, i32, i32) {
    %c0_i32 = arith.constant 0 : i32
    %c0_i32_0 = arith.constant 0 : i32
    return %arg0, %c0_i32, %arg1 : i32, i32, i32
  }
}

</mosaic_0001>

<llo_original>
// kernel: squeeze.1
$region0: #{squeeze.1}
  %s0 = inlined_call_operand.vmem [shape: f32[2,1,8,8,8], index: 0, kind: input, shape index: {}]
  %s1 = inlined_call_operand.hbm [shape: f32[2,8,64], index: 1, kind: output, shape index: {}]
  $region1: #{squeeze.1} parent=0
    #allocation0 [shape = 'u8[8192]{0}', space=vmem, size = 0x2000, scoped, tag = 'operand span for operand 1']
    #allocation1 [shape = 's32[1]{0}', space=sflag, size = 0x4, scoped, tag = 'scoped memory for squeeze.1']
    %2 = vsyncpa [#allocation1], 0
    %v3 = vld [vmem:[%s0] ss:$8 sm:$0xf]
    %v4 = vld [vmem:[%s0] ss:$8 sm:$0xf0]
    %vm5 = vcmask 1047556
    %v6 = vsel %vm5, %v4, %v3
    %vm7 = vcmask 64512
    %8 = vst.msk [vmem:[#allocation0] sm:$0xff] %vm7, %v6
    %s9 = scalar_lea.vmem %s0, 64
    %v10 = vld [vmem:[%s9] ss:$8 sm:$0xf]
    %s11 = scalar_lea.vmem %s0, 64
    %v12 = vld [vmem:[%s11] ss:$8 sm:$0xf0]
    %vm13 = vcmask 1047556
    %v14 = vsel %vm13, %v12, %v10
    %vm15 = vcmask 64512
    %s16 = scalar_lea.vmem [#allocation0], 8
    %17 = vst.msk [vmem:[%s16] sm:$0xff] %vm15, %v14
    %s18 = scalar_lea.vmem %s0, 7
    %v19 = vld [vmem:[%s18] ss:$8 sm:$0xf]
    %s20 = scalar_lea.vmem %s0, 7
    %v21 = vld [vmem:[%s20] ss:$8 sm:$0xf0]
    %vm22 = vcmask 1047556
    %v23 = vsel %vm22, %v21, %v19
    %24 = vrot.lane.b32.xlu0 %v23, 56
    %v25 = vpop.permute.xlu0 %24
    %vm26 = vcmask 523712
    %27 = vst.msk [vmem:[#allocation0] sm:$0xff] %vm26, %v25
    %s28 = scalar_lea.vmem %s0, 71
    %v29 = vld [vmem:[%s28] ss:$8 sm:$0xf]
    %s30 = scalar_lea.vmem %s0, 71
    %v31 = vld [vmem:[%s30] ss:$8 sm:$0xf0]
    %vm32 = vcmask 1047556
    %v33 = vsel %vm32, %v31, %v29
    %34 = vrot.lane.b32.xlu0 %v33, 56
    %v35 = vpop.permute.xlu0 %34
    %vm36 = vcmask 523712
    %s37 = scalar_lea.vmem [#allocation0], 8
    %38 = vst.msk [vmem:[%s37] sm:$0xff] %vm36, %v35
    %s39 = scalar_lea.vmem %s0, 6
    %v40 = vld [vmem:[%s39] ss:$8 sm:$0xf]
    %s41 = scalar_lea.vmem %s0, 6
    %v42 = vld [vmem:[%s41] ss:$8 sm:$0xf0]
    %vm43 = vcmask 1047556
    %v44 = vsel %vm43, %v42, %v40
    %45 = vrot.lane.b32.xlu0 %v44, 48
    %v46 = vpop.permute.xlu0 %45
    %vm47 = vcmask 458112
    %48 = vst.msk [vmem:[#allocation0] sm:$0xff] %vm47, %v46
    %s49 = scalar_lea.vmem %s0, 70
    %v50 = vld [vmem:[%s49] ss:$8 sm:$0xf]
    %s51 = scalar_lea.vmem %s0, 70
    %v52 = vld [vmem:[%s51] ss:$8 sm:$0xf0]
    %vm53 = vcmask 1047556
    %v54 = vsel %vm53, %v52, %v50
    %55 = vrot.lane.b32.xlu0 %v54, 48
    %v56 = vpop.permute.xlu0 %55
    %vm57 = vcmask 458112
    %s58 = scalar_lea.vmem [#allocation0], 8
    %59 = vst.msk [vmem:[%s58] sm:$0xff] %vm57, %v56
    %s60 = scalar_lea.vmem %s0, 5
    %v61 = vld [vmem:[%s60] ss:$8 sm:$0xf]
    %s62 = scalar_lea.vmem %s0, 5
    %v63 = vld [vmem:[%s62] ss:$8 sm:$0xf0]
    %vm64 = vcmask 1047556
    %v65 = vsel %vm64, %v63, %v61
    %66 = vrot.lane.b32.xlu0 %v65, 40
    %v67 = vpop.permute.xlu0 %66
    %vm68 = vcmask 392512
    %69 = vst.msk [vmem:[#allocation0] sm:$0xff] %vm68, %v67
    %s70 = scalar_lea.vmem %s0, 69
    %v71 = vld [vmem:[%s70] ss:$8 sm:$0xf]
    %s72 = scalar_lea.vmem %s0, 69
    %v73 = vld [vmem:[%s72] ss:$8 sm:$0xf0]
    %vm74 = vcmask 1047556
    %v75 = vsel %vm74, %v73, %v71
    %76 = vrot.lane.b32.xlu0 %v75, 40
    %v77 = vpop.permute.xlu0 %76
    %vm78 = vcmask 392512
    %s79 = scalar_lea.vmem [#allocation0], 8
    %80 = vst.msk [vmem:[%s79] sm:$0xff] %vm78, %v77
    %s81 = scalar_lea.vmem %s0, 4
    %v82 = vld [vmem:[%s81] ss:$8 sm:$0xf]
    %s83 = scalar_lea.vmem %s0, 4
    %v84 = vld [vmem:[%s83] ss:$8 sm:$0xf0]
    %vm85 = vcmask 1047556
    %v86 = vsel %vm85, %v84, %v82
    %87 = vrot.lane.b32.xlu0 %v86, 32
    %v88 = vpop.permute.xlu0 %87
    %vm89 = vcmask 326912
    %90 = vst.msk [vmem:[#allocation0] sm:$0xff] %vm89, %v88
    %s91 = scalar_lea.vmem %s0, 68
    %v92 = vld [vmem:[%s91] ss:$8 sm:$0xf]
    %s93 = scalar_lea.vmem %s0, 68
    %v94 = vld [vmem:[%s93] ss:$8 sm:$0xf0]
    %vm95 = vcmask 1047556
    %v96 = vsel %vm95, %v94, %v92
    %97 = vrot.lane.b32.xlu0 %v96, 32
    %v98 = vpop.permute.xlu0 %97
    %vm99 = vcmask 326912
    %s100 = scalar_lea.vmem [#allocation0], 8
    %101 = vst.msk [vmem:[%s100] sm:$0xff] %vm99, %v98
    %s102 = scalar_lea.vmem %s0, 3
    %v103 = vld [vmem:[%s102] ss:$8 sm:$0xf]
    %s104 = scalar_lea.vmem %s0, 3
    %v105 = vld [vmem:[%s104] ss:$8 sm:$0xf0]
    %vm106 = vcmask 1047556
    %v107 = vsel %vm106, %v105, %v103
    %108 = vrot.lane.b32.xlu0 %v107, 24
    %v109 = vpop.permute.xlu0 %108
    %vm110 = vcmask 261312
    %111 = vst.msk [vmem:[#allocation0] sm:$0xff] %vm110, %v109
    %s112 = scalar_lea.vmem %s0, 67
    %v113 = vld [vmem:[%s112] ss:$8 sm:$0xf]
    %s114 = scalar_lea.vmem %s0, 67
    %v115 = vld [vmem:[%s114] ss:$8 sm:$0xf0]
    %vm116 = vcmask 1047556
    %v117 = vsel %vm116, %v115, %v113
    %118 = vrot.lane.b32.xlu0 %v117, 24
    %v119 = vpop.permute.xlu0 %118
    %vm120 = vcmask 261312
    %s121 = scalar_lea.vmem [#allocation0], 8
    %122 = vst.msk [vmem:[%s121] sm:$0xff] %vm120, %v119
    %s123 = scalar_lea.vmem %s0, 2
    %v124 = vld [vmem:[%s123] ss:$8 sm:$0xf]
    %s125 = scalar_lea.vmem %s0, 2
    %v126 = vld [vmem:[%s125] ss:$8 sm:$0xf0]
    %vm127 = vcmask 1047556
    %v128 = vsel %vm127, %v126, %v124
    %129 = vrot.lane.b32.xlu0 %v128, 16
    %v130 = vpop.permute.xlu0 %129
    %vm131 = vcmask 195712
    %132 = vst.msk [vmem:[#allocation0] sm:$0xff] %vm131, %v130
    %s133 = scalar_lea.vmem %s0, 66
    %v134 = vld [vmem:[%s133] ss:$8 sm:$0xf]
    %s135 = scalar_lea.vmem %s0, 66
    %v136 = vld [vmem:[%s135] ss:$8 sm:$0xf0]
    %vm137 = vcmask 1047556
    %v138 = vsel %vm137, %v136, %v134
    %139 = vrot.lane.b32.xlu0 %v138, 16
    %v140 = vpop.permute.xlu0 %139
    %vm141 = vcmask 195712
    %s142 = scalar_lea.vmem [#allocation0], 8
    %143 = vst.msk [vmem:[%s142] sm:$0xff] %vm141, %v140
    %s144 = scalar_lea.vmem %s0, 1
    %v145 = vld [vmem:[%s144] ss:$8 sm:$0xf]
    %s146 = scalar_lea.vmem %s0, 1
    %v147 = vld [vmem:[%s146] ss:$8 sm:$0xf0]
    %vm148 = vcmask 1047556
    %v149 = vsel %vm148, %v147, %v145
    %150 = vrot.lane.b32.xlu0 %v149, 8
    %v151 = vpop.permute.xlu0 %150
    %vm152 = vcmask 130112
    %153 = vst.msk [vmem:[#allocation0] sm:$0xff] %vm152, %v151
    %s154 = scalar_lea.vmem %s0, 65
    %v155 = vld [vmem:[%s154] ss:$8 sm:$0xf]
    %s156 = scalar_lea.vmem %s0, 65
    %v157 = vld [vmem:[%s156] ss:$8 sm:$0xf0]
    %vm158 = vcmask 1047556
    %v159 = vsel %vm158, %v157, %v155
    %160 = vrot.lane.b32.xlu0 %v159, 8
    %v161 = vpop.permute.xlu0 %160
    %vm162 = vcmask 130112
    %s163 = scalar_lea.vmem [#allocation0], 8
    %164 = vst.msk [vmem:[%s163] sm:$0xff] %vm162, %v161
    %s166 = ssub.s32 256, 256
    %167 = vsyncadd [#allocation1], %s166
    %s169 = sshll.u32 [#allocation0], 4
    %s170 = int_to_ptr.vmem [resolvable:$true] %s169
    %172 = dma.vmem_to_hbm [thread:$0]  %s170, 256, %s1, [#allocation1]
    %173 = dma.done [#allocation1], 256
    %174 = vsyncpa [#allocation1], 1

// kernel: ocr_forward.3
$region0: #{ocr_forward.3}
  #allocation0 [shape = 'u32[]', space=smem, size = 0x4, offset = 0x4, fixed_abs, tag = 'smem constant byte address 0x4 - core index']
  #allocation1 [shape = 'u32[144,128]{1,0:T(1,128)}', space=vmem, size = 0x12000, scoped, tag = 'internal scratch']
  %s0 = inlined_call_operand.hbm [shape: f32[2,32,64], index: 0, kind: input, shape index: {}]
  %s1 = inlined_call_operand.hbm [shape: bf16[256,32], index: 1, kind: input, shape index: {}]
  %s2 = inlined_call_operand.hbm [shape: f32[256,1], index: 2, kind: input, shape index: {}]
  %s3 = inlined_call_operand.hbm [shape: bf16[2,256,64], index: 3, kind: output, shape index: {}]
  %s4 = sld [smem:[#allocation0]]
  $region57: #{ocr_forward.3} parent=0
    _
  %s6 = ssub.s32 1, %s4
  %s7 = scalar_select 0, %s6, %s4
  $region1: #{ocr_forward.3} parent=0
    #allocation2 [shape = 'u8[32768]{0}', space=vmem, size = 0x8000, scoped, tag = 'input window, operand 0']
    #allocation3 [shape = 's32[2]{0}', space=sflag, size = 0x8, scoped, tag = 'scoped memory for ocr_forward.3']
    #allocation4 [shape = 's32[2]{0}', space=sflag, size = 0x8, scoped, tag = 'scoped memory for ocr_forward.3']
    #allocation5 [shape = 'u8[65536]{0}', space=vmem, size = 0x10000, scoped, tag = 'input window, operand 1, single buffered']
    #allocation6 [shape = 's32[1]{0}', space=sflag, size = 0x4, scoped, tag = 'scoped memory for ocr_forward.3']
    #allocation7 [shape = 'u8[131072]{0}', space=vmem, size = 0x20000, scoped, tag = 'input window, operand 2, single buffered']
    #allocation8 [shape = 'u8[131072]{0}', space=vmem, size = 0x20000, scoped, tag = 'output window, operand 0']
    %8 = vsyncpa [#allocation3], 0
    %s9 = scalar_lea.sflag [#allocation3], 1
    %10 = vsyncpa %s9, 0
    %11 = vsyncpa [#allocation6], 0
    %12 = vsyncpa [#allocation4], 0
    %s13 = scalar_lea.sflag [#allocation4], 1
    %14 = vsyncpa %s13, 0
    loop: start=0, step=1, limit=4
    $region2: #{ocr_forward.3} parent=1 // loop_pre_header
      _
    $region3: #{ocr_forward.3} parent=1 // loop_header
      %s16 = sphi 0, %s20
      %p17 = scmp.ge.s32.totalorder %s16, 4
      %s23 = sphi 0, %s35
      %s24 = sphi 0, %s31
      %s25 = sphi 0, %s23
      %s26 = sphi 0, %s24
      %s27 = sphi 0, %s25
      %s28 = sphi 0, %s26
      %s40 = sphi 0, %s42
      %s43 = sphi 0, %s40
      %s44 = sphi 0, %s43
      %s60 = sphi 0, %s44
      %s64 = sphi 0, %s64
      %s66 = sphi 0, %s64
      %s67 = sphi 0, %s66
      %s81 = sphi 0, %s67
      %s85 = sphi 0, %s85
      %s87 = sphi 0, %s85
      %s88 = sphi 0, %s87
      %s102 = sphi 0, %s88
      %s110 = sphi 0, %s112
      %s113 = sphi 0, %s110
      %s114 = sphi 0, %s113
      %s130 = sphi 0, %s114
    $region4: #{ocr_forward.3} parent=1 // loop_header_branch
      %19 = sbr.rel (%p17) target = $region8
    $region5: #{ocr_forward.3} parent=1 // loop_body
      %s21 = ssub.s32 %s16, 1
      %s22 = ssub.s32 %s16, 2
      %s29 = sadd.s32 1, %s24
      %p30 = scmp.ge.s32.totalorder %s29, 1
      %s31 = scalar_select %p30, 0, %s29
      %s32 = sadd.s32 1, %s23
      %s33 = scalar_select %p30, %s32, %s23
      %p34 = scmp.ge.s32.totalorder %s33, 2
      %s35 = scalar_select %p34, 0, %s33
      %s36 = ssub.s32 %s23, %s35
      %s37 = ssub.s32 %s24, %s31
      %s38 = sor.u32 %s36, %s37
      %p39 = scmp.eq.s32.totalorder %s38, 0
      %s41 = sadd.s32 %s40, 1
      %s42 = scalar_select %p39, %s40, %s41
      %p45 = pneg %p39
      %p46 = scmp.eq.s32.totalorder %s16, 1
      %p47 = por %p45, %p46
      %p48 = scmp.ne.s32.totalorder %s40, %s43
      %p49 = scmp.eq.s32.totalorder %s16, 0
      %p50 = por %p48, %p49
      %p51 = scmp.ne.s32.totalorder %s40, %s43
      %p52 = scmp.eq.s32.totalorder %s21, 1
      %p53 = por %p51, %p52
      %p54 = scmp.ne.s32.totalorder %s43, %s44
      %p55 = scmp.eq.s32.totalorder %s21, 0
      %p56 = por %p54, %p55
      %p57 = scmp.ne.s32.totalorder %s43, %s44
      %p58 = scmp.eq.s32.totalorder %s22, 1
      %p59 = por %p57, %p58
      %p61 = scmp.ne.s32.totalorder %s44, %s60
      %p62 = scmp.eq.s32.totalorder %s22, 0
      %p63 = por %p61, %p62
      %s65 = sadd.s32 %s64, 1
      %p68 = scmp.eq.s32.totalorder %s16, 1
      %p69 = scmp.ne.s32.totalorder %s64, %s66
      %p70 = scmp.eq.s32.totalorder %s16, 0
      %p71 = por %p69, %p70
      %p72 = scmp.ne.s32.totalorder %s64, %s66
      %p73 = scmp.eq.s32.totalorder %s21, 1
      %p74 = por %p72, %p73
      %p75 = scmp.ne.s32.totalorder %s66, %s67
      %p76 = scmp.eq.s32.totalorder %s21, 0
      %p77 = por %p75, %p76
      %p78 = scmp.ne.s32.totalorder %s66, %s67
      %p79 = scmp.eq.s32.totalorder %s22, 1
      %p80 = por %p78, %p79
      %p82 = scmp.ne.s32.totalorder %s67, %s81
      %p83 = scmp.eq.s32.totalorder %s22, 0
      %p84 = por %p82, %p83
      %s86 = sadd.s32 %s85, 1
      %p89 = scmp.eq.s32.totalorder %s16, 1
      %p90 = scmp.ne.s32.totalorder %s85, %s87
      %p91 = scmp.eq.s32.totalorder %s16, 0
      %p92 = por %p90, %p91
      %p93 = scmp.ne.s32.totalorder %s85, %s87
      %p94 = scmp.eq.s32.totalorder %s21, 1
      %p95 = por %p93, %p94
      %p96 = scmp.ne.s32.totalorder %s87, %s88
      %p97 = scmp.eq.s32.totalorder %s21, 0
      %p98 = por %p96, %p97
      %p99 = scmp.ne.s32.totalorder %s87, %s88
      %p100 = scmp.eq.s32.totalorder %s22, 1
      %p101 = por %p99, %p100
      %p103 = scmp.ne.s32.totalorder %s88, %s102
      %p104 = scmp.eq.s32.totalorder %s22, 0
      %p105 = por %p103, %p104
      %s106 = ssub.s32 %s23, %s35
      %s107 = ssub.s32 %s24, %s31
      %s108 = sor.u32 %s106, %s107
      %p109 = scmp.eq.s32.totalorder %s108, 0
      %s111 = sadd.s32 %s110, 1
      %s112 = scalar_select %p109, %s110, %s111
      %p115 = pneg %p109
      %p116 = scmp.eq.s32.totalorder %s16, 1
      %p117 = por %p115, %p116
      %p118 = scmp.ne.s32.totalorder %s110, %s113
      %p119 = scmp.eq.s32.totalorder %s16, 0
      %p120 = por %p118, %p119
      %p121 = scmp.ne.s32.totalorder %s110, %s113
      %p122 = scmp.eq.s32.totalorder %s21, 1
      %p123 = por %p121, %p122
      %p124 = scmp.ne.s32.totalorder %s113, %s114
      %p125 = scmp.eq.s32.totalorder %s21, 0
      %p126 = por %p124, %p125
      %p127 = scmp.ne.s32.totalorder %s113, %s114
      %p128 = scmp.eq.s32.totalorder %s22, 1
      %p129 = por %p127, %p128
      %p131 = scmp.ne.s32.totalorder %s114, %s130
      %p132 = scmp.eq.s32.totalorder %s22, 0
      %p133 = por %p131, %p132
      %p134 = scmp.le.s32.totalorder 1, %s16
      %p135 = scmp.lt.s32.totalorder %s16, 3
      %p136 = pnand %p134, %p135
      %p137 = pneg %p136
      // Predicated region
      $region9: #{ocr_forward.3} parent=5 // pred_check
        _
      $region10: #{ocr_forward.3} parent=5 // pred_check_branch
        %139 = sbr.rel (%p136) target = $region12
      $region11: #{ocr_forward.3} parent=5 // pred_region
        %s140 = ssub.s32 %s16, 1
        // Predicated region
        $region13: #{ocr_forward.3} parent=11 // pred_check
          %p141 = pneg %p77
        $region14: #{ocr_forward.3} parent=11 // pred_check_branch
          %143 = sbr.rel (%p141) target = $region16
        $region15: #{ocr_forward.3} parent=11 // pred_region
          %s145 = ssub.s32 2048, 2048
          %146 = vsyncadd [#allocation6], %s145
          %s147 = sshll.u32 [#allocation5], 4
          %s148 = int_to_ptr.vmem [resolvable:$true] %s147
          %153 = dma.hbm_to_vmem [thread:$0]  %s1, 2048, %s148, [#allocation6], 64, 64, 4
        $region16: #{ocr_forward.3} parent=11 // pred_fallthru
          _
        // Predicated region
        $region17: #{ocr_forward.3} parent=11 // pred_check
          %p154 = pneg %p98
        $region18: #{ocr_forward.3} parent=11 // pred_check_branch
          %156 = sbr.rel (%p154) target = $region20
        $region19: #{ocr_forward.3} parent=11 // pred_region
          %s158 = ssub.s32 4096, 4096
          %159 = vsyncadd [#allocation6], %s158
          %s160 = sshll.u32 [#allocation7], 4
          %s161 = int_to_ptr.vmem [resolvable:$true] %s160
          %166 = dma.hbm_to_vmem [thread:$0]  %s2, 4096, %s161, [#allocation6], 128, 128, 8
        $region20: #{ocr_forward.3} parent=11 // pred_fallthru
          _
      $region12: #{ocr_forward.3} parent=5 // pred_fallthru
        _
      %p167 = scmp.lt.s32.totalorder %s16, 2
      // Predicated region
      $region21: #{ocr_forward.3} parent=5 // pred_check
        %p168 = pneg %p167
      $region22: #{ocr_forward.3} parent=5 // pred_check_branch
        %170 = sbr.rel (%p168) target = $region24
      $region23: #{ocr_forward.3} parent=5 // pred_region
        // Predicated region
        $region25: #{ocr_forward.3} parent=23 // pred_check
          %p171 = pneg %p50
        $region26: #{ocr_forward.3} parent=23 // pred_check_branch
          %173 = sbr.rel (%p171) target = $region28
        $region27: #{ocr_forward.3} parent=23 // pred_region
          %s174 = sand.u32 %s40, 1
          %s175 = scalar_lea.sflag [#allocation3], %s174
          %s176 = sand.u32 %s40, 1
          %s177 = smul.addr %s176, 32
          %s178 = scalar_lea.vmem [#allocation2], %s177
          %s180 = ssub.s32 512, 512
          %181 = vsyncadd %s175, %s180
          %s182 = smul.addr %s23, 4
          %s183 = sadd.s32 %s24, %s182
          %s184 = smul.addr %s183, 128
          %s185 = scalar_lea.hbm %s0, %s184
          %s186 = sshll.u32 %s178, 4
          %s187 = int_to_ptr.vmem [resolvable:$true] %s186
          %192 = dma.hbm_to_vmem [thread:$0]  %s185, 512, %s187, %s175, 128, 128, 8
        $region28: #{ocr_forward.3} parent=23 // pred_fallthru
          _
      $region24: #{ocr_forward.3} parent=5 // pred_fallthru
        _
      %p193 = scmp.le.s32.totalorder 1, %s16
      %p194 = scmp.lt.s32.totalorder %s16, 3
      %p195 = pnand %p193, %p194
      %p196 = pneg %p195
      // Predicated region
      $region29: #{ocr_forward.3} parent=5 // pred_check
        _
      $region30: #{ocr_forward.3} parent=5 // pred_check_branch
        %198 = sbr.rel (%p195) target = $region32
      $region31: #{ocr_forward.3} parent=5 // pred_region
        %s199 = ssub.s32 %s16, 1
        %s200 = sand.u32 %s43, 1
        %s201 = scalar_lea.sflag [#allocation3], %s200
        %s202 = sand.u32 %s43, 1
        %s203 = smul.addr %s202, 32
        %s204 = scalar_lea.vmem [#allocation2], %s203
        // Predicated region
        $region33: #{ocr_forward.3} parent=31 // pred_check
          %p205 = pneg %p56
        $region34: #{ocr_forward.3} parent=31 // pred_check_branch
          %207 = sbr.rel (%p205) target = $region36
        $region35: #{ocr_forward.3} parent=31 // pred_region
          %208 = dma.done %s201, 512
        $region36: #{ocr_forward.3} parent=31 // pred_fallthru
          _
        // Predicated region
        $region37: #{ocr_forward.3} parent=31 // pred_check
          %p209 = pneg %p77
        $region38: #{ocr_forward.3} parent=31 // pred_check_branch
          %211 = sbr.rel (%p209) target = $region40
        $region39: #{ocr_forward.3} parent=31 // pred_region
          %212 = dma.done [#allocation6], 2048
        $region40: #{ocr_forward.3} parent=31 // pred_fallthru
          _
        // Predicated region
        $region41: #{ocr_forward.3} parent=31 // pred_check
          %p213 = pneg %p98
        $region42: #{ocr_forward.3} parent=31 // pred_check_branch
          %215 = sbr.rel (%p213) target = $region44
        $region43: #{ocr_forward.3} parent=31 // pred_region
          %216 = dma.done [#allocation6], 4096
        $region44: #{ocr_forward.3} parent=31 // pred_fallthru
          _
        %s217 = sand.u32 %s43, 1
        %s218 = scalar_lea.sflag [#allocation3], %s217
        %s219 = sand.u32 %s43, 1
        %s220 = smul.addr %s219, 32
        %s221 = scalar_lea.vmem [#allocation2], %s220
        %p222 = pneg %p56
        %p223 = pneg %p53
        %p224 = pneg %p77
        %p225 = pneg %p74
        %p226 = pneg %p98
        %p227 = pneg %p95
        %p228 = pneg %p126
        %p229 = pneg %p123
        %s230 = sand.u32 %s113, 1
        %s231 = scalar_lea.sflag [#allocation4], %s230
        %s232 = sand.u32 %s113, 1
        %s233 = smul.addr %s232, 128
        %s234 = scalar_lea.vmem [#allocation8], %s233
        %v236 = vld [vmem:[%s204] sm:$0xff]
        %v237 = vld [vmem:[%s204 + $0x8] sm:$0xff]
        %v238 = vld [vmem:[%s204 + $0x10] sm:$0xff]
        %v239 = vld [vmem:[%s204 + $0x18] sm:$0xff]
        %v240 = vpack.c.bf16 %v237, %v236
        %v241 = vpack.c.bf16 %v239, %v238
        %v242 = vld [vmem:[#allocation5] sm:$0xf]
        %v243 = vld [vmem:[#allocation5 + $0x4] sm:$0xf]
        %v244 = vld [vmem:[#allocation5 + $0x8] sm:$0xf]
        %v245 = vld [vmem:[#allocation5 + $0xc] sm:$0xf]
        %v246 = vld [vmem:[#allocation5 + $0x10] sm:$0xf]
        %v247 = vld [vmem:[#allocation5 + $0x14] sm:$0xf]
        %v248 = vld [vmem:[#allocation5 + $0x18] sm:$0xf]
        %v249 = vld [vmem:[#allocation5 + $0x1c] sm:$0xf]
        %v250 = vld [vmem:[#allocation5 + $0x20] sm:$0xf]
        %v251 = vld [vmem:[#allocation5 + $0x24] sm:$0xf]
        %v252 = vld [vmem:[#allocation5 + $0x28] sm:$0xf]
        %v253 = vld [vmem:[#allocation5 + $0x2c] sm:$0xf]
        %v254 = vld [vmem:[#allocation5 + $0x30] sm:$0xf]
        %v255 = vld [vmem:[#allocation5 + $0x34] sm:$0xf]
        %v256 = vld [vmem:[#allocation5 + $0x38] sm:$0xf]
        %v257 = vld [vmem:[#allocation5 + $0x3c] sm:$0xf]
        %v258 = vld [vmem:[#allocation5 + $0x40] sm:$0xf]
        %v259 = vld [vmem:[#allocation5 + $0x44] sm:$0xf]
        %v260 = vld [vmem:[#allocation5 + $0x48] sm:$0xf]
        %v261 = vld [vmem:[#allocation5 + $0x4c] sm:$0xf]
        %v262 = vld [vmem:[#allocation5 + $0x50] sm:$0xf]
        %v263 = vld [vmem:[#allocation5 + $0x54] sm:$0xf]
        %v264 = vld [vmem:[#allocation5 + $0x58] sm:$0xf]
        %v265 = vld [vmem:[#allocation5 + $0x5c] sm:$0xf]
        %v266 = vld [vmem:[#allocation5 + $0x60] sm:$0xf]
        %v267 = vld [vmem:[#allocation5 + $0x64] sm:$0xf]
        %v268 = vld [vmem:[#allocation5 + $0x68] sm:$0xf]
        %v269 = vld [vmem:[#allocation5 + $0x6c] sm:$0xf]
        %v270 = vld [vmem:[#allocation5 + $0x70] sm:$0xf]
        %v271 = vld [vmem:[#allocation5 + $0x74] sm:$0xf]
        %v272 = vld [vmem:[#allocation5 + $0x78] sm:$0xf]
        %v273 = vld [vmem:[#allocation5 + $0x7c] sm:$0xf]
        %v274 = vld [vmem:[#allocation7] sm:$0xff]
        %v275 = vld [vmem:[#allocation7 + $0x8] sm:$0xff]
        %v276 = vld [vmem:[#allocation7 + $0x10] sm:$0xff]
        %v277 = vld [vmem:[#allocation7 + $0x18] sm:$0xff]
        %v278 = vld [vmem:[#allocation7 + $0x20] sm:$0xff]
        %v279 = vld [vmem:[#allocation7 + $0x28] sm:$0xff]
        %v280 = vld [vmem:[#allocation7 + $0x30] sm:$0xff]
        %v281 = vld [vmem:[#allocation7 + $0x38] sm:$0xff]
        %v282 = vld [vmem:[#allocation7 + $0x40] sm:$0xff]
        %v283 = vld [vmem:[#allocation7 + $0x48] sm:$0xff]
        %v284 = vld [vmem:[#allocation7 + $0x50] sm:$0xff]
        %v285 = vld [vmem:[#allocation7 + $0x58] sm:$0xff]
        %v286 = vld [vmem:[#allocation7 + $0x60] sm:$0xff]
        %v287 = vld [vmem:[#allocation7 + $0x68] sm:$0xff]
        %v288 = vld [vmem:[#allocation7 + $0x70] sm:$0xff]
        %v289 = vld [vmem:[#allocation7 + $0x78] sm:$0xff]
        %v290 = vld [vmem:[#allocation7 + $0x80] sm:$0xff]
        %v291 = vld [vmem:[#allocation7 + $0x88] sm:$0xff]
        %v292 = vld [vmem:[#allocation7 + $0x90] sm:$0xff]
        %v293 = vld [vmem:[#allocation7 + $0x98] sm:$0xff]
        %v294 = vld [vmem:[#allocation7 + $0xa0] sm:$0xff]
        %v295 = vld [vmem:[#allocation7 + $0xa8] sm:$0xff]
        %v296 = vld [vmem:[#allocation7 + $0xb0] sm:$0xff]
        %v297 = vld [vmem:[#allocation7 + $0xb8] sm:$0xff]
        %v298 = vld [vmem:[#allocation7 + $0xc0] sm:$0xff]
        %v299 = vld [vmem:[#allocation7 + $0xc8] sm:$0xff]
        %v300 = vld [vmem:[#allocation7 + $0xd0] sm:$0xff]
        %v301 = vld [vmem:[#allocation7 + $0xd8] sm:$0xff]
        %v302 = vld [vmem:[#allocation7 + $0xe0] sm:$0xff]
        %v303 = vld [vmem:[#allocation7 + $0xe8] sm:$0xff]
        %v304 = vld [vmem:[#allocation7 + $0xf0] sm:$0xff]
        %v305 = vld [vmem:[#allocation7 + $0xf8] sm:$0xff]
        %307 = vset.pattern.permute.xlu0 0
        %308 = vperm.xlu0 %307, %v274
        %v309 = vpop.permute.xlu0 %308
        %312 = vset.pattern.permute.xlu0 0
        %313 = vperm.xlu0 %312, %v275
        %v314 = vpop.permute.xlu0 %313
        %317 = vset.pattern.permute.xlu0 0
        %318 = vperm.xlu0 %317, %v276
        %v319 = vpop.permute.xlu0 %318
        %322 = vset.pattern.permute.xlu0 0
        %323 = vperm.xlu0 %322, %v277
        %v324 = vpop.permute.xlu0 %323
        %327 = vset.pattern.permute.xlu0 0
        %328 = vperm.xlu0 %327, %v278
        %v329 = vpop.permute.xlu0 %328
        %332 = vset.pattern.permute.xlu0 0
        %333 = vperm.xlu0 %332, %v279
        %v334 = vpop.permute.xlu0 %333
        %337 = vset.pattern.permute.xlu0 0
        %338 = vperm.xlu0 %337, %v280
        %v339 = vpop.permute.xlu0 %338
        %342 = vset.pattern.permute.xlu0 0
        %343 = vperm.xlu0 %342, %v281
        %v344 = vpop.permute.xlu0 %343
        %347 = vset.pattern.permute.xlu0 0
        %348 = vperm.xlu0 %347, %v282
        %v349 = vpop.permute.xlu0 %348
        %352 = vset.pattern.permute.xlu0 0
        %353 = vperm.xlu0 %352, %v283
        %v354 = vpop.permute.xlu0 %353
        %357 = vset.pattern.permute.xlu0 0
        %358 = vperm.xlu0 %357, %v284
        %v359 = vpop.permute.xlu0 %358
        %362 = vset.pattern.permute.xlu0 0
        %363 = vperm.xlu0 %362, %v285
        %v364 = vpop.permute.xlu0 %363
        %367 = vset.pattern.permute.xlu0 0
        %368 = vperm.xlu0 %367, %v286
        %v369 = vpop.permute.xlu0 %368
        %372 = vset.pattern.permute.xlu0 0
        %373 = vperm.xlu0 %372, %v287
        %v374 = vpop.permute.xlu0 %373
        %377 = vset.pattern.permute.xlu0 0
        %378 = vperm.xlu0 %377, %v288
        %v379 = vpop.permute.xlu0 %378
        %382 = vset.pattern.permute.xlu0 0
        %383 = vperm.xlu0 %382, %v289
        %v384 = vpop.permute.xlu0 %383
        %387 = vset.pattern.permute.xlu0 0
        %388 = vperm.xlu0 %387, %v290
        %v389 = vpop.permute.xlu0 %388
        %392 = vset.pattern.permute.xlu0 0
        %393 = vperm.xlu0 %392, %v291
        %v394 = vpop.permute.xlu0 %393
        %397 = vset.pattern.permute.xlu0 0
        %398 = vperm.xlu0 %397, %v292
        %v399 = vpop.permute.xlu0 %398
        %402 = vset.pattern.permute.xlu0 0
        %403 = vperm.xlu0 %402, %v293
        %v404 = vpop.permute.xlu0 %403
        %407 = vset.pattern.permute.xlu0 0
        %408 = vperm.xlu0 %407, %v294
        %v409 = vpop.permute.xlu0 %408
        %412 = vset.pattern.permute.xlu0 0
        %413 = vperm.xlu0 %412, %v295
        %v414 = vpop.permute.xlu0 %413
        %417 = vset.pattern.permute.xlu0 0
        %418 = vperm.xlu0 %417, %v296
        %v419 = vpop.permute.xlu0 %418
        %422 = vset.pattern.permute.xlu0 0
        %423 = vperm.xlu0 %422, %v297
        %v424 = vpop.permute.xlu0 %423
        %427 = vset.pattern.permute.xlu0 0
        %428 = vperm.xlu0 %427, %v298
        %v429 = vpop.permute.xlu0 %428
        %432 = vset.pattern.permute.xlu0 0
        %433 = vperm.xlu0 %432, %v299
        %v434 = vpop.permute.xlu0 %433
        %437 = vset.pattern.permute.xlu0 0
        %438 = vperm.xlu0 %437, %v300
        %v439 = vpop.permute.xlu0 %438
        %442 = vset.pattern.permute.xlu0 0
        %443 = vperm.xlu0 %442, %v301
        %v444 = vpop.permute.xlu0 %443
        %447 = vset.pattern.permute.xlu0 0
        %448 = vperm.xlu0 %447, %v302
        %v449 = vpop.permute.xlu0 %448
        %452 = vset.pattern.permute.xlu0 0
        %453 = vperm.xlu0 %452, %v303
        %v454 = vpop.permute.xlu0 %453
        %457 = vset.pattern.permute.xlu0 0
        %458 = vperm.xlu0 %457, %v304
        %v459 = vpop.permute.xlu0 %458
        %462 = vset.pattern.permute.xlu0 0
        %463 = vperm.xlu0 %462, %v305
        %v464 = vpop.permute.xlu0 %463
        %v498 = vunpack.c.l.b16 %v242
        %v499 = vunpack.c.l.b16 %v243
        %v500 = vunpack.c.l.b16 %v244
        %v501 = vunpack.c.l.b16 %v245
        %v502 = vunpack.c.l.b16 %v246
        %v503 = vunpack.c.l.b16 %v247
        %v504 = vunpack.c.l.b16 %v248
        %v505 = vunpack.c.l.b16 %v249
        %v506 = vunpack.c.l.b16 %v250
        %v507 = vunpack.c.l.b16 %v251
        %v508 = vunpack.c.l.b16 %v252
        %v509 = vunpack.c.l.b16 %v253
        %v510 = vunpack.c.l.b16 %v254
        %v511 = vunpack.c.l.b16 %v255
        %v512 = vunpack.c.l.b16 %v256
        %v513 = vunpack.c.l.b16 %v257
        %v514 = vunpack.c.l.b16 %v258
        %v515 = vunpack.c.l.b16 %v259
        %v516 = vunpack.c.l.b16 %v260
        %v517 = vunpack.c.l.b16 %v261
        %v518 = vunpack.c.l.b16 %v262
        %v519 = vunpack.c.l.b16 %v263
        %v520 = vunpack.c.l.b16 %v264
        %v521 = vunpack.c.l.b16 %v265
        %v522 = vunpack.c.l.b16 %v266
        %v523 = vunpack.c.l.b16 %v267
        %v524 = vunpack.c.l.b16 %v268
        %v525 = vunpack.c.l.b16 %v269
        %v526 = vunpack.c.l.b16 %v270
        %v527 = vunpack.c.l.b16 %v271
        %v528 = vunpack.c.l.b16 %v272
        %v529 = vunpack.c.l.b16 %v273
        %v530 = vpack.c.b16 %v499, %v498
        %v531 = vpack.c.b16 %v501, %v500
        %v532 = vpack.c.b16 %v503, %v502
        %v533 = vpack.c.b16 %v505, %v504
        %v534 = vpack.c.b16 %v507, %v506
        %v535 = vpack.c.b16 %v509, %v508
        %v536 = vpack.c.b16 %v511, %v510
        %v537 = vpack.c.b16 %v513, %v512
        %v538 = vpack.c.b16 %v515, %v514
        %v539 = vpack.c.b16 %v517, %v516
        %v540 = vpack.c.b16 %v519, %v518
        %v541 = vpack.c.b16 %v521, %v520
        %v542 = vpack.c.b16 %v523, %v522
        %v543 = vpack.c.b16 %v525, %v524
        %v544 = vpack.c.b16 %v527, %v526
        %v545 = vpack.c.b16 %v529, %v528
        %vm546 = vcmask 261120
        %v548 = vsel %vm546, %v530, 0
        %v551 = vsel %vm546, %v531, 0
        %v554 = vsel %vm546, %v532, 0
        %v557 = vsel %vm546, %v533, 0
        %v560 = vsel %vm546, %v534, 0
        %v563 = vsel %vm546, %v535, 0
        %v566 = vsel %vm546, %v536, 0
        %v569 = vsel %vm546, %v537, 0
        %v572 = vsel %vm546, %v538, 0
        %v575 = vsel %vm546, %v539, 0
        %v578 = vsel %vm546, %v540, 0
        %v581 = vsel %vm546, %v541, 0
        %v584 = vsel %vm546, %v542, 0
        %v587 = vsel %vm546, %v543, 0
        %v590 = vsel %vm546, %v544, 0
        %v593 = vsel %vm546, %v545, 0
        %595 = vmatprep.subr.bf16.mxu0 0
        %596 = vmatpush1.bf16.msra.mxu0 %v240
        %597 = vmatprep.subr.bf16.mxu0 0
        %598 = vmatpush1.bf16.msra.mxu0 %v241
        %599 = vmatprep.subr.bf16.mxu0 0
        %600 = vmatpush1.bf16.msra.mxu0 0
        %601 = vmatprep.subr.bf16.mxu0 0
        %602 = vmatpush1.bf16.msra.mxu0 0
        %603 = vmatprep.subr.bf16.mxu0 0
        %604 = vmatpush1.bf16.msra.mxu0 0
        %605 = vmatprep.subr.bf16.mxu0 0
        %606 = vmatpush1.bf16.msra.mxu0 0
        %607 = vmatprep.subr.bf16.mxu0 0
        %608 = vmatpush1.bf16.msra.mxu0 0
        %609 = vmatprep.subr.bf16.mxu0 0
        %610 = vmatpush1.bf16.msra.mxu0 0
        %611 = vmatprep.subr.bf16.mxu0 0
        %612 = vmatpush1.bf16.msra.mxu0 0
        %613 = vmatprep.subr.bf16.mxu0 0
        %614 = vmatpush1.bf16.msra.mxu0 0
        %615 = vmatprep.subr.bf16.mxu0 0
        %616 = vmatpush1.bf16.msra.mxu0 0
        %617 = vmatprep.subr.bf16.mxu0 0
        %618 = vmatpush1.bf16.msra.mxu0 0
        %619 = vmatprep.subr.bf16.mxu0 0
        %620 = vmatpush1.bf16.msra.mxu0 0
        %621 = vmatprep.subr.bf16.mxu0 0
        %622 = vmatpush1.bf16.msra.mxu0 0
        %623 = vmatprep.subr.bf16.mxu0 0
        %624 = vmatpush1.bf16.msra.mxu0 0
        %625 = vmatprep.subr.bf16.mxu0 0
        %626 = vmatpush1.bf16.msra.mxu0 0
        %627 = vmatprep.mubr.bf16.mxu0 0
        %628 = vmatmul.mubr.bf16.gmra.mrb[0].mxu0 %v548
        %v629 = vpop.f32.mrb[0].mxu0
        %v630 = vadd.f32 %v309, %v629
        %v631 = vpop.f32.mrb[0].mxu0
        %v632 = vpop.f32.mrb[0].mxu0
        %v633 = vadd.f32 %v314, %v632
        %v634 = vpop.f32.mrb[0].mxu0
        %635 = vmatprep.mubr.bf16.mxu0 0
        %636 = vmatmul.mubr.bf16.gmra.mrb[0].mxu0 %v551
        %v637 = vpop.f32.mrb[0].mxu0
        %v638 = vadd.f32 %v319, %v637
        %v639 = vpop.f32.mrb[0].mxu0
        %v640 = vpop.f32.mrb[0].mxu0
        %v641 = vadd.f32 %v324, %v640
        %v642 = vpop.f32.mrb[0].mxu0
        %643 = vmatprep.mubr.bf16.mxu0 0
        %644 = vmatmul.mubr.bf16.gmra.mrb[0].mxu0 %v554
        %v645 = vpop.f32.mrb[0].mxu0
        %v646 = vadd.f32 %v329, %v645
        %v647 = vpop.f32.mrb[0].mxu0
        %v648 = vpop.f32.mrb[0].mxu0
        %v649 = vadd.f32 %v334, %v648
        %v650 = vpop.f32.mrb[0].mxu0
        %651 = vmatprep.mubr.bf16.mxu0 0
        %652 = vmatmul.mubr.bf16.gmra.mrb[0].mxu0 %v557
        %v653 = vpop.f32.mrb[0].mxu0
        %v654 = vadd.f32 %v339, %v653
        %v655 = vpop.f32.mrb[0].mxu0
        %v656 = vpop.f32.mrb[0].mxu0
        %v657 = vadd.f32 %v344, %v656
        %v658 = vpop.f32.mrb[0].mxu0
        %659 = vmatprep.mubr.bf16.mxu0 0
        %660 = vmatmul.mubr.bf16.gmra.mrb[0].mxu0 %v560
        %v661 = vpop.f32.mrb[0].mxu0
        %v662 = vadd.f32 %v349, %v661
        %v663 = vpop.f32.mrb[0].mxu0
        %v664 = vpop.f32.mrb[0].mxu0
        %v665 = vadd.f32 %v354, %v664
        %v666 = vpop.f32.mrb[0].mxu0
        %667 = vmatprep.mubr.bf16.mxu0 0
        %668 = vmatmul.mubr.bf16.gmra.mrb[0].mxu0 %v563
        %v669 = vpop.f32.mrb[0].mxu0
        %v670 = vadd.f32 %v359, %v669
        %v671 = vpop.f32.mrb[0].mxu0
        %v672 = vpop.f32.mrb[0].mxu0
        %v673 = vadd.f32 %v364, %v672
        %v674 = vpop.f32.mrb[0].mxu0
        %675 = vmatprep.mubr.bf16.mxu0 0
        %676 = vmatmul.mubr.bf16.gmra.mrb[0].mxu0 %v566
        %v677 = vpop.f32.mrb[0].mxu0
        %v678 = vadd.f32 %v369, %v677
        %v679 = vpop.f32.mrb[0].mxu0
        %v680 = vpop.f32.mrb[0].mxu0
        %v681 = vadd.f32 %v374, %v680
        %v682 = vpop.f32.mrb[0].mxu0
        %683 = vmatprep.mubr.bf16.mxu0 0
        %684 = vmatmul.mubr.bf16.gmra.mrb[0].mxu0 %v569
        %v685 = vpop.f32.mrb[0].mxu0
        %v686 = vadd.f32 %v379, %v685
        %v687 = vpop.f32.mrb[0].mxu0
        %v688 = vpop.f32.mrb[0].mxu0
        %v689 = vadd.f32 %v384, %v688
        %v690 = vpop.f32.mrb[0].mxu0
        %691 = vmatprep.mubr.bf16.mxu0 0
        %692 = vmatmul.mubr.bf16.gmra.mrb[0].mxu0 %v572
        %v693 = vpop.f32.mrb[0].mxu0
        %v694 = vadd.f32 %v389, %v693
        %v695 = vpop.f32.mrb[0].mxu0
        %v696 = vpop.f32.mrb[0].mxu0
        %v697 = vadd.f32 %v394, %v696
        %v698 = vpop.f32.mrb[0].mxu0
        %699 = vmatprep.mubr.bf16.mxu0 0
        %700 = vmatmul.mubr.bf16.gmra.mrb[0].mxu0 %v575
        %v701 = vpop.f32.mrb[0].mxu0
        %v702 = vadd.f32 %v399, %v701
        %v703 = vpop.f32.mrb[0].mxu0
        %v704 = vpop.f32.mrb[0].mxu0
        %v705 = vadd.f32 %v404, %v704
        %v706 = vpop.f32.mrb[0].mxu0
        %707 = vmatprep.mubr.bf16.mxu0 0
        %708 = vmatmul.mubr.bf16.gmra.mrb[0].mxu0 %v578
        %v709 = vpop.f32.mrb[0].mxu0
        %v710 = vadd.f32 %v409, %v709
        %v711 = vpop.f32.mrb[0].mxu0
        %v712 = vpop.f32.mrb[0].mxu0
        %v713 = vadd.f32 %v414, %v712
        %v714 = vpop.f32.mrb[0].mxu0
        %715 = vmatprep.mubr.bf16.mxu0 0
        %716 = vmatmul.mubr.bf16.gmra.mrb[0].mxu0 %v581
        %v717 = vpop.f32.mrb[0].mxu0
        %v718 = vadd.f32 %v419, %v717
        %v719 = vpop.f32.mrb[0].mxu0
        %v720 = vpop.f32.mrb[0].mxu0
        %v721 = vadd.f32 %v424, %v720
        %v722 = vpop.f32.mrb[0].mxu0
        %723 = vmatprep.mubr.bf16.mxu0 0
        %724 = vmatmul.mubr.bf16.gmra.mrb[0].mxu0 %v584
        %v725 = vpop.f32.mrb[0].mxu0
        %v726 = vadd.f32 %v429, %v725
        %v727 = vpop.f32.mrb[0].mxu0
        %v728 = vpop.f32.mrb[0].mxu0
        %v729 = vadd.f32 %v434, %v728
        %v730 = vpop.f32.mrb[0].mxu0
        %731 = vmatprep.mubr.bf16.mxu0 0
        %732 = vmatmul.mubr.bf16.gmra.mrb[0].mxu0 %v587
        %v733 = vpop.f32.mrb[0].mxu0
        %v734 = vadd.f32 %v439, %v733
        %v735 = vpop.f32.mrb[0].mxu0
        %v736 = vpop.f32.mrb[0].mxu0
        %v737 = vadd.f32 %v444, %v736
        %v738 = vpop.f32.mrb[0].mxu0
        %739 = vmatprep.mubr.bf16.mxu0 0
        %740 = vmatmul.mubr.bf16.gmra.mrb[0].mxu0 %v590
        %v741 = vpop.f32.mrb[0].mxu0
        %v742 = vadd.f32 %v449, %v741
        %v743 = vpop.f32.mrb[0].mxu0
        %v744 = vpop.f32.mrb[0].mxu0
        %v745 = vadd.f32 %v454, %v744
        %v746 = vpop.f32.mrb[0].mxu0
        %747 = vmatprep.mubr.bf16.mxu0 0
        %748 = vmatmul.mubr.bf16.gmra.mrb[0].mxu0 %v593
        %v749 = vpop.f32.mrb[0].mxu0
        %v750 = vadd.f32 %v459, %v749
        %v751 = vpop.f32.mrb[0].mxu0
        %v752 = vpop.f32.mrb[0].mxu0
        %v753 = vadd.f32 %v464, %v752
        %v754 = vpop.f32.mrb[0].mxu0
        %755 = vdwg.mxu0
        %v756 = vmax.f32 %v630, 0.0
        %v757 = vmax.f32 %v633, 0.0
        %v758 = vmax.f32 %v638, 0.0
        %v759 = vmax.f32 %v641, 0.0
        %v760 = vmax.f32 %v646, 0.0
        %v761 = vmax.f32 %v649, 0.0
        %v762 = vmax.f32 %v654, 0.0
        %v763 = vmax.f32 %v657, 0.0
        %v764 = vmax.f32 %v662, 0.0
        %v765 = vmax.f32 %v665, 0.0
        %v766 = vmax.f32 %v670, 0.0
        %v767 = vmax.f32 %v673, 0.0
        %v768 = vmax.f32 %v678, 0.0
        %v769 = vmax.f32 %v681, 0.0
        %v770 = vmax.f32 %v686, 0.0
        %v771 = vmax.f32 %v689, 0.0
        %v772 = vmax.f32 %v694, 0.0
        %v773 = vmax.f32 %v697, 0.0
        %v774 = vmax.f32 %v702, 0.0
        %v775 = vmax.f32 %v705, 0.0
        %v776 = vmax.f32 %v710, 0.0
        %v777 = vmax.f32 %v713, 0.0
        %v778 = vmax.f32 %v718, 0.0
        %v779 = vmax.f32 %v721, 0.0
        %v780 = vmax.f32 %v726, 0.0
        %v781 = vmax.f32 %v729, 0.0
        %v782 = vmax.f32 %v734, 0.0
        %v783 = vmax.f32 %v737, 0.0
        %v784 = vmax.f32 %v742, 0.0
        %v785 = vmax.f32 %v745, 0.0
        %v786 = vmax.f32 %v750, 0.0
        %v787 = vmax.f32 %v753, 0.0
        %v788 = vpack.c.bf16 %v757, %v756
        %v789 = vpack.c.bf16 %v759, %v758
        %v790 = vpack.c.bf16 %v761, %v760
        %v791 = vpack.c.bf16 %v763, %v762
        %v792 = vpack.c.bf16 %v765, %v764
        %v793 = vpack.c.bf16 %v767, %v766
        %v794 = vpack.c.bf16 %v769, %v768
        %v795 = vpack.c.bf16 %v771, %v770
        %v796 = vpack.c.bf16 %v773, %v772
        %v797 = vpack.c.bf16 %v775, %v774
        %v798 = vpack.c.bf16 %v777, %v776
        %v799 = vpack.c.bf16 %v779, %v778
        %v800 = vpack.c.bf16 %v781, %v780
        %v801 = vpack.c.bf16 %v783, %v782
        %v802 = vpack.c.bf16 %v785, %v784
        %v803 = vpack.c.bf16 %v787, %v786
        %v820 = vunpack.c.l.b16 %v788
        %v821 = vunpack.c.h.b16 %v788
        %v822 = vunpack.c.l.b16 %v789
        %v823 = vunpack.c.h.b16 %v789
        %v824 = vunpack.c.l.b16 %v790
        %v825 = vunpack.c.h.b16 %v790
        %v826 = vunpack.c.l.b16 %v791
        %v827 = vunpack.c.h.b16 %v791
        %v828 = vunpack.c.l.b16 %v792
        %v829 = vunpack.c.h.b16 %v792
        %v830 = vunpack.c.l.b16 %v793
        %v831 = vunpack.c.h.b16 %v793
        %v832 = vunpack.c.l.b16 %v794
        %v833 = vunpack.c.h.b16 %v794
        %v834 = vunpack.c.l.b16 %v795
        %v835 = vunpack.c.h.b16 %v795
        %v836 = vunpack.c.l.b16 %v796
        %v837 = vunpack.c.h.b16 %v796
        %v838 = vunpack.c.l.b16 %v797
        %v839 = vunpack.c.h.b16 %v797
        %v840 = vunpack.c.l.b16 %v798
        %v841 = vunpack.c.h.b16 %v798
        %v842 = vunpack.c.l.b16 %v799
        %v843 = vunpack.c.h.b16 %v799
        %v844 = vunpack.c.l.b16 %v800
        %v845 = vunpack.c.h.b16 %v800
        %v846 = vunpack.c.l.b16 %v801
        %v847 = vunpack.c.h.b16 %v801
        %v848 = vunpack.c.l.b16 %v802
        %v849 = vunpack.c.h.b16 %v802
        %v850 = vunpack.c.l.b16 %v803
        %v851 = vunpack.c.h.b16 %v803
        %v852 = vpack.c.b16 %v820, %v820
        %v853 = vpack.c.b16 %v821, %v821
        %v854 = vpack.c.b16 %v822, %v822
        %v855 = vpack.c.b16 %v823, %v823
        %v856 = vpack.c.b16 %v824, %v824
        %v857 = vpack.c.b16 %v825, %v825
        %v858 = vpack.c.b16 %v826, %v826
        %v859 = vpack.c.b16 %v827, %v827
        %v860 = vpack.c.b16 %v828, %v828
        %v861 = vpack.c.b16 %v829, %v829
        %v862 = vpack.c.b16 %v830, %v830
        %v863 = vpack.c.b16 %v831, %v831
        %v864 = vpack.c.b16 %v832, %v832
        %v865 = vpack.c.b16 %v833, %v833
        %v866 = vpack.c.b16 %v834, %v834
        %v867 = vpack.c.b16 %v835, %v835
        %v868 = vpack.c.b16 %v836, %v836
        %v869 = vpack.c.b16 %v837, %v837
        %v870 = vpack.c.b16 %v838, %v838
        %v871 = vpack.c.b16 %v839, %v839
        %v872 = vpack.c.b16 %v840, %v840
        %v873 = vpack.c.b16 %v841, %v841
        %v874 = vpack.c.b16 %v842, %v842
        %v875 = vpack.c.b16 %v843, %v843
        %v876 = vpack.c.b16 %v844, %v844
        %v877 = vpack.c.b16 %v845, %v845
        %v878 = vpack.c.b16 %v846, %v846
        %v879 = vpack.c.b16 %v847, %v847
        %v880 = vpack.c.b16 %v848, %v848
        %v881 = vpack.c.b16 %v849, %v849
        %v882 = vpack.c.b16 %v850, %v850
        %v883 = vpack.c.b16 %v851, %v851
        %vm916 = vcmask 519168
        %917 = vst.msk [vmem:[%s234] sm:$0xf] %vm916, %v852
        %918 = vst.msk [vmem:[%s234 + $0x4] sm:$0xf] %vm916, %v853
        %919 = vst.msk [vmem:[%s234 + $0x8] sm:$0xf] %vm916, %v854
        %920 = vst.msk [vmem:[%s234 + $0xc] sm:$0xf] %vm916, %v855
        %921 = vst.msk [vmem:[%s234 + $0x10] sm:$0xf] %vm916, %v856
        %922 = vst.msk [vmem:[%s234 + $0x14] sm:$0xf] %vm916, %v857
        %923 = vst.msk [vmem:[%s234 + $0x18] sm:$0xf] %vm916, %v858
        %924 = vst.msk [vmem:[%s234 + $0x1c] sm:$0xf] %vm916, %v859
        %925 = vst.msk [vmem:[%s234 + $0x20] sm:$0xf] %vm916, %v860
        %926 = vst.msk [vmem:[%s234 + $0x24] sm:$0xf] %vm916, %v861
        %927 = vst.msk [vmem:[%s234 + $0x28] sm:$0xf] %vm916, %v862
        %928 = vst.msk [vmem:[%s234 + $0x2c] sm:$0xf] %vm916, %v863
        %929 = vst.msk [vmem:[%s234 + $0x30] sm:$0xf] %vm916, %v864
        %930 = vst.msk [vmem:[%s234 + $0x34] sm:$0xf] %vm916, %v865
        %931 = vst.msk [vmem:[%s234 + $0x38] sm:$0xf] %vm916, %v866
        %932 = vst.msk [vmem:[%s234 + $0x3c] sm:$0xf] %vm916, %v867
        %933 = vst.msk [vmem:[%s234 + $0x40] sm:$0xf] %vm916, %v868
        %934 = vst.msk [vmem:[%s234 + $0x44] sm:$0xf] %vm916, %v869
        %935 = vst.msk [vmem:[%s234 + $0x48] sm:$0xf] %vm916, %v870
        %936 = vst.msk [vmem:[%s234 + $0x4c] sm:$0xf] %vm916, %v871
        %937 = vst.msk [vmem:[%s234 + $0x50] sm:$0xf] %vm916, %v872
        %938 = vst.msk [vmem:[%s234 + $0x54] sm:$0xf] %vm916, %v873
        %939 = vst.msk [vmem:[%s234 + $0x58] sm:$0xf] %vm916, %v874
        %940 = vst.msk [vmem:[%s234 + $0x5c] sm:$0xf] %vm916, %v875
        %941 = vst.msk [vmem:[%s234 + $0x60] sm:$0xf] %vm916, %v876
        %942 = vst.msk [vmem:[%s234 + $0x64] sm:$0xf] %vm916, %v877
        %943 = vst.msk [vmem:[%s234 + $0x68] sm:$0xf] %vm916, %v878
        %944 = vst.msk [vmem:[%s234 + $0x6c] sm:$0xf] %vm916, %v879
        %945 = vst.msk [vmem:[%s234 + $0x70] sm:$0xf] %vm916, %v880
        %946 = vst.msk [vmem:[%s234 + $0x74] sm:$0xf] %vm916, %v881
        %947 = vst.msk [vmem:[%s234 + $0x78] sm:$0xf] %vm916, %v882
        %948 = vst.msk [vmem:[%s234 + $0x7c] sm:$0xf] %vm916, %v883
        %s949 = sand.u32 %s113, 1
        %s950 = scalar_lea.sflag [#allocation4], %s949
        %s951 = sand.u32 %s113, 1
        %s952 = smul.addr %s951, 128
        %s953 = scalar_lea.vmem [#allocation8], %s952
        // Predicated region
        $region45: #{ocr_forward.3} parent=31 // pred_check
          %p954 = pneg %p123
        $region46: #{ocr_forward.3} parent=31 // pred_check_branch
          %956 = sbr.rel (%p954) target = $region48
        $region47: #{ocr_forward.3} parent=31 // pred_region
          %s958 = ssub.s32 2048, 2048
          %959 = vsyncadd %s950, %s958
          %s960 = smul.addr %s25, 32
          %s961 = sadd.s32 %s26, %s960
          %s962 = smul.addr %s961, 64
          %s963 = scalar_lea.hbm %s3, %s962
          %s964 = sshll.u32 %s953, 4
          %s965 = int_to_ptr.vmem [resolvable:$true] %s964
          %970 = dma.vmem_to_hbm [thread:$0]  %s965, 2048, %s963, %s950, 64, 64, 4
        $region48: #{ocr_forward.3} parent=31 // pred_fallthru
          _
      $region32: #{ocr_forward.3} parent=5 // pred_fallthru
        _
      %p971 = scmp.le.s32.totalorder 2, %s16
      // Predicated region
      $region49: #{ocr_forward.3} parent=5 // pred_check
        %p972 = pneg %p971
      $region50: #{ocr_forward.3} parent=5 // pred_check_branch
        %974 = sbr.rel (%p972) target = $region52
      $region51: #{ocr_forward.3} parent=5 // pred_region
        %s975 = ssub.s32 %s16, 2
        // Predicated region
        $region53: #{ocr_forward.3} parent=51 // pred_check
          %p976 = pneg %p129
        $region54: #{ocr_forward.3} parent=51 // pred_check_branch
          %978 = sbr.rel (%p976) target = $region56
        $region55: #{ocr_forward.3} parent=51 // pred_region
          %s979 = sand.u32 %s114, 1
          %s980 = scalar_lea.sflag [#allocation4], %s979
          %s981 = sand.u32 %s114, 1
          %s982 = smul.addr %s981, 128
          %s983 = scalar_lea.vmem [#allocation8], %s982
          %984 = dma.done %s980, 2048
        $region56: #{ocr_forward.3} parent=51 // pred_fallthru
          _
      $region52: #{ocr_forward.3} parent=5 // pred_fallthru
        _
    $region6: #{ocr_forward.3} parent=1 // loop_footer
      %s20 = sadd.s32 1, %s16
    $region7: #{ocr_forward.3} parent=1 // loop_footer_branch
      %15 = sbr.rel target = $region3
    $region8: #{ocr_forward.3} parent=1 // loop_exit
      _
    %985 = vsyncpa [#allocation3], 1
    %s986 = scalar_lea.sflag [#allocation3], 1
    %987 = vsyncpa %s986, 1
    %988 = vsyncpa [#allocation6], 1
    %989 = vsyncpa [#allocation4], 1
    %s990 = scalar_lea.sflag [#allocation4], 1
    %991 = vsyncpa %s990, 1

// kernel: ocr_forward.4
$region0: #{ocr_forward.4}
  #allocation0 [shape = 'u32[]', space=smem, size = 0x4, offset = 0x4, fixed_abs, tag = 'smem constant byte address 0x4 - core index']
  #allocation1 [shape = 'u32[144,128]{1,0:T(1,128)}', space=vmem, size = 0x12000, scoped, tag = 'internal scratch']
  #allocation2 [shape = 'f32[8,256]{1,0:T(8,128)}', space=vmem, size = 0x2000, scoped, tag = 'scratch operand']
  #allocation3 [shape = 'f32[256,8]{1,0:T(8,128)}', space=vmem, size = 0x20000, scoped, tag = 'scratch operand']
  #allocation4 [shape = 'f32[8,1]{1,0:T(8,128)}', space=vmem, size = 0x1000, scoped, tag = 'scratch operand']
  #allocation5 [shape = 'f32[1,8]{1,0:T(1,128)}', space=vmem, size = 0x200, scoped, tag = 'scratch operand']
  %s0 = inlined_call_operand.hbm [shape: f32[2,8,64], index: 0, kind: input, shape index: {}]
  %s1 = inlined_call_operand.hbm [shape: bf16[2,256,64], index: 1, kind: input, shape index: {}]
  %s2 = inlined_call_operand.hbm [shape: bf16[256,128], index: 2, kind: input, shape index: {}]
  %s3 = inlined_call_operand.hbm [shape: f32[1,128], index: 3, kind: input, shape index: {}]
  %s4 = inlined_call_operand.hbm [shape: bf16[128,128], index: 4, kind: input, shape index: {}]
  %s5 = inlined_call_operand.hbm [shape: f32[1,128], index: 5, kind: input, shape index: {}]
  %s6 = inlined_call_operand.hbm [shape: bf16[128,256], index: 6, kind: input, shape index: {}]
  %s7 = inlined_call_operand.hbm [shape: f32[128,1], index: 7, kind: input, shape index: {}]
  %s8 = inlined_call_operand.hbm [shape: f32[2,8,64], index: 8, kind: output, shape index: {0}]
  %s9 = inlined_call_operand.hbm [shape: bf16[2,8,128], index: 9, kind: output, shape index: {1}]
  %s10 = inlined_call_operand.hbm [shape: bf16[2,128,8], index: 10, kind: output, shape index: {2}]
  %11 = xla_tuple %s8, %s9, %s10
  %s12 = sld [smem:[#allocation0]]
  $region129: #{ocr_forward.4} parent=0
    _
  %s14 = ssub.s32 1, %s12
  %s15 = scalar_select 0, %s14, %s12
  $region1: #{ocr_forward.4} parent=0
    #allocation6 [shape = 'u8[8192]{0}', space=vmem, size = 0x2000, scoped, tag = 'input window, operand 0']
    #allocation7 [shape = 's32[2]{0}', space=sflag, size = 0x8, scoped, tag = 'scoped memory for ocr_forward.4']
    #allocation8 [shape = 's32[2]{0}', space=sflag, size = 0x8, scoped, tag = 'scoped memory for ocr_forward.4']
    #allocation9 [shape = 'u8[131072]{0}', space=vmem, size = 0x20000, scoped, tag = 'input window, operand 1']
    #allocation10 [shape = 's32[2]{0}', space=sflag, size = 0x8, scoped, tag = 'scoped memory for ocr_forward.4']
    #allocation11 [shape = 'u8[65536]{0}', space=vmem, size = 0x10000, scoped, tag = 'input window, operand 2, single buffered']
    #allocation12 [shape = 'u8[512]{0}', space=vmem, size = 0x400, scoped, tag = 'input window, operand 3, single buffered']
    #allocation13 [shape = 's32[1]{0}', space=sflag, size = 0x4, scoped, tag = 'scoped memory for ocr_forward.4']
    #allocation14 [shape = 'u8[32768]{0}', space=vmem, size = 0x8000, scoped, tag = 'input window, operand 4, single buffered']
    #allocation15 [shape = 'u8[512]{0}', space=vmem, size = 0x400, scoped, tag = 'input window, operand 5, single buffered']
    #allocation16 [shape = 's32[1]{0}', space=sflag, size = 0x4, scoped, tag = 'scoped memory for ocr_forward.4']
    #allocation17 [shape = 'u8[65536]{0}', space=vmem, size = 0x10000, scoped, tag = 'input window, operand 6, single buffered']
    #allocation18 [shape = 'u8[65536]{0}', space=vmem, size = 0x10000, scoped, tag = 'input window, operand 7, single buffered']
    #allocation19 [shape = 's32[1]{0}', space=sflag, size = 0x4, scoped, tag = 'scoped memory for ocr_forward.4']
    #allocation20 [shape = 'u8[8192]{0}', space=vmem, size = 0x2000, scoped, tag = 'output window, operand 0']
    #allocation21 [shape = 'u8[4096]{0}', space=vmem, size = 0x1000, scoped, tag = 'output window, operand 1']
    #allocation22 [shape = 's32[2]{0}', space=sflag, size = 0x8, scoped, tag = 'scoped memory for ocr_forward.4']
    #allocation23 [shape = 'u8[65536]{0}', space=vmem, size = 0x10000, scoped, tag = 'output window, operand 2']
    %16 = vsyncpa [#allocation7], 0
    %s17 = scalar_lea.sflag [#allocation7], 1
    %18 = vsyncpa %s17, 0
    %19 = vsyncpa [#allocation10], 0
    %s20 = scalar_lea.sflag [#allocation10], 1
    %21 = vsyncpa %s20, 0
    %22 = vsyncpa [#allocation13], 0
    %23 = vsyncpa [#allocation16], 0
    %24 = vsyncpa [#allocation19], 0
    %25 = vsyncpa [#allocation8], 0
    %s26 = scalar_lea.sflag [#allocation8], 1
    %27 = vsyncpa %s26, 0
    %28 = vsyncpa [#allocation22], 0
    %s29 = scalar_lea.sflag [#allocation22], 1
    %30 = vsyncpa %s29, 0
    loop: start=0, step=1, limit=6
    $region2: #{ocr_forward.4} parent=1 // loop_pre_header
      _
    $region3: #{ocr_forward.4} parent=1 // loop_header
      %s32 = sphi 0, %s36
      %p33 = scmp.ge.s32.totalorder %s32, 6
      %s39 = sphi 0, %s51
      %s40 = sphi 0, %s47
      %s41 = sphi 0, %s39
      %s42 = sphi 0, %s40
      %s43 = sphi 0, %s41
      %s44 = sphi 0, %s42
      %s54 = sphi 0, %s56
      %s57 = sphi 0, %s54
      %s58 = sphi 0, %s57
      %s74 = sphi 0, %s58
      %s86 = sphi 0, %s88
      %s89 = sphi 0, %s86
      %s90 = sphi 0, %s89
      %s106 = sphi 0, %s90
      %s110 = sphi 0, %s110
      %s112 = sphi 0, %s110
      %s113 = sphi 0, %s112
      %s127 = sphi 0, %s113
      %s131 = sphi 0, %s131
      %s133 = sphi 0, %s131
      %s134 = sphi 0, %s133
      %s148 = sphi 0, %s134
      %s152 = sphi 0, %s152
      %s154 = sphi 0, %s152
      %s155 = sphi 0, %s154
      %s169 = sphi 0, %s155
      %s173 = sphi 0, %s173
      %s175 = sphi 0, %s173
      %s176 = sphi 0, %s175
      %s190 = sphi 0, %s176
      %s194 = sphi 0, %s194
      %s196 = sphi 0, %s194
      %s197 = sphi 0, %s196
      %s211 = sphi 0, %s197
      %s215 = sphi 0, %s215
      %s217 = sphi 0, %s215
      %s218 = sphi 0, %s217
      %s232 = sphi 0, %s218
      %s246 = sphi 0, %s248
      %s249 = sphi 0, %s246
      %s250 = sphi 0, %s249
      %s266 = sphi 0, %s250
      %s272 = sphi 0, %s274
      %s275 = sphi 0, %s272
      %s276 = sphi 0, %s275
      %s292 = sphi 0, %s276
      %s298 = sphi 0, %s300
      %s301 = sphi 0, %s298
      %s302 = sphi 0, %s301
      %s318 = sphi 0, %s302
    $region4: #{ocr_forward.4} parent=1 // loop_header_branch
      %35 = sbr.rel (%p33) target = $region8
    $region5: #{ocr_forward.4} parent=1 // loop_body
      %s37 = ssub.s32 %s32, 1
      %s38 = ssub.s32 %s32, 2
      %s45 = sadd.s32 1, %s40
      %p46 = scmp.ge.s32.totalorder %s45, 2
      %s47 = scalar_select %p46, 0, %s45
      %s48 = sadd.s32 1, %s39
      %s49 = scalar_select %p46, %s48, %s39
      %p50 = scmp.ge.s32.totalorder %s49, 2
      %s51 = scalar_select %p50, 0, %s49
      %s52 = ssub.s32 %s39, %s51
      %p53 = scmp.eq.s32.totalorder %s52, 0
      %s55 = sadd.s32 %s54, 1
      %s56 = scalar_select %p53, %s54, %s55
      %p59 = pneg %p53
      %p60 = scmp.eq.s32.totalorder %s32, 3
      %p61 = por %p59, %p60
      %p62 = scmp.ne.s32.totalorder %s54, %s57
      %p63 = scmp.eq.s32.totalorder %s32, 0
      %p64 = por %p62, %p63
      %p65 = scmp.ne.s32.totalorder %s54, %s57
      %p66 = scmp.eq.s32.totalorder %s37, 3
      %p67 = por %p65, %p66
      %p68 = scmp.ne.s32.totalorder %s57, %s58
      %p69 = scmp.eq.s32.totalorder %s37, 0
      %p70 = por %p68, %p69
      %p71 = scmp.ne.s32.totalorder %s57, %s58
      %p72 = scmp.eq.s32.totalorder %s38, 3
      %p73 = por %p71, %p72
      %p75 = scmp.ne.s32.totalorder %s58, %s74
      %p76 = scmp.eq.s32.totalorder %s38, 0
      %p77 = por %p75, %p76
      %p78 = scmp.lt.s32.totalorder %s40, 0
      %s79 = scalar_select %p78, %s40, 0
      %p80 = scmp.lt.s32.totalorder %s47, 0
      %s81 = scalar_select %p80, %s47, 0
      %s82 = ssub.s32 %s39, %s51
      %s83 = ssub.s32 %s79, %s81
      %s84 = sor.u32 %s82, %s83
      %p85 = scmp.eq.s32.totalorder %s84, 0
      %s87 = sadd.s32 %s86, 1
      %s88 = scalar_select %p85, %s86, %s87
      %p91 = pneg %p85
      %p92 = scmp.eq.s32.totalorder %s32, 3
      %p93 = por %p91, %p92
      %p94 = scmp.ne.s32.totalorder %s86, %s89
      %p95 = scmp.eq.s32.totalorder %s32, 0
      %p96 = por %p94, %p95
      %p97 = scmp.ne.s32.totalorder %s86, %s89
      %p98 = scmp.eq.s32.totalorder %s37, 3
      %p99 = por %p97, %p98
      %p100 = scmp.ne.s32.totalorder %s89, %s90
      %p101 = scmp.eq.s32.totalorder %s37, 0
      %p102 = por %p100, %p101
      %p103 = scmp.ne.s32.totalorder %s89, %s90
      %p104 = scmp.eq.s32.totalorder %s38, 3
      %p105 = por %p103, %p104
      %p107 = scmp.ne.s32.totalorder %s90, %s106
      %p108 = scmp.eq.s32.totalorder %s38, 0
      %p109 = por %p107, %p108
      %s111 = sadd.s32 %s110, 1
      %p114 = scmp.eq.s32.totalorder %s32, 3
      %p115 = scmp.ne.s32.totalorder %s110, %s112
      %p116 = scmp.eq.s32.totalorder %s32, 0
      %p117 = por %p115, %p116
      %p118 = scmp.ne.s32.totalorder %s110, %s112
      %p119 = scmp.eq.s32.totalorder %s37, 3
      %p120 = por %p118, %p119
      %p121 = scmp.ne.s32.totalorder %s112, %s113
      %p122 = scmp.eq.s32.totalorder %s37, 0
      %p123 = por %p121, %p122
      %p124 = scmp.ne.s32.totalorder %s112, %s113
      %p125 = scmp.eq.s32.totalorder %s38, 3
      %p126 = por %p124, %p125
      %p128 = scmp.ne.s32.totalorder %s113, %s127
      %p129 = scmp.eq.s32.totalorder %s38, 0
      %p130 = por %p128, %p129
      %s132 = sadd.s32 %s131, 1
      %p135 = scmp.eq.s32.totalorder %s32, 3
      %p136 = scmp.ne.s32.totalorder %s131, %s133
      %p137 = scmp.eq.s32.totalorder %s32, 0
      %p138 = por %p136, %p137
      %p139 = scmp.ne.s32.totalorder %s131, %s133
      %p140 = scmp.eq.s32.totalorder %s37, 3
      %p141 = por %p139, %p140
      %p142 = scmp.ne.s32.totalorder %s133, %s134
      %p143 = scmp.eq.s32.totalorder %s37, 0
      %p144 = por %p142, %p143
      %p145 = scmp.ne.s32.totalorder %s133, %s134
      %p146 = scmp.eq.s32.totalorder %s38, 3
      %p147 = por %p145, %p146
      %p149 = scmp.ne.s32.totalorder %s134, %s148
      %p150 = scmp.eq.s32.totalorder %s38, 0
      %p151 = por %p149, %p150
      %s153 = sadd.s32 %s152, 1
      %p156 = scmp.eq.s32.totalorder %s32, 3
      %p157 = scmp.ne.s32.totalorder %s152, %s154
      %p158 = scmp.eq.s32.totalorder %s32, 0
      %p159 = por %p157, %p158
      %p160 = scmp.ne.s32.totalorder %s152, %s154
      %p161 = scmp.eq.s32.totalorder %s37, 3
      %p162 = por %p160, %p161
      %p163 = scmp.ne.s32.totalorder %s154, %s155
      %p164 = scmp.eq.s32.totalorder %s37, 0
      %p165 = por %p163, %p164
      %p166 = scmp.ne.s32.totalorder %s154, %s155
      %p167 = scmp.eq.s32.totalorder %s38, 3
      %p168 = por %p166, %p167
      %p170 = scmp.ne.s32.totalorder %s155, %s169
      %p171 = scmp.eq.s32.totalorder %s38, 0
      %p172 = por %p170, %p171
      %s174 = sadd.s32 %s173, 1
      %p177 = scmp.eq.s32.totalorder %s32, 3
      %p178 = scmp.ne.s32.totalorder %s173, %s175
      %p179 = scmp.eq.s32.totalorder %s32, 0
      %p180 = por %p178, %p179
      %p181 = scmp.ne.s32.totalorder %s173, %s175
      %p182 = scmp.eq.s32.totalorder %s37, 3
      %p183 = por %p181, %p182
      %p184 = scmp.ne.s32.totalorder %s175, %s176
      %p185 = scmp.eq.s32.totalorder %s37, 0
      %p186 = por %p184, %p185
      %p187 = scmp.ne.s32.totalorder %s175, %s176
      %p188 = scmp.eq.s32.totalorder %s38, 3
      %p189 = por %p187, %p188
      %p191 = scmp.ne.s32.totalorder %s176, %s190
      %p192 = scmp.eq.s32.totalorder %s38, 0
      %p193 = por %p191, %p192
      %s195 = sadd.s32 %s194, 1
      %p198 = scmp.eq.s32.totalorder %s32, 3
      %p199 = scmp.ne.s32.totalorder %s194, %s196
      %p200 = scmp.eq.s32.totalorder %s32, 0
      %p201 = por %p199, %p200
      %p202 = scmp.ne.s32.totalorder %s194, %s196
      %p203 = scmp.eq.s32.totalorder %s37, 3
      %p204 = por %p202, %p203
      %p205 = scmp.ne.s32.totalorder %s196, %s197
      %p206 = scmp.eq.s32.totalorder %s37, 0
      %p207 = por %p205, %p206
      %p208 = scmp.ne.s32.totalorder %s196, %s197
      %p209 = scmp.eq.s32.totalorder %s38, 3
      %p210 = por %p208, %p209
      %p212 = scmp.ne.s32.totalorder %s197, %s211
      %p213 = scmp.eq.s32.totalorder %s38, 0
      %p214 = por %p212, %p213
      %s216 = sadd.s32 %s215, 1
      %p219 = scmp.eq.s32.totalorder %s32, 3
      %p220 = scmp.ne.s32.totalorder %s215, %s217
      %p221 = scmp.eq.s32.totalorder %s32, 0
      %p222 = por %p220, %p221
      %p223 = scmp.ne.s32.totalorder %s215, %s217
      %p224 = scmp.eq.s32.totalorder %s37, 3
      %p225 = por %p223, %p224
      %p226 = scmp.ne.s32.totalorder %s217, %s218
      %p227 = scmp.eq.s32.totalorder %s37, 0
      %p228 = por %p226, %p227
      %p229 = scmp.ne.s32.totalorder %s217, %s218
      %p230 = scmp.eq.s32.totalorder %s38, 3
      %p231 = por %p229, %p230
      %p233 = scmp.ne.s32.totalorder %s218, %s232
      %p234 = scmp.eq.s32.totalorder %s38, 0
      %p235 = por %p233, %p234
      %s236 = ssub.s32 %s40, 1
      %p237 = scmp.gt.s32.totalorder %s236, 0
      %s238 = scalar_select %p237, %s236, 0
      %s239 = ssub.s32 %s47, 1
      %p240 = scmp.gt.s32.totalorder %s239, 0
      %s241 = scalar_select %p240, %s239, 0
      %s242 = ssub.s32 %s39, %s51
      %s243 = ssub.s32 %s238, %s241
      %s244 = sor.u32 %s242, %s243
      %p245 = scmp.eq.s32.totalorder %s244, 0
      %s247 = sadd.s32 %s246, 1
      %s248 = scalar_select %p245, %s246, %s247
      %p251 = pneg %p245
      %p252 = scmp.eq.s32.totalorder %s32, 3
      %p253 = por %p251, %p252
      %p254 = scmp.ne.s32.totalorder %s246, %s249
      %p255 = scmp.eq.s32.totalorder %s32, 0
      %p256 = por %p254, %p255
      %p257 = scmp.ne.s32.totalorder %s246, %s249
      %p258 = scmp.eq.s32.totalorder %s37, 3
      %p259 = por %p257, %p258
      %p260 = scmp.ne.s32.totalorder %s249, %s250
      %p261 = scmp.eq.s32.totalorder %s37, 0
      %p262 = por %p260, %p261
      %p263 = scmp.ne.s32.totalorder %s249, %s250
      %p264 = scmp.eq.s32.totalorder %s38, 3
      %p265 = por %p263, %p264
      %p267 = scmp.ne.s32.totalorder %s250, %s266
      %p268 = scmp.eq.s32.totalorder %s38, 0
      %p269 = por %p267, %p268
      %s270 = ssub.s32 %s39, %s51
      %p271 = scmp.eq.s32.totalorder %s270, 0
      %s273 = sadd.s32 %s272, 1
      %s274 = scalar_select %p271, %s272, %s273
      %p277 = pneg %p271
      %p278 = scmp.eq.s32.totalorder %s32, 3
      %p279 = por %p277, %p278
      %p280 = scmp.ne.s32.totalorder %s272, %s275
      %p281 = scmp.eq.s32.totalorder %s32, 0
      %p282 = por %p280, %p281
      %p283 = scmp.ne.s32.totalorder %s272, %s275
      %p284 = scmp.eq.s32.totalorder %s37, 3
      %p285 = por %p283, %p284
      %p286 = scmp.ne.s32.totalorder %s275, %s276
      %p287 = scmp.eq.s32.totalorder %s37, 0
      %p288 = por %p286, %p287
      %p289 = scmp.ne.s32.totalorder %s275, %s276
      %p290 = scmp.eq.s32.totalorder %s38, 3
      %p291 = por %p289, %p290
      %p293 = scmp.ne.s32.totalorder %s276, %s292
      %p294 = scmp.eq.s32.totalorder %s38, 0
      %p295 = por %p293, %p294
      %s296 = ssub.s32 %s39, %s51
      %p297 = scmp.eq.s32.totalorder %s296, 0
      %s299 = sadd.s32 %s298, 1
      %s300 = scalar_select %p297, %s298, %s299
      %p303 = pneg %p297
      %p304 = scmp.eq.s32.totalorder %s32, 3
      %p305 = por %p303, %p304
      %p306 = scmp.ne.s32.totalorder %s298, %s301
      %p307 = scmp.eq.s32.totalorder %s32, 0
      %p308 = por %p306, %p307
      %p309 = scmp.ne.s32.totalorder %s298, %s301
      %p310 = scmp.eq.s32.totalorder %s37, 3
      %p311 = por %p309, %p310
      %p312 = scmp.ne.s32.totalorder %s301, %s302
      %p313 = scmp.eq.s32.totalorder %s37, 0
      %p314 = por %p312, %p313
      %p315 = scmp.ne.s32.totalorder %s301, %s302
      %p316 = scmp.eq.s32.totalorder %s38, 3
      %p317 = por %p315, %p316
      %p319 = scmp.ne.s32.totalorder %s302, %s318
      %p320 = scmp.eq.s32.totalorder %s38, 0
      %p321 = por %p319, %p320
      %p322 = scmp.le.s32.totalorder 1, %s32
      %p323 = scmp.lt.s32.totalorder %s32, 5
      %p324 = pnand %p322, %p323
      %p325 = pneg %p324
      // Predicated region
      $region9: #{ocr_forward.4} parent=5 // pred_check
        _
      $region10: #{ocr_forward.4} parent=5 // pred_check_branch
        %327 = sbr.rel (%p324) target = $region12
      $region11: #{ocr_forward.4} parent=5 // pred_region
        %s328 = ssub.s32 %s32, 1
        // Predicated region
        $region13: #{ocr_forward.4} parent=11 // pred_check
          %p329 = pneg %p123
        $region14: #{ocr_forward.4} parent=11 // pred_check_branch
          %331 = sbr.rel (%p329) target = $region16
        $region15: #{ocr_forward.4} parent=11 // pred_region
          %s333 = ssub.s32 2048, 2048
          %334 = vsyncadd [#allocation10], %s333
          %s335 = sshll.u32 [#allocation11], 4
          %s336 = int_to_ptr.vmem [resolvable:$true] %s335
          %341 = dma.hbm_to_vmem [thread:$0]  %s2, 2048, %s336, [#allocation10], 64, 64, 4
        $region16: #{ocr_forward.4} parent=11 // pred_fallthru
          _
        // Predicated region
        $region17: #{ocr_forward.4} parent=11 // pred_check
          %p342 = pneg %p144
        $region18: #{ocr_forward.4} parent=11 // pred_check_branch
          %344 = sbr.rel (%p342) target = $region20
        $region19: #{ocr_forward.4} parent=11 // pred_region
          %s346 = ssub.s32 16, 16
          %347 = vsyncadd [#allocation13], %s346
          %s349 = sshll.u32 [#allocation12], 4
          %s350 = int_to_ptr.vmem [resolvable:$true] %s349
          %352 = dma.hbm_to_vmem [thread:$0]  %s3, 16, %s350, [#allocation13]
        $region20: #{ocr_forward.4} parent=11 // pred_fallthru
          _
        // Predicated region
        $region21: #{ocr_forward.4} parent=11 // pred_check
          %p353 = pneg %p165
        $region22: #{ocr_forward.4} parent=11 // pred_check_branch
          %355 = sbr.rel (%p353) target = $region24
        $region23: #{ocr_forward.4} parent=11 // pred_region
          %s357 = ssub.s32 1024, 1024
          %358 = vsyncadd [#allocation13], %s357
          %s359 = sshll.u32 [#allocation14], 4
          %s360 = int_to_ptr.vmem [resolvable:$true] %s359
          %365 = dma.hbm_to_vmem [thread:$0]  %s4, 1024, %s360, [#allocation13], 64, 64, 4
        $region24: #{ocr_forward.4} parent=11 // pred_fallthru
          _
        // Predicated region
        $region25: #{ocr_forward.4} parent=11 // pred_check
          %p366 = pneg %p186
        $region26: #{ocr_forward.4} parent=11 // pred_check_branch
          %368 = sbr.rel (%p366) target = $region28
        $region27: #{ocr_forward.4} parent=11 // pred_region
          %s370 = ssub.s32 16, 16
          %371 = vsyncadd [#allocation16], %s370
          %s373 = sshll.u32 [#allocation15], 4
          %s374 = int_to_ptr.vmem [resolvable:$true] %s373
          %376 = dma.hbm_to_vmem [thread:$0]  %s5, 16, %s374, [#allocation16]
        $region28: #{ocr_forward.4} parent=11 // pred_fallthru
          _
        // Predicated region
        $region29: #{ocr_forward.4} parent=11 // pred_check
          %p377 = pneg %p207
        $region30: #{ocr_forward.4} parent=11 // pred_check_branch
          %379 = sbr.rel (%p377) target = $region32
        $region31: #{ocr_forward.4} parent=11 // pred_region
          %s381 = ssub.s32 2048, 2048
          %382 = vsyncadd [#allocation16], %s381
          %s383 = sshll.u32 [#allocation17], 4
          %s384 = int_to_ptr.vmem [resolvable:$true] %s383
          %389 = dma.hbm_to_vmem [thread:$0]  %s6, 2048, %s384, [#allocation16], 128, 128, 8
        $region32: #{ocr_forward.4} parent=11 // pred_fallthru
          _
        // Predicated region
        $region33: #{ocr_forward.4} parent=11 // pred_check
          %p390 = pneg %p228
        $region34: #{ocr_forward.4} parent=11 // pred_check_branch
          %392 = sbr.rel (%p390) target = $region36
        $region35: #{ocr_forward.4} parent=11 // pred_region
          %s394 = ssub.s32 2048, 2048
          %395 = vsyncadd [#allocation19], %s394
          %s396 = sshll.u32 [#allocation18], 4
          %s397 = int_to_ptr.vmem [resolvable:$true] %s396
          %402 = dma.hbm_to_vmem [thread:$0]  %s7, 2048, %s397, [#allocation19], 128, 128, 8
        $region36: #{ocr_forward.4} parent=11 // pred_fallthru
          _
      $region12: #{ocr_forward.4} parent=5 // pred_fallthru
        _
      %p403 = scmp.lt.s32.totalorder %s32, 4
      // Predicated region
      $region37: #{ocr_forward.4} parent=5 // pred_check
        %p404 = pneg %p403
      $region38: #{ocr_forward.4} parent=5 // pred_check_branch
        %406 = sbr.rel (%p404) target = $region40
      $region39: #{ocr_forward.4} parent=5 // pred_region
        // Predicated region
        $region41: #{ocr_forward.4} parent=39 // pred_check
          %p407 = pneg %p64
        $region42: #{ocr_forward.4} parent=39 // pred_check_branch
          %409 = sbr.rel (%p407) target = $region44
        $region43: #{ocr_forward.4} parent=39 // pred_region
          %s410 = sand.u32 %s54, 1
          %s411 = scalar_lea.sflag [#allocation7], %s410
          %s412 = sand.u32 %s54, 1
          %s413 = smul.addr %s412, 8
          %s414 = scalar_lea.vmem [#allocation6], %s413
          %s416 = ssub.s32 128, 128
          %417 = vsyncadd %s411, %s416
          %s418 = smul.addr %s39, 128
          %s419 = scalar_lea.hbm %s0, %s418
          %s421 = sshll.u32 %s414, 4
          %s422 = int_to_ptr.vmem [resolvable:$true] %s421
          %424 = dma.hbm_to_vmem [thread:$0]  %s419, 128, %s422, %s411
        $region44: #{ocr_forward.4} parent=39 // pred_fallthru
          _
        // Predicated region
        $region45: #{ocr_forward.4} parent=39 // pred_check
          %p425 = pneg %p96
        $region46: #{ocr_forward.4} parent=39 // pred_check_branch
          %427 = sbr.rel (%p425) target = $region48
        $region47: #{ocr_forward.4} parent=39 // pred_region
          %s428 = sand.u32 %s32, 1
          %s429 = scalar_lea.sflag [#allocation10], %s428
          %s430 = sand.u32 %s86, 1
          %s431 = smul.addr %s430, 128
          %s432 = scalar_lea.vmem [#allocation9], %s431
          %p433 = scmp.lt.s32.totalorder %s40, 0
          %s434 = scalar_select %p433, %s40, 0
          %s436 = ssub.s32 2048, 2048
          %437 = vsyncadd %s429, %s436
          %s438 = smul.addr %s39, 32
          %s439 = sadd.s32 %s434, %s438
          %s440 = smul.addr %s439, 64
          %s441 = scalar_lea.hbm %s1, %s440
          %s442 = sshll.u32 %s432, 4
          %s443 = int_to_ptr.vmem [resolvable:$true] %s442
          %448 = dma.hbm_to_vmem [thread:$0]  %s441, 2048, %s443, %s429, 64, 64, 4
        $region48: #{ocr_forward.4} parent=39 // pred_fallthru
          _
      $region40: #{ocr_forward.4} parent=5 // pred_fallthru
        _
      %p449 = scmp.le.s32.totalorder 1, %s32
      %p450 = scmp.lt.s32.totalorder %s32, 5
      %p451 = pnand %p449, %p450
      %p452 = pneg %p451
      // Predicated region
      $region49: #{ocr_forward.4} parent=5 // pred_check
        _
      $region50: #{ocr_forward.4} parent=5 // pred_check_branch
        %454 = sbr.rel (%p451) target = $region52
      $region51: #{ocr_forward.4} parent=5 // pred_region
        %s455 = ssub.s32 %s32, 1
        %s456 = sand.u32 %s57, 1
        %s457 = scalar_lea.sflag [#allocation7], %s456
        %s458 = sand.u32 %s57, 1
        %s459 = smul.addr %s458, 8
        %s460 = scalar_lea.vmem [#allocation6], %s459
        // Predicated region
        $region53: #{ocr_forward.4} parent=51 // pred_check
          %p461 = pneg %p70
        $region54: #{ocr_forward.4} parent=51 // pred_check_branch
          %463 = sbr.rel (%p461) target = $region56
        $region55: #{ocr_forward.4} parent=51 // pred_region
          %464 = dma.done %s457, 128
        $region56: #{ocr_forward.4} parent=51 // pred_fallthru
          _
        %s465 = sand.u32 %s37, 1
        %s466 = scalar_lea.sflag [#allocation10], %s465
        %s467 = sand.u32 %s89, 1
        %s468 = smul.addr %s467, 128
        %s469 = scalar_lea.vmem [#allocation9], %s468
        // Predicated region
        $region57: #{ocr_forward.4} parent=51 // pred_check
          %p470 = pneg %p102
        $region58: #{ocr_forward.4} parent=51 // pred_check_branch
          %472 = sbr.rel (%p470) target = $region60
        $region59: #{ocr_forward.4} parent=51 // pred_region
          %473 = dma.done %s466, 2048
        $region60: #{ocr_forward.4} parent=51 // pred_fallthru
          _
        // Predicated region
        $region61: #{ocr_forward.4} parent=51 // pred_check
          %p474 = pneg %p123
        $region62: #{ocr_forward.4} parent=51 // pred_check_branch
          %476 = sbr.rel (%p474) target = $region64
        $region63: #{ocr_forward.4} parent=51 // pred_region
          %477 = dma.done [#allocation10], 2048
        $region64: #{ocr_forward.4} parent=51 // pred_fallthru
          _
        // Predicated region
        $region65: #{ocr_forward.4} parent=51 // pred_check
          %p478 = pneg %p144
        $region66: #{ocr_forward.4} parent=51 // pred_check_branch
          %480 = sbr.rel (%p478) target = $region68
        $region67: #{ocr_forward.4} parent=51 // pred_region
          %481 = dma.done [#allocation13], 16
        $region68: #{ocr_forward.4} parent=51 // pred_fallthru
          _
        // Predicated region
        $region69: #{ocr_forward.4} parent=51 // pred_check
          %p482 = pneg %p165
        $region70: #{ocr_forward.4} parent=51 // pred_check_branch
          %484 = sbr.rel (%p482) target = $region72
        $region71: #{ocr_forward.4} parent=51 // pred_region
          %485 = dma.done [#allocation13], 1024
        $region72: #{ocr_forward.4} parent=51 // pred_fallthru
          _
        // Predicated region
        $region73: #{ocr_forward.4} parent=51 // pred_check
          %p486 = pneg %p186
        $region74: #{ocr_forward.4} parent=51 // pred_check_branch
          %488 = sbr.rel (%p486) target = $region76
        $region75: #{ocr_forward.4} parent=51 // pred_region
          %489 = dma.done [#allocation16], 16
        $region76: #{ocr_forward.4} parent=51 // pred_fallthru
          _
        // Predicated region
        $region77: #{ocr_forward.4} parent=51 // pred_check
          %p490 = pneg %p207
        $region78: #{ocr_forward.4} parent=51 // pred_check_branch
          %492 = sbr.rel (%p490) target = $region80
        $region79: #{ocr_forward.4} parent=51 // pred_region
          %493 = dma.done [#allocation16], 2048
        $region80: #{ocr_forward.4} parent=51 // pred_fallthru
          _
        // Predicated region
        $region81: #{ocr_forward.4} parent=51 // pred_check
          %p494 = pneg %p228
        $region82: #{ocr_forward.4} parent=51 // pred_check_branch
          %496 = sbr.rel (%p494) target = $region84
        $region83: #{ocr_forward.4} parent=51 // pred_region
          %497 = dma.done [#allocation19], 2048
        $region84: #{ocr_forward.4} parent=51 // pred_fallthru
          _
        %s498 = sand.u32 %s57, 1
        %s499 = scalar_lea.sflag [#allocation7], %s498
        %s500 = sand.u32 %s57, 1
        %s501 = smul.addr %s500, 8
        %s502 = scalar_lea.vmem [#allocation6], %s501
        %p503 = pneg %p70
        %p504 = pneg %p67
        %s505 = sand.u32 %s37, 1
        %s506 = scalar_lea.sflag [#allocation10], %s505
        %s507 = sand.u32 %s89, 1
        %s508 = smul.addr %s507, 128
        %s509 = scalar_lea.vmem [#allocation9], %s508
        %p510 = pneg %p102
        %p511 = pneg %p99
        %p512 = pneg %p123
        %p513 = pneg %p120
        %p514 = pneg %p144
        %p515 = pneg %p141
        %p516 = pneg %p165
        %p517 = pneg %p162
        %p518 = pneg %p186
        %p519 = pneg %p183
        %p520 = pneg %p207
        %p521 = pneg %p204
        %p522 = pneg %p228
        %p523 = pneg %p225
        %p524 = pneg %p262
        %p525 = pneg %p259
        %s526 = sand.u32 %s249, 1
        %s527 = scalar_lea.sflag [#allocation8], %s526
        %s528 = sand.u32 %s249, 1
        %s529 = smul.addr %s528, 8
        %s530 = scalar_lea.vmem [#allocation20], %s529
        %p531 = pneg %p288
        %p532 = pneg %p285
        %s533 = sand.u32 %s37, 1
        %s534 = scalar_lea.sflag [#allocation22], %s533
        %s535 = sand.u32 %s275, 1
        %s536 = smul.addr %s535, 4
        %s537 = scalar_lea.vmem [#allocation21], %s536
        %p538 = pneg %p314
        %p539 = pneg %p311
        %s540 = sand.u32 %s37, 1
        %s541 = scalar_lea.sflag [#allocation22], %s540
        %s542 = sand.u32 %s301, 1
        %s543 = smul.addr %s542, 64
        %s544 = scalar_lea.vmem [#allocation23], %s543
        %p545 = scmp.lt.s32.totalorder %s42, 0
        %s546 = scalar_select %p545, %s42, 0
        %s547 = ssub.s32 %s42, 1
        %p548 = scmp.gt.s32.totalorder %s547, 0
        %s549 = scalar_select %p548, %s547, 0
        %p552 = scmp.eq.s32.totalorder %s42, 0
        // Predicated region
        $region85: #{ocr_forward.4} parent=51 // pred_check
          %p553 = pneg %p552
        $region86: #{ocr_forward.4} parent=51 // pred_check_branch
          %555 = sbr.rel (%p553) target = $region88
        $region87: #{ocr_forward.4} parent=51 // pred_region
          %556 = vst [vmem:[#allocation2] sm:$0xff] 0.0
          %557 = vst [vmem:[#allocation2 + $0x8] sm:$0xff] 0.0
          %vm558 = vcmask 64512
          %559 = vst.msk [vmem:[#allocation3] sm:$0xff] %vm558, 0.0
          %560 = vst.msk [vmem:[#allocation3 + $0x8] sm:$0xff] %vm558, 0.0
          %561 = vst.msk [vmem:[#allocation3 + $0x10] sm:$0xff] %vm558, 0.0
          %562 = vst.msk [vmem:[#allocation3 + $0x18] sm:$0xff] %vm558, 0.0
          %563 = vst.msk [vmem:[#allocation3 + $0x20] sm:$0xff] %vm558, 0.0
          %564 = vst.msk [vmem:[#allocation3 + $0x28] sm:$0xff] %vm558, 0.0
          %565 = vst.msk [vmem:[#allocation3 + $0x30] sm:$0xff] %vm558, 0.0
          %566 = vst.msk [vmem:[#allocation3 + $0x38] sm:$0xff] %vm558, 0.0
          %567 = vst.msk [vmem:[#allocation3 + $0x40] sm:$0xff] %vm558, 0.0
          %568 = vst.msk [vmem:[#allocation3 + $0x48] sm:$0xff] %vm558, 0.0
          %569 = vst.msk [vmem:[#allocation3 + $0x50] sm:$0xff] %vm558, 0.0
          %570 = vst.msk [vmem:[#allocation3 + $0x58] sm:$0xff] %vm558, 0.0
          %571 = vst.msk [vmem:[#allocation3 + $0x60] sm:$0xff] %vm558, 0.0
          %572 = vst.msk [vmem:[#allocation3 + $0x68] sm:$0xff] %vm558, 0.0
          %573 = vst.msk [vmem:[#allocation3 + $0x70] sm:$0xff] %vm558, 0.0
          %574 = vst.msk [vmem:[#allocation3 + $0x78] sm:$0xff] %vm558, 0.0
          %575 = vst.msk [vmem:[#allocation3 + $0x80] sm:$0xff] %vm558, 0.0
          %576 = vst.msk [vmem:[#allocation3 + $0x88] sm:$0xff] %vm558, 0.0
          %577 = vst.msk [vmem:[#allocation3 + $0x90] sm:$0xff] %vm558, 0.0
          %578 = vst.msk [vmem:[#allocation3 + $0x98] sm:$0xff] %vm558, 0.0
          %579 = vst.msk [vmem:[#allocation3 + $0xa0] sm:$0xff] %vm558, 0.0
          %580 = vst.msk [vmem:[#allocation3 + $0xa8] sm:$0xff] %vm558, 0.0
          %581 = vst.msk [vmem:[#allocation3 + $0xb0] sm:$0xff] %vm558, 0.0
          %582 = vst.msk [vmem:[#allocation3 + $0xb8] sm:$0xff] %vm558, 0.0
          %583 = vst.msk [vmem:[#allocation3 + $0xc0] sm:$0xff] %vm558, 0.0
          %584 = vst.msk [vmem:[#allocation3 + $0xc8] sm:$0xff] %vm558, 0.0
          %585 = vst.msk [vmem:[#allocation3 + $0xd0] sm:$0xff] %vm558, 0.0
          %586 = vst.msk [vmem:[#allocation3 + $0xd8] sm:$0xff] %vm558, 0.0
          %587 = vst.msk [vmem:[#allocation3 + $0xe0] sm:$0xff] %vm558, 0.0
          %588 = vst.msk [vmem:[#allocation3 + $0xe8] sm:$0xff] %vm558, 0.0
          %589 = vst.msk [vmem:[#allocation3 + $0xf0] sm:$0xff] %vm558, 0.0
          %590 = vst.msk [vmem:[#allocation3 + $0xf8] sm:$0xff] %vm558, 0.0
          %vm591 = vcmask 7168
          %592 = vst.msk [vmem:[#allocation4] sm:$0xff] %vm591, 0.0
          %vm593 = vcmask 57344
          %594 = vst.msk [vmem:[#allocation5] sm:$0x1] %vm593, 0.0
        $region88: #{ocr_forward.4} parent=51 // pred_fallthru
          _
        %v595 = vld [vmem:[%s460] sm:$0xff]
        %vm596 = vcmask 523264
        %v597 = vsel %vm596, %v595, -inf
        %v598 = vrot.slane %v597, 4
        %v599 = vmax.f32 %v597, %v598
        %v600 = vrot.slane %v599, 2
        %v601 = vmax.f32 %v599, %v600
        %v602 = vrot.slane %v601, 1
        %v603 = vmax.f32 %v601, %v602
        %v604 = vsub.f32 %v595, %v603
        %v605 = vmul.f32 %v604, 1.442695
        %v606 = vpow.pop %v605
        %v607 = vsel %vm596, %v606, 0.0
        %v608 = vrot.slane %v607, 4
        %v609 = vadd.f32 %v607, %v608
        %v610 = vrot.slane %v609, 2
        %v611 = vadd.f32 %v609, %v610
        %v612 = vrot.slane %v611, 1
        %v613 = vadd.f32 %v611, %v612
        %v614 = vrcp.pop %v613
        %v615 = vmul.f32 %v606, %v614
        %p616 = scmp.lt.s32.totalorder %s42, 1
        // Predicated region
        $region89: #{ocr_forward.4} parent=51 // pred_check
          %p617 = pneg %p616
        $region90: #{ocr_forward.4} parent=51 // pred_check_branch
          %619 = sbr.rel (%p617) target = $region92
        $region91: #{ocr_forward.4} parent=51 // pred_region
          %v620 = vpack.c.bf16 %v615, %v615
          %v621 = vld [vmem:[%s469] sm:$0xf]
          %v622 = vld [vmem:[%s469 + $0x4] sm:$0xf]
          %v623 = vld [vmem:[%s469 + $0x8] sm:$0xf]
          %v624 = vld [vmem:[%s469 + $0xc] sm:$0xf]
          %v625 = vld [vmem:[%s469 + $0x10] sm:$0xf]
          %v626 = vld [vmem:[%s469 + $0x14] sm:$0xf]
          %v627 = vld [vmem:[%s469 + $0x18] sm:$0xf]
          %v628 = vld [vmem:[%s469 + $0x1c] sm:$0xf]
          %v629 = vld [vmem:[%s469 + $0x20] sm:$0xf]
          %v630 = vld [vmem:[%s469 + $0x24] sm:$0xf]
          %v631 = vld [vmem:[%s469 + $0x28] sm:$0xf]
          %v632 = vld [vmem:[%s469 + $0x2c] sm:$0xf]
          %v633 = vld [vmem:[%s469 + $0x30] sm:$0xf]
          %v634 = vld [vmem:[%s469 + $0x34] sm:$0xf]
          %v635 = vld [vmem:[%s469 + $0x38] sm:$0xf]
          %v636 = vld [vmem:[%s469 + $0x3c] sm:$0xf]
          %v637 = vld [vmem:[%s469 + $0x40] sm:$0xf]
          %v638 = vld [vmem:[%s469 + $0x44] sm:$0xf]
          %v639 = vld [vmem:[%s469 + $0x48] sm:$0xf]
          %v640 = vld [vmem:[%s469 + $0x4c] sm:$0xf]
          %v641 = vld [vmem:[%s469 + $0x50] sm:$0xf]
          %v642 = vld [vmem:[%s469 + $0x54] sm:$0xf]
          %v643 = vld [vmem:[%s469 + $0x58] sm:$0xf]
          %v644 = vld [vmem:[%s469 + $0x5c] sm:$0xf]
          %v645 = vld [vmem:[%s469 + $0x60] sm:$0xf]
          %v646 = vld [vmem:[%s469 + $0x64] sm:$0xf]
          %v647 = vld [vmem:[%s469 + $0x68] sm:$0xf]
          %v648 = vld [vmem:[%s469 + $0x6c] sm:$0xf]
          %v649 = vld [vmem:[%s469 + $0x70] sm:$0xf]
          %v650 = vld [vmem:[%s469 + $0x74] sm:$0xf]
          %v651 = vld [vmem:[%s469 + $0x78] sm:$0xf]
          %v652 = vld [vmem:[%s469 + $0x7c] sm:$0xf]
          %v653 = vld [vmem:[#allocation4] sm:$0xff]
          %v654 = vsel %vm596, %v615, 0.0
          %655 = vadd.xlane.f32.xlu0 %v654
          %v656 = vpop.xlane.xlu0 %655
          %v657 = vadd.f32 %v653, %v656
          %vm658 = vcmask 7168
          %659 = vst.msk [vmem:[#allocation4] sm:$0xff] %vm658, %v657
          %v660 = vld [vmem:[#allocation5] sm:$0x1]
          %v662 = vsel %vm596, 1065369472, 0
          %v665 = vsel %vm596, %v620, 0
          %667 = vmatprep.subr.bf16.mxu0 0
          %668 = vmatpush1.bf16.xpose.msra.mxu0 %v665
          %669 = vmatprep.subr.bf16.mxu0 0
          %670 = vmatpush1.bf16.xpose.msra.mxu0 0
          %671 = vmatprep.subr.bf16.mxu0 0
          %672 = vmatpush1.bf16.xpose.msra.mxu0 0
          %673 = vmatprep.subr.bf16.mxu0 0
          %674 = vmatpush1.bf16.xpose.msra.mxu0 0
          %675 = vmatprep.subr.bf16.mxu0 0
          %676 = vmatpush1.bf16.xpose.msra.mxu0 0
          %677 = vmatprep.subr.bf16.mxu0 0
          %678 = vmatpush1.bf16.xpose.msra.mxu0 0
          %679 = vmatprep.subr.bf16.mxu0 0
          %680 = vmatpush1.bf16.xpose.msra.mxu0 0
          %681 = vmatprep.subr.bf16.mxu0 0
          %682 = vmatpush1.bf16.xpose.msra.mxu0 0
          %683 = vmatprep.subr.bf16.mxu0 0
          %684 = vmatpush1.bf16.xpose.msra.mxu0 0
          %685 = vmatprep.subr.bf16.mxu0 0
          %686 = vmatpush1.bf16.xpose.msra.mxu0 0
          %687 = vmatprep.subr.bf16.mxu0 0
          %688 = vmatpush1.bf16.xpose.msra.mxu0 0
          %689 = vmatprep.subr.bf16.mxu0 0
          %690 = vmatpush1.bf16.xpose.msra.mxu0 0
          %691 = vmatprep.subr.bf16.mxu0 0
          %692 = vmatpush1.bf16.xpose.msra.mxu0 0
          %693 = vmatprep.subr.bf16.mxu0 0
          %694 = vmatpush1.bf16.xpose.msra.mxu0 0
          %695 = vmatprep.subr.bf16.mxu0 0
          %696 = vmatpush1.bf16.xpose.msra.mxu0 0
          %697 = vmatprep.subr.bf16.mxu0 0
          %698 = vmatpush1.bf16.xpose.msra.mxu0 0
          %699 = vmatprep.mubr.bf16.mxu0 0
          %700 = vmatmul.mubr.bf16.gmra.mrb[0].mxu0 %v662
          %v701 = vpop.f32.mrb[0].mxu0
          %v702 = vadd.f32 0.0, %v701
          %v703 = vpop.f32.mrb[0].mxu0
          %v704 = vpop.f32.mrb[0].mxu0
          %v705 = vpop.f32.mrb[0].mxu0
          %706 = vdwg.mxu0
          %v707 = vadd.f32 %v660, %v702
          %vm708 = vcmask 57344
          %709 = vst.msk [vmem:[#allocation5] sm:$0x1] %vm708, %v707
          %v710 = vld [vmem:[#allocation2] sm:$0xff]
          %v711 = vld [vmem:[#allocation2 + $0x8] sm:$0xff]
          %v744 = vunpack.c.l.b16 %v621
          %v745 = vunpack.c.l.b16 %v622
          %v746 = vunpack.c.l.b16 %v623
          %v747 = vunpack.c.l.b16 %v624
          %v748 = vunpack.c.l.b16 %v625
          %v749 = vunpack.c.l.b16 %v626
          %v750 = vunpack.c.l.b16 %v627
          %v751 = vunpack.c.l.b16 %v628
          %v752 = vunpack.c.l.b16 %v629
          %v753 = vunpack.c.l.b16 %v630
          %v754 = vunpack.c.l.b16 %v631
          %v755 = vunpack.c.l.b16 %v632
          %v756 = vunpack.c.l.b16 %v633
          %v757 = vunpack.c.l.b16 %v634
          %v758 = vunpack.c.l.b16 %v635
          %v759 = vunpack.c.l.b16 %v636
          %v760 = vunpack.c.l.b16 %v637
          %v761 = vunpack.c.l.b16 %v638
          %v762 = vunpack.c.l.b16 %v639
          %v763 = vunpack.c.l.b16 %v640
          %v764 = vunpack.c.l.b16 %v641
          %v765 = vunpack.c.l.b16 %v642
          %v766 = vunpack.c.l.b16 %v643
          %v767 = vunpack.c.l.b16 %v644
          %v768 = vunpack.c.l.b16 %v645
          %v769 = vunpack.c.l.b16 %v646
          %v770 = vunpack.c.l.b16 %v647
          %v771 = vunpack.c.l.b16 %v648
          %v772 = vunpack.c.l.b16 %v649
          %v773 = vunpack.c.l.b16 %v650
          %v774 = vunpack.c.l.b16 %v651
          %v775 = vunpack.c.l.b16 %v652
          %v776 = vpack.c.b16 %v745, %v744
          %v777 = vpack.c.b16 %v747, %v746
          %v778 = vpack.c.b16 %v749, %v748
          %v779 = vpack.c.b16 %v751, %v750
          %v780 = vpack.c.b16 %v753, %v752
          %v781 = vpack.c.b16 %v755, %v754
          %v782 = vpack.c.b16 %v757, %v756
          %v783 = vpack.c.b16 %v759, %v758
          %v784 = vpack.c.b16 %v761, %v760
          %v785 = vpack.c.b16 %v763, %v762
          %v786 = vpack.c.b16 %v765, %v764
          %v787 = vpack.c.b16 %v767, %v766
          %v788 = vpack.c.b16 %v769, %v768
          %v789 = vpack.c.b16 %v771, %v770
          %v790 = vpack.c.b16 %v773, %v772
          %v791 = vpack.c.b16 %v775, %v774
          %v793 = vsel %vm596, %v776, 0
          %v796 = vsel %vm596, %v777, 0
          %v799 = vsel %vm596, %v778, 0
          %v802 = vsel %vm596, %v779, 0
          %v805 = vsel %vm596, %v780, 0
          %v808 = vsel %vm596, %v781, 0
          %v811 = vsel %vm596, %v782, 0
          %v814 = vsel %vm596, %v783, 0
          %v817 = vsel %vm596, %v784, 0
          %v820 = vsel %vm596, %v785, 0
          %v823 = vsel %vm596, %v786, 0
          %v826 = vsel %vm596, %v787, 0
          %v829 = vsel %vm596, %v788, 0
          %v832 = vsel %vm596, %v789, 0
          %v835 = vsel %vm596, %v790, 0
          %v838 = vsel %vm596, %v791, 0
          %840 = vmatprep.subr.bf16.mxu0 0
          %841 = vmatpush1.bf16.xpose.msra.mxu0 %v793
          %842 = vmatprep.subr.bf16.mxu0 0
          %843 = vmatpush1.bf16.xpose.msra.mxu0 %v796
          %844 = vmatprep.subr.bf16.mxu0 0
          %845 = vmatpush1.bf16.xpose.msra.mxu0 %v799
          %846 = vmatprep.subr.bf16.mxu0 0
          %847 = vmatpush1.bf16.xpose.msra.mxu0 %v802
          %848 = vmatprep.subr.bf16.mxu0 0
          %849 = vmatpush1.bf16.xpose.msra.mxu0 %v805
          %850 = vmatprep.subr.bf16.mxu0 0
          %851 = vmatpush1.bf16.xpose.msra.mxu0 %v808
          %852 = vmatprep.subr.bf16.mxu0 0
          %853 = vmatpush1.bf16.xpose.msra.mxu0 %v811
          %854 = vmatprep.subr.bf16.mxu0 0
          %855 = vmatpush1.bf16.xpose.msra.mxu0 %v814
          %856 = vmatprep.subr.bf16.mxu0 0
          %857 = vmatpush1.bf16.xpose.msra.mxu0 %v817
          %858 = vmatprep.subr.bf16.mxu0 0
          %859 = vmatpush1.bf16.xpose.msra.mxu0 %v820
          %860 = vmatprep.subr.bf16.mxu0 0
          %861 = vmatpush1.bf16.xpose.msra.mxu0 %v823
          %862 = vmatprep.subr.bf16.mxu0 0
          %863 = vmatpush1.bf16.xpose.msra.mxu0 %v826
          %864 = vmatprep.subr.bf16.mxu0 0
          %865 = vmatpush1.bf16.xpose.msra.mxu0 %v829
          %866 = vmatprep.subr.bf16.mxu0 0
          %867 = vmatpush1.bf16.xpose.msra.mxu0 %v832
          %868 = vmatprep.subr.bf16.mxu0 0
          %869 = vmatpush1.bf16.xpose.msra.mxu0 %v835
          %870 = vmatprep.subr.bf16.mxu0 0
          %871 = vmatpush1.bf16.xpose.msra.mxu0 %v838
          %872 = vmatprep.mubr.bf16.mxu0 0
          %873 = vmatmul.mubr.bf16.gmra.mrb[0].mxu0 %v665
          %v874 = vpop.f32.mrb[0].mxu0
          %v875 = vadd.f32 0.0, %v874
          %v876 = vpop.f32.mrb[0].mxu0
          %v877 = vadd.f32 0.0, %v876
          %v878 = vpop.f32.mrb[0].mxu0
          %v879 = vpop.f32.mrb[0].mxu0
          %880 = vdwg.mxu0
          %v881 = vadd.f32 %v710, %v875
          %v882 = vadd.f32 %v711, %v877
          %883 = vst [vmem:[#allocation2] sm:$0xff] %v881
          %884 = vst [vmem:[#allocation2 + $0x8] sm:$0xff] %v882
          %v885 = vld [vmem:[#allocation3] sm:$0xff]
          %v886 = vld [vmem:[#allocation3 + $0x8] sm:$0xff]
          %v887 = vld [vmem:[#allocation3 + $0x10] sm:$0xff]
          %v888 = vld [vmem:[#allocation3 + $0x18] sm:$0xff]
          %v889 = vld [vmem:[#allocation3 + $0x20] sm:$0xff]
          %v890 = vld [vmem:[#allocation3 + $0x28] sm:$0xff]
          %v891 = vld [vmem:[#allocation3 + $0x30] sm:$0xff]
          %v892 = vld [vmem:[#allocation3 + $0x38] sm:$0xff]
          %v893 = vld [vmem:[#allocation3 + $0x40] sm:$0xff]
          %v894 = vld [vmem:[#allocation3 + $0x48] sm:$0xff]
          %v895 = vld [vmem:[#allocation3 + $0x50] sm:$0xff]
          %v896 = vld [vmem:[#allocation3 + $0x58] sm:$0xff]
          %v897 = vld [vmem:[#allocation3 + $0x60] sm:$0xff]
          %v898 = vld [vmem:[#allocation3 + $0x68] sm:$0xff]
          %v899 = vld [vmem:[#allocation3 + $0x70] sm:$0xff]
          %v900 = vld [vmem:[#allocation3 + $0x78] sm:$0xff]
          %v901 = vld [vmem:[#allocation3 + $0x80] sm:$0xff]
          %v902 = vld [vmem:[#allocation3 + $0x88] sm:$0xff]
          %v903 = vld [vmem:[#allocation3 + $0x90] sm:$0xff]
          %v904 = vld [vmem:[#allocation3 + $0x98] sm:$0xff]
          %v905 = vld [vmem:[#allocation3 + $0xa0] sm:$0xff]
          %v906 = vld [vmem:[#allocation3 + $0xa8] sm:$0xff]
          %v907 = vld [vmem:[#allocation3 + $0xb0] sm:$0xff]
          %v908 = vld [vmem:[#allocation3 + $0xb8] sm:$0xff]
          %v909 = vld [vmem:[#allocation3 + $0xc0] sm:$0xff]
          %v910 = vld [vmem:[#allocation3 + $0xc8] sm:$0xff]
          %v911 = vld [vmem:[#allocation3 + $0xd0] sm:$0xff]
          %v912 = vld [vmem:[#allocation3 + $0xd8] sm:$0xff]
          %v913 = vld [vmem:[#allocation3 + $0xe0] sm:$0xff]
          %v914 = vld [vmem:[#allocation3 + $0xe8] sm:$0xff]
          %v915 = vld [vmem:[#allocation3 + $0xf0] sm:$0xff]
          %v916 = vld [vmem:[#allocation3 + $0xf8] sm:$0xff]
          %917 = vmatprep.subr.bf16.mxu0 0
          %918 = vmatpush1.bf16.xpose.msra.mxu0 %v665
          %919 = vmatprep.subr.bf16.mxu0 0
          %920 = vmatpush1.bf16.xpose.msra.mxu0 0
          %921 = vmatprep.subr.bf16.mxu0 0
          %922 = vmatpush1.bf16.xpose.msra.mxu0 0
          %923 = vmatprep.subr.bf16.mxu0 0
          %924 = vmatpush1.bf16.xpose.msra.mxu0 0
          %925 = vmatprep.subr.bf16.mxu0 0
          %926 = vmatpush1.bf16.xpose.msra.mxu0 0
          %927 = vmatprep.subr.bf16.mxu0 0
          %928 = vmatpush1.bf16.xpose.msra.mxu0 0
          %929 = vmatprep.subr.bf16.mxu0 0
          %930 = vmatpush1.bf16.xpose.msra.mxu0 0
          %931 = vmatprep.subr.bf16.mxu0 0
          %932 = vmatpush1.bf16.xpose.msra.mxu0 0
          %933 = vmatprep.subr.bf16.mxu0 0
          %934 = vmatpush1.bf16.xpose.msra.mxu0 0
          %935 = vmatprep.subr.bf16.mxu0 0
          %936 = vmatpush1.bf16.xpose.msra.mxu0 0
          %937 = vmatprep.subr.bf16.mxu0 0
          %938 = vmatpush1.bf16.xpose.msra.mxu0 0
          %939 = vmatprep.subr.bf16.mxu0 0
          %940 = vmatpush1.bf16.xpose.msra.mxu0 0
          %941 = vmatprep.subr.bf16.mxu0 0
          %942 = vmatpush1.bf16.xpose.msra.mxu0 0
          %943 = vmatprep.subr.bf16.mxu0 0
          %944 = vmatpush1.bf16.xpose.msra.mxu0 0
          %945 = vmatprep.subr.bf16.mxu0 0
          %946 = vmatpush1.bf16.xpose.msra.mxu0 0
          %947 = vmatprep.subr.bf16.mxu0 0
          %948 = vmatpush1.bf16.xpose.msra.mxu0 0
          %949 = vmatprep.mubr.bf16.mxu0 0
          %950 = vmatmul.mubr.bf16.gmra.mrb[0].mxu0 %v793
          %v951 = vpop.f32.mrb[0].mxu0
          %v952 = vadd.f32 0.0, %v951
          %v953 = vpop.f32.mrb[0].mxu0
          %v954 = vpop.f32.mrb[0].mxu0
          %v955 = vadd.f32 0.0, %v954
          %v956 = vpop.f32.mrb[0].mxu0
          %957 = vmatprep.mubr.bf16.mxu0 0
          %958 = vmatmul.mubr.bf16.gmra.mrb[0].mxu0 %v796
          %v959 = vpop.f32.mrb[0].mxu0
          %v960 = vadd.f32 0.0, %v959
          %v961 = vpop.f32.mrb[0].mxu0
          %v962 = vpop.f32.mrb[0].mxu0
          %v963 = vadd.f32 0.0, %v962
          %v964 = vpop.f32.mrb[0].mxu0
          %965 = vmatprep.mubr.bf16.mxu0 0
          %966 = vmatmul.mubr.bf16.gmra.mrb[0].mxu0 %v799
          %v967 = vpop.f32.mrb[0].mxu0
          %v968 = vadd.f32 0.0, %v967
          %v969 = vpop.f32.mrb[0].mxu0
          %v970 = vpop.f32.mrb[0].mxu0
          %v971 = vadd.f32 0.0, %v970
          %v972 = vpop.f32.mrb[0].mxu0
          %973 = vmatprep.mubr.bf16.mxu0 0
          %974 = vmatmul.mubr.bf16.gmra.mrb[0].mxu0 %v802
          %v975 = vpop.f32.mrb[0].mxu0
          %v976 = vadd.f32 0.0, %v975
          %v977 = vpop.f32.mrb[0].mxu0
          %v978 = vpop.f32.mrb[0].mxu0
          %v979 = vadd.f32 0.0, %v978
          %v980 = vpop.f32.mrb[0].mxu0
          %981 = vmatprep.mubr.bf16.mxu0 0
          %982 = vmatmul.mubr.bf16.gmra.mrb[0].mxu0 %v805
          %v983 = vpop.f32.mrb[0].mxu0
          %v984 = vadd.f32 0.0, %v983
          %v985 = vpop.f32.mrb[0].mxu0
          %v986 = vpop.f32.mrb[0].mxu0
          %v987 = vadd.f32 0.0, %v986
          %v988 = vpop.f32.mrb[0].mxu0
          %989 = vmatprep.mubr.bf16.mxu0 0
          %990 = vmatmul.mubr.bf16.gmra.mrb[0].mxu0 %v808
          %v991 = vpop.f32.mrb[0].mxu0
          %v992 = vadd.f32 0.0, %v991
          %v993 = vpop.f32.mrb[0].mxu0
          %v994 = vpop.f32.mrb[0].mxu0
          %v995 = vadd.f32 0.0, %v994
          %v996 = vpop.f32.mrb[0].mxu0
          %997 = vmatprep.mubr.bf16.mxu0 0
          %998 = vmatmul.mubr.bf16.gmra.mrb[0].mxu0 %v811
          %v999 = vpop.f32.mrb[0].mxu0
          %v1000 = vadd.f32 0.0, %v999
          %v1001 = vpop.f32.mrb[0].mxu0
          %v1002 = vpop.f32.mrb[0].mxu0
          %v1003 = vadd.f32 0.0, %v1002
          %v1004 = vpop.f32.mrb[0].mxu0
          %1005 = vmatprep.mubr.bf16.mxu0 0
          %1006 = vmatmul.mubr.bf16.gmra.mrb[0].mxu0 %v814
          %v1007 = vpop.f32.mrb[0].mxu0
          %v1008 = vadd.f32 0.0, %v1007
          %v1009 = vpop.f32.mrb[0].mxu0
          %v1010 = vpop.f32.mrb[0].mxu0
          %v1011 = vadd.f32 0.0, %v1010
          %v1012 = vpop.f32.mrb[0].mxu0
          %1013 = vmatprep.mubr.bf16.mxu0 0
          %1014 = vmatmul.mubr.bf16.gmra.mrb[0].mxu0 %v817
          %v1015 = vpop.f32.mrb[0].mxu0
          %v1016 = vadd.f32 0.0, %v1015
          %v1017 = vpop.f32.mrb[0].mxu0
          %v1018 = vpop.f32.mrb[0].mxu0
          %v1019 = vadd.f32 0.0, %v1018
          %v1020 = vpop.f32.mrb[0].mxu0
          %1021 = vmatprep.mubr.bf16.mxu0 0
          %1022 = vmatmul.mubr.bf16.gmra.mrb[0].mxu0 %v820
          %v1023 = vpop.f32.mrb[0].mxu0
          %v1024 = vadd.f32 0.0, %v1023
          %v1025 = vpop.f32.mrb[0].mxu0
          %v1026 = vpop.f32.mrb[0].mxu0
          %v1027 = vadd.f32 0.0, %v1026
          %v1028 = vpop.f32.mrb[0].mxu0
          %1029 = vmatprep.mubr.bf16.mxu0 0
          %1030 = vmatmul.mubr.bf16.gmra.mrb[0].mxu0 %v823
          %v1031 = vpop.f32.mrb[0].mxu0
          %v1032 = vadd.f32 0.0, %v1031
          %v1033 = vpop.f32.mrb[0].mxu0
          %v1034 = vpop.f32.mrb[0].mxu0
          %v1035 = vadd.f32 0.0, %v1034
          %v1036 = vpop.f32.mrb[0].mxu0
          %1037 = vmatprep.mubr.bf16.mxu0 0
          %1038 = vmatmul.mubr.bf16.gmra.mrb[0].mxu0 %v826
          %v1039 = vpop.f32.mrb[0].mxu0
          %v1040 = vadd.f32 0.0, %v1039
          %v1041 = vpop.f32.mrb[0].mxu0
          %v1042 = vpop.f32.mrb[0].mxu0
          %v1043 = vadd.f32 0.0, %v1042
          %v1044 = vpop.f32.mrb[0].mxu0
          %1045 = vmatprep.mubr.bf16.mxu0 0
          %1046 = vmatmul.mubr.bf16.gmra.mrb[0].mxu0 %v829
          %v1047 = vpop.f32.mrb[0].mxu0
          %v1048 = vadd.f32 0.0, %v1047
          %v1049 = vpop.f32.mrb[0].mxu0
          %v1050 = vpop.f32.mrb[0].mxu0
          %v1051 = vadd.f32 0.0, %v1050
          %v1052 = vpop.f32.mrb[0].mxu0
          %1053 = vmatprep.mubr.bf16.mxu0 0
          %1054 = vmatmul.mubr.bf16.gmra.mrb[0].mxu0 %v832
          %v1055 = vpop.f32.mrb[0].mxu0
          %v1056 = vadd.f32 0.0, %v1055
          %v1057 = vpop.f32.mrb[0].mxu0
          %v1058 = vpop.f32.mrb[0].mxu0
          %v1059 = vadd.f32 0.0, %v1058
          %v1060 = vpop.f32.mrb[0].mxu0
          %1061 = vmatprep.mubr.bf16.mxu0 0
          %1062 = vmatmul.mubr.bf16.gmra.mrb[0].mxu0 %v835
          %v1063 = vpop.f32.mrb[0].mxu0
          %v1064 = vadd.f32 0.0, %v1063
          %v1065 = vpop.f32.mrb[0].mxu0
          %v1066 = vpop.f32.mrb[0].mxu0
          %v1067 = vadd.f32 0.0, %v1066
          %v1068 = vpop.f32.mrb[0].mxu0
          %1069 = vmatprep.mubr.bf16.mxu0 0
          %1070 = vmatmul.mubr.bf16.gmra.mrb[0].mxu0 %v838
          %v1071 = vpop.f32.mrb[0].mxu0
          %v1072 = vadd.f32 0.0, %v1071
          %v1073 = vpop.f32.mrb[0].mxu0
          %v1074 = vpop.f32.mrb[0].mxu0
          %v1075 = vadd.f32 0.0, %v1074
          %v1076 = vpop.f32.mrb[0].mxu0
          %1077 = vdwg.mxu0
          %v1078 = vadd.f32 %v885, %v952
          %v1079 = vadd.f32 %v886, %v955
          %v1080 = vadd.f32 %v887, %v960
          %v1081 = vadd.f32 %v888, %v963
          %v1082 = vadd.f32 %v889, %v968
          %v1083 = vadd.f32 %v890, %v971
          %v1084 = vadd.f32 %v891, %v976
          %v1085 = vadd.f32 %v892, %v979
          %v1086 = vadd.f32 %v893, %v984
          %v1087 = vadd.f32 %v894, %v987
          %v1088 = vadd.f32 %v895, %v992
          %v1089 = vadd.f32 %v896, %v995
          %v1090 = vadd.f32 %v897, %v1000
          %v1091 = vadd.f32 %v898, %v1003
          %v1092 = vadd.f32 %v899, %v1008
          %v1093 = vadd.f32 %v900, %v1011
          %v1094 = vadd.f32 %v901, %v1016
          %v1095 = vadd.f32 %v902, %v1019
          %v1096 = vadd.f32 %v903, %v1024
          %v1097 = vadd.f32 %v904, %v1027
          %v1098 = vadd.f32 %v905, %v1032
          %v1099 = vadd.f32 %v906, %v1035
          %v1100 = vadd.f32 %v907, %v1040
          %v1101 = vadd.f32 %v908, %v1043
          %v1102 = vadd.f32 %v909, %v1048
          %v1103 = vadd.f32 %v910, %v1051
          %v1104 = vadd.f32 %v911, %v1056
          %v1105 = vadd.f32 %v912, %v1059
          %v1106 = vadd.f32 %v913, %v1064
          %v1107 = vadd.f32 %v914, %v1067
          %v1108 = vadd.f32 %v915, %v1072
          %v1109 = vadd.f32 %v916, %v1075
          %vm1110 = vcmask 64512
          %1111 = vst.msk [vmem:[#allocation3] sm:$0xff] %vm1110, %v1078
          %1112 = vst.msk [vmem:[#allocation3 + $0x8] sm:$0xff] %vm1110, %v1079
          %1113 = vst.msk [vmem:[#allocation3 + $0x10] sm:$0xff] %vm1110, %v1080
          %1114 = vst.msk [vmem:[#allocation3 + $0x18] sm:$0xff] %vm1110, %v1081
          %1115 = vst.msk [vmem:[#allocation3 + $0x20] sm:$0xff] %vm1110, %v1082
          %1116 = vst.msk [vmem:[#allocation3 + $0x28] sm:$0xff] %vm1110, %v1083
          %1117 = vst.msk [vmem:[#allocation3 + $0x30] sm:$0xff] %vm1110, %v1084
          %1118 = vst.msk [vmem:[#allocation3 + $0x38] sm:$0xff] %vm1110, %v1085
          %1119 = vst.msk [vmem:[#allocation3 + $0x40] sm:$0xff] %vm1110, %v1086
          %1120 = vst.msk [vmem:[#allocation3 + $0x48] sm:$0xff] %vm1110, %v1087
          %1121 = vst.msk [vmem:[#allocation3 + $0x50] sm:$0xff] %vm1110, %v1088
          %1122 = vst.msk [vmem:[#allocation3 + $0x58] sm:$0xff] %vm1110, %v1089
          %1123 = vst.msk [vmem:[#allocation3 + $0x60] sm:$0xff] %vm1110, %v1090
          %1124 = vst.msk [vmem:[#allocation3 + $0x68] sm:$0xff] %vm1110, %v1091
          %1125 = vst.msk [vmem:[#allocation3 + $0x70] sm:$0xff] %vm1110, %v1092
          %1126 = vst.msk [vmem:[#allocation3 + $0x78] sm:$0xff] %vm1110, %v1093
          %1127 = vst.msk [vmem:[#allocation3 + $0x80] sm:$0xff] %vm1110, %v1094
          %1128 = vst.msk [vmem:[#allocation3 + $0x88] sm:$0xff] %vm1110, %v1095
          %1129 = vst.msk [vmem:[#allocation3 + $0x90] sm:$0xff] %vm1110, %v1096
          %1130 = vst.msk [vmem:[#allocation3 + $0x98] sm:$0xff] %vm1110, %v1097
          %1131 = vst.msk [vmem:[#allocation3 + $0xa0] sm:$0xff] %vm1110, %v1098
          %1132 = vst.msk [vmem:[#allocation3 + $0xa8] sm:$0xff] %vm1110, %v1099
          %1133 = vst.msk [vmem:[#allocation3 + $0xb0] sm:$0xff] %vm1110, %v1100
          %1134 = vst.msk [vmem:[#allocation3 + $0xb8] sm:$0xff] %vm1110, %v1101
          %1135 = vst.msk [vmem:[#allocation3 + $0xc0] sm:$0xff] %vm1110, %v1102
          %1136 = vst.msk [vmem:[#allocation3 + $0xc8] sm:$0xff] %vm1110, %v1103
          %1137 = vst.msk [vmem:[#allocation3 + $0xd0] sm:$0xff] %vm1110, %v1104
          %1138 = vst.msk [vmem:[#allocation3 + $0xd8] sm:$0xff] %vm1110, %v1105
          %1139 = vst.msk [vmem:[#allocation3 + $0xe0] sm:$0xff] %vm1110, %v1106
          %1140 = vst.msk [vmem:[#allocation3 + $0xe8] sm:$0xff] %vm1110, %v1107
          %1141 = vst.msk [vmem:[#allocation3 + $0xf0] sm:$0xff] %vm1110, %v1108
          %1142 = vst.msk [vmem:[#allocation3 + $0xf8] sm:$0xff] %vm1110, %v1109
        $region92: #{ocr_forward.4} parent=51 // pred_fallthru
          _
        // Predicated region
        $region93: #{ocr_forward.4} parent=51 // pred_check
          %p1143 = pneg %p552
        $region94: #{ocr_forward.4} parent=51 // pred_check_branch
          %1145 = sbr.rel (%p1143) target = $region96
        $region95: #{ocr_forward.4} parent=51 // pred_region
          %v1146 = vld [vmem:[#allocation4] sm:$0xff]
          %v1147 = vmax.f32 %v1146, 1e-12
          %v1148 = vrcp.pop %v1147
          %v1149 = vmul.f32 1.0, %v1148
          %v1150 = vld [vmem:[#allocation5] sm:$0x1]
          %v1151 = vmax.f32 %v1150, 1e-12
          %v1152 = vrcp.pop %v1151
          %v1153 = vmul.f32 1.0, %v1152
          %v1154 = vld [vmem:[#allocation2] sm:$0xff]
          %v1155 = vld [vmem:[#allocation2 + $0x8] sm:$0xff]
          %1157 = vset.pattern.permute.xlu0 0
          %1158 = vperm.xlu0 %1157, %v1149
          %v1159 = vpop.permute.xlu0 %1158
          %v1161 = vmul.f32 %v1154, %v1159
          %v1162 = vmul.f32 %v1155, %v1159
          %v1163 = vpack.c.bf16 %v1161, %v1161
          %v1164 = vpack.c.bf16 %v1162, %v1162
          %v1165 = vld [vmem:[#allocation11] sm:$0xf]
          %v1166 = vld [vmem:[#allocation11 + $0x4] sm:$0xf]
          %v1167 = vld [vmem:[#allocation11 + $0x8] sm:$0xf]
          %v1168 = vld [vmem:[#allocation11 + $0xc] sm:$0xf]
          %v1169 = vld [vmem:[#allocation11 + $0x10] sm:$0xf]
          %v1170 = vld [vmem:[#allocation11 + $0x14] sm:$0xf]
          %v1171 = vld [vmem:[#allocation11 + $0x18] sm:$0xf]
          %v1172 = vld [vmem:[#allocation11 + $0x1c] sm:$0xf]
          %v1173 = vld [vmem:[#allocation11 + $0x20] sm:$0xf]
          %v1174 = vld [vmem:[#allocation11 + $0x24] sm:$0xf]
          %v1175 = vld [vmem:[#allocation11 + $0x28] sm:$0xf]
          %v1176 = vld [vmem:[#allocation11 + $0x2c] sm:$0xf]
          %v1177 = vld [vmem:[#allocation11 + $0x30] sm:$0xf]
          %v1178 = vld [vmem:[#allocation11 + $0x34] sm:$0xf]
          %v1179 = vld [vmem:[#allocation11 + $0x38] sm:$0xf]
          %v1180 = vld [vmem:[#allocation11 + $0x3c] sm:$0xf]
          %v1181 = vld [vmem:[#allocation11 + $0x40] sm:$0xf]
          %v1182 = vld [vmem:[#allocation11 + $0x44] sm:$0xf]
          %v1183 = vld [vmem:[#allocation11 + $0x48] sm:$0xf]
          %v1184 = vld [vmem:[#allocation11 + $0x4c] sm:$0xf]
          %v1185 = vld [vmem:[#allocation11 + $0x50] sm:$0xf]
          %v1186 = vld [vmem:[#allocation11 + $0x54] sm:$0xf]
          %v1187 = vld [vmem:[#allocation11 + $0x58] sm:$0xf]
          %v1188 = vld [vmem:[#allocation11 + $0x5c] sm:$0xf]
          %v1189 = vld [vmem:[#allocation11 + $0x60] sm:$0xf]
          %v1190 = vld [vmem:[#allocation11 + $0x64] sm:$0xf]
          %v1191 = vld [vmem:[#allocation11 + $0x68] sm:$0xf]
          %v1192 = vld [vmem:[#allocation11 + $0x6c] sm:$0xf]
          %v1193 = vld [vmem:[#allocation11 + $0x70] sm:$0xf]
          %v1194 = vld [vmem:[#allocation11 + $0x74] sm:$0xf]
          %v1195 = vld [vmem:[#allocation11 + $0x78] sm:$0xf]
          %v1196 = vld [vmem:[#allocation11 + $0x7c] sm:$0xf]
          %v1197 = vld [vmem:[#allocation12] sm:$0x1]
          %v1199 = vlaneseq
          %v1200 = vshrl.u32 %v1199, 7
          %v1201 = vsub.s32 0, %v1200
          %v1202 = vrot.slane %v1197, %v1201
          %v1236 = vunpack.c.l.b16 %v1165
          %v1237 = vunpack.c.l.b16 %v1166
          %v1238 = vunpack.c.l.b16 %v1167
          %v1239 = vunpack.c.l.b16 %v1168
          %v1240 = vunpack.c.l.b16 %v1169
          %v1241 = vunpack.c.l.b16 %v1170
          %v1242 = vunpack.c.l.b16 %v1171
          %v1243 = vunpack.c.l.b16 %v1172
          %v1244 = vunpack.c.l.b16 %v1173
          %v1245 = vunpack.c.l.b16 %v1174
          %v1246 = vunpack.c.l.b16 %v1175
          %v1247 = vunpack.c.l.b16 %v1176
          %v1248 = vunpack.c.l.b16 %v1177
          %v1249 = vunpack.c.l.b16 %v1178
          %v1250 = vunpack.c.l.b16 %v1179
          %v1251 = vunpack.c.l.b16 %v1180
          %v1252 = vunpack.c.l.b16 %v1181
          %v1253 = vunpack.c.l.b16 %v1182
          %v1254 = vunpack.c.l.b16 %v1183
          %v1255 = vunpack.c.l.b16 %v1184
          %v1256 = vunpack.c.l.b16 %v1185
          %v1257 = vunpack.c.l.b16 %v1186
          %v1258 = vunpack.c.l.b16 %v1187
          %v1259 = vunpack.c.l.b16 %v1188
          %v1260 = vunpack.c.l.b16 %v1189
          %v1261 = vunpack.c.l.b16 %v1190
          %v1262 = vunpack.c.l.b16 %v1191
          %v1263 = vunpack.c.l.b16 %v1192
          %v1264 = vunpack.c.l.b16 %v1193
          %v1265 = vunpack.c.l.b16 %v1194
          %v1266 = vunpack.c.l.b16 %v1195
          %v1267 = vunpack.c.l.b16 %v1196
          %v1268 = vpack.c.b16 %v1237, %v1236
          %v1269 = vpack.c.b16 %v1239, %v1238
          %v1270 = vpack.c.b16 %v1241, %v1240
          %v1271 = vpack.c.b16 %v1243, %v1242
          %v1272 = vpack.c.b16 %v1245, %v1244
          %v1273 = vpack.c.b16 %v1247, %v1246
          %v1274 = vpack.c.b16 %v1249, %v1248
          %v1275 = vpack.c.b16 %v1251, %v1250
          %v1276 = vpack.c.b16 %v1253, %v1252
          %v1277 = vpack.c.b16 %v1255, %v1254
          %v1278 = vpack.c.b16 %v1257, %v1256
          %v1279 = vpack.c.b16 %v1259, %v1258
          %v1280 = vpack.c.b16 %v1261, %v1260
          %v1281 = vpack.c.b16 %v1263, %v1262
          %v1282 = vpack.c.b16 %v1265, %v1264
          %v1283 = vpack.c.b16 %v1267, %v1266
          %1300 = vmatprep.subr.bf16.mxu0 0
          %1301 = vmatpush1.bf16.msra.mxu0 %v1268
          %1302 = vmatprep.subr.bf16.mxu0 0
          %1303 = vmatpush1.bf16.msra.mxu0 %v1269
          %1304 = vmatprep.subr.bf16.mxu0 0
          %1305 = vmatpush1.bf16.msra.mxu0 %v1270
          %1306 = vmatprep.subr.bf16.mxu0 0
          %1307 = vmatpush1.bf16.msra.mxu0 %v1271
          %1308 = vmatprep.subr.bf16.mxu0 0
          %1309 = vmatpush1.bf16.msra.mxu0 %v1272
          %1310 = vmatprep.subr.bf16.mxu0 0
          %1311 = vmatpush1.bf16.msra.mxu0 %v1273
          %1312 = vmatprep.subr.bf16.mxu0 0
          %1313 = vmatpush1.bf16.msra.mxu0 %v1274
          %1314 = vmatprep.subr.bf16.mxu0 0
          %1315 = vmatpush1.bf16.msra.mxu0 %v1275
          %1316 = vmatprep.subr.bf16.mxu0 0
          %1317 = vmatpush1.bf16.msra.mxu0 %v1276
          %1318 = vmatprep.subr.bf16.mxu0 0
          %1319 = vmatpush1.bf16.msra.mxu0 %v1277
          %1320 = vmatprep.subr.bf16.mxu0 0
          %1321 = vmatpush1.bf16.msra.mxu0 %v1278
          %1322 = vmatprep.subr.bf16.mxu0 0
          %1323 = vmatpush1.bf16.msra.mxu0 %v1279
          %1324 = vmatprep.subr.bf16.mxu0 0
          %1325 = vmatpush1.bf16.msra.mxu0 %v1280
          %1326 = vmatprep.subr.bf16.mxu0 0
          %1327 = vmatpush1.bf16.msra.mxu0 %v1281
          %1328 = vmatprep.subr.bf16.mxu0 0
          %1329 = vmatpush1.bf16.msra.mxu0 %v1282
          %1330 = vmatprep.subr.bf16.mxu0 0
          %1331 = vmatpush1.bf16.msra.mxu0 %v1283
          %1332 = vmatprep.mubr.bf16.mxu0 %v1164
          %1333 = vmatmul.mubr.bf16.gmra.mrb[0].mxu0 %v1163
          %v1334 = vpop.f32.mrb[0].mxu0
          %v1335 = vadd.f32 %v1202, %v1334
          %v1336 = vpop.f32.mrb[0].mxu0
          %v1337 = vpop.f32.mrb[0].mxu0
          %v1338 = vpop.f32.mrb[0].mxu0
          %1339 = vdwg.mxu0
          %v1340 = vmax.f32 %v1335, 0.0
          %v1341 = vpack.c.bf16 %v1340, %v1340
          %v1342 = vld [vmem:[#allocation14] sm:$0xf]
          %v1343 = vld [vmem:[#allocation14 + $0x4] sm:$0xf]
          %v1344 = vld [vmem:[#allocation14 + $0x8] sm:$0xf]
          %v1345 = vld [vmem:[#allocation14 + $0xc] sm:$0xf]
          %v1346 = vld [vmem:[#allocation14 + $0x10] sm:$0xf]
          %v1347 = vld [vmem:[#allocation14 + $0x14] sm:$0xf]
          %v1348 = vld [vmem:[#allocation14 + $0x18] sm:$0xf]
          %v1349 = vld [vmem:[#allocation14 + $0x1c] sm:$0xf]
          %v1350 = vld [vmem:[#allocation14 + $0x20] sm:$0xf]
          %v1351 = vld [vmem:[#allocation14 + $0x24] sm:$0xf]
          %v1352 = vld [vmem:[#allocation14 + $0x28] sm:$0xf]
          %v1353 = vld [vmem:[#allocation14 + $0x2c] sm:$0xf]
          %v1354 = vld [vmem:[#allocation14 + $0x30] sm:$0xf]
          %v1355 = vld [vmem:[#allocation14 + $0x34] sm:$0xf]
          %v1356 = vld [vmem:[#allocation14 + $0x38] sm:$0xf]
          %v1357 = vld [vmem:[#allocation14 + $0x3c] sm:$0xf]
          %v1358 = vld [vmem:[#allocation15] sm:$0x1]
          %v1360 = vlaneseq
          %v1361 = vshrl.u32 %v1360, 7
          %v1362 = vsub.s32 0, %v1361
          %v1363 = vrot.slane %v1358, %v1362
          %v1381 = vunpack.c.l.b16 %v1342
          %v1382 = vunpack.c.l.b16 %v1343
          %v1383 = vunpack.c.l.b16 %v1344
          %v1384 = vunpack.c.l.b16 %v1345
          %v1385 = vunpack.c.l.b16 %v1346
          %v1386 = vunpack.c.l.b16 %v1347
          %v1387 = vunpack.c.l.b16 %v1348
          %v1388 = vunpack.c.l.b16 %v1349
          %v1389 = vunpack.c.l.b16 %v1350
          %v1390 = vunpack.c.l.b16 %v1351
          %v1391 = vunpack.c.l.b16 %v1352
          %v1392 = vunpack.c.l.b16 %v1353
          %v1393 = vunpack.c.l.b16 %v1354
          %v1394 = vunpack.c.l.b16 %v1355
          %v1395 = vunpack.c.l.b16 %v1356
          %v1396 = vunpack.c.l.b16 %v1357
          %v1397 = vpack.c.b16 %v1382, %v1381
          %v1398 = vpack.c.b16 %v1384, %v1383
          %v1399 = vpack.c.b16 %v1386, %v1385
          %v1400 = vpack.c.b16 %v1388, %v1387
          %v1401 = vpack.c.b16 %v1390, %v1389
          %v1402 = vpack.c.b16 %v1392, %v1391
          %v1403 = vpack.c.b16 %v1394, %v1393
          %v1404 = vpack.c.b16 %v1396, %v1395
          %1413 = vmatprep.subr.bf16.mxu0 0
          %1414 = vmatpush1.bf16.msra.mxu0 %v1397
          %1415 = vmatprep.subr.bf16.mxu0 0
          %1416 = vmatpush1.bf16.msra.mxu0 %v1398
          %1417 = vmatprep.subr.bf16.mxu0 0
          %1418 = vmatpush1.bf16.msra.mxu0 %v1399
          %1419 = vmatprep.subr.bf16.mxu0 0
          %1420 = vmatpush1.bf16.msra.mxu0 %v1400
          %1421 = vmatprep.subr.bf16.mxu0 0
          %1422 = vmatpush1.bf16.msra.mxu0 %v1401
          %1423 = vmatprep.subr.bf16.mxu0 0
          %1424 = vmatpush1.bf16.msra.mxu0 %v1402
          %1425 = vmatprep.subr.bf16.mxu0 0
          %1426 = vmatpush1.bf16.msra.mxu0 %v1403
          %1427 = vmatprep.subr.bf16.mxu0 0
          %1428 = vmatpush1.bf16.msra.mxu0 %v1404
          %1429 = vmatprep.subr.bf16.mxu0 0
          %1430 = vmatpush1.bf16.msra.mxu0 0
          %1431 = vmatprep.subr.bf16.mxu0 0
          %1432 = vmatpush1.bf16.msra.mxu0 0
          %1433 = vmatprep.subr.bf16.mxu0 0
          %1434 = vmatpush1.bf16.msra.mxu0 0
          %1435 = vmatprep.subr.bf16.mxu0 0
          %1436 = vmatpush1.bf16.msra.mxu0 0
          %1437 = vmatprep.subr.bf16.mxu0 0
          %1438 = vmatpush1.bf16.msra.mxu0 0
          %1439 = vmatprep.subr.bf16.mxu0 0
          %1440 = vmatpush1.bf16.msra.mxu0 0
          %1441 = vmatprep.subr.bf16.mxu0 0
          %1442 = vmatpush1.bf16.msra.mxu0 0
          %1443 = vmatprep.subr.bf16.mxu0 0
          %1444 = vmatpush1.bf16.msra.mxu0 0
          %1445 = vmatprep.mubr.bf16.mxu0 0
          %1446 = vmatmul.mubr.bf16.gmra.mrb[0].mxu0 %v1341
          %v1447 = vpop.f32.mrb[0].mxu0
          %v1448 = vadd.f32 %v1363, %v1447
          %v1449 = vpop.f32.mrb[0].mxu0
          %v1450 = vpop.f32.mrb[0].mxu0
          %v1451 = vpop.f32.mrb[0].mxu0
          %1452 = vdwg.mxu0
          %v1453 = vmax.f32 %v1448, 0.0
          %v1454 = vpack.c.bf16 %v1453, %v1453
          %1455 = vst [vmem:[%s537] sm:$0xf] %v1454
          %v1456 = vld [vmem:[#allocation3] sm:$0xff]
          %v1457 = vld [vmem:[#allocation3 + $0x8] sm:$0xff]
          %v1458 = vld [vmem:[#allocation3 + $0x10] sm:$0xff]
          %v1459 = vld [vmem:[#allocation3 + $0x18] sm:$0xff]
          %v1460 = vld [vmem:[#allocation3 + $0x20] sm:$0xff]
          %v1461 = vld [vmem:[#allocation3 + $0x28] sm:$0xff]
          %v1462 = vld [vmem:[#allocation3 + $0x30] sm:$0xff]
          %v1463 = vld [vmem:[#allocation3 + $0x38] sm:$0xff]
          %v1464 = vld [vmem:[#allocation3 + $0x40] sm:$0xff]
          %v1465 = vld [vmem:[#allocation3 + $0x48] sm:$0xff]
          %v1466 = vld [vmem:[#allocation3 + $0x50] sm:$0xff]
          %v1467 = vld [vmem:[#allocation3 + $0x58] sm:$0xff]
          %v1468 = vld [vmem:[#allocation3 + $0x60] sm:$0xff]
          %v1469 = vld [vmem:[#allocation3 + $0x68] sm:$0xff]
          %v1470 = vld [vmem:[#allocation3 + $0x70] sm:$0xff]
          %v1471 = vld [vmem:[#allocation3 + $0x78] sm:$0xff]
          %v1472 = vld [vmem:[#allocation3 + $0x80] sm:$0xff]
          %v1473 = vld [vmem:[#allocation3 + $0x88] sm:$0xff]
          %v1474 = vld [vmem:[#allocation3 + $0x90] sm:$0xff]
          %v1475 = vld [vmem:[#allocation3 + $0x98] sm:$0xff]
          %v1476 = vld [vmem:[#allocation3 + $0xa0] sm:$0xff]
          %v1477 = vld [vmem:[#allocation3 + $0xa8] sm:$0xff]
          %v1478 = vld [vmem:[#allocation3 + $0xb0] sm:$0xff]
          %v1479 = vld [vmem:[#allocation3 + $0xb8] sm:$0xff]
          %v1480 = vld [vmem:[#allocation3 + $0xc0] sm:$0xff]
          %v1481 = vld [vmem:[#allocation3 + $0xc8] sm:$0xff]
          %v1482 = vld [vmem:[#allocation3 + $0xd0] sm:$0xff]
          %v1483 = vld [vmem:[#allocation3 + $0xd8] sm:$0xff]
          %v1484 = vld [vmem:[#allocation3 + $0xe0] sm:$0xff]
          %v1485 = vld [vmem:[#allocation3 + $0xe8] sm:$0xff]
          %v1486 = vld [vmem:[#allocation3 + $0xf0] sm:$0xff]
          %v1487 = vld [vmem:[#allocation3 + $0xf8] sm:$0xff]
          %v1489 = vlaneseq
          %v1490 = vshrl.u32 %v1489, 7
          %v1491 = vsub.s32 0, %v1490
          %v1492 = vrot.slane %v1153, %v1491
          %v1494 = vmul.f32 %v1456, %v1492
          %v1495 = vmul.f32 %v1457, %v1492
          %v1496 = vmul.f32 %v1458, %v1492
          %v1497 = vmul.f32 %v1459, %v1492
          %v1498 = vmul.f32 %v1460, %v1492
          %v1499 = vmul.f32 %v1461, %v1492
          %v1500 = vmul.f32 %v1462, %v1492
          %v1501 = vmul.f32 %v1463, %v1492
          %v1502 = vmul.f32 %v1464, %v1492
          %v1503 = vmul.f32 %v1465, %v1492
          %v1504 = vmul.f32 %v1466, %v1492
          %v1505 = vmul.f32 %v1467, %v1492
          %v1506 = vmul.f32 %v1468, %v1492
          %v1507 = vmul.f32 %v1469, %v1492
          %v1508 = vmul.f32 %v1470, %v1492
          %v1509 = vmul.f32 %v1471, %v1492
          %v1510 = vmul.f32 %v1472, %v1492
          %v1511 = vmul.f32 %v1473, %v1492
          %v1512 = vmul.f32 %v1474, %v1492
          %v1513 = vmul.f32 %v1475, %v1492
          %v1514 = vmul.f32 %v1476, %v1492
          %v1515 = vmul.f32 %v1477, %v1492
          %v1516 = vmul.f32 %v1478, %v1492
          %v1517 = vmul.f32 %v1479, %v1492
          %v1518 = vmul.f32 %v1480, %v1492
          %v1519 = vmul.f32 %v1481, %v1492
          %v1520 = vmul.f32 %v1482, %v1492
          %v1521 = vmul.f32 %v1483, %v1492
          %v1522 = vmul.f32 %v1484, %v1492
          %v1523 = vmul.f32 %v1485, %v1492
          %v1524 = vmul.f32 %v1486, %v1492
          %v1525 = vmul.f32 %v1487, %v1492
          %v1526 = vpack.c.bf16 %v1495, %v1494
          %v1527 = vpack.c.bf16 %v1497, %v1496
          %v1528 = vpack.c.bf16 %v1499, %v1498
          %v1529 = vpack.c.bf16 %v1501, %v1500
          %v1530 = vpack.c.bf16 %v1503, %v1502
          %v1531 = vpack.c.bf16 %v1505, %v1504
          %v1532 = vpack.c.bf16 %v1507, %v1506
          %v1533 = vpack.c.bf16 %v1509, %v1508
          %v1534 = vpack.c.bf16 %v1511, %v1510
          %v1535 = vpack.c.bf16 %v1513, %v1512
          %v1536 = vpack.c.bf16 %v1515, %v1514
          %v1537 = vpack.c.bf16 %v1517, %v1516
          %v1538 = vpack.c.bf16 %v1519, %v1518
          %v1539 = vpack.c.bf16 %v1521, %v1520
          %v1540 = vpack.c.bf16 %v1523, %v1522
          %v1541 = vpack.c.bf16 %v1525, %v1524
          %v1542 = vld [vmem:[#allocation17] sm:$0xff]
          %v1543 = vld [vmem:[#allocation17 + $0x8] sm:$0xff]
          %v1544 = vld [vmem:[#allocation17 + $0x10] sm:$0xff]
          %v1545 = vld [vmem:[#allocation17 + $0x18] sm:$0xff]
          %v1546 = vld [vmem:[#allocation17 + $0x20] sm:$0xff]
          %v1547 = vld [vmem:[#allocation17 + $0x28] sm:$0xff]
          %v1548 = vld [vmem:[#allocation17 + $0x30] sm:$0xff]
          %v1549 = vld [vmem:[#allocation17 + $0x38] sm:$0xff]
          %v1550 = vld [vmem:[#allocation17 + $0x40] sm:$0xff]
          %v1551 = vld [vmem:[#allocation17 + $0x48] sm:$0xff]
          %v1552 = vld [vmem:[#allocation17 + $0x50] sm:$0xff]
          %v1553 = vld [vmem:[#allocation17 + $0x58] sm:$0xff]
          %v1554 = vld [vmem:[#allocation17 + $0x60] sm:$0xff]
          %v1555 = vld [vmem:[#allocation17 + $0x68] sm:$0xff]
          %v1556 = vld [vmem:[#allocation17 + $0x70] sm:$0xff]
          %v1557 = vld [vmem:[#allocation17 + $0x78] sm:$0xff]
          %v1558 = vld [vmem:[#allocation18] sm:$0xff]
          %v1559 = vld [vmem:[#allocation18 + $0x8] sm:$0xff]
          %v1560 = vld [vmem:[#allocation18 + $0x10] sm:$0xff]
          %v1561 = vld [vmem:[#allocation18 + $0x18] sm:$0xff]
          %v1562 = vld [vmem:[#allocation18 + $0x20] sm:$0xff]
          %v1563 = vld [vmem:[#allocation18 + $0x28] sm:$0xff]
          %v1564 = vld [vmem:[#allocation18 + $0x30] sm:$0xff]
          %v1565 = vld [vmem:[#allocation18 + $0x38] sm:$0xff]
          %v1566 = vld [vmem:[#allocation18 + $0x40] sm:$0xff]
          %v1567 = vld [vmem:[#allocation18 + $0x48] sm:$0xff]
          %v1568 = vld [vmem:[#allocation18 + $0x50] sm:$0xff]
          %v1569 = vld [vmem:[#allocation18 + $0x58] sm:$0xff]
          %v1570 = vld [vmem:[#allocation18 + $0x60] sm:$0xff]
          %v1571 = vld [vmem:[#allocation18 + $0x68] sm:$0xff]
          %v1572 = vld [vmem:[#allocation18 + $0x70] sm:$0xff]
          %v1573 = vld [vmem:[#allocation18 + $0x78] sm:$0xff]
          %1575 = vset.pattern.permute.xlu0 0
          %1576 = vperm.xlu0 %1575, %v1558
          %v1577 = vpop.permute.xlu0 %1576
          %1580 = vset.pattern.permute.xlu0 0
          %1581 = vperm.xlu0 %1580, %v1559
          %v1582 = vpop.permute.xlu0 %1581
          %1585 = vset.pattern.permute.xlu0 0
          %1586 = vperm.xlu0 %1585, %v1560
          %v1587 = vpop.permute.xlu0 %1586
          %1590 = vset.pattern.permute.xlu0 0
          %1591 = vperm.xlu0 %1590, %v1561
          %v1592 = vpop.permute.xlu0 %1591
          %1595 = vset.pattern.permute.xlu0 0
          %1596 = vperm.xlu0 %1595, %v1562
          %v1597 = vpop.permute.xlu0 %1596
          %1600 = vset.pattern.permute.xlu0 0
          %1601 = vperm.xlu0 %1600, %v1563
          %v1602 = vpop.permute.xlu0 %1601
          %1605 = vset.pattern.permute.xlu0 0
          %1606 = vperm.xlu0 %1605, %v1564
          %v1607 = vpop.permute.xlu0 %1606
          %1610 = vset.pattern.permute.xlu0 0
          %1611 = vperm.xlu0 %1610, %v1565
          %v1612 = vpop.permute.xlu0 %1611
          %1615 = vset.pattern.permute.xlu0 0
          %1616 = vperm.xlu0 %1615, %v1566
          %v1617 = vpop.permute.xlu0 %1616
          %1620 = vset.pattern.permute.xlu0 0
          %1621 = vperm.xlu0 %1620, %v1567
          %v1622 = vpop.permute.xlu0 %1621
          %1625 = vset.pattern.permute.xlu0 0
          %1626 = vperm.xlu0 %1625, %v1568
          %v1627 = vpop.permute.xlu0 %1626
          %1630 = vset.pattern.permute.xlu0 0
          %1631 = vperm.xlu0 %1630, %v1569
          %v1632 = vpop.permute.xlu0 %1631
          %1635 = vset.pattern.permute.xlu0 0
          %1636 = vperm.xlu0 %1635, %v1570
          %v1637 = vpop.permute.xlu0 %1636
          %1640 = vset.pattern.permute.xlu0 0
          %1641 = vperm.xlu0 %1640, %v1571
          %v1642 = vpop.permute.xlu0 %1641
          %1645 = vset.pattern.permute.xlu0 0
          %1646 = vperm.xlu0 %1645, %v1572
          %v1647 = vpop.permute.xlu0 %1646
          %1650 = vset.pattern.permute.xlu0 0
          %1651 = vperm.xlu0 %1650, %v1573
          %v1652 = vpop.permute.xlu0 %1651
          %v1670 = vunpack.c.l.b16 %v1542
          %v1671 = vunpack.c.h.b16 %v1542
          %v1672 = vunpack.c.l.b16 %v1543
          %v1673 = vunpack.c.h.b16 %v1543
          %v1674 = vunpack.c.l.b16 %v1544
          %v1675 = vunpack.c.h.b16 %v1544
          %v1676 = vunpack.c.l.b16 %v1545
          %v1677 = vunpack.c.h.b16 %v1545
          %v1678 = vunpack.c.l.b16 %v1546
          %v1679 = vunpack.c.h.b16 %v1546
          %v1680 = vunpack.c.l.b16 %v1547
          %v1681 = vunpack.c.h.b16 %v1547
          %v1682 = vunpack.c.l.b16 %v1548
          %v1683 = vunpack.c.h.b16 %v1548
          %v1684 = vunpack.c.l.b16 %v1549
          %v1685 = vunpack.c.h.b16 %v1549
          %v1686 = vunpack.c.l.b16 %v1550
          %v1687 = vunpack.c.h.b16 %v1550
          %v1688 = vunpack.c.l.b16 %v1551
          %v1689 = vunpack.c.h.b16 %v1551
          %v1690 = vunpack.c.l.b16 %v1552
          %v1691 = vunpack.c.h.b16 %v1552
          %v1692 = vunpack.c.l.b16 %v1553
          %v1693 = vunpack.c.h.b16 %v1553
          %v1694 = vunpack.c.l.b16 %v1554
          %v1695 = vunpack.c.h.b16 %v1554
          %v1696 = vunpack.c.l.b16 %v1555
          %v1697 = vunpack.c.h.b16 %v1555
          %v1698 = vunpack.c.l.b16 %v1556
          %v1699 = vunpack.c.h.b16 %v1556
          %v1700 = vunpack.c.l.b16 %v1557
          %v1701 = vunpack.c.h.b16 %v1557
          %v1702 = vpack.c.b16 %v1672, %v1670
          %v1703 = vpack.c.b16 %v1673, %v1671
          %v1704 = vpack.c.b16 %v1676, %v1674
          %v1705 = vpack.c.b16 %v1677, %v1675
          %v1706 = vpack.c.b16 %v1680, %v1678
          %v1707 = vpack.c.b16 %v1681, %v1679
          %v1708 = vpack.c.b16 %v1684, %v1682
          %v1709 = vpack.c.b16 %v1685, %v1683
          %v1710 = vpack.c.b16 %v1688, %v1686
          %v1711 = vpack.c.b16 %v1689, %v1687
          %v1712 = vpack.c.b16 %v1692, %v1690
          %v1713 = vpack.c.b16 %v1693, %v1691
          %v1714 = vpack.c.b16 %v1696, %v1694
          %v1715 = vpack.c.b16 %v1697, %v1695
          %v1716 = vpack.c.b16 %v1700, %v1698
          %v1717 = vpack.c.b16 %v1701, %v1699
          %1734 = vmatprep.subr.bf16.mxu0 0
          %1735 = vmatpush1.bf16.msra.mxu0 %v1526
          %1736 = vmatprep.subr.bf16.mxu0 0
          %1737 = vmatpush1.bf16.msra.mxu0 %v1527
          %1738 = vmatprep.subr.bf16.mxu0 0
          %1739 = vmatpush1.bf16.msra.mxu0 %v1528
          %1740 = vmatprep.subr.bf16.mxu0 0
          %1741 = vmatpush1.bf16.msra.mxu0 %v1529
          %1742 = vmatprep.subr.bf16.mxu0 0
          %1743 = vmatpush1.bf16.msra.mxu0 %v1530
          %1744 = vmatprep.subr.bf16.mxu0 0
          %1745 = vmatpush1.bf16.msra.mxu0 %v1531
          %1746 = vmatprep.subr.bf16.mxu0 0
          %1747 = vmatpush1.bf16.msra.mxu0 %v1532
          %1748 = vmatprep.subr.bf16.mxu0 0
          %1749 = vmatpush1.bf16.msra.mxu0 %v1533
          %1750 = vmatprep.subr.bf16.mxu0 0
          %1751 = vmatpush1.bf16.msra.mxu0 %v1534
          %1752 = vmatprep.subr.bf16.mxu0 0
          %1753 = vmatpush1.bf16.msra.mxu0 %v1535
          %1754 = vmatprep.subr.bf16.mxu0 0
          %1755 = vmatpush1.bf16.msra.mxu0 %v1536
          %1756 = vmatprep.subr.bf16.mxu0 0
          %1757 = vmatpush1.bf16.msra.mxu0 %v1537
          %1758 = vmatprep.subr.bf16.mxu0 0
          %1759 = vmatpush1.bf16.msra.mxu0 %v1538
          %1760 = vmatprep.subr.bf16.mxu0 0
          %1761 = vmatpush1.bf16.msra.mxu0 %v1539
          %1762 = vmatprep.subr.bf16.mxu0 0
          %1763 = vmatpush1.bf16.msra.mxu0 %v1540
          %1764 = vmatprep.subr.bf16.mxu0 0
          %1765 = vmatpush1.bf16.msra.mxu0 %v1541
          %1766 = vmatprep.mubr.bf16.mxu0 %v1703
          %1767 = vmatmul.mubr.bf16.gmra.mrb[0].mxu0 %v1702
          %v1768 = vpop.f32.mrb[0].mxu0
          %v1769 = vadd.f32 %v1577, %v1768
          %v1770 = vpop.f32.mrb[0].mxu0
          %v1771 = vpop.f32.mrb[0].mxu0
          %v1772 = vadd.f32 %v1582, %v1771
          %v1773 = vpop.f32.mrb[0].mxu0
          %1774 = vmatprep.mubr.bf16.mxu0 %v1705
          %1775 = vmatmul.mubr.bf16.gmra.mrb[0].mxu0 %v1704
          %v1776 = vpop.f32.mrb[0].mxu0
          %v1777 = vadd.f32 %v1587, %v1776
          %v1778 = vpop.f32.mrb[0].mxu0
          %v1779 = vpop.f32.mrb[0].mxu0
          %v1780 = vadd.f32 %v1592, %v1779
          %v1781 = vpop.f32.mrb[0].mxu0
          %1782 = vmatprep.mubr.bf16.mxu0 %v1707
          %1783 = vmatmul.mubr.bf16.gmra.mrb[0].mxu0 %v1706
          %v1784 = vpop.f32.mrb[0].mxu0
          %v1785 = vadd.f32 %v1597, %v1784
          %v1786 = vpop.f32.mrb[0].mxu0
          %v1787 = vpop.f32.mrb[0].mxu0
          %v1788 = vadd.f32 %v1602, %v1787
          %v1789 = vpop.f32.mrb[0].mxu0
          %1790 = vmatprep.mubr.bf16.mxu0 %v1709
          %1791 = vmatmul.mubr.bf16.gmra.mrb[0].mxu0 %v1708
          %v1792 = vpop.f32.mrb[0].mxu0
          %v1793 = vadd.f32 %v1607, %v1792
          %v1794 = vpop.f32.mrb[0].mxu0
          %v1795 = vpop.f32.mrb[0].mxu0
          %v1796 = vadd.f32 %v1612, %v1795
          %v1797 = vpop.f32.mrb[0].mxu0
          %1798 = vmatprep.mubr.bf16.mxu0 %v1711
          %1799 = vmatmul.mubr.bf16.gmra.mrb[0].mxu0 %v1710
          %v1800 = vpop.f32.mrb[0].mxu0
          %v1801 = vadd.f32 %v1617, %v1800
          %v1802 = vpop.f32.mrb[0].mxu0
          %v1803 = vpop.f32.mrb[0].mxu0
          %v1804 = vadd.f32 %v1622, %v1803
          %v1805 = vpop.f32.mrb[0].mxu0
          %1806 = vmatprep.mubr.bf16.mxu0 %v1713
          %1807 = vmatmul.mubr.bf16.gmra.mrb[0].mxu0 %v1712
          %v1808 = vpop.f32.mrb[0].mxu0
          %v1809 = vadd.f32 %v1627, %v1808
          %v1810 = vpop.f32.mrb[0].mxu0
          %v1811 = vpop.f32.mrb[0].mxu0
          %v1812 = vadd.f32 %v1632, %v1811
          %v1813 = vpop.f32.mrb[0].mxu0
          %1814 = vmatprep.mubr.bf16.mxu0 %v1715
          %1815 = vmatmul.mubr.bf16.gmra.mrb[0].mxu0 %v1714
          %v1816 = vpop.f32.mrb[0].mxu0
          %v1817 = vadd.f32 %v1637, %v1816
          %v1818 = vpop.f32.mrb[0].mxu0
          %v1819 = vpop.f32.mrb[0].mxu0
          %v1820 = vadd.f32 %v1642, %v1819
          %v1821 = vpop.f32.mrb[0].mxu0
          %1822 = vmatprep.mubr.bf16.mxu0 %v1717
          %1823 = vmatmul.mubr.bf16.gmra.mrb[0].mxu0 %v1716
          %v1824 = vpop.f32.mrb[0].mxu0
          %v1825 = vadd.f32 %v1647, %v1824
          %v1826 = vpop.f32.mrb[0].mxu0
          %v1827 = vpop.f32.mrb[0].mxu0
          %v1828 = vadd.f32 %v1652, %v1827
          %v1829 = vpop.f32.mrb[0].mxu0
          %1830 = vdwg.mxu0
          %v1831 = vmax.f32 %v1769, 0.0
          %v1832 = vmax.f32 %v1772, 0.0
          %v1833 = vmax.f32 %v1777, 0.0
          %v1834 = vmax.f32 %v1780, 0.0
          %v1835 = vmax.f32 %v1785, 0.0
          %v1836 = vmax.f32 %v1788, 0.0
          %v1837 = vmax.f32 %v1793, 0.0
          %v1838 = vmax.f32 %v1796, 0.0
          %v1839 = vmax.f32 %v1801, 0.0
          %v1840 = vmax.f32 %v1804, 0.0
          %v1841 = vmax.f32 %v1809, 0.0
          %v1842 = vmax.f32 %v1812, 0.0
          %v1843 = vmax.f32 %v1817, 0.0
          %v1844 = vmax.f32 %v1820, 0.0
          %v1845 = vmax.f32 %v1825, 0.0
          %v1846 = vmax.f32 %v1828, 0.0
          %v1847 = vpack.c.bf16 %v1832, %v1831
          %v1848 = vpack.c.bf16 %v1834, %v1833
          %v1849 = vpack.c.bf16 %v1836, %v1835
          %v1850 = vpack.c.bf16 %v1838, %v1837
          %v1851 = vpack.c.bf16 %v1840, %v1839
          %v1852 = vpack.c.bf16 %v1842, %v1841
          %v1853 = vpack.c.bf16 %v1844, %v1843
          %v1854 = vpack.c.bf16 %v1846, %v1845
          %v1863 = vunpack.c.l.b16 %v1847
          %v1864 = vunpack.c.h.b16 %v1847
          %v1865 = vunpack.c.l.b16 %v1848
          %v1866 = vunpack.c.h.b16 %v1848
          %v1867 = vunpack.c.l.b16 %v1849
          %v1868 = vunpack.c.h.b16 %v1849
          %v1869 = vunpack.c.l.b16 %v1850
          %v1870 = vunpack.c.h.b16 %v1850
          %v1871 = vunpack.c.l.b16 %v1851
          %v1872 = vunpack.c.h.b16 %v1851
          %v1873 = vunpack.c.l.b16 %v1852
          %v1874 = vunpack.c.h.b16 %v1852
          %v1875 = vunpack.c.l.b16 %v1853
          %v1876 = vunpack.c.h.b16 %v1853
          %v1877 = vunpack.c.l.b16 %v1854
          %v1878 = vunpack.c.h.b16 %v1854
          %v1879 = vpack.c.b16 %v1863, %v1863
          %v1880 = vpack.c.b16 %v1864, %v1864
          %v1881 = vpack.c.b16 %v1865, %v1865
          %v1882 = vpack.c.b16 %v1866, %v1866
          %v1883 = vpack.c.b16 %v1867, %v1867
          %v1884 = vpack.c.b16 %v1868, %v1868
          %v1885 = vpack.c.b16 %v1869, %v1869
          %v1886 = vpack.c.b16 %v1870, %v1870
          %v1887 = vpack.c.b16 %v1871, %v1871
          %v1888 = vpack.c.b16 %v1872, %v1872
          %v1889 = vpack.c.b16 %v1873, %v1873
          %v1890 = vpack.c.b16 %v1874, %v1874
          %v1891 = vpack.c.b16 %v1875, %v1875
          %v1892 = vpack.c.b16 %v1876, %v1876
          %v1893 = vpack.c.b16 %v1877, %v1877
          %v1894 = vpack.c.b16 %v1878, %v1878
          %vm1911 = vcmask 60416
          %1912 = vst.msk [vmem:[%s544] sm:$0xf] %vm1911, %v1879
          %1913 = vst.msk [vmem:[%s544 + $0x4] sm:$0xf] %vm1911, %v1880
          %1914 = vst.msk [vmem:[%s544 + $0x8] sm:$0xf] %vm1911, %v1881
          %1915 = vst.msk [vmem:[%s544 + $0xc] sm:$0xf] %vm1911, %v1882
          %1916 = vst.msk [vmem:[%s544 + $0x10] sm:$0xf] %vm1911, %v1883
          %1917 = vst.msk [vmem:[%s544 + $0x14] sm:$0xf] %vm1911, %v1884
          %1918 = vst.msk [vmem:[%s544 + $0x18] sm:$0xf] %vm1911, %v1885
          %1919 = vst.msk [vmem:[%s544 + $0x1c] sm:$0xf] %vm1911, %v1886
          %1920 = vst.msk [vmem:[%s544 + $0x20] sm:$0xf] %vm1911, %v1887
          %1921 = vst.msk [vmem:[%s544 + $0x24] sm:$0xf] %vm1911, %v1888
          %1922 = vst.msk [vmem:[%s544 + $0x28] sm:$0xf] %vm1911, %v1889
          %1923 = vst.msk [vmem:[%s544 + $0x2c] sm:$0xf] %vm1911, %v1890
          %1924 = vst.msk [vmem:[%s544 + $0x30] sm:$0xf] %vm1911, %v1891
          %1925 = vst.msk [vmem:[%s544 + $0x34] sm:$0xf] %vm1911, %v1892
          %1926 = vst.msk [vmem:[%s544 + $0x38] sm:$0xf] %vm1911, %v1893
          %1927 = vst.msk [vmem:[%s544 + $0x3c] sm:$0xf] %vm1911, %v1894
        $region96: #{ocr_forward.4} parent=51 // pred_fallthru
          _
        %p1928 = scmp.ge.s32.totalorder %s42, 1
        // Predicated region
        $region97: #{ocr_forward.4} parent=51 // pred_check
          %p1929 = pneg %p1928
        $region98: #{ocr_forward.4} parent=51 // pred_check_branch
          %1931 = sbr.rel (%p1929) target = $region100
        $region99: #{ocr_forward.4} parent=51 // pred_region
          %v1932 = vld [vmem:[#allocation4] sm:$0xff]
          %v1933 = vmax.f32 %v1932, 1e-12
          %v1934 = vrcp.pop %v1933
          %v1935 = vmul.f32 1.0, %v1934
          %1937 = vset.pattern.permute.xlu0 0
          %1938 = vperm.xlu0 %1937, %v1935
          %v1939 = vpop.permute.xlu0 %1938
          %v1941 = vmul.f32 %v615, %v1939
          %1942 = vst.msk [vmem:[%s530] sm:$0xff] %vm596, %v1941
        $region100: #{ocr_forward.4} parent=51 // pred_fallthru
          _
        %s1943 = sand.u32 %s249, 1
        %s1944 = scalar_lea.sflag [#allocation8], %s1943
        %s1945 = sand.u32 %s249, 1
        %s1946 = smul.addr %s1945, 8
        %s1947 = scalar_lea.vmem [#allocation20], %s1946
        %s1948 = sand.u32 %s37, 1
        %s1949 = scalar_lea.sflag [#allocation22], %s1948
        %s1950 = sand.u32 %s275, 1
        %s1951 = smul.addr %s1950, 4
        %s1952 = scalar_lea.vmem [#allocation21], %s1951
        %s1953 = sand.u32 %s37, 1
        %s1954 = scalar_lea.sflag [#allocation22], %s1953
        %s1955 = sand.u32 %s301, 1
        %s1956 = smul.addr %s1955, 64
        %s1957 = scalar_lea.vmem [#allocation23], %s1956
        // Predicated region
        $region101: #{ocr_forward.4} parent=51 // pred_check
          %p1958 = pneg %p259
        $region102: #{ocr_forward.4} parent=51 // pred_check_branch
          %1960 = sbr.rel (%p1958) target = $region104
        $region103: #{ocr_forward.4} parent=51 // pred_region
          %s1961 = ssub.s32 %s42, 1
          %p1962 = scmp.gt.s32.totalorder %s1961, 0
          %s1963 = scalar_select %p1962, %s1961, 0
          %s1965 = ssub.s32 128, 128
          %1966 = vsyncadd %s1944, %s1965
          %s1967 = sadd.s32 %s1963, %s41
          %s1968 = smul.addr %s1967, 128
          %s1969 = scalar_lea.hbm %s8, %s1968
          %s1971 = sshll.u32 %s1947, 4
          %s1972 = int_to_ptr.vmem [resolvable:$true] %s1971
          %1974 = dma.vmem_to_hbm [thread:$0]  %s1972, 128, %s1969, %s1944
        $region104: #{ocr_forward.4} parent=51 // pred_fallthru
          _
        // Predicated region
        $region105: #{ocr_forward.4} parent=51 // pred_check
          %p1975 = pneg %p285
        $region106: #{ocr_forward.4} parent=51 // pred_check_branch
          %1977 = sbr.rel (%p1975) target = $region108
        $region107: #{ocr_forward.4} parent=51 // pred_region
          %s1979 = ssub.s32 64, 64
          %1980 = vsyncadd %s1949, %s1979
          %s1981 = smul.addr %s41, 64
          %s1982 = scalar_lea.hbm %s9, %s1981
          %s1984 = sshll.u32 %s1952, 4
          %s1985 = int_to_ptr.vmem [resolvable:$true] %s1984
          %1987 = dma.vmem_to_hbm [thread:$0]  %s1985, 64, %s1982, %s1949
        $region108: #{ocr_forward.4} parent=51 // pred_fallthru
          _
        // Predicated region
        $region109: #{ocr_forward.4} parent=51 // pred_check
          %p1988 = pneg %p311
        $region110: #{ocr_forward.4} parent=51 // pred_check_branch
          %1990 = sbr.rel (%p1988) target = $region112
        $region111: #{ocr_forward.4} parent=51 // pred_region
          %s1992 = ssub.s32 1024, 1024
          %1993 = vsyncadd %s1954, %s1992
          %s1994 = smul.addr %s41, 16
          %s1995 = smul.addr %s1994, 64
          %s1996 = scalar_lea.hbm %s10, %s1995
          %s1997 = sshll.u32 %s1957, 4
          %s1998 = int_to_ptr.vmem [resolvable:$true] %s1997
          %2003 = dma.vmem_to_hbm [thread:$0]  %s1998, 1024, %s1996, %s1954, 64, 64, 4
        $region112: #{ocr_forward.4} parent=51 // pred_fallthru
          _
      $region52: #{ocr_forward.4} parent=5 // pred_fallthru
        _
      %p2004 = scmp.le.s32.totalorder 2, %s32
      // Predicated region
      $region113: #{ocr_forward.4} parent=5 // pred_check
        %p2005 = pneg %p2004
      $region114: #{ocr_forward.4} parent=5 // pred_check_branch
        %2007 = sbr.rel (%p2005) target = $region116
      $region115: #{ocr_forward.4} parent=5 // pred_region
        %s2008 = ssub.s32 %s32, 2
        // Predicated region
        $region117: #{ocr_forward.4} parent=115 // pred_check
          %p2009 = pneg %p265
        $region118: #{ocr_forward.4} parent=115 // pred_check_branch
          %2011 = sbr.rel (%p2009) target = $region120
        $region119: #{ocr_forward.4} parent=115 // pred_region
          %s2012 = sand.u32 %s250, 1
          %s2013 = scalar_lea.sflag [#allocation8], %s2012
          %s2014 = sand.u32 %s250, 1
          %s2015 = smul.addr %s2014, 8
          %s2016 = scalar_lea.vmem [#allocation20], %s2015
          %2017 = dma.done %s2013, 128
        $region120: #{ocr_forward.4} parent=115 // pred_fallthru
          _
        // Predicated region
        $region121: #{ocr_forward.4} parent=115 // pred_check
          %p2018 = pneg %p291
        $region122: #{ocr_forward.4} parent=115 // pred_check_branch
          %2020 = sbr.rel (%p2018) target = $region124
        $region123: #{ocr_forward.4} parent=115 // pred_region
          %s2021 = sand.u32 %s38, 1
          %s2022 = scalar_lea.sflag [#allocation22], %s2021
          %s2023 = sand.u32 %s276, 1
          %s2024 = smul.addr %s2023, 4
          %s2025 = scalar_lea.vmem [#allocation21], %s2024
          %2026 = dma.done %s2022, 64
        $region124: #{ocr_forward.4} parent=115 // pred_fallthru
          _
        // Predicated region
        $region125: #{ocr_forward.4} parent=115 // pred_check
          %p2027 = pneg %p317
        $region126: #{ocr_forward.4} parent=115 // pred_check_branch
          %2029 = sbr.rel (%p2027) target = $region128
        $region127: #{ocr_forward.4} parent=115 // pred_region
          %s2030 = sand.u32 %s38, 1
          %s2031 = scalar_lea.sflag [#allocation22], %s2030
          %s2032 = sand.u32 %s302, 1
          %s2033 = smul.addr %s2032, 64
          %s2034 = scalar_lea.vmem [#allocation23], %s2033
          %2035 = dma.done %s2031, 1024
        $region128: #{ocr_forward.4} parent=115 // pred_fallthru
          _
      $region116: #{ocr_forward.4} parent=5 // pred_fallthru
        _
    $region6: #{ocr_forward.4} parent=1 // loop_footer
      %s36 = sadd.s32 1, %s32
    $region7: #{ocr_forward.4} parent=1 // loop_footer_branch
      %31 = sbr.rel target = $region3
    $region8: #{ocr_forward.4} parent=1 // loop_exit
      _
    %2036 = vsyncpa [#allocation7], 1
    %s2037 = scalar_lea.sflag [#allocation7], 1
    %2038 = vsyncpa %s2037, 1
    %2039 = vsyncpa [#allocation10], 1
    %s2040 = scalar_lea.sflag [#allocation10], 1
    %2041 = vsyncpa %s2040, 1
    %2042 = vsyncpa [#allocation13], 1
    %2043 = vsyncpa [#allocation16], 1
    %2044 = vsyncpa [#allocation19], 1
    %2045 = vsyncpa [#allocation8], 1
    %s2046 = scalar_lea.sflag [#allocation8], 1
    %2047 = vsyncpa %s2046, 1
    %2048 = vsyncpa [#allocation22], 1
    %s2049 = scalar_lea.sflag [#allocation22], 1
    %2050 = vsyncpa %s2049, 1

// kernel: ocr_forward.5
$region0: #{ocr_forward.5}
  #allocation0 [shape = 'u32[]', space=smem, size = 0x4, offset = 0x4, fixed_abs, tag = 'smem constant byte address 0x4 - core index']
  #allocation1 [shape = 'u32[144,128]{1,0:T(1,128)}', space=vmem, size = 0x12000, scoped, tag = 'internal scratch']
  %s0 = inlined_call_operand.hbm [shape: bf16[2,256,64], index: 0, kind: input, shape index: {}]
  %s1 = inlined_call_operand.hbm [shape: bf16[2,8,128], index: 1, kind: input, shape index: {}]
  %s2 = inlined_call_operand.hbm [shape: bf16[2,128,8], index: 2, kind: input, shape index: {}]
  %s3 = inlined_call_operand.hbm [shape: bf16[128,256], index: 3, kind: input, shape index: {}]
  %s4 = inlined_call_operand.hbm [shape: f32[128,1], index: 4, kind: input, shape index: {}]
  %s5 = inlined_call_operand.hbm [shape: bf16[128,128], index: 5, kind: input, shape index: {}]
  %s6 = inlined_call_operand.hbm [shape: f32[128,1], index: 6, kind: input, shape index: {}]
  %s7 = inlined_call_operand.hbm [shape: bf16[256,128], index: 7, kind: input, shape index: {}]
  %s8 = inlined_call_operand.hbm [shape: f32[256,1], index: 8, kind: input, shape index: {}]
  %s9 = inlined_call_operand.hbm [shape: bf16[256,256], index: 9, kind: input, shape index: {}]
  %s10 = inlined_call_operand.hbm [shape: bf16[256,256], index: 10, kind: input, shape index: {}]
  %s11 = inlined_call_operand.hbm [shape: f32[256,1], index: 11, kind: input, shape index: {}]
  %s12 = inlined_call_operand.hbm [shape: bf16[8,256], index: 12, kind: input, shape index: {}]
  %s13 = inlined_call_operand.hbm [shape: f32[8,1], index: 13, kind: input, shape index: {}]
  %s14 = inlined_call_operand.hbm [shape: f32[2,8,64], index: 14, kind: output, shape index: {}]
  %s15 = sld [smem:[#allocation0]]
  $region145: #{ocr_forward.5} parent=0
    _
  %s17 = ssub.s32 1, %s15
  %s18 = scalar_select 0, %s17, %s15
  $region1: #{ocr_forward.5} parent=0
    #allocation2 [shape = 'u8[131072]{0}', space=vmem, size = 0x20000, scoped, tag = 'input window, operand 0']
    #allocation3 [shape = 's32[2]{0}', space=sflag, size = 0x8, scoped, tag = 'scoped memory for ocr_forward.5']
    #allocation4 [shape = 's32[2]{0}', space=sflag, size = 0x8, scoped, tag = 'scoped memory for ocr_forward.5']
    #allocation5 [shape = 'u8[4096]{0}', space=vmem, size = 0x1000, scoped, tag = 'input window, operand 1']
    #allocation6 [shape = 's32[2]{0}', space=sflag, size = 0x8, scoped, tag = 'scoped memory for ocr_forward.5']
    #allocation7 [shape = 'u8[65536]{0}', space=vmem, size = 0x10000, scoped, tag = 'input window, operand 2']
    #allocation8 [shape = 'u8[65536]{0}', space=vmem, size = 0x10000, scoped, tag = 'input window, operand 3, single buffered']
    #allocation9 [shape = 's32[1]{0}', space=sflag, size = 0x4, scoped, tag = 'scoped memory for ocr_forward.5']
    #allocation10 [shape = 'u8[65536]{0}', space=vmem, size = 0x10000, scoped, tag = 'input window, operand 4, single buffered']
    #allocation11 [shape = 'u8[32768]{0}', space=vmem, size = 0x8000, scoped, tag = 'input window, operand 5, single buffered']
    #allocation12 [shape = 's32[1]{0}', space=sflag, size = 0x4, scoped, tag = 'scoped memory for ocr_forward.5']
    #allocation13 [shape = 'u8[65536]{0}', space=vmem, size = 0x10000, scoped, tag = 'input window, operand 6, single buffered']
    #allocation14 [shape = 'u8[65536]{0}', space=vmem, size = 0x10000, scoped, tag = 'input window, operand 7, single buffered']
    #allocation15 [shape = 's32[1]{0}', space=sflag, size = 0x4, scoped, tag = 'scoped memory for ocr_forward.5']
    #allocation16 [shape = 'u8[131072]{0}', space=vmem, size = 0x20000, scoped, tag = 'input window, operand 8, single buffered']
    #allocation17 [shape = 'u8[131072]{0}', space=vmem, size = 0x20000, scoped, tag = 'input window, operand 9, single buffered']
    #allocation18 [shape = 's32[1]{0}', space=sflag, size = 0x4, scoped, tag = 'scoped memory for ocr_forward.5']
    #allocation19 [shape = 'u8[131072]{0}', space=vmem, size = 0x20000, scoped, tag = 'input window, operand 10, single buffered']
    #allocation20 [shape = 'u8[131072]{0}', space=vmem, size = 0x20000, scoped, tag = 'input window, operand 11, single buffered']
    #allocation21 [shape = 's32[1]{0}', space=sflag, size = 0x4, scoped, tag = 'scoped memory for ocr_forward.5']
    #allocation22 [shape = 'u8[4096]{0}', space=vmem, size = 0x1000, scoped, tag = 'input window, operand 12, single buffered']
    #allocation23 [shape = 'u8[4096]{0}', space=vmem, size = 0x1000, scoped, tag = 'input window, operand 13, single buffered']
    #allocation24 [shape = 's32[1]{0}', space=sflag, size = 0x4, scoped, tag = 'scoped memory for ocr_forward.5']
    #allocation25 [shape = 'u8[8192]{0}', space=vmem, size = 0x2000, scoped, tag = 'output window, operand 0']
    %19 = vsyncpa [#allocation3], 0
    %s20 = scalar_lea.sflag [#allocation3], 1
    %21 = vsyncpa %s20, 0
    %22 = vsyncpa [#allocation6], 0
    %s23 = scalar_lea.sflag [#allocation6], 1
    %24 = vsyncpa %s23, 0
    %25 = vsyncpa [#allocation9], 0
    %26 = vsyncpa [#allocation12], 0
    %27 = vsyncpa [#allocation15], 0
    %28 = vsyncpa [#allocation18], 0
    %29 = vsyncpa [#allocation21], 0
    %30 = vsyncpa [#allocation24], 0
    %31 = vsyncpa [#allocation4], 0
    %s32 = scalar_lea.sflag [#allocation4], 1
    %33 = vsyncpa %s32, 0
    loop: start=0, step=1, limit=4
    $region2: #{ocr_forward.5} parent=1 // loop_pre_header
      _
    $region3: #{ocr_forward.5} parent=1 // loop_header
      %s35 = sphi 0, %s39
      %p36 = scmp.ge.s32.totalorder %s35, 4
      %s42 = sphi 0, %s54
      %s43 = sphi 0, %s50
      %s44 = sphi 0, %s42
      %s45 = sphi 0, %s43
      %s46 = sphi 0, %s44
      %s47 = sphi 0, %s45
      %s59 = sphi 0, %s61
      %s62 = sphi 0, %s59
      %s63 = sphi 0, %s62
      %s79 = sphi 0, %s63
      %s85 = sphi 0, %s87
      %s88 = sphi 0, %s85
      %s89 = sphi 0, %s88
      %s105 = sphi 0, %s89
      %s111 = sphi 0, %s113
      %s114 = sphi 0, %s111
      %s115 = sphi 0, %s114
      %s131 = sphi 0, %s115
      %s135 = sphi 0, %s135
      %s137 = sphi 0, %s135
      %s138 = sphi 0, %s137
      %s152 = sphi 0, %s138
      %s156 = sphi 0, %s156
      %s158 = sphi 0, %s156
      %s159 = sphi 0, %s158
      %s173 = sphi 0, %s159
      %s177 = sphi 0, %s177
      %s179 = sphi 0, %s177
      %s180 = sphi 0, %s179
      %s194 = sphi 0, %s180
      %s198 = sphi 0, %s198
      %s200 = sphi 0, %s198
      %s201 = sphi 0, %s200
      %s215 = sphi 0, %s201
      %s219 = sphi 0, %s219
      %s221 = sphi 0, %s219
      %s222 = sphi 0, %s221
      %s236 = sphi 0, %s222
      %s240 = sphi 0, %s240
      %s242 = sphi 0, %s240
      %s243 = sphi 0, %s242
      %s257 = sphi 0, %s243
      %s261 = sphi 0, %s261
      %s263 = sphi 0, %s261
      %s264 = sphi 0, %s263
      %s278 = sphi 0, %s264
      %s282 = sphi 0, %s282
      %s284 = sphi 0, %s282
      %s285 = sphi 0, %s284
      %s299 = sphi 0, %s285
      %s303 = sphi 0, %s303
      %s305 = sphi 0, %s303
      %s306 = sphi 0, %s305
      %s320 = sphi 0, %s306
      %s324 = sphi 0, %s324
      %s326 = sphi 0, %s324
      %s327 = sphi 0, %s326
      %s341 = sphi 0, %s327
      %s345 = sphi 0, %s345
      %s347 = sphi 0, %s345
      %s348 = sphi 0, %s347
      %s362 = sphi 0, %s348
      %s370 = sphi 0, %s372
      %s373 = sphi 0, %s370
      %s374 = sphi 0, %s373
      %s390 = sphi 0, %s374
    $region4: #{ocr_forward.5} parent=1 // loop_header_branch
      %38 = sbr.rel (%p36) target = $region8
    $region5: #{ocr_forward.5} parent=1 // loop_body
      %s40 = ssub.s32 %s35, 1
      %s41 = ssub.s32 %s35, 2
      %s48 = sadd.s32 1, %s43
      %p49 = scmp.ge.s32.totalorder %s48, 1
      %s50 = scalar_select %p49, 0, %s48
      %s51 = sadd.s32 1, %s42
      %s52 = scalar_select %p49, %s51, %s42
      %p53 = scmp.ge.s32.totalorder %s52, 2
      %s54 = scalar_select %p53, 0, %s52
      %s55 = ssub.s32 %s42, %s54
      %s56 = ssub.s32 %s43, %s50
      %s57 = sor.u32 %s55, %s56
      %p58 = scmp.eq.s32.totalorder %s57, 0
      %s60 = sadd.s32 %s59, 1
      %s61 = scalar_select %p58, %s59, %s60
      %p64 = pneg %p58
      %p65 = scmp.eq.s32.totalorder %s35, 1
      %p66 = por %p64, %p65
      %p67 = scmp.ne.s32.totalorder %s59, %s62
      %p68 = scmp.eq.s32.totalorder %s35, 0
      %p69 = por %p67, %p68
      %p70 = scmp.ne.s32.totalorder %s59, %s62
      %p71 = scmp.eq.s32.totalorder %s40, 1
      %p72 = por %p70, %p71
      %p73 = scmp.ne.s32.totalorder %s62, %s63
      %p74 = scmp.eq.s32.totalorder %s40, 0
      %p75 = por %p73, %p74
      %p76 = scmp.ne.s32.totalorder %s62, %s63
      %p77 = scmp.eq.s32.totalorder %s41, 1
      %p78 = por %p76, %p77
      %p80 = scmp.ne.s32.totalorder %s63, %s79
      %p81 = scmp.eq.s32.totalorder %s41, 0
      %p82 = por %p80, %p81
      %s83 = ssub.s32 %s42, %s54
      %p84 = scmp.eq.s32.totalorder %s83, 0
      %s86 = sadd.s32 %s85, 1
      %s87 = scalar_select %p84, %s85, %s86
      %p90 = pneg %p84
      %p91 = scmp.eq.s32.totalorder %s35, 1
      %p92 = por %p90, %p91
      %p93 = scmp.ne.s32.totalorder %s85, %s88
      %p94 = scmp.eq.s32.totalorder %s35, 0
      %p95 = por %p93, %p94
      %p96 = scmp.ne.s32.totalorder %s85, %s88
      %p97 = scmp.eq.s32.totalorder %s40, 1
      %p98 = por %p96, %p97
      %p99 = scmp.ne.s32.totalorder %s88, %s89
      %p100 = scmp.eq.s32.totalorder %s40, 0
      %p101 = por %p99, %p100
      %p102 = scmp.ne.s32.totalorder %s88, %s89
      %p103 = scmp.eq.s32.totalorder %s41, 1
      %p104 = por %p102, %p103
      %p106 = scmp.ne.s32.totalorder %s89, %s105
      %p107 = scmp.eq.s32.totalorder %s41, 0
      %p108 = por %p106, %p107
      %s109 = ssub.s32 %s42, %s54
      %p110 = scmp.eq.s32.totalorder %s109, 0
      %s112 = sadd.s32 %s111, 1
      %s113 = scalar_select %p110, %s111, %s112
      %p116 = pneg %p110
      %p117 = scmp.eq.s32.totalorder %s35, 1
      %p118 = por %p116, %p117
      %p119 = scmp.ne.s32.totalorder %s111, %s114
      %p120 = scmp.eq.s32.totalorder %s35, 0
      %p121 = por %p119, %p120
      %p122 = scmp.ne.s32.totalorder %s111, %s114
      %p123 = scmp.eq.s32.totalorder %s40, 1
      %p124 = por %p122, %p123
      %p125 = scmp.ne.s32.totalorder %s114, %s115
      %p126 = scmp.eq.s32.totalorder %s40, 0
      %p127 = por %p125, %p126
      %p128 = scmp.ne.s32.totalorder %s114, %s115
      %p129 = scmp.eq.s32.totalorder %s41, 1
      %p130 = por %p128, %p129
      %p132 = scmp.ne.s32.totalorder %s115, %s131
      %p133 = scmp.eq.s32.totalorder %s41, 0
      %p134 = por %p132, %p133
      %s136 = sadd.s32 %s135, 1
      %p139 = scmp.eq.s32.totalorder %s35, 1
      %p140 = scmp.ne.s32.totalorder %s135, %s137
      %p141 = scmp.eq.s32.totalorder %s35, 0
      %p142 = por %p140, %p141
      %p143 = scmp.ne.s32.totalorder %s135, %s137
      %p144 = scmp.eq.s32.totalorder %s40, 1
      %p145 = por %p143, %p144
      %p146 = scmp.ne.s32.totalorder %s137, %s138
      %p147 = scmp.eq.s32.totalorder %s40, 0
      %p148 = por %p146, %p147
      %p149 = scmp.ne.s32.totalorder %s137, %s138
      %p150 = scmp.eq.s32.totalorder %s41, 1
      %p151 = por %p149, %p150
      %p153 = scmp.ne.s32.totalorder %s138, %s152
      %p154 = scmp.eq.s32.totalorder %s41, 0
      %p155 = por %p153, %p154
      %s157 = sadd.s32 %s156, 1
      %p160 = scmp.eq.s32.totalorder %s35, 1
      %p161 = scmp.ne.s32.totalorder %s156, %s158
      %p162 = scmp.eq.s32.totalorder %s35, 0
      %p163 = por %p161, %p162
      %p164 = scmp.ne.s32.totalorder %s156, %s158
      %p165 = scmp.eq.s32.totalorder %s40, 1
      %p166 = por %p164, %p165
      %p167 = scmp.ne.s32.totalorder %s158, %s159
      %p168 = scmp.eq.s32.totalorder %s40, 0
      %p169 = por %p167, %p168
      %p170 = scmp.ne.s32.totalorder %s158, %s159
      %p171 = scmp.eq.s32.totalorder %s41, 1
      %p172 = por %p170, %p171
      %p174 = scmp.ne.s32.totalorder %s159, %s173
      %p175 = scmp.eq.s32.totalorder %s41, 0
      %p176 = por %p174, %p175
      %s178 = sadd.s32 %s177, 1
      %p181 = scmp.eq.s32.totalorder %s35, 1
      %p182 = scmp.ne.s32.totalorder %s177, %s179
      %p183 = scmp.eq.s32.totalorder %s35, 0
      %p184 = por %p182, %p183
      %p185 = scmp.ne.s32.totalorder %s177, %s179
      %p186 = scmp.eq.s32.totalorder %s40, 1
      %p187 = por %p185, %p186
      %p188 = scmp.ne.s32.totalorder %s179, %s180
      %p189 = scmp.eq.s32.totalorder %s40, 0
      %p190 = por %p188, %p189
      %p191 = scmp.ne.s32.totalorder %s179, %s180
      %p192 = scmp.eq.s32.totalorder %s41, 1
      %p193 = por %p191, %p192
      %p195 = scmp.ne.s32.totalorder %s180, %s194
      %p196 = scmp.eq.s32.totalorder %s41, 0
      %p197 = por %p195, %p196
      %s199 = sadd.s32 %s198, 1
      %p202 = scmp.eq.s32.totalorder %s35, 1
      %p203 = scmp.ne.s32.totalorder %s198, %s200
      %p204 = scmp.eq.s32.totalorder %s35, 0
      %p205 = por %p203, %p204
      %p206 = scmp.ne.s32.totalorder %s198, %s200
      %p207 = scmp.eq.s32.totalorder %s40, 1
      %p208 = por %p206, %p207
      %p209 = scmp.ne.s32.totalorder %s200, %s201
      %p210 = scmp.eq.s32.totalorder %s40, 0
      %p211 = por %p209, %p210
      %p212 = scmp.ne.s32.totalorder %s200, %s201
      %p213 = scmp.eq.s32.totalorder %s41, 1
      %p214 = por %p212, %p213
      %p216 = scmp.ne.s32.totalorder %s201, %s215
      %p217 = scmp.eq.s32.totalorder %s41, 0
      %p218 = por %p216, %p217
      %s220 = sadd.s32 %s219, 1
      %p223 = scmp.eq.s32.totalorder %s35, 1
      %p224 = scmp.ne.s32.totalorder %s219, %s221
      %p225 = scmp.eq.s32.totalorder %s35, 0
      %p226 = por %p224, %p225
      %p227 = scmp.ne.s32.totalorder %s219, %s221
      %p228 = scmp.eq.s32.totalorder %s40, 1
      %p229 = por %p227, %p228
      %p230 = scmp.ne.s32.totalorder %s221, %s222
      %p231 = scmp.eq.s32.totalorder %s40, 0
      %p232 = por %p230, %p231
      %p233 = scmp.ne.s32.totalorder %s221, %s222
      %p234 = scmp.eq.s32.totalorder %s41, 1
      %p235 = por %p233, %p234
      %p237 = scmp.ne.s32.totalorder %s222, %s236
      %p238 = scmp.eq.s32.totalorder %s41, 0
      %p239 = por %p237, %p238
      %s241 = sadd.s32 %s240, 1
      %p244 = scmp.eq.s32.totalorder %s35, 1
      %p245 = scmp.ne.s32.totalorder %s240, %s242
      %p246 = scmp.eq.s32.totalorder %s35, 0
      %p247 = por %p245, %p246
      %p248 = scmp.ne.s32.totalorder %s240, %s242
      %p249 = scmp.eq.s32.totalorder %s40, 1
      %p250 = por %p248, %p249
      %p251 = scmp.ne.s32.totalorder %s242, %s243
      %p252 = scmp.eq.s32.totalorder %s40, 0
      %p253 = por %p251, %p252
      %p254 = scmp.ne.s32.totalorder %s242, %s243
      %p255 = scmp.eq.s32.totalorder %s41, 1
      %p256 = por %p254, %p255
      %p258 = scmp.ne.s32.totalorder %s243, %s257
      %p259 = scmp.eq.s32.totalorder %s41, 0
      %p260 = por %p258, %p259
      %s262 = sadd.s32 %s261, 1
      %p265 = scmp.eq.s32.totalorder %s35, 1
      %p266 = scmp.ne.s32.totalorder %s261, %s263
      %p267 = scmp.eq.s32.totalorder %s35, 0
      %p268 = por %p266, %p267
      %p269 = scmp.ne.s32.totalorder %s261, %s263
      %p270 = scmp.eq.s32.totalorder %s40, 1
      %p271 = por %p269, %p270
      %p272 = scmp.ne.s32.totalorder %s263, %s264
      %p273 = scmp.eq.s32.totalorder %s40, 0
      %p274 = por %p272, %p273
      %p275 = scmp.ne.s32.totalorder %s263, %s264
      %p276 = scmp.eq.s32.totalorder %s41, 1
      %p277 = por %p275, %p276
      %p279 = scmp.ne.s32.totalorder %s264, %s278
      %p280 = scmp.eq.s32.totalorder %s41, 0
      %p281 = por %p279, %p280
      %s283 = sadd.s32 %s282, 1
      %p286 = scmp.eq.s32.totalorder %s35, 1
      %p287 = scmp.ne.s32.totalorder %s282, %s284
      %p288 = scmp.eq.s32.totalorder %s35, 0
      %p289 = por %p287, %p288
      %p290 = scmp.ne.s32.totalorder %s282, %s284
      %p291 = scmp.eq.s32.totalorder %s40, 1
      %p292 = por %p290, %p291
      %p293 = scmp.ne.s32.totalorder %s284, %s285
      %p294 = scmp.eq.s32.totalorder %s40, 0
      %p295 = por %p293, %p294
      %p296 = scmp.ne.s32.totalorder %s284, %s285
      %p297 = scmp.eq.s32.totalorder %s41, 1
      %p298 = por %p296, %p297
      %p300 = scmp.ne.s32.totalorder %s285, %s299
      %p301 = scmp.eq.s32.totalorder %s41, 0
      %p302 = por %p300, %p301
      %s304 = sadd.s32 %s303, 1
      %p307 = scmp.eq.s32.totalorder %s35, 1
      %p308 = scmp.ne.s32.totalorder %s303, %s305
      %p309 = scmp.eq.s32.totalorder %s35, 0
      %p310 = por %p308, %p309
      %p311 = scmp.ne.s32.totalorder %s303, %s305
      %p312 = scmp.eq.s32.totalorder %s40, 1
      %p313 = por %p311, %p312
      %p314 = scmp.ne.s32.totalorder %s305, %s306
      %p315 = scmp.eq.s32.totalorder %s40, 0
      %p316 = por %p314, %p315
      %p317 = scmp.ne.s32.totalorder %s305, %s306
      %p318 = scmp.eq.s32.totalorder %s41, 1
      %p319 = por %p317, %p318
      %p321 = scmp.ne.s32.totalorder %s306, %s320
      %p322 = scmp.eq.s32.totalorder %s41, 0
      %p323 = por %p321, %p322
      %s325 = sadd.s32 %s324, 1
      %p328 = scmp.eq.s32.totalorder %s35, 1
      %p329 = scmp.ne.s32.totalorder %s324, %s326
      %p330 = scmp.eq.s32.totalorder %s35, 0
      %p331 = por %p329, %p330
      %p332 = scmp.ne.s32.totalorder %s324, %s326
      %p333 = scmp.eq.s32.totalorder %s40, 1
      %p334 = por %p332, %p333
      %p335 = scmp.ne.s32.totalorder %s326, %s327
      %p336 = scmp.eq.s32.totalorder %s40, 0
      %p337 = por %p335, %p336
      %p338 = scmp.ne.s32.totalorder %s326, %s327
      %p339 = scmp.eq.s32.totalorder %s41, 1
      %p340 = por %p338, %p339
      %p342 = scmp.ne.s32.totalorder %s327, %s341
      %p343 = scmp.eq.s32.totalorder %s41, 0
      %p344 = por %p342, %p343
      %s346 = sadd.s32 %s345, 1
      %p349 = scmp.eq.s32.totalorder %s35, 1
      %p350 = scmp.ne.s32.totalorder %s345, %s347
      %p351 = scmp.eq.s32.totalorder %s35, 0
      %p352 = por %p350, %p351
      %p353 = scmp.ne.s32.totalorder %s345, %s347
      %p354 = scmp.eq.s32.totalorder %s40, 1
      %p355 = por %p353, %p354
      %p356 = scmp.ne.s32.totalorder %s347, %s348
      %p357 = scmp.eq.s32.totalorder %s40, 0
      %p358 = por %p356, %p357
      %p359 = scmp.ne.s32.totalorder %s347, %s348
      %p360 = scmp.eq.s32.totalorder %s41, 1
      %p361 = por %p359, %p360
      %p363 = scmp.ne.s32.totalorder %s348, %s362
      %p364 = scmp.eq.s32.totalorder %s41, 0
      %p365 = por %p363, %p364
      %s366 = ssub.s32 %s42, %s54
      %s367 = ssub.s32 %s43, %s50
      %s368 = sor.u32 %s366, %s367
      %p369 = scmp.eq.s32.totalorder %s368, 0
      %s371 = sadd.s32 %s370, 1
      %s372 = scalar_select %p369, %s370, %s371
      %p375 = pneg %p369
      %p376 = scmp.eq.s32.totalorder %s35, 1
      %p377 = por %p375, %p376
      %p378 = scmp.ne.s32.totalorder %s370, %s373
      %p379 = scmp.eq.s32.totalorder %s35, 0
      %p380 = por %p378, %p379
      %p381 = scmp.ne.s32.totalorder %s370, %s373
      %p382 = scmp.eq.s32.totalorder %s40, 1
      %p383 = por %p381, %p382
      %p384 = scmp.ne.s32.totalorder %s373, %s374
      %p385 = scmp.eq.s32.totalorder %s40, 0
      %p386 = por %p384, %p385
      %p387 = scmp.ne.s32.totalorder %s373, %s374
      %p388 = scmp.eq.s32.totalorder %s41, 1
      %p389 = por %p387, %p388
      %p391 = scmp.ne.s32.totalorder %s374, %s390
      %p392 = scmp.eq.s32.totalorder %s41, 0
      %p393 = por %p391, %p392
      %p394 = scmp.le.s32.totalorder 1, %s35
      %p395 = scmp.lt.s32.totalorder %s35, 3
      %p396 = pnand %p394, %p395
      %p397 = pneg %p396
      // Predicated region
      $region9: #{ocr_forward.5} parent=5 // pred_check
        _
      $region10: #{ocr_forward.5} parent=5 // pred_check_branch
        %399 = sbr.rel (%p396) target = $region12
      $region11: #{ocr_forward.5} parent=5 // pred_region
        %s400 = ssub.s32 %s35, 1
        // Predicated region
        $region13: #{ocr_forward.5} parent=11 // pred_check
          %p401 = pneg %p148
        $region14: #{ocr_forward.5} parent=11 // pred_check_branch
          %403 = sbr.rel (%p401) target = $region16
        $region15: #{ocr_forward.5} parent=11 // pred_region
          %s405 = ssub.s32 2048, 2048
          %406 = vsyncadd [#allocation9], %s405
          %s407 = sshll.u32 [#allocation8], 4
          %s408 = int_to_ptr.vmem [resolvable:$true] %s407
          %413 = dma.hbm_to_vmem [thread:$0]  %s3, 2048, %s408, [#allocation9], 128, 128, 8
        $region16: #{ocr_forward.5} parent=11 // pred_fallthru
          _
        // Predicated region
        $region17: #{ocr_forward.5} parent=11 // pred_check
          %p414 = pneg %p169
        $region18: #{ocr_forward.5} parent=11 // pred_check_branch
          %416 = sbr.rel (%p414) target = $region20
        $region19: #{ocr_forward.5} parent=11 // pred_region
          %s418 = ssub.s32 2048, 2048
          %419 = vsyncadd [#allocation9], %s418
          %s420 = sshll.u32 [#allocation10], 4
          %s421 = int_to_ptr.vmem [resolvable:$true] %s420
          %426 = dma.hbm_to_vmem [thread:$0]  %s4, 2048, %s421, [#allocation9], 128, 128, 8
        $region20: #{ocr_forward.5} parent=11 // pred_fallthru
          _
        // Predicated region
        $region21: #{ocr_forward.5} parent=11 // pred_check
          %p427 = pneg %p190
        $region22: #{ocr_forward.5} parent=11 // pred_check_branch
          %429 = sbr.rel (%p427) target = $region24
        $region23: #{ocr_forward.5} parent=11 // pred_region
          %s431 = ssub.s32 1024, 1024
          %432 = vsyncadd [#allocation12], %s431
          %s433 = sshll.u32 [#allocation11], 4
          %s434 = int_to_ptr.vmem [resolvable:$true] %s433
          %439 = dma.hbm_to_vmem [thread:$0]  %s5, 1024, %s434, [#allocation12], 64, 64, 4
        $region24: #{ocr_forward.5} parent=11 // pred_fallthru
          _
        // Predicated region
        $region25: #{ocr_forward.5} parent=11 // pred_check
          %p440 = pneg %p211
        $region26: #{ocr_forward.5} parent=11 // pred_check_branch
          %442 = sbr.rel (%p440) target = $region28
        $region27: #{ocr_forward.5} parent=11 // pred_region
          %s444 = ssub.s32 2048, 2048
          %445 = vsyncadd [#allocation12], %s444
          %s446 = sshll.u32 [#allocation13], 4
          %s447 = int_to_ptr.vmem [resolvable:$true] %s446
          %452 = dma.hbm_to_vmem [thread:$0]  %s6, 2048, %s447, [#allocation12], 128, 128, 8
        $region28: #{ocr_forward.5} parent=11 // pred_fallthru
          _
        // Predicated region
        $region29: #{ocr_forward.5} parent=11 // pred_check
          %p453 = pneg %p232
        $region30: #{ocr_forward.5} parent=11 // pred_check_branch
          %455 = sbr.rel (%p453) target = $region32
        $region31: #{ocr_forward.5} parent=11 // pred_region
          %s457 = ssub.s32 2048, 2048
          %458 = vsyncadd [#allocation15], %s457
          %s459 = sshll.u32 [#allocation14], 4
          %s460 = int_to_ptr.vmem [resolvable:$true] %s459
          %465 = dma.hbm_to_vmem [thread:$0]  %s7, 2048, %s460, [#allocation15], 64, 64, 4
        $region32: #{ocr_forward.5} parent=11 // pred_fallthru
          _
        // Predicated region
        $region33: #{ocr_forward.5} parent=11 // pred_check
          %p466 = pneg %p253
        $region34: #{ocr_forward.5} parent=11 // pred_check_branch
          %468 = sbr.rel (%p466) target = $region36
        $region35: #{ocr_forward.5} parent=11 // pred_region
          %s470 = ssub.s32 4096, 4096
          %471 = vsyncadd [#allocation15], %s470
          %s472 = sshll.u32 [#allocation16], 4
          %s473 = int_to_ptr.vmem [resolvable:$true] %s472
          %478 = dma.hbm_to_vmem [thread:$0]  %s8, 4096, %s473, [#allocation15], 128, 128, 8
        $region36: #{ocr_forward.5} parent=11 // pred_fallthru
          _
        // Predicated region
        $region37: #{ocr_forward.5} parent=11 // pred_check
          %p479 = pneg %p274
        $region38: #{ocr_forward.5} parent=11 // pred_check_branch
          %481 = sbr.rel (%p479) target = $region40
        $region39: #{ocr_forward.5} parent=11 // pred_region
          %s483 = ssub.s32 4096, 4096
          %484 = vsyncadd [#allocation18], %s483
          %s485 = sshll.u32 [#allocation17], 4
          %s486 = int_to_ptr.vmem [resolvable:$true] %s485
          %491 = dma.hbm_to_vmem [thread:$0]  %s9, 4096, %s486, [#allocation18], 128, 128, 8
        $region40: #{ocr_forward.5} parent=11 // pred_fallthru
          _
        // Predicated region
        $region41: #{ocr_forward.5} parent=11 // pred_check
          %p492 = pneg %p295
        $region42: #{ocr_forward.5} parent=11 // pred_check_branch
          %494 = sbr.rel (%p492) target = $region44
        $region43: #{ocr_forward.5} parent=11 // pred_region
          %s496 = ssub.s32 4096, 4096
          %497 = vsyncadd [#allocation18], %s496
          %s498 = sshll.u32 [#allocation19], 4
          %s499 = int_to_ptr.vmem [resolvable:$true] %s498
          %504 = dma.hbm_to_vmem [thread:$0]  %s10, 4096, %s499, [#allocation18], 128, 128, 8
        $region44: #{ocr_forward.5} parent=11 // pred_fallthru
          _
        // Predicated region
        $region45: #{ocr_forward.5} parent=11 // pred_check
          %p505 = pneg %p316
        $region46: #{ocr_forward.5} parent=11 // pred_check_branch
          %507 = sbr.rel (%p505) target = $region48
        $region47: #{ocr_forward.5} parent=11 // pred_region
          %s509 = ssub.s32 4096, 4096
          %510 = vsyncadd [#allocation21], %s509
          %s511 = sshll.u32 [#allocation20], 4
          %s512 = int_to_ptr.vmem [resolvable:$true] %s511
          %517 = dma.hbm_to_vmem [thread:$0]  %s11, 4096, %s512, [#allocation21], 128, 128, 8
        $region48: #{ocr_forward.5} parent=11 // pred_fallthru
          _
        // Predicated region
        $region49: #{ocr_forward.5} parent=11 // pred_check
          %p518 = pneg %p337
        $region50: #{ocr_forward.5} parent=11 // pred_check_branch
          %520 = sbr.rel (%p518) target = $region52
        $region51: #{ocr_forward.5} parent=11 // pred_region
          %s522 = ssub.s32 128, 128
          %523 = vsyncadd [#allocation21], %s522
          %s525 = sshll.u32 [#allocation22], 4
          %s526 = int_to_ptr.vmem [resolvable:$true] %s525
          %528 = dma.hbm_to_vmem [thread:$0]  %s12, 128, %s526, [#allocation21]
        $region52: #{ocr_forward.5} parent=11 // pred_fallthru
          _
        // Predicated region
        $region53: #{ocr_forward.5} parent=11 // pred_check
          %p529 = pneg %p358
        $region54: #{ocr_forward.5} parent=11 // pred_check_branch
          %531 = sbr.rel (%p529) target = $region56
        $region55: #{ocr_forward.5} parent=11 // pred_region
          %s533 = ssub.s32 128, 128
          %534 = vsyncadd [#allocation24], %s533
          %s536 = sshll.u32 [#allocation23], 4
          %s537 = int_to_ptr.vmem [resolvable:$true] %s536
          %539 = dma.hbm_to_vmem [thread:$0]  %s13, 128, %s537, [#allocation24]
        $region56: #{ocr_forward.5} parent=11 // pred_fallthru
          _
      $region12: #{ocr_forward.5} parent=5 // pred_fallthru
        _
      %p540 = scmp.lt.s32.totalorder %s35, 2
      // Predicated region
      $region57: #{ocr_forward.5} parent=5 // pred_check
        %p541 = pneg %p540
      $region58: #{ocr_forward.5} parent=5 // pred_check_branch
        %543 = sbr.rel (%p541) target = $region60
      $region59: #{ocr_forward.5} parent=5 // pred_region
        // Predicated region
        $region61: #{ocr_forward.5} parent=59 // pred_check
          %p544 = pneg %p69
        $region62: #{ocr_forward.5} parent=59 // pred_check_branch
          %546 = sbr.rel (%p544) target = $region64
        $region63: #{ocr_forward.5} parent=59 // pred_region
          %s547 = sand.u32 %s59, 1
          %s548 = scalar_lea.sflag [#allocation3], %s547
          %s549 = sand.u32 %s59, 1
          %s550 = smul.addr %s549, 128
          %s551 = scalar_lea.vmem [#allocation2], %s550
          %s553 = ssub.s32 2048, 2048
          %554 = vsyncadd %s548, %s553
          %s555 = smul.addr %s42, 32
          %s556 = sadd.s32 %s43, %s555
          %s557 = smul.addr %s556, 64
          %s558 = scalar_lea.hbm %s0, %s557
          %s559 = sshll.u32 %s551, 4
          %s560 = int_to_ptr.vmem [resolvable:$true] %s559
          %565 = dma.hbm_to_vmem [thread:$0]  %s558, 2048, %s560, %s548, 64, 64, 4
        $region64: #{ocr_forward.5} parent=59 // pred_fallthru
          _
        // Predicated region
        $region65: #{ocr_forward.5} parent=59 // pred_check
          %p566 = pneg %p95
        $region66: #{ocr_forward.5} parent=59 // pred_check_branch
          %568 = sbr.rel (%p566) target = $region68
        $region67: #{ocr_forward.5} parent=59 // pred_region
          %s569 = sand.u32 %s35, 1
          %s570 = scalar_lea.sflag [#allocation6], %s569
          %s571 = sand.u32 %s85, 1
          %s572 = smul.addr %s571, 4
          %s573 = scalar_lea.vmem [#allocation5], %s572
          %s575 = ssub.s32 64, 64
          %576 = vsyncadd %s570, %s575
          %s577 = smul.addr %s42, 64
          %s578 = scalar_lea.hbm %s1, %s577
          %s580 = sshll.u32 %s573, 4
          %s581 = int_to_ptr.vmem [resolvable:$true] %s580
          %583 = dma.hbm_to_vmem [thread:$0]  %s578, 64, %s581, %s570
        $region68: #{ocr_forward.5} parent=59 // pred_fallthru
          _
        // Predicated region
        $region69: #{ocr_forward.5} parent=59 // pred_check
          %p584 = pneg %p121
        $region70: #{ocr_forward.5} parent=59 // pred_check_branch
          %586 = sbr.rel (%p584) target = $region72
        $region71: #{ocr_forward.5} parent=59 // pred_region
          %s587 = sand.u32 %s35, 1
          %s588 = scalar_lea.sflag [#allocation6], %s587
          %s589 = sand.u32 %s111, 1
          %s590 = smul.addr %s589, 64
          %s591 = scalar_lea.vmem [#allocation7], %s590
          %s593 = ssub.s32 1024, 1024
          %594 = vsyncadd %s588, %s593
          %s595 = smul.addr %s42, 16
          %s596 = smul.addr %s595, 64
          %s597 = scalar_lea.hbm %s2, %s596
          %s598 = sshll.u32 %s591, 4
          %s599 = int_to_ptr.vmem [resolvable:$true] %s598
          %604 = dma.hbm_to_vmem [thread:$0]  %s597, 1024, %s599, %s588, 64, 64, 4
        $region72: #{ocr_forward.5} parent=59 // pred_fallthru
          _
      $region60: #{ocr_forward.5} parent=5 // pred_fallthru
        _
      %p605 = scmp.le.s32.totalorder 1, %s35
      %p606 = scmp.lt.s32.totalorder %s35, 3
      %p607 = pnand %p605, %p606
      %p608 = pneg %p607
      // Predicated region
      $region73: #{ocr_forward.5} parent=5 // pred_check
        _
      $region74: #{ocr_forward.5} parent=5 // pred_check_branch
        %610 = sbr.rel (%p607) target = $region76
      $region75: #{ocr_forward.5} parent=5 // pred_region
        %s611 = ssub.s32 %s35, 1
        %s612 = sand.u32 %s62, 1
        %s613 = scalar_lea.sflag [#allocation3], %s612
        %s614 = sand.u32 %s62, 1
        %s615 = smul.addr %s614, 128
        %s616 = scalar_lea.vmem [#allocation2], %s615
        // Predicated region
        $region77: #{ocr_forward.5} parent=75 // pred_check
          %p617 = pneg %p75
        $region78: #{ocr_forward.5} parent=75 // pred_check_branch
          %619 = sbr.rel (%p617) target = $region80
        $region79: #{ocr_forward.5} parent=75 // pred_region
          %620 = dma.done %s613, 2048
        $region80: #{ocr_forward.5} parent=75 // pred_fallthru
          _
        %s621 = sand.u32 %s40, 1
        %s622 = scalar_lea.sflag [#allocation6], %s621
        %s623 = sand.u32 %s88, 1
        %s624 = smul.addr %s623, 4
        %s625 = scalar_lea.vmem [#allocation5], %s624
        // Predicated region
        $region81: #{ocr_forward.5} parent=75 // pred_check
          %p626 = pneg %p101
        $region82: #{ocr_forward.5} parent=75 // pred_check_branch
          %628 = sbr.rel (%p626) target = $region84
        $region83: #{ocr_forward.5} parent=75 // pred_region
          %629 = dma.done %s622, 64
        $region84: #{ocr_forward.5} parent=75 // pred_fallthru
          _
        %s630 = sand.u32 %s40, 1
        %s631 = scalar_lea.sflag [#allocation6], %s630
        %s632 = sand.u32 %s114, 1
        %s633 = smul.addr %s632, 64
        %s634 = scalar_lea.vmem [#allocation7], %s633
        // Predicated region
        $region85: #{ocr_forward.5} parent=75 // pred_check
          %p635 = pneg %p127
        $region86: #{ocr_forward.5} parent=75 // pred_check_branch
          %637 = sbr.rel (%p635) target = $region88
        $region87: #{ocr_forward.5} parent=75 // pred_region
          %638 = dma.done %s631, 1024
        $region88: #{ocr_forward.5} parent=75 // pred_fallthru
          _
        // Predicated region
        $region89: #{ocr_forward.5} parent=75 // pred_check
          %p639 = pneg %p148
        $region90: #{ocr_forward.5} parent=75 // pred_check_branch
          %641 = sbr.rel (%p639) target = $region92
        $region91: #{ocr_forward.5} parent=75 // pred_region
          %642 = dma.done [#allocation9], 2048
        $region92: #{ocr_forward.5} parent=75 // pred_fallthru
          _
        // Predicated region
        $region93: #{ocr_forward.5} parent=75 // pred_check
          %p643 = pneg %p169
        $region94: #{ocr_forward.5} parent=75 // pred_check_branch
          %645 = sbr.rel (%p643) target = $region96
        $region95: #{ocr_forward.5} parent=75 // pred_region
          %646 = dma.done [#allocation9], 2048
        $region96: #{ocr_forward.5} parent=75 // pred_fallthru
          _
        // Predicated region
        $region97: #{ocr_forward.5} parent=75 // pred_check
          %p647 = pneg %p190
        $region98: #{ocr_forward.5} parent=75 // pred_check_branch
          %649 = sbr.rel (%p647) target = $region100
        $region99: #{ocr_forward.5} parent=75 // pred_region
          %650 = dma.done [#allocation12], 1024
        $region100: #{ocr_forward.5} parent=75 // pred_fallthru
          _
        // Predicated region
        $region101: #{ocr_forward.5} parent=75 // pred_check
          %p651 = pneg %p211
        $region102: #{ocr_forward.5} parent=75 // pred_check_branch
          %653 = sbr.rel (%p651) target = $region104
        $region103: #{ocr_forward.5} parent=75 // pred_region
          %654 = dma.done [#allocation12], 2048
        $region104: #{ocr_forward.5} parent=75 // pred_fallthru
          _
        // Predicated region
        $region105: #{ocr_forward.5} parent=75 // pred_check
          %p655 = pneg %p232
        $region106: #{ocr_forward.5} parent=75 // pred_check_branch
          %657 = sbr.rel (%p655) target = $region108
        $region107: #{ocr_forward.5} parent=75 // pred_region
          %658 = dma.done [#allocation15], 2048
        $region108: #{ocr_forward.5} parent=75 // pred_fallthru
          _
        // Predicated region
        $region109: #{ocr_forward.5} parent=75 // pred_check
          %p659 = pneg %p253
        $region110: #{ocr_forward.5} parent=75 // pred_check_branch
          %661 = sbr.rel (%p659) target = $region112
        $region111: #{ocr_forward.5} parent=75 // pred_region
          %662 = dma.done [#allocation15], 4096
        $region112: #{ocr_forward.5} parent=75 // pred_fallthru
          _
        // Predicated region
        $region113: #{ocr_forward.5} parent=75 // pred_check
          %p663 = pneg %p274
        $region114: #{ocr_forward.5} parent=75 // pred_check_branch
          %665 = sbr.rel (%p663) target = $region116
        $region115: #{ocr_forward.5} parent=75 // pred_region
          %666 = dma.done [#allocation18], 4096
        $region116: #{ocr_forward.5} parent=75 // pred_fallthru
          _
        // Predicated region
        $region117: #{ocr_forward.5} parent=75 // pred_check
          %p667 = pneg %p295
        $region118: #{ocr_forward.5} parent=75 // pred_check_branch
          %669 = sbr.rel (%p667) target = $region120
        $region119: #{ocr_forward.5} parent=75 // pred_region
          %670 = dma.done [#allocation18], 4096
        $region120: #{ocr_forward.5} parent=75 // pred_fallthru
          _
        // Predicated region
        $region121: #{ocr_forward.5} parent=75 // pred_check
          %p671 = pneg %p316
        $region122: #{ocr_forward.5} parent=75 // pred_check_branch
          %673 = sbr.rel (%p671) target = $region124
        $region123: #{ocr_forward.5} parent=75 // pred_region
          %674 = dma.done [#allocation21], 4096
        $region124: #{ocr_forward.5} parent=75 // pred_fallthru
          _
        // Predicated region
        $region125: #{ocr_forward.5} parent=75 // pred_check
          %p675 = pneg %p337
        $region126: #{ocr_forward.5} parent=75 // pred_check_branch
          %677 = sbr.rel (%p675) target = $region128
        $region127: #{ocr_forward.5} parent=75 // pred_region
          %678 = dma.done [#allocation21], 128
        $region128: #{ocr_forward.5} parent=75 // pred_fallthru
          _
        // Predicated region
        $region129: #{ocr_forward.5} parent=75 // pred_check
          %p679 = pneg %p358
        $region130: #{ocr_forward.5} parent=75 // pred_check_branch
          %681 = sbr.rel (%p679) target = $region132
        $region131: #{ocr_forward.5} parent=75 // pred_region
          %682 = dma.done [#allocation24], 128
        $region132: #{ocr_forward.5} parent=75 // pred_fallthru
          _
        %s683 = sand.u32 %s62, 1
        %s684 = scalar_lea.sflag [#allocation3], %s683
        %s685 = sand.u32 %s62, 1
        %s686 = smul.addr %s685, 128
        %s687 = scalar_lea.vmem [#allocation2], %s686
        %p688 = pneg %p75
        %p689 = pneg %p72
        %s690 = sand.u32 %s40, 1
        %s691 = scalar_lea.sflag [#allocation6], %s690
        %s692 = sand.u32 %s88, 1
        %s693 = smul.addr %s692, 4
        %s694 = scalar_lea.vmem [#allocation5], %s693
        %p695 = pneg %p101
        %p696 = pneg %p98
        %s697 = sand.u32 %s40, 1
        %s698 = scalar_lea.sflag [#allocation6], %s697
        %s699 = sand.u32 %s114, 1
        %s700 = smul.addr %s699, 64
        %s701 = scalar_lea.vmem [#allocation7], %s700
        %p702 = pneg %p127
        %p703 = pneg %p124
        %p704 = pneg %p148
        %p705 = pneg %p145
        %p706 = pneg %p169
        %p707 = pneg %p166
        %p708 = pneg %p190
        %p709 = pneg %p187
        %p710 = pneg %p211
        %p711 = pneg %p208
        %p712 = pneg %p232
        %p713 = pneg %p229
        %p714 = pneg %p253
        %p715 = pneg %p250
        %p716 = pneg %p274
        %p717 = pneg %p271
        %p718 = pneg %p295
        %p719 = pneg %p292
        %p720 = pneg %p316
        %p721 = pneg %p313
        %p722 = pneg %p337
        %p723 = pneg %p334
        %p724 = pneg %p358
        %p725 = pneg %p355
        %p726 = pneg %p386
        %p727 = pneg %p383
        %s728 = sand.u32 %s373, 1
        %s729 = scalar_lea.sflag [#allocation4], %s728
        %s730 = sand.u32 %s373, 1
        %s731 = smul.addr %s730, 8
        %s732 = scalar_lea.vmem [#allocation25], %s731
        %v734 = vld [vmem:[%s616] sm:$0xf]
        %v735 = vld [vmem:[%s616 + $0x4] sm:$0xf]
        %v736 = vld [vmem:[%s616 + $0x8] sm:$0xf]
        %v737 = vld [vmem:[%s616 + $0xc] sm:$0xf]
        %v738 = vld [vmem:[%s616 + $0x10] sm:$0xf]
        %v739 = vld [vmem:[%s616 + $0x14] sm:$0xf]
        %v740 = vld [vmem:[%s616 + $0x18] sm:$0xf]
        %v741 = vld [vmem:[%s616 + $0x1c] sm:$0xf]
        %v742 = vld [vmem:[%s616 + $0x20] sm:$0xf]
        %v743 = vld [vmem:[%s616 + $0x24] sm:$0xf]
        %v744 = vld [vmem:[%s616 + $0x28] sm:$0xf]
        %v745 = vld [vmem:[%s616 + $0x2c] sm:$0xf]
        %v746 = vld [vmem:[%s616 + $0x30] sm:$0xf]
        %v747 = vld [vmem:[%s616 + $0x34] sm:$0xf]
        %v748 = vld [vmem:[%s616 + $0x38] sm:$0xf]
        %v749 = vld [vmem:[%s616 + $0x3c] sm:$0xf]
        %v750 = vld [vmem:[%s616 + $0x40] sm:$0xf]
        %v751 = vld [vmem:[%s616 + $0x44] sm:$0xf]
        %v752 = vld [vmem:[%s616 + $0x48] sm:$0xf]
        %v753 = vld [vmem:[%s616 + $0x4c] sm:$0xf]
        %v754 = vld [vmem:[%s616 + $0x50] sm:$0xf]
        %v755 = vld [vmem:[%s616 + $0x54] sm:$0xf]
        %v756 = vld [vmem:[%s616 + $0x58] sm:$0xf]
        %v757 = vld [vmem:[%s616 + $0x5c] sm:$0xf]
        %v758 = vld [vmem:[%s616 + $0x60] sm:$0xf]
        %v759 = vld [vmem:[%s616 + $0x64] sm:$0xf]
        %v760 = vld [vmem:[%s616 + $0x68] sm:$0xf]
        %v761 = vld [vmem:[%s616 + $0x6c] sm:$0xf]
        %v762 = vld [vmem:[%s616 + $0x70] sm:$0xf]
        %v763 = vld [vmem:[%s616 + $0x74] sm:$0xf]
        %v764 = vld [vmem:[%s616 + $0x78] sm:$0xf]
        %v765 = vld [vmem:[%s616 + $0x7c] sm:$0xf]
        %v766 = vld [vmem:[#allocation8] sm:$0xff]
        %v767 = vld [vmem:[#allocation8 + $0x8] sm:$0xff]
        %v768 = vld [vmem:[#allocation8 + $0x10] sm:$0xff]
        %v769 = vld [vmem:[#allocation8 + $0x18] sm:$0xff]
        %v770 = vld [vmem:[#allocation8 + $0x20] sm:$0xff]
        %v771 = vld [vmem:[#allocation8 + $0x28] sm:$0xff]
        %v772 = vld [vmem:[#allocation8 + $0x30] sm:$0xff]
        %v773 = vld [vmem:[#allocation8 + $0x38] sm:$0xff]
        %v774 = vld [vmem:[#allocation8 + $0x40] sm:$0xff]
        %v775 = vld [vmem:[#allocation8 + $0x48] sm:$0xff]
        %v776 = vld [vmem:[#allocation8 + $0x50] sm:$0xff]
        %v777 = vld [vmem:[#allocation8 + $0x58] sm:$0xff]
        %v778 = vld [vmem:[#allocation8 + $0x60] sm:$0xff]
        %v779 = vld [vmem:[#allocation8 + $0x68] sm:$0xff]
        %v780 = vld [vmem:[#allocation8 + $0x70] sm:$0xff]
        %v781 = vld [vmem:[#allocation8 + $0x78] sm:$0xff]
        %v782 = vld [vmem:[#allocation10] sm:$0xff]
        %v783 = vld [vmem:[#allocation10 + $0x8] sm:$0xff]
        %v784 = vld [vmem:[#allocation10 + $0x10] sm:$0xff]
        %v785 = vld [vmem:[#allocation10 + $0x18] sm:$0xff]
        %v786 = vld [vmem:[#allocation10 + $0x20] sm:$0xff]
        %v787 = vld [vmem:[#allocation10 + $0x28] sm:$0xff]
        %v788 = vld [vmem:[#allocation10 + $0x30] sm:$0xff]
        %v789 = vld [vmem:[#allocation10 + $0x38] sm:$0xff]
        %v790 = vld [vmem:[#allocation10 + $0x40] sm:$0xff]
        %v791 = vld [vmem:[#allocation10 + $0x48] sm:$0xff]
        %v792 = vld [vmem:[#allocation10 + $0x50] sm:$0xff]
        %v793 = vld [vmem:[#allocation10 + $0x58] sm:$0xff]
        %v794 = vld [vmem:[#allocation10 + $0x60] sm:$0xff]
        %v795 = vld [vmem:[#allocation10 + $0x68] sm:$0xff]
        %v796 = vld [vmem:[#allocation10 + $0x70] sm:$0xff]
        %v797 = vld [vmem:[#allocation10 + $0x78] sm:$0xff]
        %799 = vset.pattern.permute.xlu0 0
        %800 = vperm.xlu0 %799, %v782
        %v801 = vpop.permute.xlu0 %800
        %804 = vset.pattern.permute.xlu0 0
        %805 = vperm.xlu0 %804, %v783
        %v806 = vpop.permute.xlu0 %805
        %809 = vset.pattern.permute.xlu0 0
        %810 = vperm.xlu0 %809, %v784
        %v811 = vpop.permute.xlu0 %810
        %814 = vset.pattern.permute.xlu0 0
        %815 = vperm.xlu0 %814, %v785
        %v816 = vpop.permute.xlu0 %815
        %819 = vset.pattern.permute.xlu0 0
        %820 = vperm.xlu0 %819, %v786
        %v821 = vpop.permute.xlu0 %820
        %824 = vset.pattern.permute.xlu0 0
        %825 = vperm.xlu0 %824, %v787
        %v826 = vpop.permute.xlu0 %825
        %829 = vset.pattern.permute.xlu0 0
        %830 = vperm.xlu0 %829, %v788
        %v831 = vpop.permute.xlu0 %830
        %834 = vset.pattern.permute.xlu0 0
        %835 = vperm.xlu0 %834, %v789
        %v836 = vpop.permute.xlu0 %835
        %839 = vset.pattern.permute.xlu0 0
        %840 = vperm.xlu0 %839, %v790
        %v841 = vpop.permute.xlu0 %840
        %844 = vset.pattern.permute.xlu0 0
        %845 = vperm.xlu0 %844, %v791
        %v846 = vpop.permute.xlu0 %845
        %849 = vset.pattern.permute.xlu0 0
        %850 = vperm.xlu0 %849, %v792
        %v851 = vpop.permute.xlu0 %850
        %854 = vset.pattern.permute.xlu0 0
        %855 = vperm.xlu0 %854, %v793
        %v856 = vpop.permute.xlu0 %855
        %859 = vset.pattern.permute.xlu0 0
        %860 = vperm.xlu0 %859, %v794
        %v861 = vpop.permute.xlu0 %860
        %864 = vset.pattern.permute.xlu0 0
        %865 = vperm.xlu0 %864, %v795
        %v866 = vpop.permute.xlu0 %865
        %869 = vset.pattern.permute.xlu0 0
        %870 = vperm.xlu0 %869, %v796
        %v871 = vpop.permute.xlu0 %870
        %874 = vset.pattern.permute.xlu0 0
        %875 = vperm.xlu0 %874, %v797
        %v876 = vpop.permute.xlu0 %875
        %v894 = vunpack.c.l.b16 %v766
        %v895 = vunpack.c.h.b16 %v766
        %v896 = vunpack.c.l.b16 %v767
        %v897 = vunpack.c.h.b16 %v767
        %v898 = vunpack.c.l.b16 %v768
        %v899 = vunpack.c.h.b16 %v768
        %v900 = vunpack.c.l.b16 %v769
        %v901 = vunpack.c.h.b16 %v769
        %v902 = vunpack.c.l.b16 %v770
        %v903 = vunpack.c.h.b16 %v770
        %v904 = vunpack.c.l.b16 %v771
        %v905 = vunpack.c.h.b16 %v771
        %v906 = vunpack.c.l.b16 %v772
        %v907 = vunpack.c.h.b16 %v772
        %v908 = vunpack.c.l.b16 %v773
        %v909 = vunpack.c.h.b16 %v773
        %v910 = vunpack.c.l.b16 %v774
        %v911 = vunpack.c.h.b16 %v774
        %v912 = vunpack.c.l.b16 %v775
        %v913 = vunpack.c.h.b16 %v775
        %v914 = vunpack.c.l.b16 %v776
        %v915 = vunpack.c.h.b16 %v776
        %v916 = vunpack.c.l.b16 %v777
        %v917 = vunpack.c.h.b16 %v777
        %v918 = vunpack.c.l.b16 %v778
        %v919 = vunpack.c.h.b16 %v778
        %v920 = vunpack.c.l.b16 %v779
        %v921 = vunpack.c.h.b16 %v779
        %v922 = vunpack.c.l.b16 %v780
        %v923 = vunpack.c.h.b16 %v780
        %v924 = vunpack.c.l.b16 %v781
        %v925 = vunpack.c.h.b16 %v781
        %v926 = vpack.c.b16 %v896, %v894
        %v927 = vpack.c.b16 %v897, %v895
        %v928 = vpack.c.b16 %v900, %v898
        %v929 = vpack.c.b16 %v901, %v899
        %v930 = vpack.c.b16 %v904, %v902
        %v931 = vpack.c.b16 %v905, %v903
        %v932 = vpack.c.b16 %v908, %v906
        %v933 = vpack.c.b16 %v909, %v907
        %v934 = vpack.c.b16 %v912, %v910
        %v935 = vpack.c.b16 %v913, %v911
        %v936 = vpack.c.b16 %v916, %v914
        %v937 = vpack.c.b16 %v917, %v915
        %v938 = vpack.c.b16 %v920, %v918
        %v939 = vpack.c.b16 %v921, %v919
        %v940 = vpack.c.b16 %v924, %v922
        %v941 = vpack.c.b16 %v925, %v923
        %v990 = vunpack.c.l.b16 %v734
        %v991 = vunpack.c.l.b16 %v735
        %v992 = vunpack.c.l.b16 %v736
        %v993 = vunpack.c.l.b16 %v737
        %v994 = vunpack.c.l.b16 %v738
        %v995 = vunpack.c.l.b16 %v739
        %v996 = vunpack.c.l.b16 %v740
        %v997 = vunpack.c.l.b16 %v741
        %v998 = vunpack.c.l.b16 %v742
        %v999 = vunpack.c.l.b16 %v743
        %v1000 = vunpack.c.l.b16 %v744
        %v1001 = vunpack.c.l.b16 %v745
        %v1002 = vunpack.c.l.b16 %v746
        %v1003 = vunpack.c.l.b16 %v747
        %v1004 = vunpack.c.l.b16 %v748
        %v1005 = vunpack.c.l.b16 %v749
        %v1006 = vunpack.c.l.b16 %v750
        %v1007 = vunpack.c.l.b16 %v751
        %v1008 = vunpack.c.l.b16 %v752
        %v1009 = vunpack.c.l.b16 %v753
        %v1010 = vunpack.c.l.b16 %v754
        %v1011 = vunpack.c.l.b16 %v755
        %v1012 = vunpack.c.l.b16 %v756
        %v1013 = vunpack.c.l.b16 %v757
        %v1014 = vunpack.c.l.b16 %v758
        %v1015 = vunpack.c.l.b16 %v759
        %v1016 = vunpack.c.l.b16 %v760
        %v1017 = vunpack.c.l.b16 %v761
        %v1018 = vunpack.c.l.b16 %v762
        %v1019 = vunpack.c.l.b16 %v763
        %v1020 = vunpack.c.l.b16 %v764
        %v1021 = vunpack.c.l.b16 %v765
        %v1022 = vpack.c.b16 %v991, %v990
        %v1023 = vpack.c.b16 %v993, %v992
        %v1024 = vpack.c.b16 %v995, %v994
        %v1025 = vpack.c.b16 %v997, %v996
        %v1026 = vpack.c.b16 %v999, %v998
        %v1027 = vpack.c.b16 %v1001, %v1000
        %v1028 = vpack.c.b16 %v1003, %v1002
        %v1029 = vpack.c.b16 %v1005, %v1004
        %v1030 = vpack.c.b16 %v1007, %v1006
        %v1031 = vpack.c.b16 %v1009, %v1008
        %v1032 = vpack.c.b16 %v1011, %v1010
        %v1033 = vpack.c.b16 %v1013, %v1012
        %v1034 = vpack.c.b16 %v1015, %v1014
        %v1035 = vpack.c.b16 %v1017, %v1016
        %v1036 = vpack.c.b16 %v1019, %v1018
        %v1037 = vpack.c.b16 %v1021, %v1020
        %1054 = vmatprep.subr.bf16.mxu0 0
        %1055 = vmatpush1.bf16.msra.mxu0 %v1022
        %1056 = vmatprep.subr.bf16.mxu0 0
        %1057 = vmatpush1.bf16.msra.mxu0 %v1023
        %1058 = vmatprep.subr.bf16.mxu0 0
        %1059 = vmatpush1.bf16.msra.mxu0 %v1024
        %1060 = vmatprep.subr.bf16.mxu0 0
        %1061 = vmatpush1.bf16.msra.mxu0 %v1025
        %1062 = vmatprep.subr.bf16.mxu0 0
        %1063 = vmatpush1.bf16.msra.mxu0 %v1026
        %1064 = vmatprep.subr.bf16.mxu0 0
        %1065 = vmatpush1.bf16.msra.mxu0 %v1027
        %1066 = vmatprep.subr.bf16.mxu0 0
        %1067 = vmatpush1.bf16.msra.mxu0 %v1028
        %1068 = vmatprep.subr.bf16.mxu0 0
        %1069 = vmatpush1.bf16.msra.mxu0 %v1029
        %1070 = vmatprep.subr.bf16.mxu0 0
        %1071 = vmatpush1.bf16.msra.mxu0 %v1030
        %1072 = vmatprep.subr.bf16.mxu0 0
        %1073 = vmatpush1.bf16.msra.mxu0 %v1031
        %1074 = vmatprep.subr.bf16.mxu0 0
        %1075 = vmatpush1.bf16.msra.mxu0 %v1032
        %1076 = vmatprep.subr.bf16.mxu0 0
        %1077 = vmatpush1.bf16.msra.mxu0 %v1033
        %1078 = vmatprep.subr.bf16.mxu0 0
        %1079 = vmatpush1.bf16.msra.mxu0 %v1034
        %1080 = vmatprep.subr.bf16.mxu0 0
        %1081 = vmatpush1.bf16.msra.mxu0 %v1035
        %1082 = vmatprep.subr.bf16.mxu0 0
        %1083 = vmatpush1.bf16.msra.mxu0 %v1036
        %1084 = vmatprep.subr.bf16.mxu0 0
        %1085 = vmatpush1.bf16.msra.mxu0 %v1037
        %1086 = vmatprep.mubr.bf16.mxu0 %v927
        %1087 = vmatmul.mubr.bf16.gmra.mrb[0].mxu0 %v926
        %v1088 = vpop.f32.mrb[0].mxu0
        %v1089 = vadd.f32 %v801, %v1088
        %v1090 = vpop.f32.mrb[0].mxu0
        %v1091 = vpop.f32.mrb[0].mxu0
        %v1092 = vadd.f32 %v806, %v1091
        %v1093 = vpop.f32.mrb[0].mxu0
        %1094 = vmatprep.mubr.bf16.mxu0 %v929
        %1095 = vmatmul.mubr.bf16.gmra.mrb[0].mxu0 %v928
        %v1096 = vpop.f32.mrb[0].mxu0
        %v1097 = vadd.f32 %v811, %v1096
        %v1098 = vpop.f32.mrb[0].mxu0
        %v1099 = vpop.f32.mrb[0].mxu0
        %v1100 = vadd.f32 %v816, %v1099
        %v1101 = vpop.f32.mrb[0].mxu0
        %1102 = vmatprep.mubr.bf16.mxu0 %v931
        %1103 = vmatmul.mubr.bf16.gmra.mrb[0].mxu0 %v930
        %v1104 = vpop.f32.mrb[0].mxu0
        %v1105 = vadd.f32 %v821, %v1104
        %v1106 = vpop.f32.mrb[0].mxu0
        %v1107 = vpop.f32.mrb[0].mxu0
        %v1108 = vadd.f32 %v826, %v1107
        %v1109 = vpop.f32.mrb[0].mxu0
        %1110 = vmatprep.mubr.bf16.mxu0 %v933
        %1111 = vmatmul.mubr.bf16.gmra.mrb[0].mxu0 %v932
        %v1112 = vpop.f32.mrb[0].mxu0
        %v1113 = vadd.f32 %v831, %v1112
        %v1114 = vpop.f32.mrb[0].mxu0
        %v1115 = vpop.f32.mrb[0].mxu0
        %v1116 = vadd.f32 %v836, %v1115
        %v1117 = vpop.f32.mrb[0].mxu0
        %1118 = vmatprep.mubr.bf16.mxu0 %v935
        %1119 = vmatmul.mubr.bf16.gmra.mrb[0].mxu0 %v934
        %v1120 = vpop.f32.mrb[0].mxu0
        %v1121 = vadd.f32 %v841, %v1120
        %v1122 = vpop.f32.mrb[0].mxu0
        %v1123 = vpop.f32.mrb[0].mxu0
        %v1124 = vadd.f32 %v846, %v1123
        %v1125 = vpop.f32.mrb[0].mxu0
        %1126 = vmatprep.mubr.bf16.mxu0 %v937
        %1127 = vmatmul.mubr.bf16.gmra.mrb[0].mxu0 %v936
        %v1128 = vpop.f32.mrb[0].mxu0
        %v1129 = vadd.f32 %v851, %v1128
        %v1130 = vpop.f32.mrb[0].mxu0
        %v1131 = vpop.f32.mrb[0].mxu0
        %v1132 = vadd.f32 %v856, %v1131
        %v1133 = vpop.f32.mrb[0].mxu0
        %1134 = vmatprep.mubr.bf16.mxu0 %v939
        %1135 = vmatmul.mubr.bf16.gmra.mrb[0].mxu0 %v938
        %v1136 = vpop.f32.mrb[0].mxu0
        %v1137 = vadd.f32 %v861, %v1136
        %v1138 = vpop.f32.mrb[0].mxu0
        %v1139 = vpop.f32.mrb[0].mxu0
        %v1140 = vadd.f32 %v866, %v1139
        %v1141 = vpop.f32.mrb[0].mxu0
        %1142 = vmatprep.mubr.bf16.mxu0 %v941
        %1143 = vmatmul.mubr.bf16.gmra.mrb[0].mxu0 %v940
        %v1144 = vpop.f32.mrb[0].mxu0
        %v1145 = vadd.f32 %v871, %v1144
        %v1146 = vpop.f32.mrb[0].mxu0
        %v1147 = vpop.f32.mrb[0].mxu0
        %v1148 = vadd.f32 %v876, %v1147
        %v1149 = vpop.f32.mrb[0].mxu0
        %1150 = vdwg.mxu0
        %v1151 = vmax.f32 %v1089, 0.0
        %v1152 = vmax.f32 %v1092, 0.0
        %v1153 = vmax.f32 %v1097, 0.0
        %v1154 = vmax.f32 %v1100, 0.0
        %v1155 = vmax.f32 %v1105, 0.0
        %v1156 = vmax.f32 %v1108, 0.0
        %v1157 = vmax.f32 %v1113, 0.0
        %v1158 = vmax.f32 %v1116, 0.0
        %v1159 = vmax.f32 %v1121, 0.0
        %v1160 = vmax.f32 %v1124, 0.0
        %v1161 = vmax.f32 %v1129, 0.0
        %v1162 = vmax.f32 %v1132, 0.0
        %v1163 = vmax.f32 %v1137, 0.0
        %v1164 = vmax.f32 %v1140, 0.0
        %v1165 = vmax.f32 %v1145, 0.0
        %v1166 = vmax.f32 %v1148, 0.0
        %v1167 = vld [vmem:[#allocation11] sm:$0xf]
        %v1168 = vld [vmem:[#allocation11 + $0x4] sm:$0xf]
        %v1169 = vld [vmem:[#allocation11 + $0x8] sm:$0xf]
        %v1170 = vld [vmem:[#allocation11 + $0xc] sm:$0xf]
        %v1171 = vld [vmem:[#allocation11 + $0x10] sm:$0xf]
        %v1172 = vld [vmem:[#allocation11 + $0x14] sm:$0xf]
        %v1173 = vld [vmem:[#allocation11 + $0x18] sm:$0xf]
        %v1174 = vld [vmem:[#allocation11 + $0x1c] sm:$0xf]
        %v1175 = vld [vmem:[#allocation11 + $0x20] sm:$0xf]
        %v1176 = vld [vmem:[#allocation11 + $0x24] sm:$0xf]
        %v1177 = vld [vmem:[#allocation11 + $0x28] sm:$0xf]
        %v1178 = vld [vmem:[#allocation11 + $0x2c] sm:$0xf]
        %v1179 = vld [vmem:[#allocation11 + $0x30] sm:$0xf]
        %v1180 = vld [vmem:[#allocation11 + $0x34] sm:$0xf]
        %v1181 = vld [vmem:[#allocation11 + $0x38] sm:$0xf]
        %v1182 = vld [vmem:[#allocation11 + $0x3c] sm:$0xf]
        %v1183 = vpack.c.bf16 %v1152, %v1151
        %v1184 = vpack.c.bf16 %v1154, %v1153
        %v1185 = vpack.c.bf16 %v1156, %v1155
        %v1186 = vpack.c.bf16 %v1158, %v1157
        %v1187 = vpack.c.bf16 %v1160, %v1159
        %v1188 = vpack.c.bf16 %v1162, %v1161
        %v1189 = vpack.c.bf16 %v1164, %v1163
        %v1190 = vpack.c.bf16 %v1166, %v1165
        %v1191 = vld [vmem:[#allocation13] sm:$0xff]
        %v1192 = vld [vmem:[#allocation13 + $0x8] sm:$0xff]
        %v1193 = vld [vmem:[#allocation13 + $0x10] sm:$0xff]
        %v1194 = vld [vmem:[#allocation13 + $0x18] sm:$0xff]
        %v1195 = vld [vmem:[#allocation13 + $0x20] sm:$0xff]
        %v1196 = vld [vmem:[#allocation13 + $0x28] sm:$0xff]
        %v1197 = vld [vmem:[#allocation13 + $0x30] sm:$0xff]
        %v1198 = vld [vmem:[#allocation13 + $0x38] sm:$0xff]
        %v1199 = vld [vmem:[#allocation13 + $0x40] sm:$0xff]
        %v1200 = vld [vmem:[#allocation13 + $0x48] sm:$0xff]
        %v1201 = vld [vmem:[#allocation13 + $0x50] sm:$0xff]
        %v1202 = vld [vmem:[#allocation13 + $0x58] sm:$0xff]
        %v1203 = vld [vmem:[#allocation13 + $0x60] sm:$0xff]
        %v1204 = vld [vmem:[#allocation13 + $0x68] sm:$0xff]
        %v1205 = vld [vmem:[#allocation13 + $0x70] sm:$0xff]
        %v1206 = vld [vmem:[#allocation13 + $0x78] sm:$0xff]
        %1208 = vset.pattern.permute.xlu0 0
        %1209 = vperm.xlu0 %1208, %v1191
        %v1210 = vpop.permute.xlu0 %1209
        %1213 = vset.pattern.permute.xlu0 0
        %1214 = vperm.xlu0 %1213, %v1192
        %v1215 = vpop.permute.xlu0 %1214
        %1218 = vset.pattern.permute.xlu0 0
        %1219 = vperm.xlu0 %1218, %v1193
        %v1220 = vpop.permute.xlu0 %1219
        %1223 = vset.pattern.permute.xlu0 0
        %1224 = vperm.xlu0 %1223, %v1194
        %v1225 = vpop.permute.xlu0 %1224
        %1228 = vset.pattern.permute.xlu0 0
        %1229 = vperm.xlu0 %1228, %v1195
        %v1230 = vpop.permute.xlu0 %1229
        %1233 = vset.pattern.permute.xlu0 0
        %1234 = vperm.xlu0 %1233, %v1196
        %v1235 = vpop.permute.xlu0 %1234
        %1238 = vset.pattern.permute.xlu0 0
        %1239 = vperm.xlu0 %1238, %v1197
        %v1240 = vpop.permute.xlu0 %1239
        %1243 = vset.pattern.permute.xlu0 0
        %1244 = vperm.xlu0 %1243, %v1198
        %v1245 = vpop.permute.xlu0 %1244
        %1248 = vset.pattern.permute.xlu0 0
        %1249 = vperm.xlu0 %1248, %v1199
        %v1250 = vpop.permute.xlu0 %1249
        %1253 = vset.pattern.permute.xlu0 0
        %1254 = vperm.xlu0 %1253, %v1200
        %v1255 = vpop.permute.xlu0 %1254
        %1258 = vset.pattern.permute.xlu0 0
        %1259 = vperm.xlu0 %1258, %v1201
        %v1260 = vpop.permute.xlu0 %1259
        %1263 = vset.pattern.permute.xlu0 0
        %1264 = vperm.xlu0 %1263, %v1202
        %v1265 = vpop.permute.xlu0 %1264
        %1268 = vset.pattern.permute.xlu0 0
        %1269 = vperm.xlu0 %1268, %v1203
        %v1270 = vpop.permute.xlu0 %1269
        %1273 = vset.pattern.permute.xlu0 0
        %1274 = vperm.xlu0 %1273, %v1204
        %v1275 = vpop.permute.xlu0 %1274
        %1278 = vset.pattern.permute.xlu0 0
        %1279 = vperm.xlu0 %1278, %v1205
        %v1280 = vpop.permute.xlu0 %1279
        %1283 = vset.pattern.permute.xlu0 0
        %1284 = vperm.xlu0 %1283, %v1206
        %v1285 = vpop.permute.xlu0 %1284
        %v1303 = vunpack.c.l.b16 %v1167
        %v1304 = vunpack.c.l.b16 %v1168
        %v1305 = vunpack.c.l.b16 %v1169
        %v1306 = vunpack.c.l.b16 %v1170
        %v1307 = vunpack.c.l.b16 %v1171
        %v1308 = vunpack.c.l.b16 %v1172
        %v1309 = vunpack.c.l.b16 %v1173
        %v1310 = vunpack.c.l.b16 %v1174
        %v1311 = vunpack.c.l.b16 %v1175
        %v1312 = vunpack.c.l.b16 %v1176
        %v1313 = vunpack.c.l.b16 %v1177
        %v1314 = vunpack.c.l.b16 %v1178
        %v1315 = vunpack.c.l.b16 %v1179
        %v1316 = vunpack.c.l.b16 %v1180
        %v1317 = vunpack.c.l.b16 %v1181
        %v1318 = vunpack.c.l.b16 %v1182
        %v1319 = vpack.c.b16 %v1304, %v1303
        %v1320 = vpack.c.b16 %v1306, %v1305
        %v1321 = vpack.c.b16 %v1308, %v1307
        %v1322 = vpack.c.b16 %v1310, %v1309
        %v1323 = vpack.c.b16 %v1312, %v1311
        %v1324 = vpack.c.b16 %v1314, %v1313
        %v1325 = vpack.c.b16 %v1316, %v1315
        %v1326 = vpack.c.b16 %v1318, %v1317
        %1335 = vmatprep.subr.bf16.mxu0 0
        %1336 = vmatpush1.bf16.msra.mxu0 %v1183
        %1337 = vmatprep.subr.bf16.mxu0 0
        %1338 = vmatpush1.bf16.msra.mxu0 %v1184
        %1339 = vmatprep.subr.bf16.mxu0 0
        %1340 = vmatpush1.bf16.msra.mxu0 %v1185
        %1341 = vmatprep.subr.bf16.mxu0 0
        %1342 = vmatpush1.bf16.msra.mxu0 %v1186
        %1343 = vmatprep.subr.bf16.mxu0 0
        %1344 = vmatpush1.bf16.msra.mxu0 %v1187
        %1345 = vmatprep.subr.bf16.mxu0 0
        %1346 = vmatpush1.bf16.msra.mxu0 %v1188
        %1347 = vmatprep.subr.bf16.mxu0 0
        %1348 = vmatpush1.bf16.msra.mxu0 %v1189
        %1349 = vmatprep.subr.bf16.mxu0 0
        %1350 = vmatpush1.bf16.msra.mxu0 %v1190
        %1351 = vmatprep.subr.bf16.mxu0 0
        %1352 = vmatpush1.bf16.msra.mxu0 0
        %1353 = vmatprep.subr.bf16.mxu0 0
        %1354 = vmatpush1.bf16.msra.mxu0 0
        %1355 = vmatprep.subr.bf16.mxu0 0
        %1356 = vmatpush1.bf16.msra.mxu0 0
        %1357 = vmatprep.subr.bf16.mxu0 0
        %1358 = vmatpush1.bf16.msra.mxu0 0
        %1359 = vmatprep.subr.bf16.mxu0 0
        %1360 = vmatpush1.bf16.msra.mxu0 0
        %1361 = vmatprep.subr.bf16.mxu0 0
        %1362 = vmatpush1.bf16.msra.mxu0 0
        %1363 = vmatprep.subr.bf16.mxu0 0
        %1364 = vmatpush1.bf16.msra.mxu0 0
        %1365 = vmatprep.subr.bf16.mxu0 0
        %1366 = vmatpush1.bf16.msra.mxu0 0
        %1367 = vmatprep.mubr.bf16.mxu0 0
        %1368 = vmatmul.mubr.bf16.gmra.mrb[0].mxu0 %v1319
        %v1369 = vpop.f32.mrb[0].mxu0
        %v1370 = vadd.f32 %v1210, %v1369
        %v1371 = vpop.f32.mrb[0].mxu0
        %v1372 = vpop.f32.mrb[0].mxu0
        %v1373 = vadd.f32 %v1215, %v1372
        %v1374 = vpop.f32.mrb[0].mxu0
        %1375 = vmatprep.mubr.bf16.mxu0 0
        %1376 = vmatmul.mubr.bf16.gmra.mrb[0].mxu0 %v1320
        %v1377 = vpop.f32.mrb[0].mxu0
        %v1378 = vadd.f32 %v1220, %v1377
        %v1379 = vpop.f32.mrb[0].mxu0
        %v1380 = vpop.f32.mrb[0].mxu0
        %v1381 = vadd.f32 %v1225, %v1380
        %v1382 = vpop.f32.mrb[0].mxu0
        %1383 = vmatprep.mubr.bf16.mxu0 0
        %1384 = vmatmul.mubr.bf16.gmra.mrb[0].mxu0 %v1321
        %v1385 = vpop.f32.mrb[0].mxu0
        %v1386 = vadd.f32 %v1230, %v1385
        %v1387 = vpop.f32.mrb[0].mxu0
        %v1388 = vpop.f32.mrb[0].mxu0
        %v1389 = vadd.f32 %v1235, %v1388
        %v1390 = vpop.f32.mrb[0].mxu0
        %1391 = vmatprep.mubr.bf16.mxu0 0
        %1392 = vmatmul.mubr.bf16.gmra.mrb[0].mxu0 %v1322
        %v1393 = vpop.f32.mrb[0].mxu0
        %v1394 = vadd.f32 %v1240, %v1393
        %v1395 = vpop.f32.mrb[0].mxu0
        %v1396 = vpop.f32.mrb[0].mxu0
        %v1397 = vadd.f32 %v1245, %v1396
        %v1398 = vpop.f32.mrb[0].mxu0
        %1399 = vmatprep.mubr.bf16.mxu0 0
        %1400 = vmatmul.mubr.bf16.gmra.mrb[0].mxu0 %v1323
        %v1401 = vpop.f32.mrb[0].mxu0
        %v1402 = vadd.f32 %v1250, %v1401
        %v1403 = vpop.f32.mrb[0].mxu0
        %v1404 = vpop.f32.mrb[0].mxu0
        %v1405 = vadd.f32 %v1255, %v1404
        %v1406 = vpop.f32.mrb[0].mxu0
        %1407 = vmatprep.mubr.bf16.mxu0 0
        %1408 = vmatmul.mubr.bf16.gmra.mrb[0].mxu0 %v1324
        %v1409 = vpop.f32.mrb[0].mxu0
        %v1410 = vadd.f32 %v1260, %v1409
        %v1411 = vpop.f32.mrb[0].mxu0
        %v1412 = vpop.f32.mrb[0].mxu0
        %v1413 = vadd.f32 %v1265, %v1412
        %v1414 = vpop.f32.mrb[0].mxu0
        %1415 = vmatprep.mubr.bf16.mxu0 0
        %1416 = vmatmul.mubr.bf16.gmra.mrb[0].mxu0 %v1325
        %v1417 = vpop.f32.mrb[0].mxu0
        %v1418 = vadd.f32 %v1270, %v1417
        %v1419 = vpop.f32.mrb[0].mxu0
        %v1420 = vpop.f32.mrb[0].mxu0
        %v1421 = vadd.f32 %v1275, %v1420
        %v1422 = vpop.f32.mrb[0].mxu0
        %1423 = vmatprep.mubr.bf16.mxu0 0
        %1424 = vmatmul.mubr.bf16.gmra.mrb[0].mxu0 %v1326
        %v1425 = vpop.f32.mrb[0].mxu0
        %v1426 = vadd.f32 %v1280, %v1425
        %v1427 = vpop.f32.mrb[0].mxu0
        %v1428 = vpop.f32.mrb[0].mxu0
        %v1429 = vadd.f32 %v1285, %v1428
        %v1430 = vpop.f32.mrb[0].mxu0
        %1431 = vdwg.mxu0
        %v1432 = vmax.f32 %v1370, 0.0
        %v1433 = vmax.f32 %v1373, 0.0
        %v1434 = vmax.f32 %v1378, 0.0
        %v1435 = vmax.f32 %v1381, 0.0
        %v1436 = vmax.f32 %v1386, 0.0
        %v1437 = vmax.f32 %v1389, 0.0
        %v1438 = vmax.f32 %v1394, 0.0
        %v1439 = vmax.f32 %v1397, 0.0
        %v1440 = vmax.f32 %v1402, 0.0
        %v1441 = vmax.f32 %v1405, 0.0
        %v1442 = vmax.f32 %v1410, 0.0
        %v1443 = vmax.f32 %v1413, 0.0
        %v1444 = vmax.f32 %v1418, 0.0
        %v1445 = vmax.f32 %v1421, 0.0
        %v1446 = vmax.f32 %v1426, 0.0
        %v1447 = vmax.f32 %v1429, 0.0
        %v1448 = vpack.c.bf16 %v1433, %v1432
        %v1449 = vpack.c.bf16 %v1435, %v1434
        %v1450 = vpack.c.bf16 %v1437, %v1436
        %v1451 = vpack.c.bf16 %v1439, %v1438
        %v1452 = vpack.c.bf16 %v1441, %v1440
        %v1453 = vpack.c.bf16 %v1443, %v1442
        %v1454 = vpack.c.bf16 %v1445, %v1444
        %v1455 = vpack.c.bf16 %v1447, %v1446
        %v1456 = vld [vmem:[%s625] sm:$0xf]
        %1457 = vmatprep.subr.bf16.mxu0 0
        %1458 = vmatpush1.bf16.msra.mxu0 %v1448
        %1459 = vmatprep.subr.bf16.mxu0 0
        %1460 = vmatpush1.bf16.msra.mxu0 %v1449
        %1461 = vmatprep.subr.bf16.mxu0 0
        %1462 = vmatpush1.bf16.msra.mxu0 %v1450
        %1463 = vmatprep.subr.bf16.mxu0 0
        %1464 = vmatpush1.bf16.msra.mxu0 %v1451
        %1465 = vmatprep.subr.bf16.mxu0 0
        %1466 = vmatpush1.bf16.msra.mxu0 %v1452
        %1467 = vmatprep.subr.bf16.mxu0 0
        %1468 = vmatpush1.bf16.msra.mxu0 %v1453
        %1469 = vmatprep.subr.bf16.mxu0 0
        %1470 = vmatpush1.bf16.msra.mxu0 %v1454
        %1471 = vmatprep.subr.bf16.mxu0 0
        %1472 = vmatpush1.bf16.msra.mxu0 %v1455
        %1473 = vmatprep.subr.bf16.mxu0 0
        %1474 = vmatpush1.bf16.msra.mxu0 0
        %1475 = vmatprep.subr.bf16.mxu0 0
        %1476 = vmatpush1.bf16.msra.mxu0 0
        %1477 = vmatprep.subr.bf16.mxu0 0
        %1478 = vmatpush1.bf16.msra.mxu0 0
        %1479 = vmatprep.subr.bf16.mxu0 0
        %1480 = vmatpush1.bf16.msra.mxu0 0
        %1481 = vmatprep.subr.bf16.mxu0 0
        %1482 = vmatpush1.bf16.msra.mxu0 0
        %1483 = vmatprep.subr.bf16.mxu0 0
        %1484 = vmatpush1.bf16.msra.mxu0 0
        %1485 = vmatprep.subr.bf16.mxu0 0
        %1486 = vmatpush1.bf16.msra.mxu0 0
        %1487 = vmatprep.subr.bf16.mxu0 0
        %1488 = vmatpush1.bf16.msra.mxu0 0
        %1489 = vmatprep.mubr.bf16.mxu0 0
        %1490 = vmatmul.mubr.bf16.gmra.mrb[0].mxu0 %v1456
        %v1491 = vpop.f32.mrb[0].mxu0
        %v1492 = vadd.f32 0.0, %v1491
        %v1493 = vpop.f32.mrb[0].mxu0
        %v1494 = vpop.f32.mrb[0].mxu0
        %v1495 = vpop.f32.mrb[0].mxu0
        %1496 = vdwg.mxu0
        %vm1497 = vcmask 523264
        %v1498 = vsel %vm1497, %v1492, -inf
        %v1499 = vrot.slane %v1498, 4
        %v1500 = vmax.f32 %v1498, %v1499
        %v1501 = vrot.slane %v1500, 2
        %v1502 = vmax.f32 %v1500, %v1501
        %v1503 = vrot.slane %v1502, 1
        %v1504 = vmax.f32 %v1502, %v1503
        %v1505 = vsub.f32 %v1492, %v1504
        %v1506 = vmul.f32 %v1505, 1.442695
        %v1507 = vpow.pop %v1506
        %v1508 = vsel %vm1497, %v1507, 0.0
        %v1509 = vrot.slane %v1508, 4
        %v1510 = vadd.f32 %v1508, %v1509
        %v1511 = vrot.slane %v1510, 2
        %v1512 = vadd.f32 %v1510, %v1511
        %v1513 = vrot.slane %v1512, 1
        %v1514 = vadd.f32 %v1512, %v1513
        %v1515 = vrcp.pop %v1514
        %v1516 = vmul.f32 %v1507, %v1515
        %v1517 = vld [vmem:[%s634] sm:$0xf]
        %v1518 = vld [vmem:[%s634 + $0x4] sm:$0xf]
        %v1519 = vld [vmem:[%s634 + $0x8] sm:$0xf]
        %v1520 = vld [vmem:[%s634 + $0xc] sm:$0xf]
        %v1521 = vld [vmem:[%s634 + $0x10] sm:$0xf]
        %v1522 = vld [vmem:[%s634 + $0x14] sm:$0xf]
        %v1523 = vld [vmem:[%s634 + $0x18] sm:$0xf]
        %v1524 = vld [vmem:[%s634 + $0x1c] sm:$0xf]
        %v1525 = vld [vmem:[%s634 + $0x20] sm:$0xf]
        %v1526 = vld [vmem:[%s634 + $0x24] sm:$0xf]
        %v1527 = vld [vmem:[%s634 + $0x28] sm:$0xf]
        %v1528 = vld [vmem:[%s634 + $0x2c] sm:$0xf]
        %v1529 = vld [vmem:[%s634 + $0x30] sm:$0xf]
        %v1530 = vld [vmem:[%s634 + $0x34] sm:$0xf]
        %v1531 = vld [vmem:[%s634 + $0x38] sm:$0xf]
        %v1532 = vld [vmem:[%s634 + $0x3c] sm:$0xf]
        %v1533 = vpack.c.bf16 %v1516, %v1516
        %v1550 = vunpack.c.l.b16 %v1517
        %v1551 = vunpack.c.l.b16 %v1518
        %v1552 = vunpack.c.l.b16 %v1519
        %v1553 = vunpack.c.l.b16 %v1520
        %v1554 = vunpack.c.l.b16 %v1521
        %v1555 = vunpack.c.l.b16 %v1522
        %v1556 = vunpack.c.l.b16 %v1523
        %v1557 = vunpack.c.l.b16 %v1524
        %v1558 = vunpack.c.l.b16 %v1525
        %v1559 = vunpack.c.l.b16 %v1526
        %v1560 = vunpack.c.l.b16 %v1527
        %v1561 = vunpack.c.l.b16 %v1528
        %v1562 = vunpack.c.l.b16 %v1529
        %v1563 = vunpack.c.l.b16 %v1530
        %v1564 = vunpack.c.l.b16 %v1531
        %v1565 = vunpack.c.l.b16 %v1532
        %v1566 = vpack.c.b16 %v1551, %v1550
        %v1567 = vpack.c.b16 %v1553, %v1552
        %v1568 = vpack.c.b16 %v1555, %v1554
        %v1569 = vpack.c.b16 %v1557, %v1556
        %v1570 = vpack.c.b16 %v1559, %v1558
        %v1571 = vpack.c.b16 %v1561, %v1560
        %v1572 = vpack.c.b16 %v1563, %v1562
        %v1573 = vpack.c.b16 %v1565, %v1564
        %vm1574 = vcmask 64512
        %v1576 = vsel %vm1574, %v1566, 0
        %v1579 = vsel %vm1574, %v1567, 0
        %v1582 = vsel %vm1574, %v1568, 0
        %v1585 = vsel %vm1574, %v1569, 0
        %v1588 = vsel %vm1574, %v1570, 0
        %v1591 = vsel %vm1574, %v1571, 0
        %v1594 = vsel %vm1574, %v1572, 0
        %v1597 = vsel %vm1574, %v1573, 0
        %vm1599 = vcmask 1043456
        %v1601 = vsel %vm1599, %v1533, 0
        %1603 = vmatprep.subr.bf16.mxu0 0
        %1604 = vmatpush1.bf16.msra.mxu0 %v1601
        %1605 = vmatprep.subr.bf16.mxu0 0
        %1606 = vmatpush1.bf16.msra.mxu0 0
        %1607 = vmatprep.subr.bf16.mxu0 0
        %1608 = vmatpush1.bf16.msra.mxu0 0
        %1609 = vmatprep.subr.bf16.mxu0 0
        %1610 = vmatpush1.bf16.msra.mxu0 0
        %1611 = vmatprep.subr.bf16.mxu0 0
        %1612 = vmatpush1.bf16.msra.mxu0 0
        %1613 = vmatprep.subr.bf16.mxu0 0
        %1614 = vmatpush1.bf16.msra.mxu0 0
        %1615 = vmatprep.subr.bf16.mxu0 0
        %1616 = vmatpush1.bf16.msra.mxu0 0
        %1617 = vmatprep.subr.bf16.mxu0 0
        %1618 = vmatpush1.bf16.msra.mxu0 0
        %1619 = vmatprep.subr.bf16.mxu0 0
        %1620 = vmatpush1.bf16.msra.mxu0 0
        %1621 = vmatprep.subr.bf16.mxu0 0
        %1622 = vmatpush1.bf16.msra.mxu0 0
        %1623 = vmatprep.subr.bf16.mxu0 0
        %1624 = vmatpush1.bf16.msra.mxu0 0
        %1625 = vmatprep.subr.bf16.mxu0 0
        %1626 = vmatpush1.bf16.msra.mxu0 0
        %1627 = vmatprep.subr.bf16.mxu0 0
        %1628 = vmatpush1.bf16.msra.mxu0 0
        %1629 = vmatprep.subr.bf16.mxu0 0
        %1630 = vmatpush1.bf16.msra.mxu0 0
        %1631 = vmatprep.subr.bf16.mxu0 0
        %1632 = vmatpush1.bf16.msra.mxu0 0
        %1633 = vmatprep.subr.bf16.mxu0 0
        %1634 = vmatpush1.bf16.msra.mxu0 0
        %1635 = vmatprep.mubr.bf16.mxu0 0
        %1636 = vmatmul.mubr.bf16.gmra.mrb[0].mxu0 %v1576
        %v1637 = vpop.f32.mrb[0].mxu0
        %v1638 = vadd.f32 0.0, %v1637
        %v1639 = vpop.f32.mrb[0].mxu0
        %v1640 = vpop.f32.mrb[0].mxu0
        %v1641 = vadd.f32 0.0, %v1640
        %v1642 = vpop.f32.mrb[0].mxu0
        %1643 = vmatprep.mubr.bf16.mxu0 0
        %1644 = vmatmul.mubr.bf16.gmra.mrb[0].mxu0 %v1579
        %v1645 = vpop.f32.mrb[0].mxu0
        %v1646 = vadd.f32 0.0, %v1645
        %v1647 = vpop.f32.mrb[0].mxu0
        %v1648 = vpop.f32.mrb[0].mxu0
        %v1649 = vadd.f32 0.0, %v1648
        %v1650 = vpop.f32.mrb[0].mxu0
        %1651 = vmatprep.mubr.bf16.mxu0 0
        %1652 = vmatmul.mubr.bf16.gmra.mrb[0].mxu0 %v1582
        %v1653 = vpop.f32.mrb[0].mxu0
        %v1654 = vadd.f32 0.0, %v1653
        %v1655 = vpop.f32.mrb[0].mxu0
        %v1656 = vpop.f32.mrb[0].mxu0
        %v1657 = vadd.f32 0.0, %v1656
        %v1658 = vpop.f32.mrb[0].mxu0
        %1659 = vmatprep.mubr.bf16.mxu0 0
        %1660 = vmatmul.mubr.bf16.gmra.mrb[0].mxu0 %v1585
        %v1661 = vpop.f32.mrb[0].mxu0
        %v1662 = vadd.f32 0.0, %v1661
        %v1663 = vpop.f32.mrb[0].mxu0
        %v1664 = vpop.f32.mrb[0].mxu0
        %v1665 = vadd.f32 0.0, %v1664
        %v1666 = vpop.f32.mrb[0].mxu0
        %1667 = vmatprep.mubr.bf16.mxu0 0
        %1668 = vmatmul.mubr.bf16.gmra.mrb[0].mxu0 %v1588
        %v1669 = vpop.f32.mrb[0].mxu0
        %v1670 = vadd.f32 0.0, %v1669
        %v1671 = vpop.f32.mrb[0].mxu0
        %v1672 = vpop.f32.mrb[0].mxu0
        %v1673 = vadd.f32 0.0, %v1672
        %v1674 = vpop.f32.mrb[0].mxu0
        %1675 = vmatprep.mubr.bf16.mxu0 0
        %1676 = vmatmul.mubr.bf16.gmra.mrb[0].mxu0 %v1591
        %v1677 = vpop.f32.mrb[0].mxu0
        %v1678 = vadd.f32 0.0, %v1677
        %v1679 = vpop.f32.mrb[0].mxu0
        %v1680 = vpop.f32.mrb[0].mxu0
        %v1681 = vadd.f32 0.0, %v1680
        %v1682 = vpop.f32.mrb[0].mxu0
        %1683 = vmatprep.mubr.bf16.mxu0 0
        %1684 = vmatmul.mubr.bf16.gmra.mrb[0].mxu0 %v1594
        %v1685 = vpop.f32.mrb[0].mxu0
        %v1686 = vadd.f32 0.0, %v1685
        %v1687 = vpop.f32.mrb[0].mxu0
        %v1688 = vpop.f32.mrb[0].mxu0
        %v1689 = vadd.f32 0.0, %v1688
        %v1690 = vpop.f32.mrb[0].mxu0
        %1691 = vmatprep.mubr.bf16.mxu0 0
        %1692 = vmatmul.mubr.bf16.gmra.mrb[0].mxu0 %v1597
        %v1693 = vpop.f32.mrb[0].mxu0
        %v1694 = vadd.f32 0.0, %v1693
        %v1695 = vpop.f32.mrb[0].mxu0
        %v1696 = vpop.f32.mrb[0].mxu0
        %v1697 = vadd.f32 0.0, %v1696
        %v1698 = vpop.f32.mrb[0].mxu0
        %1699 = vdwg.mxu0
        %v1700 = vld [vmem:[#allocation14] sm:$0xf]
        %v1701 = vld [vmem:[#allocation14 + $0x4] sm:$0xf]
        %v1702 = vld [vmem:[#allocation14 + $0x8] sm:$0xf]
        %v1703 = vld [vmem:[#allocation14 + $0xc] sm:$0xf]
        %v1704 = vld [vmem:[#allocation14 + $0x10] sm:$0xf]
        %v1705 = vld [vmem:[#allocation14 + $0x14] sm:$0xf]
        %v1706 = vld [vmem:[#allocation14 + $0x18] sm:$0xf]
        %v1707 = vld [vmem:[#allocation14 + $0x1c] sm:$0xf]
        %v1708 = vld [vmem:[#allocation14 + $0x20] sm:$0xf]
        %v1709 = vld [vmem:[#allocation14 + $0x24] sm:$0xf]
        %v1710 = vld [vmem:[#allocation14 + $0x28] sm:$0xf]
        %v1711 = vld [vmem:[#allocation14 + $0x2c] sm:$0xf]
        %v1712 = vld [vmem:[#allocation14 + $0x30] sm:$0xf]
        %v1713 = vld [vmem:[#allocation14 + $0x34] sm:$0xf]
        %v1714 = vld [vmem:[#allocation14 + $0x38] sm:$0xf]
        %v1715 = vld [vmem:[#allocation14 + $0x3c] sm:$0xf]
        %v1716 = vld [vmem:[#allocation14 + $0x40] sm:$0xf]
        %v1717 = vld [vmem:[#allocation14 + $0x44] sm:$0xf]
        %v1718 = vld [vmem:[#allocation14 + $0x48] sm:$0xf]
        %v1719 = vld [vmem:[#allocation14 + $0x4c] sm:$0xf]
        %v1720 = vld [vmem:[#allocation14 + $0x50] sm:$0xf]
        %v1721 = vld [vmem:[#allocation14 + $0x54] sm:$0xf]
        %v1722 = vld [vmem:[#allocation14 + $0x58] sm:$0xf]
        %v1723 = vld [vmem:[#allocation14 + $0x5c] sm:$0xf]
        %v1724 = vld [vmem:[#allocation14 + $0x60] sm:$0xf]
        %v1725 = vld [vmem:[#allocation14 + $0x64] sm:$0xf]
        %v1726 = vld [vmem:[#allocation14 + $0x68] sm:$0xf]
        %v1727 = vld [vmem:[#allocation14 + $0x6c] sm:$0xf]
        %v1728 = vld [vmem:[#allocation14 + $0x70] sm:$0xf]
        %v1729 = vld [vmem:[#allocation14 + $0x74] sm:$0xf]
        %v1730 = vld [vmem:[#allocation14 + $0x78] sm:$0xf]
        %v1731 = vld [vmem:[#allocation14 + $0x7c] sm:$0xf]
        %v1732 = vpack.c.bf16 %v1641, %v1638
        %v1733 = vpack.c.bf16 %v1649, %v1646
        %v1734 = vpack.c.bf16 %v1657, %v1654
        %v1735 = vpack.c.bf16 %v1665, %v1662
        %v1736 = vpack.c.bf16 %v1673, %v1670
        %v1737 = vpack.c.bf16 %v1681, %v1678
        %v1738 = vpack.c.bf16 %v1689, %v1686
        %v1739 = vpack.c.bf16 %v1697, %v1694
        %v1740 = vld [vmem:[#allocation16] sm:$0xff]
        %v1741 = vld [vmem:[#allocation16 + $0x8] sm:$0xff]
        %v1742 = vld [vmem:[#allocation16 + $0x10] sm:$0xff]
        %v1743 = vld [vmem:[#allocation16 + $0x18] sm:$0xff]
        %v1744 = vld [vmem:[#allocation16 + $0x20] sm:$0xff]
        %v1745 = vld [vmem:[#allocation16 + $0x28] sm:$0xff]
        %v1746 = vld [vmem:[#allocation16 + $0x30] sm:$0xff]
        %v1747 = vld [vmem:[#allocation16 + $0x38] sm:$0xff]
        %v1748 = vld [vmem:[#allocation16 + $0x40] sm:$0xff]
        %v1749 = vld [vmem:[#allocation16 + $0x48] sm:$0xff]
        %v1750 = vld [vmem:[#allocation16 + $0x50] sm:$0xff]
        %v1751 = vld [vmem:[#allocation16 + $0x58] sm:$0xff]
        %v1752 = vld [vmem:[#allocation16 + $0x60] sm:$0xff]
        %v1753 = vld [vmem:[#allocation16 + $0x68] sm:$0xff]
        %v1754 = vld [vmem:[#allocation16 + $0x70] sm:$0xff]
        %v1755 = vld [vmem:[#allocation16 + $0x78] sm:$0xff]
        %v1756 = vld [vmem:[#allocation16 + $0x80] sm:$0xff]
        %v1757 = vld [vmem:[#allocation16 + $0x88] sm:$0xff]
        %v1758 = vld [vmem:[#allocation16 + $0x90] sm:$0xff]
        %v1759 = vld [vmem:[#allocation16 + $0x98] sm:$0xff]
        %v1760 = vld [vmem:[#allocation16 + $0xa0] sm:$0xff]
        %v1761 = vld [vmem:[#allocation16 + $0xa8] sm:$0xff]
        %v1762 = vld [vmem:[#allocation16 + $0xb0] sm:$0xff]
        %v1763 = vld [vmem:[#allocation16 + $0xb8] sm:$0xff]
        %v1764 = vld [vmem:[#allocation16 + $0xc0] sm:$0xff]
        %v1765 = vld [vmem:[#allocation16 + $0xc8] sm:$0xff]
        %v1766 = vld [vmem:[#allocation16 + $0xd0] sm:$0xff]
        %v1767 = vld [vmem:[#allocation16 + $0xd8] sm:$0xff]
        %v1768 = vld [vmem:[#allocation16 + $0xe0] sm:$0xff]
        %v1769 = vld [vmem:[#allocation16 + $0xe8] sm:$0xff]
        %v1770 = vld [vmem:[#allocation16 + $0xf0] sm:$0xff]
        %v1771 = vld [vmem:[#allocation16 + $0xf8] sm:$0xff]
        %1773 = vset.pattern.permute.xlu0 0
        %1774 = vperm.xlu0 %1773, %v1740
        %v1775 = vpop.permute.xlu0 %1774
        %1778 = vset.pattern.permute.xlu0 0
        %1779 = vperm.xlu0 %1778, %v1741
        %v1780 = vpop.permute.xlu0 %1779
        %1783 = vset.pattern.permute.xlu0 0
        %1784 = vperm.xlu0 %1783, %v1742
        %v1785 = vpop.permute.xlu0 %1784
        %1788 = vset.pattern.permute.xlu0 0
        %1789 = vperm.xlu0 %1788, %v1743
        %v1790 = vpop.permute.xlu0 %1789
        %1793 = vset.pattern.permute.xlu0 0
        %1794 = vperm.xlu0 %1793, %v1744
        %v1795 = vpop.permute.xlu0 %1794
        %1798 = vset.pattern.permute.xlu0 0
        %1799 = vperm.xlu0 %1798, %v1745
        %v1800 = vpop.permute.xlu0 %1799
        %1803 = vset.pattern.permute.xlu0 0
        %1804 = vperm.xlu0 %1803, %v1746
        %v1805 = vpop.permute.xlu0 %1804
        %1808 = vset.pattern.permute.xlu0 0
        %1809 = vperm.xlu0 %1808, %v1747
        %v1810 = vpop.permute.xlu0 %1809
        %1813 = vset.pattern.permute.xlu0 0
        %1814 = vperm.xlu0 %1813, %v1748
        %v1815 = vpop.permute.xlu0 %1814
        %1818 = vset.pattern.permute.xlu0 0
        %1819 = vperm.xlu0 %1818, %v1749
        %v1820 = vpop.permute.xlu0 %1819
        %1823 = vset.pattern.permute.xlu0 0
        %1824 = vperm.xlu0 %1823, %v1750
        %v1825 = vpop.permute.xlu0 %1824
        %1828 = vset.pattern.permute.xlu0 0
        %1829 = vperm.xlu0 %1828, %v1751
        %v1830 = vpop.permute.xlu0 %1829
        %1833 = vset.pattern.permute.xlu0 0
        %1834 = vperm.xlu0 %1833, %v1752
        %v1835 = vpop.permute.xlu0 %1834
        %1838 = vset.pattern.permute.xlu0 0
        %1839 = vperm.xlu0 %1838, %v1753
        %v1840 = vpop.permute.xlu0 %1839
        %1843 = vset.pattern.permute.xlu0 0
        %1844 = vperm.xlu0 %1843, %v1754
        %v1845 = vpop.permute.xlu0 %1844
        %1848 = vset.pattern.permute.xlu0 0
        %1849 = vperm.xlu0 %1848, %v1755
        %v1850 = vpop.permute.xlu0 %1849
        %1853 = vset.pattern.permute.xlu0 0
        %1854 = vperm.xlu0 %1853, %v1756
        %v1855 = vpop.permute.xlu0 %1854
        %1858 = vset.pattern.permute.xlu0 0
        %1859 = vperm.xlu0 %1858, %v1757
        %v1860 = vpop.permute.xlu0 %1859
        %1863 = vset.pattern.permute.xlu0 0
        %1864 = vperm.xlu0 %1863, %v1758
        %v1865 = vpop.permute.xlu0 %1864
        %1868 = vset.pattern.permute.xlu0 0
        %1869 = vperm.xlu0 %1868, %v1759
        %v1870 = vpop.permute.xlu0 %1869
        %1873 = vset.pattern.permute.xlu0 0
        %1874 = vperm.xlu0 %1873, %v1760
        %v1875 = vpop.permute.xlu0 %1874
        %1878 = vset.pattern.permute.xlu0 0
        %1879 = vperm.xlu0 %1878, %v1761
        %v1880 = vpop.permute.xlu0 %1879
        %1883 = vset.pattern.permute.xlu0 0
        %1884 = vperm.xlu0 %1883, %v1762
        %v1885 = vpop.permute.xlu0 %1884
        %1888 = vset.pattern.permute.xlu0 0
        %1889 = vperm.xlu0 %1888, %v1763
        %v1890 = vpop.permute.xlu0 %1889
        %1893 = vset.pattern.permute.xlu0 0
        %1894 = vperm.xlu0 %1893, %v1764
        %v1895 = vpop.permute.xlu0 %1894
        %1898 = vset.pattern.permute.xlu0 0
        %1899 = vperm.xlu0 %1898, %v1765
        %v1900 = vpop.permute.xlu0 %1899
        %1903 = vset.pattern.permute.xlu0 0
        %1904 = vperm.xlu0 %1903, %v1766
        %v1905 = vpop.permute.xlu0 %1904
        %1908 = vset.pattern.permute.xlu0 0
        %1909 = vperm.xlu0 %1908, %v1767
        %v1910 = vpop.permute.xlu0 %1909
        %1913 = vset.pattern.permute.xlu0 0
        %1914 = vperm.xlu0 %1913, %v1768
        %v1915 = vpop.permute.xlu0 %1914
        %1918 = vset.pattern.permute.xlu0 0
        %1919 = vperm.xlu0 %1918, %v1769
        %v1920 = vpop.permute.xlu0 %1919
        %1923 = vset.pattern.permute.xlu0 0
        %1924 = vperm.xlu0 %1923, %v1770
        %v1925 = vpop.permute.xlu0 %1924
        %1928 = vset.pattern.permute.xlu0 0
        %1929 = vperm.xlu0 %1928, %v1771
        %v1930 = vpop.permute.xlu0 %1929
        %v1964 = vunpack.c.l.b16 %v1700
        %v1965 = vunpack.c.l.b16 %v1701
        %v1966 = vunpack.c.l.b16 %v1702
        %v1967 = vunpack.c.l.b16 %v1703
        %v1968 = vunpack.c.l.b16 %v1704
        %v1969 = vunpack.c.l.b16 %v1705
        %v1970 = vunpack.c.l.b16 %v1706
        %v1971 = vunpack.c.l.b16 %v1707
        %v1972 = vunpack.c.l.b16 %v1708
        %v1973 = vunpack.c.l.b16 %v1709
        %v1974 = vunpack.c.l.b16 %v1710
        %v1975 = vunpack.c.l.b16 %v1711
        %v1976 = vunpack.c.l.b16 %v1712
        %v1977 = vunpack.c.l.b16 %v1713
        %v1978 = vunpack.c.l.b16 %v1714
        %v1979 = vunpack.c.l.b16 %v1715
        %v1980 = vunpack.c.l.b16 %v1716
        %v1981 = vunpack.c.l.b16 %v1717
        %v1982 = vunpack.c.l.b16 %v1718
        %v1983 = vunpack.c.l.b16 %v1719
        %v1984 = vunpack.c.l.b16 %v1720
        %v1985 = vunpack.c.l.b16 %v1721
        %v1986 = vunpack.c.l.b16 %v1722
        %v1987 = vunpack.c.l.b16 %v1723
        %v1988 = vunpack.c.l.b16 %v1724
        %v1989 = vunpack.c.l.b16 %v1725
        %v1990 = vunpack.c.l.b16 %v1726
        %v1991 = vunpack.c.l.b16 %v1727
        %v1992 = vunpack.c.l.b16 %v1728
        %v1993 = vunpack.c.l.b16 %v1729
        %v1994 = vunpack.c.l.b16 %v1730
        %v1995 = vunpack.c.l.b16 %v1731
        %v1996 = vpack.c.b16 %v1965, %v1964
        %v1997 = vpack.c.b16 %v1967, %v1966
        %v1998 = vpack.c.b16 %v1969, %v1968
        %v1999 = vpack.c.b16 %v1971, %v1970
        %v2000 = vpack.c.b16 %v1973, %v1972
        %v2001 = vpack.c.b16 %v1975, %v1974
        %v2002 = vpack.c.b16 %v1977, %v1976
        %v2003 = vpack.c.b16 %v1979, %v1978
        %v2004 = vpack.c.b16 %v1981, %v1980
        %v2005 = vpack.c.b16 %v1983, %v1982
        %v2006 = vpack.c.b16 %v1985, %v1984
        %v2007 = vpack.c.b16 %v1987, %v1986
        %v2008 = vpack.c.b16 %v1989, %v1988
        %v2009 = vpack.c.b16 %v1991, %v1990
        %v2010 = vpack.c.b16 %v1993, %v1992
        %v2011 = vpack.c.b16 %v1995, %v1994
        %2028 = vmatprep.subr.bf16.mxu0 0
        %2029 = vmatpush1.bf16.msra.mxu0 %v1732
        %2030 = vmatprep.subr.bf16.mxu0 0
        %2031 = vmatpush1.bf16.msra.mxu0 %v1733
        %2032 = vmatprep.subr.bf16.mxu0 0
        %2033 = vmatpush1.bf16.msra.mxu0 %v1734
        %2034 = vmatprep.subr.bf16.mxu0 0
        %2035 = vmatpush1.bf16.msra.mxu0 %v1735
        %2036 = vmatprep.subr.bf16.mxu0 0
        %2037 = vmatpush1.bf16.msra.mxu0 %v1736
        %2038 = vmatprep.subr.bf16.mxu0 0
        %2039 = vmatpush1.bf16.msra.mxu0 %v1737
        %2040 = vmatprep.subr.bf16.mxu0 0
        %2041 = vmatpush1.bf16.msra.mxu0 %v1738
        %2042 = vmatprep.subr.bf16.mxu0 0
        %2043 = vmatpush1.bf16.msra.mxu0 %v1739
        %2044 = vmatprep.subr.bf16.mxu0 0
        %2045 = vmatpush1.bf16.msra.mxu0 0
        %2046 = vmatprep.subr.bf16.mxu0 0
        %2047 = vmatpush1.bf16.msra.mxu0 0
        %2048 = vmatprep.subr.bf16.mxu0 0
        %2049 = vmatpush1.bf16.msra.mxu0 0
        %2050 = vmatprep.subr.bf16.mxu0 0
        %2051 = vmatpush1.bf16.msra.mxu0 0
        %2052 = vmatprep.subr.bf16.mxu0 0
        %2053 = vmatpush1.bf16.msra.mxu0 0
        %2054 = vmatprep.subr.bf16.mxu0 0
        %2055 = vmatpush1.bf16.msra.mxu0 0
        %2056 = vmatprep.subr.bf16.mxu0 0
        %2057 = vmatpush1.bf16.msra.mxu0 0
        %2058 = vmatprep.subr.bf16.mxu0 0
        %2059 = vmatpush1.bf16.msra.mxu0 0
        %2060 = vmatprep.mubr.bf16.mxu0 0
        %2061 = vmatmul.mubr.bf16.gmra.mrb[0].mxu0 %v1996
        %v2062 = vpop.f32.mrb[0].mxu0
        %v2063 = vadd.f32 %v1775, %v2062
        %v2064 = vpop.f32.mrb[0].mxu0
        %v2065 = vpop.f32.mrb[0].mxu0
        %v2066 = vadd.f32 %v1780, %v2065
        %v2067 = vpop.f32.mrb[0].mxu0
        %2068 = vmatprep.mubr.bf16.mxu0 0
        %2069 = vmatmul.mubr.bf16.gmra.mrb[0].mxu0 %v1997
        %v2070 = vpop.f32.mrb[0].mxu0
        %v2071 = vadd.f32 %v1785, %v2070
        %v2072 = vpop.f32.mrb[0].mxu0
        %v2073 = vpop.f32.mrb[0].mxu0
        %v2074 = vadd.f32 %v1790, %v2073
        %v2075 = vpop.f32.mrb[0].mxu0
        %2076 = vmatprep.mubr.bf16.mxu0 0
        %2077 = vmatmul.mubr.bf16.gmra.mrb[0].mxu0 %v1998
        %v2078 = vpop.f32.mrb[0].mxu0
        %v2079 = vadd.f32 %v1795, %v2078
        %v2080 = vpop.f32.mrb[0].mxu0
        %v2081 = vpop.f32.mrb[0].mxu0
        %v2082 = vadd.f32 %v1800, %v2081
        %v2083 = vpop.f32.mrb[0].mxu0
        %2084 = vmatprep.mubr.bf16.mxu0 0
        %2085 = vmatmul.mubr.bf16.gmra.mrb[0].mxu0 %v1999
        %v2086 = vpop.f32.mrb[0].mxu0
        %v2087 = vadd.f32 %v1805, %v2086
        %v2088 = vpop.f32.mrb[0].mxu0
        %v2089 = vpop.f32.mrb[0].mxu0
        %v2090 = vadd.f32 %v1810, %v2089
        %v2091 = vpop.f32.mrb[0].mxu0
        %2092 = vmatprep.mubr.bf16.mxu0 0
        %2093 = vmatmul.mubr.bf16.gmra.mrb[0].mxu0 %v2000
        %v2094 = vpop.f32.mrb[0].mxu0
        %v2095 = vadd.f32 %v1815, %v2094
        %v2096 = vpop.f32.mrb[0].mxu0
        %v2097 = vpop.f32.mrb[0].mxu0
        %v2098 = vadd.f32 %v1820, %v2097
        %v2099 = vpop.f32.mrb[0].mxu0
        %2100 = vmatprep.mubr.bf16.mxu0 0
        %2101 = vmatmul.mubr.bf16.gmra.mrb[0].mxu0 %v2001
        %v2102 = vpop.f32.mrb[0].mxu0
        %v2103 = vadd.f32 %v1825, %v2102
        %v2104 = vpop.f32.mrb[0].mxu0
        %v2105 = vpop.f32.mrb[0].mxu0
        %v2106 = vadd.f32 %v1830, %v2105
        %v2107 = vpop.f32.mrb[0].mxu0
        %2108 = vmatprep.mubr.bf16.mxu0 0
        %2109 = vmatmul.mubr.bf16.gmra.mrb[0].mxu0 %v2002
        %v2110 = vpop.f32.mrb[0].mxu0
        %v2111 = vadd.f32 %v1835, %v2110
        %v2112 = vpop.f32.mrb[0].mxu0
        %v2113 = vpop.f32.mrb[0].mxu0
        %v2114 = vadd.f32 %v1840, %v2113
        %v2115 = vpop.f32.mrb[0].mxu0
        %2116 = vmatprep.mubr.bf16.mxu0 0
        %2117 = vmatmul.mubr.bf16.gmra.mrb[0].mxu0 %v2003
        %v2118 = vpop.f32.mrb[0].mxu0
        %v2119 = vadd.f32 %v1845, %v2118
        %v2120 = vpop.f32.mrb[0].mxu0
        %v2121 = vpop.f32.mrb[0].mxu0
        %v2122 = vadd.f32 %v1850, %v2121
        %v2123 = vpop.f32.mrb[0].mxu0
        %2124 = vmatprep.mubr.bf16.mxu0 0
        %2125 = vmatmul.mubr.bf16.gmra.mrb[0].mxu0 %v2004
        %v2126 = vpop.f32.mrb[0].mxu0
        %v2127 = vadd.f32 %v1855, %v2126
        %v2128 = vpop.f32.mrb[0].mxu0
        %v2129 = vpop.f32.mrb[0].mxu0
        %v2130 = vadd.f32 %v1860, %v2129
        %v2131 = vpop.f32.mrb[0].mxu0
        %2132 = vmatprep.mubr.bf16.mxu0 0
        %2133 = vmatmul.mubr.bf16.gmra.mrb[0].mxu0 %v2005
        %v2134 = vpop.f32.mrb[0].mxu0
        %v2135 = vadd.f32 %v1865, %v2134
        %v2136 = vpop.f32.mrb[0].mxu0
        %v2137 = vpop.f32.mrb[0].mxu0
        %v2138 = vadd.f32 %v1870, %v2137
        %v2139 = vpop.f32.mrb[0].mxu0
        %2140 = vmatprep.mubr.bf16.mxu0 0
        %2141 = vmatmul.mubr.bf16.gmra.mrb[0].mxu0 %v2006
        %v2142 = vpop.f32.mrb[0].mxu0
        %v2143 = vadd.f32 %v1875, %v2142
        %v2144 = vpop.f32.mrb[0].mxu0
        %v2145 = vpop.f32.mrb[0].mxu0
        %v2146 = vadd.f32 %v1880, %v2145
        %v2147 = vpop.f32.mrb[0].mxu0
        %2148 = vmatprep.mubr.bf16.mxu0 0
        %2149 = vmatmul.mubr.bf16.gmra.mrb[0].mxu0 %v2007
        %v2150 = vpop.f32.mrb[0].mxu0
        %v2151 = vadd.f32 %v1885, %v2150
        %v2152 = vpop.f32.mrb[0].mxu0
        %v2153 = vpop.f32.mrb[0].mxu0
        %v2154 = vadd.f32 %v1890, %v2153
        %v2155 = vpop.f32.mrb[0].mxu0
        %2156 = vmatprep.mubr.bf16.mxu0 0
        %2157 = vmatmul.mubr.bf16.gmra.mrb[0].mxu0 %v2008
        %v2158 = vpop.f32.mrb[0].mxu0
        %v2159 = vadd.f32 %v1895, %v2158
        %v2160 = vpop.f32.mrb[0].mxu0
        %v2161 = vpop.f32.mrb[0].mxu0
        %v2162 = vadd.f32 %v1900, %v2161
        %v2163 = vpop.f32.mrb[0].mxu0
        %2164 = vmatprep.mubr.bf16.mxu0 0
        %2165 = vmatmul.mubr.bf16.gmra.mrb[0].mxu0 %v2009
        %v2166 = vpop.f32.mrb[0].mxu0
        %v2167 = vadd.f32 %v1905, %v2166
        %v2168 = vpop.f32.mrb[0].mxu0
        %v2169 = vpop.f32.mrb[0].mxu0
        %v2170 = vadd.f32 %v1910, %v2169
        %v2171 = vpop.f32.mrb[0].mxu0
        %2172 = vmatprep.mubr.bf16.mxu0 0
        %2173 = vmatmul.mubr.bf16.gmra.mrb[0].mxu0 %v2010
        %v2174 = vpop.f32.mrb[0].mxu0
        %v2175 = vadd.f32 %v1915, %v2174
        %v2176 = vpop.f32.mrb[0].mxu0
        %v2177 = vpop.f32.mrb[0].mxu0
        %v2178 = vadd.f32 %v1920, %v2177
        %v2179 = vpop.f32.mrb[0].mxu0
        %2180 = vmatprep.mubr.bf16.mxu0 0
        %2181 = vmatmul.mubr.bf16.gmra.mrb[0].mxu0 %v2011
        %v2182 = vpop.f32.mrb[0].mxu0
        %v2183 = vadd.f32 %v1925, %v2182
        %v2184 = vpop.f32.mrb[0].mxu0
        %v2185 = vpop.f32.mrb[0].mxu0
        %v2186 = vadd.f32 %v1930, %v2185
        %v2187 = vpop.f32.mrb[0].mxu0
        %2188 = vdwg.mxu0
        %v2189 = vmax.f32 %v2063, 0.0
        %v2190 = vmax.f32 %v2066, 0.0
        %v2191 = vmax.f32 %v2071, 0.0
        %v2192 = vmax.f32 %v2074, 0.0
        %v2193 = vmax.f32 %v2079, 0.0
        %v2194 = vmax.f32 %v2082, 0.0
        %v2195 = vmax.f32 %v2087, 0.0
        %v2196 = vmax.f32 %v2090, 0.0
        %v2197 = vmax.f32 %v2095, 0.0
        %v2198 = vmax.f32 %v2098, 0.0
        %v2199 = vmax.f32 %v2103, 0.0
        %v2200 = vmax.f32 %v2106, 0.0
        %v2201 = vmax.f32 %v2111, 0.0
        %v2202 = vmax.f32 %v2114, 0.0
        %v2203 = vmax.f32 %v2119, 0.0
        %v2204 = vmax.f32 %v2122, 0.0
        %v2205 = vmax.f32 %v2127, 0.0
        %v2206 = vmax.f32 %v2130, 0.0
        %v2207 = vmax.f32 %v2135, 0.0
        %v2208 = vmax.f32 %v2138, 0.0
        %v2209 = vmax.f32 %v2143, 0.0
        %v2210 = vmax.f32 %v2146, 0.0
        %v2211 = vmax.f32 %v2151, 0.0
        %v2212 = vmax.f32 %v2154, 0.0
        %v2213 = vmax.f32 %v2159, 0.0
        %v2214 = vmax.f32 %v2162, 0.0
        %v2215 = vmax.f32 %v2167, 0.0
        %v2216 = vmax.f32 %v2170, 0.0
        %v2217 = vmax.f32 %v2175, 0.0
        %v2218 = vmax.f32 %v2178, 0.0
        %v2219 = vmax.f32 %v2183, 0.0
        %v2220 = vmax.f32 %v2186, 0.0
        %v2221 = vld [vmem:[#allocation17] sm:$0xff]
        %v2222 = vld [vmem:[#allocation17 + $0x8] sm:$0xff]
        %v2223 = vld [vmem:[#allocation17 + $0x10] sm:$0xff]
        %v2224 = vld [vmem:[#allocation17 + $0x18] sm:$0xff]
        %v2225 = vld [vmem:[#allocation17 + $0x20] sm:$0xff]
        %v2226 = vld [vmem:[#allocation17 + $0x28] sm:$0xff]
        %v2227 = vld [vmem:[#allocation17 + $0x30] sm:$0xff]
        %v2228 = vld [vmem:[#allocation17 + $0x38] sm:$0xff]
        %v2229 = vld [vmem:[#allocation17 + $0x40] sm:$0xff]
        %v2230 = vld [vmem:[#allocation17 + $0x48] sm:$0xff]
        %v2231 = vld [vmem:[#allocation17 + $0x50] sm:$0xff]
        %v2232 = vld [vmem:[#allocation17 + $0x58] sm:$0xff]
        %v2233 = vld [vmem:[#allocation17 + $0x60] sm:$0xff]
        %v2234 = vld [vmem:[#allocation17 + $0x68] sm:$0xff]
        %v2235 = vld [vmem:[#allocation17 + $0x70] sm:$0xff]
        %v2236 = vld [vmem:[#allocation17 + $0x78] sm:$0xff]
        %v2237 = vld [vmem:[#allocation17 + $0x80] sm:$0xff]
        %v2238 = vld [vmem:[#allocation17 + $0x88] sm:$0xff]
        %v2239 = vld [vmem:[#allocation17 + $0x90] sm:$0xff]
        %v2240 = vld [vmem:[#allocation17 + $0x98] sm:$0xff]
        %v2241 = vld [vmem:[#allocation17 + $0xa0] sm:$0xff]
        %v2242 = vld [vmem:[#allocation17 + $0xa8] sm:$0xff]
        %v2243 = vld [vmem:[#allocation17 + $0xb0] sm:$0xff]
        %v2244 = vld [vmem:[#allocation17 + $0xb8] sm:$0xff]
        %v2245 = vld [vmem:[#allocation17 + $0xc0] sm:$0xff]
        %v2246 = vld [vmem:[#allocation17 + $0xc8] sm:$0xff]
        %v2247 = vld [vmem:[#allocation17 + $0xd0] sm:$0xff]
        %v2248 = vld [vmem:[#allocation17 + $0xd8] sm:$0xff]
        %v2249 = vld [vmem:[#allocation17 + $0xe0] sm:$0xff]
        %v2250 = vld [vmem:[#allocation17 + $0xe8] sm:$0xff]
        %v2251 = vld [vmem:[#allocation17 + $0xf0] sm:$0xff]
        %v2252 = vld [vmem:[#allocation17 + $0xf8] sm:$0xff]
        %v2253 = vpack.c.bf16 %v2190, %v2189
        %v2254 = vpack.c.bf16 %v2192, %v2191
        %v2255 = vpack.c.bf16 %v2194, %v2193
        %v2256 = vpack.c.bf16 %v2196, %v2195
        %v2257 = vpack.c.bf16 %v2198, %v2197
        %v2258 = vpack.c.bf16 %v2200, %v2199
        %v2259 = vpack.c.bf16 %v2202, %v2201
        %v2260 = vpack.c.bf16 %v2204, %v2203
        %v2261 = vpack.c.bf16 %v2206, %v2205
        %v2262 = vpack.c.bf16 %v2208, %v2207
        %v2263 = vpack.c.bf16 %v2210, %v2209
        %v2264 = vpack.c.bf16 %v2212, %v2211
        %v2265 = vpack.c.bf16 %v2214, %v2213
        %v2266 = vpack.c.bf16 %v2216, %v2215
        %v2267 = vpack.c.bf16 %v2218, %v2217
        %v2268 = vpack.c.bf16 %v2220, %v2219
        %v2269 = vld [vmem:[#allocation19] sm:$0xff]
        %v2270 = vld [vmem:[#allocation19 + $0x8] sm:$0xff]
        %v2271 = vld [vmem:[#allocation19 + $0x10] sm:$0xff]
        %v2272 = vld [vmem:[#allocation19 + $0x18] sm:$0xff]
        %v2273 = vld [vmem:[#allocation19 + $0x20] sm:$0xff]
        %v2274 = vld [vmem:[#allocation19 + $0x28] sm:$0xff]
        %v2275 = vld [vmem:[#allocation19 + $0x30] sm:$0xff]
        %v2276 = vld [vmem:[#allocation19 + $0x38] sm:$0xff]
        %v2277 = vld [vmem:[#allocation19 + $0x40] sm:$0xff]
        %v2278 = vld [vmem:[#allocation19 + $0x48] sm:$0xff]
        %v2279 = vld [vmem:[#allocation19 + $0x50] sm:$0xff]
        %v2280 = vld [vmem:[#allocation19 + $0x58] sm:$0xff]
        %v2281 = vld [vmem:[#allocation19 + $0x60] sm:$0xff]
        %v2282 = vld [vmem:[#allocation19 + $0x68] sm:$0xff]
        %v2283 = vld [vmem:[#allocation19 + $0x70] sm:$0xff]
        %v2284 = vld [vmem:[#allocation19 + $0x78] sm:$0xff]
        %v2285 = vld [vmem:[#allocation19 + $0x80] sm:$0xff]
        %v2286 = vld [vmem:[#allocation19 + $0x88] sm:$0xff]
        %v2287 = vld [vmem:[#allocation19 + $0x90] sm:$0xff]
        %v2288 = vld [vmem:[#allocation19 + $0x98] sm:$0xff]
        %v2289 = vld [vmem:[#allocation19 + $0xa0] sm:$0xff]
        %v2290 = vld [vmem:[#allocation19 + $0xa8] sm:$0xff]
        %v2291 = vld [vmem:[#allocation19 + $0xb0] sm:$0xff]
        %v2292 = vld [vmem:[#allocation19 + $0xb8] sm:$0xff]
        %v2293 = vld [vmem:[#allocation19 + $0xc0] sm:$0xff]
        %v2294 = vld [vmem:[#allocation19 + $0xc8] sm:$0xff]
        %v2295 = vld [vmem:[#allocation19 + $0xd0] sm:$0xff]
        %v2296 = vld [vmem:[#allocation19 + $0xd8] sm:$0xff]
        %v2297 = vld [vmem:[#allocation19 + $0xe0] sm:$0xff]
        %v2298 = vld [vmem:[#allocation19 + $0xe8] sm:$0xff]
        %v2299 = vld [vmem:[#allocation19 + $0xf0] sm:$0xff]
        %v2300 = vld [vmem:[#allocation19 + $0xf8] sm:$0xff]
        %v2333 = vunpack.c.l.b16 %v2269
        %v2334 = vunpack.c.h.b16 %v2269
        %v2335 = vunpack.c.l.b16 %v2270
        %v2336 = vunpack.c.h.b16 %v2270
        %v2337 = vunpack.c.l.b16 %v2271
        %v2338 = vunpack.c.h.b16 %v2271
        %v2339 = vunpack.c.l.b16 %v2272
        %v2340 = vunpack.c.h.b16 %v2272
        %v2341 = vunpack.c.l.b16 %v2273
        %v2342 = vunpack.c.h.b16 %v2273
        %v2343 = vunpack.c.l.b16 %v2274
        %v2344 = vunpack.c.h.b16 %v2274
        %v2345 = vunpack.c.l.b16 %v2275
        %v2346 = vunpack.c.h.b16 %v2275
        %v2347 = vunpack.c.l.b16 %v2276
        %v2348 = vunpack.c.h.b16 %v2276
        %v2349 = vunpack.c.l.b16 %v2277
        %v2350 = vunpack.c.h.b16 %v2277
        %v2351 = vunpack.c.l.b16 %v2278
        %v2352 = vunpack.c.h.b16 %v2278
        %v2353 = vunpack.c.l.b16 %v2279
        %v2354 = vunpack.c.h.b16 %v2279
        %v2355 = vunpack.c.l.b16 %v2280
        %v2356 = vunpack.c.h.b16 %v2280
        %v2357 = vunpack.c.l.b16 %v2281
        %v2358 = vunpack.c.h.b16 %v2281
        %v2359 = vunpack.c.l.b16 %v2282
        %v2360 = vunpack.c.h.b16 %v2282
        %v2361 = vunpack.c.l.b16 %v2283
        %v2362 = vunpack.c.h.b16 %v2283
        %v2363 = vunpack.c.l.b16 %v2284
        %v2364 = vunpack.c.h.b16 %v2284
        %v2365 = vunpack.c.l.b16 %v2285
        %v2366 = vunpack.c.h.b16 %v2285
        %v2367 = vunpack.c.l.b16 %v2286
        %v2368 = vunpack.c.h.b16 %v2286
        %v2369 = vunpack.c.l.b16 %v2287
        %v2370 = vunpack.c.h.b16 %v2287
        %v2371 = vunpack.c.l.b16 %v2288
        %v2372 = vunpack.c.h.b16 %v2288
        %v2373 = vunpack.c.l.b16 %v2289
        %v2374 = vunpack.c.h.b16 %v2289
        %v2375 = vunpack.c.l.b16 %v2290
        %v2376 = vunpack.c.h.b16 %v2290
        %v2377 = vunpack.c.l.b16 %v2291
        %v2378 = vunpack.c.h.b16 %v2291
        %v2379 = vunpack.c.l.b16 %v2292
        %v2380 = vunpack.c.h.b16 %v2292
        %v2381 = vunpack.c.l.b16 %v2293
        %v2382 = vunpack.c.h.b16 %v2293
        %v2383 = vunpack.c.l.b16 %v2294
        %v2384 = vunpack.c.h.b16 %v2294
        %v2385 = vunpack.c.l.b16 %v2295
        %v2386 = vunpack.c.h.b16 %v2295
        %v2387 = vunpack.c.l.b16 %v2296
        %v2388 = vunpack.c.h.b16 %v2296
        %v2389 = vunpack.c.l.b16 %v2297
        %v2390 = vunpack.c.h.b16 %v2297
        %v2391 = vunpack.c.l.b16 %v2298
        %v2392 = vunpack.c.h.b16 %v2298
        %v2393 = vunpack.c.l.b16 %v2299
        %v2394 = vunpack.c.h.b16 %v2299
        %v2395 = vunpack.c.l.b16 %v2300
        %v2396 = vunpack.c.h.b16 %v2300
        %v2397 = vpack.c.b16 %v2335, %v2333
        %v2398 = vpack.c.b16 %v2336, %v2334
        %v2399 = vpack.c.b16 %v2339, %v2337
        %v2400 = vpack.c.b16 %v2340, %v2338
        %v2401 = vpack.c.b16 %v2343, %v2341
        %v2402 = vpack.c.b16 %v2344, %v2342
        %v2403 = vpack.c.b16 %v2347, %v2345
        %v2404 = vpack.c.b16 %v2348, %v2346
        %v2405 = vpack.c.b16 %v2351, %v2349
        %v2406 = vpack.c.b16 %v2352, %v2350
        %v2407 = vpack.c.b16 %v2355, %v2353
        %v2408 = vpack.c.b16 %v2356, %v2354
        %v2409 = vpack.c.b16 %v2359, %v2357
        %v2410 = vpack.c.b16 %v2360, %v2358
        %v2411 = vpack.c.b16 %v2363, %v2361
        %v2412 = vpack.c.b16 %v2364, %v2362
        %v2413 = vpack.c.b16 %v2367, %v2365
        %v2414 = vpack.c.b16 %v2368, %v2366
        %v2415 = vpack.c.b16 %v2371, %v2369
        %v2416 = vpack.c.b16 %v2372, %v2370
        %v2417 = vpack.c.b16 %v2375, %v2373
        %v2418 = vpack.c.b16 %v2376, %v2374
        %v2419 = vpack.c.b16 %v2379, %v2377
        %v2420 = vpack.c.b16 %v2380, %v2378
        %v2421 = vpack.c.b16 %v2383, %v2381
        %v2422 = vpack.c.b16 %v2384, %v2382
        %v2423 = vpack.c.b16 %v2387, %v2385
        %v2424 = vpack.c.b16 %v2388, %v2386
        %v2425 = vpack.c.b16 %v2391, %v2389
        %v2426 = vpack.c.b16 %v2392, %v2390
        %v2427 = vpack.c.b16 %v2395, %v2393
        %v2428 = vpack.c.b16 %v2396, %v2394
        %2461 = vmatprep.subr.bf16.mxu0 0
        %2462 = vmatpush1.bf16.msra.mxu0 %v1022
        %2463 = vmatprep.subr.bf16.mxu0 0
        %2464 = vmatpush1.bf16.msra.mxu0 %v1023
        %2465 = vmatprep.subr.bf16.mxu0 0
        %2466 = vmatpush1.bf16.msra.mxu0 %v1024
        %2467 = vmatprep.subr.bf16.mxu0 0
        %2468 = vmatpush1.bf16.msra.mxu0 %v1025
        %2469 = vmatprep.subr.bf16.mxu0 0
        %2470 = vmatpush1.bf16.msra.mxu0 %v1026
        %2471 = vmatprep.subr.bf16.mxu0 0
        %2472 = vmatpush1.bf16.msra.mxu0 %v1027
        %2473 = vmatprep.subr.bf16.mxu0 0
        %2474 = vmatpush1.bf16.msra.mxu0 %v1028
        %2475 = vmatprep.subr.bf16.mxu0 0
        %2476 = vmatpush1.bf16.msra.mxu0 %v1029
        %2477 = vmatprep.subr.bf16.mxu0 0
        %2478 = vmatpush1.bf16.msra.mxu0 %v1030
        %2479 = vmatprep.subr.bf16.mxu0 0
        %2480 = vmatpush1.bf16.msra.mxu0 %v1031
        %2481 = vmatprep.subr.bf16.mxu0 0
        %2482 = vmatpush1.bf16.msra.mxu0 %v1032
        %2483 = vmatprep.subr.bf16.mxu0 0
        %2484 = vmatpush1.bf16.msra.mxu0 %v1033
        %2485 = vmatprep.subr.bf16.mxu0 0
        %2486 = vmatpush1.bf16.msra.mxu0 %v1034
        %2487 = vmatprep.subr.bf16.mxu0 0
        %2488 = vmatpush1.bf16.msra.mxu0 %v1035
        %2489 = vmatprep.subr.bf16.mxu0 0
        %2490 = vmatpush1.bf16.msra.mxu0 %v1036
        %2491 = vmatprep.subr.bf16.mxu0 0
        %2492 = vmatpush1.bf16.msra.mxu0 %v1037
        %2493 = vmatprep.mubr.bf16.mxu0 %v2398
        %2494 = vmatmul.mubr.bf16.gmra.mrb[0].mxu0 %v2397
        %v2495 = vpop.f32.mrb[0].mxu0
        %v2496 = vadd.f32 0.0, %v2495
        %v2497 = vpop.f32.mrb[0].mxu0
        %v2498 = vpop.f32.mrb[0].mxu0
        %v2499 = vadd.f32 0.0, %v2498
        %v2500 = vpop.f32.mrb[0].mxu0
        %2501 = vmatprep.mubr.bf16.mxu0 %v2400
        %2502 = vmatmul.mubr.bf16.gmra.mrb[0].mxu0 %v2399
        %v2503 = vpop.f32.mrb[0].mxu0
        %v2504 = vadd.f32 0.0, %v2503
        %v2505 = vpop.f32.mrb[0].mxu0
        %v2506 = vpop.f32.mrb[0].mxu0
        %v2507 = vadd.f32 0.0, %v2506
        %v2508 = vpop.f32.mrb[0].mxu0
        %2509 = vmatprep.mubr.bf16.mxu0 %v2402
        %2510 = vmatmul.mubr.bf16.gmra.mrb[0].mxu0 %v2401
        %v2511 = vpop.f32.mrb[0].mxu0
        %v2512 = vadd.f32 0.0, %v2511
        %v2513 = vpop.f32.mrb[0].mxu0
        %v2514 = vpop.f32.mrb[0].mxu0
        %v2515 = vadd.f32 0.0, %v2514
        %v2516 = vpop.f32.mrb[0].mxu0
        %2517 = vmatprep.mubr.bf16.mxu0 %v2404
        %2518 = vmatmul.mubr.bf16.gmra.mrb[0].mxu0 %v2403
        %v2519 = vpop.f32.mrb[0].mxu0
        %v2520 = vadd.f32 0.0, %v2519
        %v2521 = vpop.f32.mrb[0].mxu0
        %v2522 = vpop.f32.mrb[0].mxu0
        %v2523 = vadd.f32 0.0, %v2522
        %v2524 = vpop.f32.mrb[0].mxu0
        %2525 = vmatprep.mubr.bf16.mxu0 %v2406
        %2526 = vmatmul.mubr.bf16.gmra.mrb[0].mxu0 %v2405
        %v2527 = vpop.f32.mrb[0].mxu0
        %v2528 = vadd.f32 0.0, %v2527
        %v2529 = vpop.f32.mrb[0].mxu0
        %v2530 = vpop.f32.mrb[0].mxu0
        %v2531 = vadd.f32 0.0, %v2530
        %v2532 = vpop.f32.mrb[0].mxu0
        %2533 = vmatprep.mubr.bf16.mxu0 %v2408
        %2534 = vmatmul.mubr.bf16.gmra.mrb[0].mxu0 %v2407
        %v2535 = vpop.f32.mrb[0].mxu0
        %v2536 = vadd.f32 0.0, %v2535
        %v2537 = vpop.f32.mrb[0].mxu0
        %v2538 = vpop.f32.mrb[0].mxu0
        %v2539 = vadd.f32 0.0, %v2538
        %v2540 = vpop.f32.mrb[0].mxu0
        %2541 = vmatprep.mubr.bf16.mxu0 %v2410
        %2542 = vmatmul.mubr.bf16.gmra.mrb[0].mxu0 %v2409
        %v2543 = vpop.f32.mrb[0].mxu0
        %v2544 = vadd.f32 0.0, %v2543
        %v2545 = vpop.f32.mrb[0].mxu0
        %v2546 = vpop.f32.mrb[0].mxu0
        %v2547 = vadd.f32 0.0, %v2546
        %v2548 = vpop.f32.mrb[0].mxu0
        %2549 = vmatprep.mubr.bf16.mxu0 %v2412
        %2550 = vmatmul.mubr.bf16.gmra.mrb[0].mxu0 %v2411
        %v2551 = vpop.f32.mrb[0].mxu0
        %v2552 = vadd.f32 0.0, %v2551
        %v2553 = vpop.f32.mrb[0].mxu0
        %v2554 = vpop.f32.mrb[0].mxu0
        %v2555 = vadd.f32 0.0, %v2554
        %v2556 = vpop.f32.mrb[0].mxu0
        %2557 = vmatprep.mubr.bf16.mxu0 %v2414
        %2558 = vmatmul.mubr.bf16.gmra.mrb[0].mxu0 %v2413
        %v2559 = vpop.f32.mrb[0].mxu0
        %v2560 = vadd.f32 0.0, %v2559
        %v2561 = vpop.f32.mrb[0].mxu0
        %v2562 = vpop.f32.mrb[0].mxu0
        %v2563 = vadd.f32 0.0, %v2562
        %v2564 = vpop.f32.mrb[0].mxu0
        %2565 = vmatprep.mubr.bf16.mxu0 %v2416
        %2566 = vmatmul.mubr.bf16.gmra.mrb[0].mxu0 %v2415
        %v2567 = vpop.f32.mrb[0].mxu0
        %v2568 = vadd.f32 0.0, %v2567
        %v2569 = vpop.f32.mrb[0].mxu0
        %v2570 = vpop.f32.mrb[0].mxu0
        %v2571 = vadd.f32 0.0, %v2570
        %v2572 = vpop.f32.mrb[0].mxu0
        %2573 = vmatprep.mubr.bf16.mxu0 %v2418
        %2574 = vmatmul.mubr.bf16.gmra.mrb[0].mxu0 %v2417
        %v2575 = vpop.f32.mrb[0].mxu0
        %v2576 = vadd.f32 0.0, %v2575
        %v2577 = vpop.f32.mrb[0].mxu0
        %v2578 = vpop.f32.mrb[0].mxu0
        %v2579 = vadd.f32 0.0, %v2578
        %v2580 = vpop.f32.mrb[0].mxu0
        %2581 = vmatprep.mubr.bf16.mxu0 %v2420
        %2582 = vmatmul.mubr.bf16.gmra.mrb[0].mxu0 %v2419
        %v2583 = vpop.f32.mrb[0].mxu0
        %v2584 = vadd.f32 0.0, %v2583
        %v2585 = vpop.f32.mrb[0].mxu0
        %v2586 = vpop.f32.mrb[0].mxu0
        %v2587 = vadd.f32 0.0, %v2586
        %v2588 = vpop.f32.mrb[0].mxu0
        %2589 = vmatprep.mubr.bf16.mxu0 %v2422
        %2590 = vmatmul.mubr.bf16.gmra.mrb[0].mxu0 %v2421
        %v2591 = vpop.f32.mrb[0].mxu0
        %v2592 = vadd.f32 0.0, %v2591
        %v2593 = vpop.f32.mrb[0].mxu0
        %v2594 = vpop.f32.mrb[0].mxu0
        %v2595 = vadd.f32 0.0, %v2594
        %v2596 = vpop.f32.mrb[0].mxu0
        %2597 = vmatprep.mubr.bf16.mxu0 %v2424
        %2598 = vmatmul.mubr.bf16.gmra.mrb[0].mxu0 %v2423
        %v2599 = vpop.f32.mrb[0].mxu0
        %v2600 = vadd.f32 0.0, %v2599
        %v2601 = vpop.f32.mrb[0].mxu0
        %v2602 = vpop.f32.mrb[0].mxu0
        %v2603 = vadd.f32 0.0, %v2602
        %v2604 = vpop.f32.mrb[0].mxu0
        %2605 = vmatprep.mubr.bf16.mxu0 %v2426
        %2606 = vmatmul.mubr.bf16.gmra.mrb[0].mxu0 %v2425
        %v2607 = vpop.f32.mrb[0].mxu0
        %v2608 = vadd.f32 0.0, %v2607
        %v2609 = vpop.f32.mrb[0].mxu0
        %v2610 = vpop.f32.mrb[0].mxu0
        %v2611 = vadd.f32 0.0, %v2610
        %v2612 = vpop.f32.mrb[0].mxu0
        %2613 = vmatprep.mubr.bf16.mxu0 %v2428
        %2614 = vmatmul.mubr.bf16.gmra.mrb[0].mxu0 %v2427
        %v2615 = vpop.f32.mrb[0].mxu0
        %v2616 = vadd.f32 0.0, %v2615
        %v2617 = vpop.f32.mrb[0].mxu0
        %v2618 = vpop.f32.mrb[0].mxu0
        %v2619 = vadd.f32 0.0, %v2618
        %v2620 = vpop.f32.mrb[0].mxu0
        %2621 = vdwg.mxu0
        %v2654 = vunpack.c.l.b16 %v2221
        %v2655 = vunpack.c.h.b16 %v2221
        %v2656 = vunpack.c.l.b16 %v2222
        %v2657 = vunpack.c.h.b16 %v2222
        %v2658 = vunpack.c.l.b16 %v2223
        %v2659 = vunpack.c.h.b16 %v2223
        %v2660 = vunpack.c.l.b16 %v2224
        %v2661 = vunpack.c.h.b16 %v2224
        %v2662 = vunpack.c.l.b16 %v2225
        %v2663 = vunpack.c.h.b16 %v2225
        %v2664 = vunpack.c.l.b16 %v2226
        %v2665 = vunpack.c.h.b16 %v2226
        %v2666 = vunpack.c.l.b16 %v2227
        %v2667 = vunpack.c.h.b16 %v2227
        %v2668 = vunpack.c.l.b16 %v2228
        %v2669 = vunpack.c.h.b16 %v2228
        %v2670 = vunpack.c.l.b16 %v2229
        %v2671 = vunpack.c.h.b16 %v2229
        %v2672 = vunpack.c.l.b16 %v2230
        %v2673 = vunpack.c.h.b16 %v2230
        %v2674 = vunpack.c.l.b16 %v2231
        %v2675 = vunpack.c.h.b16 %v2231
        %v2676 = vunpack.c.l.b16 %v2232
        %v2677 = vunpack.c.h.b16 %v2232
        %v2678 = vunpack.c.l.b16 %v2233
        %v2679 = vunpack.c.h.b16 %v2233
        %v2680 = vunpack.c.l.b16 %v2234
        %v2681 = vunpack.c.h.b16 %v2234
        %v2682 = vunpack.c.l.b16 %v2235
        %v2683 = vunpack.c.h.b16 %v2235
        %v2684 = vunpack.c.l.b16 %v2236
        %v2685 = vunpack.c.h.b16 %v2236
        %v2686 = vunpack.c.l.b16 %v2237
        %v2687 = vunpack.c.h.b16 %v2237
        %v2688 = vunpack.c.l.b16 %v2238
        %v2689 = vunpack.c.h.b16 %v2238
        %v2690 = vunpack.c.l.b16 %v2239
        %v2691 = vunpack.c.h.b16 %v2239
        %v2692 = vunpack.c.l.b16 %v2240
        %v2693 = vunpack.c.h.b16 %v2240
        %v2694 = vunpack.c.l.b16 %v2241
        %v2695 = vunpack.c.h.b16 %v2241
        %v2696 = vunpack.c.l.b16 %v2242
        %v2697 = vunpack.c.h.b16 %v2242
        %v2698 = vunpack.c.l.b16 %v2243
        %v2699 = vunpack.c.h.b16 %v2243
        %v2700 = vunpack.c.l.b16 %v2244
        %v2701 = vunpack.c.h.b16 %v2244
        %v2702 = vunpack.c.l.b16 %v2245
        %v2703 = vunpack.c.h.b16 %v2245
        %v2704 = vunpack.c.l.b16 %v2246
        %v2705 = vunpack.c.h.b16 %v2246
        %v2706 = vunpack.c.l.b16 %v2247
        %v2707 = vunpack.c.h.b16 %v2247
        %v2708 = vunpack.c.l.b16 %v2248
        %v2709 = vunpack.c.h.b16 %v2248
        %v2710 = vunpack.c.l.b16 %v2249
        %v2711 = vunpack.c.h.b16 %v2249
        %v2712 = vunpack.c.l.b16 %v2250
        %v2713 = vunpack.c.h.b16 %v2250
        %v2714 = vunpack.c.l.b16 %v2251
        %v2715 = vunpack.c.h.b16 %v2251
        %v2716 = vunpack.c.l.b16 %v2252
        %v2717 = vunpack.c.h.b16 %v2252
        %v2718 = vpack.c.b16 %v2656, %v2654
        %v2719 = vpack.c.b16 %v2657, %v2655
        %v2720 = vpack.c.b16 %v2660, %v2658
        %v2721 = vpack.c.b16 %v2661, %v2659
        %v2722 = vpack.c.b16 %v2664, %v2662
        %v2723 = vpack.c.b16 %v2665, %v2663
        %v2724 = vpack.c.b16 %v2668, %v2666
        %v2725 = vpack.c.b16 %v2669, %v2667
        %v2726 = vpack.c.b16 %v2672, %v2670
        %v2727 = vpack.c.b16 %v2673, %v2671
        %v2728 = vpack.c.b16 %v2676, %v2674
        %v2729 = vpack.c.b16 %v2677, %v2675
        %v2730 = vpack.c.b16 %v2680, %v2678
        %v2731 = vpack.c.b16 %v2681, %v2679
        %v2732 = vpack.c.b16 %v2684, %v2682
        %v2733 = vpack.c.b16 %v2685, %v2683
        %v2734 = vpack.c.b16 %v2688, %v2686
        %v2735 = vpack.c.b16 %v2689, %v2687
        %v2736 = vpack.c.b16 %v2692, %v2690
        %v2737 = vpack.c.b16 %v2693, %v2691
        %v2738 = vpack.c.b16 %v2696, %v2694
        %v2739 = vpack.c.b16 %v2697, %v2695
        %v2740 = vpack.c.b16 %v2700, %v2698
        %v2741 = vpack.c.b16 %v2701, %v2699
        %v2742 = vpack.c.b16 %v2704, %v2702
        %v2743 = vpack.c.b16 %v2705, %v2703
        %v2744 = vpack.c.b16 %v2708, %v2706
        %v2745 = vpack.c.b16 %v2709, %v2707
        %v2746 = vpack.c.b16 %v2712, %v2710
        %v2747 = vpack.c.b16 %v2713, %v2711
        %v2748 = vpack.c.b16 %v2716, %v2714
        %v2749 = vpack.c.b16 %v2717, %v2715
        %2782 = vmatprep.subr.bf16.mxu0 0
        %2783 = vmatpush1.bf16.msra.mxu0 %v2253
        %2784 = vmatprep.subr.bf16.mxu0 0
        %2785 = vmatpush1.bf16.msra.mxu0 %v2254
        %2786 = vmatprep.subr.bf16.mxu0 0
        %2787 = vmatpush1.bf16.msra.mxu0 %v2255
        %2788 = vmatprep.subr.bf16.mxu0 0
        %2789 = vmatpush1.bf16.msra.mxu0 %v2256
        %2790 = vmatprep.subr.bf16.mxu0 0
        %2791 = vmatpush1.bf16.msra.mxu0 %v2257
        %2792 = vmatprep.subr.bf16.mxu0 0
        %2793 = vmatpush1.bf16.msra.mxu0 %v2258
        %2794 = vmatprep.subr.bf16.mxu0 0
        %2795 = vmatpush1.bf16.msra.mxu0 %v2259
        %2796 = vmatprep.subr.bf16.mxu0 0
        %2797 = vmatpush1.bf16.msra.mxu0 %v2260
        %2798 = vmatprep.subr.bf16.mxu0 0
        %2799 = vmatpush1.bf16.msra.mxu0 %v2261
        %2800 = vmatprep.subr.bf16.mxu0 0
        %2801 = vmatpush1.bf16.msra.mxu0 %v2262
        %2802 = vmatprep.subr.bf16.mxu0 0
        %2803 = vmatpush1.bf16.msra.mxu0 %v2263
        %2804 = vmatprep.subr.bf16.mxu0 0
        %2805 = vmatpush1.bf16.msra.mxu0 %v2264
        %2806 = vmatprep.subr.bf16.mxu0 0
        %2807 = vmatpush1.bf16.msra.mxu0 %v2265
        %2808 = vmatprep.subr.bf16.mxu0 0
        %2809 = vmatpush1.bf16.msra.mxu0 %v2266
        %2810 = vmatprep.subr.bf16.mxu0 0
        %2811 = vmatpush1.bf16.msra.mxu0 %v2267
        %2812 = vmatprep.subr.bf16.mxu0 0
        %2813 = vmatpush1.bf16.msra.mxu0 %v2268
        %2814 = vmatprep.mubr.bf16.mxu0 %v2719
        %2815 = vmatmul.mubr.bf16.gmra.mrb[0].mxu0 %v2718
        %v2816 = vpop.f32.mrb[0].mxu0
        %v2817 = vadd.f32 %v2496, %v2816
        %v2818 = vpop.f32.mrb[0].mxu0
        %v2819 = vpop.f32.mrb[0].mxu0
        %v2820 = vadd.f32 %v2499, %v2819
        %v2821 = vpop.f32.mrb[0].mxu0
        %2822 = vmatprep.mubr.bf16.mxu0 %v2721
        %2823 = vmatmul.mubr.bf16.gmra.mrb[0].mxu0 %v2720
        %v2824 = vpop.f32.mrb[0].mxu0
        %v2825 = vadd.f32 %v2504, %v2824
        %v2826 = vpop.f32.mrb[0].mxu0
        %v2827 = vpop.f32.mrb[0].mxu0
        %v2828 = vadd.f32 %v2507, %v2827
        %v2829 = vpop.f32.mrb[0].mxu0
        %2830 = vmatprep.mubr.bf16.mxu0 %v2723
        %2831 = vmatmul.mubr.bf16.gmra.mrb[0].mxu0 %v2722
        %v2832 = vpop.f32.mrb[0].mxu0
        %v2833 = vadd.f32 %v2512, %v2832
        %v2834 = vpop.f32.mrb[0].mxu0
        %v2835 = vpop.f32.mrb[0].mxu0
        %v2836 = vadd.f32 %v2515, %v2835
        %v2837 = vpop.f32.mrb[0].mxu0
        %2838 = vmatprep.mubr.bf16.mxu0 %v2725
        %2839 = vmatmul.mubr.bf16.gmra.mrb[0].mxu0 %v2724
        %v2840 = vpop.f32.mrb[0].mxu0
        %v2841 = vadd.f32 %v2520, %v2840
        %v2842 = vpop.f32.mrb[0].mxu0
        %v2843 = vpop.f32.mrb[0].mxu0
        %v2844 = vadd.f32 %v2523, %v2843
        %v2845 = vpop.f32.mrb[0].mxu0
        %2846 = vmatprep.mubr.bf16.mxu0 %v2727
        %2847 = vmatmul.mubr.bf16.gmra.mrb[0].mxu0 %v2726
        %v2848 = vpop.f32.mrb[0].mxu0
        %v2849 = vadd.f32 %v2528, %v2848
        %v2850 = vpop.f32.mrb[0].mxu0
        %v2851 = vpop.f32.mrb[0].mxu0
        %v2852 = vadd.f32 %v2531, %v2851
        %v2853 = vpop.f32.mrb[0].mxu0
        %2854 = vmatprep.mubr.bf16.mxu0 %v2729
        %2855 = vmatmul.mubr.bf16.gmra.mrb[0].mxu0 %v2728
        %v2856 = vpop.f32.mrb[0].mxu0
        %v2857 = vadd.f32 %v2536, %v2856
        %v2858 = vpop.f32.mrb[0].mxu0
        %v2859 = vpop.f32.mrb[0].mxu0
        %v2860 = vadd.f32 %v2539, %v2859
        %v2861 = vpop.f32.mrb[0].mxu0
        %2862 = vmatprep.mubr.bf16.mxu0 %v2731
        %2863 = vmatmul.mubr.bf16.gmra.mrb[0].mxu0 %v2730
        %v2864 = vpop.f32.mrb[0].mxu0
        %v2865 = vadd.f32 %v2544, %v2864
        %v2866 = vpop.f32.mrb[0].mxu0
        %v2867 = vpop.f32.mrb[0].mxu0
        %v2868 = vadd.f32 %v2547, %v2867
        %v2869 = vpop.f32.mrb[0].mxu0
        %2870 = vmatprep.mubr.bf16.mxu0 %v2733
        %2871 = vmatmul.mubr.bf16.gmra.mrb[0].mxu0 %v2732
        %v2872 = vpop.f32.mrb[0].mxu0
        %v2873 = vadd.f32 %v2552, %v2872
        %v2874 = vpop.f32.mrb[0].mxu0
        %v2875 = vpop.f32.mrb[0].mxu0
        %v2876 = vadd.f32 %v2555, %v2875
        %v2877 = vpop.f32.mrb[0].mxu0
        %2878 = vmatprep.mubr.bf16.mxu0 %v2735
        %2879 = vmatmul.mubr.bf16.gmra.mrb[0].mxu0 %v2734
        %v2880 = vpop.f32.mrb[0].mxu0
        %v2881 = vadd.f32 %v2560, %v2880
        %v2882 = vpop.f32.mrb[0].mxu0
        %v2883 = vpop.f32.mrb[0].mxu0
        %v2884 = vadd.f32 %v2563, %v2883
        %v2885 = vpop.f32.mrb[0].mxu0
        %2886 = vmatprep.mubr.bf16.mxu0 %v2737
        %2887 = vmatmul.mubr.bf16.gmra.mrb[0].mxu0 %v2736
        %v2888 = vpop.f32.mrb[0].mxu0
        %v2889 = vadd.f32 %v2568, %v2888
        %v2890 = vpop.f32.mrb[0].mxu0
        %v2891 = vpop.f32.mrb[0].mxu0
        %v2892 = vadd.f32 %v2571, %v2891
        %v2893 = vpop.f32.mrb[0].mxu0
        %2894 = vmatprep.mubr.bf16.mxu0 %v2739
        %2895 = vmatmul.mubr.bf16.gmra.mrb[0].mxu0 %v2738
        %v2896 = vpop.f32.mrb[0].mxu0
        %v2897 = vadd.f32 %v2576, %v2896
        %v2898 = vpop.f32.mrb[0].mxu0
        %v2899 = vpop.f32.mrb[0].mxu0
        %v2900 = vadd.f32 %v2579, %v2899
        %v2901 = vpop.f32.mrb[0].mxu0
        %2902 = vmatprep.mubr.bf16.mxu0 %v2741
        %2903 = vmatmul.mubr.bf16.gmra.mrb[0].mxu0 %v2740
        %v2904 = vpop.f32.mrb[0].mxu0
        %v2905 = vadd.f32 %v2584, %v2904
        %v2906 = vpop.f32.mrb[0].mxu0
        %v2907 = vpop.f32.mrb[0].mxu0
        %v2908 = vadd.f32 %v2587, %v2907
        %v2909 = vpop.f32.mrb[0].mxu0
        %2910 = vmatprep.mubr.bf16.mxu0 %v2743
        %2911 = vmatmul.mubr.bf16.gmra.mrb[0].mxu0 %v2742
        %v2912 = vpop.f32.mrb[0].mxu0
        %v2913 = vadd.f32 %v2592, %v2912
        %v2914 = vpop.f32.mrb[0].mxu0
        %v2915 = vpop.f32.mrb[0].mxu0
        %v2916 = vadd.f32 %v2595, %v2915
        %v2917 = vpop.f32.mrb[0].mxu0
        %2918 = vmatprep.mubr.bf16.mxu0 %v2745
        %2919 = vmatmul.mubr.bf16.gmra.mrb[0].mxu0 %v2744
        %v2920 = vpop.f32.mrb[0].mxu0
        %v2921 = vadd.f32 %v2600, %v2920
        %v2922 = vpop.f32.mrb[0].mxu0
        %v2923 = vpop.f32.mrb[0].mxu0
        %v2924 = vadd.f32 %v2603, %v2923
        %v2925 = vpop.f32.mrb[0].mxu0
        %2926 = vmatprep.mubr.bf16.mxu0 %v2747
        %2927 = vmatmul.mubr.bf16.gmra.mrb[0].mxu0 %v2746
        %v2928 = vpop.f32.mrb[0].mxu0
        %v2929 = vadd.f32 %v2608, %v2928
        %v2930 = vpop.f32.mrb[0].mxu0
        %v2931 = vpop.f32.mrb[0].mxu0
        %v2932 = vadd.f32 %v2611, %v2931
        %v2933 = vpop.f32.mrb[0].mxu0
        %2934 = vmatprep.mubr.bf16.mxu0 %v2749
        %2935 = vmatmul.mubr.bf16.gmra.mrb[0].mxu0 %v2748
        %v2936 = vpop.f32.mrb[0].mxu0
        %v2937 = vadd.f32 %v2616, %v2936
        %v2938 = vpop.f32.mrb[0].mxu0
        %v2939 = vpop.f32.mrb[0].mxu0
        %v2940 = vadd.f32 %v2619, %v2939
        %v2941 = vpop.f32.mrb[0].mxu0
        %2942 = vdwg.mxu0
        %v2943 = vld [vmem:[#allocation20] sm:$0xff]
        %v2944 = vld [vmem:[#allocation20 + $0x8] sm:$0xff]
        %v2945 = vld [vmem:[#allocation20 + $0x10] sm:$0xff]
        %v2946 = vld [vmem:[#allocation20 + $0x18] sm:$0xff]
        %v2947 = vld [vmem:[#allocation20 + $0x20] sm:$0xff]
        %v2948 = vld [vmem:[#allocation20 + $0x28] sm:$0xff]
        %v2949 = vld [vmem:[#allocation20 + $0x30] sm:$0xff]
        %v2950 = vld [vmem:[#allocation20 + $0x38] sm:$0xff]
        %v2951 = vld [vmem:[#allocation20 + $0x40] sm:$0xff]
        %v2952 = vld [vmem:[#allocation20 + $0x48] sm:$0xff]
        %v2953 = vld [vmem:[#allocation20 + $0x50] sm:$0xff]
        %v2954 = vld [vmem:[#allocation20 + $0x58] sm:$0xff]
        %v2955 = vld [vmem:[#allocation20 + $0x60] sm:$0xff]
        %v2956 = vld [vmem:[#allocation20 + $0x68] sm:$0xff]
        %v2957 = vld [vmem:[#allocation20 + $0x70] sm:$0xff]
        %v2958 = vld [vmem:[#allocation20 + $0x78] sm:$0xff]
        %v2959 = vld [vmem:[#allocation20 + $0x80] sm:$0xff]
        %v2960 = vld [vmem:[#allocation20 + $0x88] sm:$0xff]
        %v2961 = vld [vmem:[#allocation20 + $0x90] sm:$0xff]
        %v2962 = vld [vmem:[#allocation20 + $0x98] sm:$0xff]
        %v2963 = vld [vmem:[#allocation20 + $0xa0] sm:$0xff]
        %v2964 = vld [vmem:[#allocation20 + $0xa8] sm:$0xff]
        %v2965 = vld [vmem:[#allocation20 + $0xb0] sm:$0xff]
        %v2966 = vld [vmem:[#allocation20 + $0xb8] sm:$0xff]
        %v2967 = vld [vmem:[#allocation20 + $0xc0] sm:$0xff]
        %v2968 = vld [vmem:[#allocation20 + $0xc8] sm:$0xff]
        %v2969 = vld [vmem:[#allocation20 + $0xd0] sm:$0xff]
        %v2970 = vld [vmem:[#allocation20 + $0xd8] sm:$0xff]
        %v2971 = vld [vmem:[#allocation20 + $0xe0] sm:$0xff]
        %v2972 = vld [vmem:[#allocation20 + $0xe8] sm:$0xff]
        %v2973 = vld [vmem:[#allocation20 + $0xf0] sm:$0xff]
        %v2974 = vld [vmem:[#allocation20 + $0xf8] sm:$0xff]
        %2976 = vset.pattern.permute.xlu0 0
        %2977 = vperm.xlu0 %2976, %v2943
        %v2978 = vpop.permute.xlu0 %2977
        %2981 = vset.pattern.permute.xlu0 0
        %2982 = vperm.xlu0 %2981, %v2944
        %v2983 = vpop.permute.xlu0 %2982
        %2986 = vset.pattern.permute.xlu0 0
        %2987 = vperm.xlu0 %2986, %v2945
        %v2988 = vpop.permute.xlu0 %2987
        %2991 = vset.pattern.permute.xlu0 0
        %2992 = vperm.xlu0 %2991, %v2946
        %v2993 = vpop.permute.xlu0 %2992
        %2996 = vset.pattern.permute.xlu0 0
        %2997 = vperm.xlu0 %2996, %v2947
        %v2998 = vpop.permute.xlu0 %2997
        %3001 = vset.pattern.permute.xlu0 0
        %3002 = vperm.xlu0 %3001, %v2948
        %v3003 = vpop.permute.xlu0 %3002
        %3006 = vset.pattern.permute.xlu0 0
        %3007 = vperm.xlu0 %3006, %v2949
        %v3008 = vpop.permute.xlu0 %3007
        %3011 = vset.pattern.permute.xlu0 0
        %3012 = vperm.xlu0 %3011, %v2950
        %v3013 = vpop.permute.xlu0 %3012
        %3016 = vset.pattern.permute.xlu0 0
        %3017 = vperm.xlu0 %3016, %v2951
        %v3018 = vpop.permute.xlu0 %3017
        %3021 = vset.pattern.permute.xlu0 0
        %3022 = vperm.xlu0 %3021, %v2952
        %v3023 = vpop.permute.xlu0 %3022
        %3026 = vset.pattern.permute.xlu0 0
        %3027 = vperm.xlu0 %3026, %v2953
        %v3028 = vpop.permute.xlu0 %3027
        %3031 = vset.pattern.permute.xlu0 0
        %3032 = vperm.xlu0 %3031, %v2954
        %v3033 = vpop.permute.xlu0 %3032
        %3036 = vset.pattern.permute.xlu0 0
        %3037 = vperm.xlu0 %3036, %v2955
        %v3038 = vpop.permute.xlu0 %3037
        %3041 = vset.pattern.permute.xlu0 0
        %3042 = vperm.xlu0 %3041, %v2956
        %v3043 = vpop.permute.xlu0 %3042
        %3046 = vset.pattern.permute.xlu0 0
        %3047 = vperm.xlu0 %3046, %v2957
        %v3048 = vpop.permute.xlu0 %3047
        %3051 = vset.pattern.permute.xlu0 0
        %3052 = vperm.xlu0 %3051, %v2958
        %v3053 = vpop.permute.xlu0 %3052
        %3056 = vset.pattern.permute.xlu0 0
        %3057 = vperm.xlu0 %3056, %v2959
        %v3058 = vpop.permute.xlu0 %3057
        %3061 = vset.pattern.permute.xlu0 0
        %3062 = vperm.xlu0 %3061, %v2960
        %v3063 = vpop.permute.xlu0 %3062
        %3066 = vset.pattern.permute.xlu0 0
        %3067 = vperm.xlu0 %3066, %v2961
        %v3068 = vpop.permute.xlu0 %3067
        %3071 = vset.pattern.permute.xlu0 0
        %3072 = vperm.xlu0 %3071, %v2962
        %v3073 = vpop.permute.xlu0 %3072
        %3076 = vset.pattern.permute.xlu0 0
        %3077 = vperm.xlu0 %3076, %v2963
        %v3078 = vpop.permute.xlu0 %3077
        %3081 = vset.pattern.permute.xlu0 0
        %3082 = vperm.xlu0 %3081, %v2964
        %v3083 = vpop.permute.xlu0 %3082
        %3086 = vset.pattern.permute.xlu0 0
        %3087 = vperm.xlu0 %3086, %v2965
        %v3088 = vpop.permute.xlu0 %3087
        %3091 = vset.pattern.permute.xlu0 0
        %3092 = vperm.xlu0 %3091, %v2966
        %v3093 = vpop.permute.xlu0 %3092
        %3096 = vset.pattern.permute.xlu0 0
        %3097 = vperm.xlu0 %3096, %v2967
        %v3098 = vpop.permute.xlu0 %3097
        %3101 = vset.pattern.permute.xlu0 0
        %3102 = vperm.xlu0 %3101, %v2968
        %v3103 = vpop.permute.xlu0 %3102
        %3106 = vset.pattern.permute.xlu0 0
        %3107 = vperm.xlu0 %3106, %v2969
        %v3108 = vpop.permute.xlu0 %3107
        %3111 = vset.pattern.permute.xlu0 0
        %3112 = vperm.xlu0 %3111, %v2970
        %v3113 = vpop.permute.xlu0 %3112
        %3116 = vset.pattern.permute.xlu0 0
        %3117 = vperm.xlu0 %3116, %v2971
        %v3118 = vpop.permute.xlu0 %3117
        %3121 = vset.pattern.permute.xlu0 0
        %3122 = vperm.xlu0 %3121, %v2972
        %v3123 = vpop.permute.xlu0 %3122
        %3126 = vset.pattern.permute.xlu0 0
        %3127 = vperm.xlu0 %3126, %v2973
        %v3128 = vpop.permute.xlu0 %3127
        %3131 = vset.pattern.permute.xlu0 0
        %3132 = vperm.xlu0 %3131, %v2974
        %v3133 = vpop.permute.xlu0 %3132
        %v3135 = vadd.f32 %v2817, %v2978
        %v3136 = vadd.f32 %v2820, %v2983
        %v3137 = vadd.f32 %v2825, %v2988
        %v3138 = vadd.f32 %v2828, %v2993
        %v3139 = vadd.f32 %v2833, %v2998
        %v3140 = vadd.f32 %v2836, %v3003
        %v3141 = vadd.f32 %v2841, %v3008
        %v3142 = vadd.f32 %v2844, %v3013
        %v3143 = vadd.f32 %v2849, %v3018
        %v3144 = vadd.f32 %v2852, %v3023
        %v3145 = vadd.f32 %v2857, %v3028
        %v3146 = vadd.f32 %v2860, %v3033
        %v3147 = vadd.f32 %v2865, %v3038
        %v3148 = vadd.f32 %v2868, %v3043
        %v3149 = vadd.f32 %v2873, %v3048
        %v3150 = vadd.f32 %v2876, %v3053
        %v3151 = vadd.f32 %v2881, %v3058
        %v3152 = vadd.f32 %v2884, %v3063
        %v3153 = vadd.f32 %v2889, %v3068
        %v3154 = vadd.f32 %v2892, %v3073
        %v3155 = vadd.f32 %v2897, %v3078
        %v3156 = vadd.f32 %v2900, %v3083
        %v3157 = vadd.f32 %v2905, %v3088
        %v3158 = vadd.f32 %v2908, %v3093
        %v3159 = vadd.f32 %v2913, %v3098
        %v3160 = vadd.f32 %v2916, %v3103
        %v3161 = vadd.f32 %v2921, %v3108
        %v3162 = vadd.f32 %v2924, %v3113
        %v3163 = vadd.f32 %v2929, %v3118
        %v3164 = vadd.f32 %v2932, %v3123
        %v3165 = vadd.f32 %v2937, %v3128
        %v3166 = vadd.f32 %v2940, %v3133
        %v3167 = vmax.f32 %v3135, 0.0
        %v3168 = vmax.f32 %v3136, 0.0
        %v3169 = vmax.f32 %v3137, 0.0
        %v3170 = vmax.f32 %v3138, 0.0
        %v3171 = vmax.f32 %v3139, 0.0
        %v3172 = vmax.f32 %v3140, 0.0
        %v3173 = vmax.f32 %v3141, 0.0
        %v3174 = vmax.f32 %v3142, 0.0
        %v3175 = vmax.f32 %v3143, 0.0
        %v3176 = vmax.f32 %v3144, 0.0
        %v3177 = vmax.f32 %v3145, 0.0
        %v3178 = vmax.f32 %v3146, 0.0
        %v3179 = vmax.f32 %v3147, 0.0
        %v3180 = vmax.f32 %v3148, 0.0
        %v3181 = vmax.f32 %v3149, 0.0
        %v3182 = vmax.f32 %v3150, 0.0
        %v3183 = vmax.f32 %v3151, 0.0
        %v3184 = vmax.f32 %v3152, 0.0
        %v3185 = vmax.f32 %v3153, 0.0
        %v3186 = vmax.f32 %v3154, 0.0
        %v3187 = vmax.f32 %v3155, 0.0
        %v3188 = vmax.f32 %v3156, 0.0
        %v3189 = vmax.f32 %v3157, 0.0
        %v3190 = vmax.f32 %v3158, 0.0
        %v3191 = vmax.f32 %v3159, 0.0
        %v3192 = vmax.f32 %v3160, 0.0
        %v3193 = vmax.f32 %v3161, 0.0
        %v3194 = vmax.f32 %v3162, 0.0
        %v3195 = vmax.f32 %v3163, 0.0
        %v3196 = vmax.f32 %v3164, 0.0
        %v3197 = vmax.f32 %v3165, 0.0
        %v3198 = vmax.f32 %v3166, 0.0
        %v3199 = vld [vmem:[#allocation22] sm:$0xff]
        %v3200 = vpack.c.bf16 %v3168, %v3167
        %v3201 = vpack.c.bf16 %v3170, %v3169
        %v3202 = vpack.c.bf16 %v3172, %v3171
        %v3203 = vpack.c.bf16 %v3174, %v3173
        %v3204 = vpack.c.bf16 %v3176, %v3175
        %v3205 = vpack.c.bf16 %v3178, %v3177
        %v3206 = vpack.c.bf16 %v3180, %v3179
        %v3207 = vpack.c.bf16 %v3182, %v3181
        %v3208 = vpack.c.bf16 %v3184, %v3183
        %v3209 = vpack.c.bf16 %v3186, %v3185
        %v3210 = vpack.c.bf16 %v3188, %v3187
        %v3211 = vpack.c.bf16 %v3190, %v3189
        %v3212 = vpack.c.bf16 %v3192, %v3191
        %v3213 = vpack.c.bf16 %v3194, %v3193
        %v3214 = vpack.c.bf16 %v3196, %v3195
        %v3215 = vpack.c.bf16 %v3198, %v3197
        %v3216 = vld [vmem:[#allocation23] sm:$0xff]
        %3218 = vset.pattern.permute.xlu0 0
        %3219 = vperm.xlu0 %3218, %v3216
        %v3220 = vpop.permute.xlu0 %3219
        %v3223 = vunpack.c.l.b16 %v3199
        %v3224 = vunpack.c.h.b16 %v3199
        %v3225 = vpack.c.b16 %v3223, %v3223
        %v3226 = vpack.c.b16 %v3224, %v3224
        %3229 = vmatprep.subr.bf16.mxu0 0
        %3230 = vmatpush1.bf16.msra.mxu0 %v3200
        %3231 = vmatprep.subr.bf16.mxu0 0
        %3232 = vmatpush1.bf16.msra.mxu0 %v3201
        %3233 = vmatprep.subr.bf16.mxu0 0
        %3234 = vmatpush1.bf16.msra.mxu0 %v3202
        %3235 = vmatprep.subr.bf16.mxu0 0
        %3236 = vmatpush1.bf16.msra.mxu0 %v3203
        %3237 = vmatprep.subr.bf16.mxu0 0
        %3238 = vmatpush1.bf16.msra.mxu0 %v3204
        %3239 = vmatprep.subr.bf16.mxu0 0
        %3240 = vmatpush1.bf16.msra.mxu0 %v3205
        %3241 = vmatprep.subr.bf16.mxu0 0
        %3242 = vmatpush1.bf16.msra.mxu0 %v3206
        %3243 = vmatprep.subr.bf16.mxu0 0
        %3244 = vmatpush1.bf16.msra.mxu0 %v3207
        %3245 = vmatprep.subr.bf16.mxu0 0
        %3246 = vmatpush1.bf16.msra.mxu0 %v3208
        %3247 = vmatprep.subr.bf16.mxu0 0
        %3248 = vmatpush1.bf16.msra.mxu0 %v3209
        %3249 = vmatprep.subr.bf16.mxu0 0
        %3250 = vmatpush1.bf16.msra.mxu0 %v3210
        %3251 = vmatprep.subr.bf16.mxu0 0
        %3252 = vmatpush1.bf16.msra.mxu0 %v3211
        %3253 = vmatprep.subr.bf16.mxu0 0
        %3254 = vmatpush1.bf16.msra.mxu0 %v3212
        %3255 = vmatprep.subr.bf16.mxu0 0
        %3256 = vmatpush1.bf16.msra.mxu0 %v3213
        %3257 = vmatprep.subr.bf16.mxu0 0
        %3258 = vmatpush1.bf16.msra.mxu0 %v3214
        %3259 = vmatprep.subr.bf16.mxu0 0
        %3260 = vmatpush1.bf16.msra.mxu0 %v3215
        %3261 = vmatprep.mubr.bf16.mxu0 %v3226
        %3262 = vmatmul.mubr.bf16.gmra.mrb[0].mxu0 %v3225
        %v3263 = vpop.f32.mrb[0].mxu0
        %v3264 = vadd.f32 %v3220, %v3263
        %v3265 = vpop.f32.mrb[0].mxu0
        %v3266 = vpop.f32.mrb[0].mxu0
        %v3267 = vpop.f32.mrb[0].mxu0
        %3268 = vdwg.mxu0
        %3269 = vst.msk [vmem:[%s732] sm:$0xff] %vm1497, %v3264
        %s3270 = sand.u32 %s373, 1
        %s3271 = scalar_lea.sflag [#allocation4], %s3270
        %s3272 = sand.u32 %s373, 1
        %s3273 = smul.addr %s3272, 8
        %s3274 = scalar_lea.vmem [#allocation25], %s3273
        // Predicated region
        $region133: #{ocr_forward.5} parent=75 // pred_check
          %p3275 = pneg %p383
        $region134: #{ocr_forward.5} parent=75 // pred_check_branch
          %3277 = sbr.rel (%p3275) target = $region136
        $region135: #{ocr_forward.5} parent=75 // pred_region
          %s3279 = ssub.s32 128, 128
          %3280 = vsyncadd %s3271, %s3279
          %s3281 = sadd.s32 %s45, %s44
          %s3282 = smul.addr %s3281, 128
          %s3283 = scalar_lea.hbm %s14, %s3282
          %s3285 = sshll.u32 %s3274, 4
          %s3286 = int_to_ptr.vmem [resolvable:$true] %s3285
          %3288 = dma.vmem_to_hbm [thread:$0]  %s3286, 128, %s3283, %s3271
        $region136: #{ocr_forward.5} parent=75 // pred_fallthru
          _
      $region76: #{ocr_forward.5} parent=5 // pred_fallthru
        _
      %p3289 = scmp.le.s32.totalorder 2, %s35
      // Predicated region
      $region137: #{ocr_forward.5} parent=5 // pred_check
        %p3290 = pneg %p3289
      $region138: #{ocr_forward.5} parent=5 // pred_check_branch
        %3292 = sbr.rel (%p3290) target = $region140
      $region139: #{ocr_forward.5} parent=5 // pred_region
        %s3293 = ssub.s32 %s35, 2
        // Predicated region
        $region141: #{ocr_forward.5} parent=139 // pred_check
          %p3294 = pneg %p389
        $region142: #{ocr_forward.5} parent=139 // pred_check_branch
          %3296 = sbr.rel (%p3294) target = $region144
        $region143: #{ocr_forward.5} parent=139 // pred_region
          %s3297 = sand.u32 %s374, 1
          %s3298 = scalar_lea.sflag [#allocation4], %s3297
          %s3299 = sand.u32 %s374, 1
          %s3300 = smul.addr %s3299, 8
          %s3301 = scalar_lea.vmem [#allocation25], %s3300
          %3302 = dma.done %s3298, 128
        $region144: #{ocr_forward.5} parent=139 // pred_fallthru
          _
      $region140: #{ocr_forward.5} parent=5 // pred_fallthru
        _
    $region6: #{ocr_forward.5} parent=1 // loop_footer
      %s39 = sadd.s32 1, %s35
    $region7: #{ocr_forward.5} parent=1 // loop_footer_branch
      %34 = sbr.rel target = $region3
    $region8: #{ocr_forward.5} parent=1 // loop_exit
      _
    %3303 = vsyncpa [#allocation3], 1
    %s3304 = scalar_lea.sflag [#allocation3], 1
    %3305 = vsyncpa %s3304, 1
    %3306 = vsyncpa [#allocation6], 1
    %s3307 = scalar_lea.sflag [#allocation6], 1
    %3308 = vsyncpa %s3307, 1
    %3309 = vsyncpa [#allocation9], 1
    %3310 = vsyncpa [#allocation12], 1
    %3311 = vsyncpa [#allocation15], 1
    %3312 = vsyncpa [#allocation18], 1
    %3313 = vsyncpa [#allocation21], 1
    %3314 = vsyncpa [#allocation24], 1
    %3315 = vsyncpa [#allocation4], 1
    %s3316 = scalar_lea.sflag [#allocation4], 1
    %3317 = vsyncpa %s3316, 1

</llo_original>
